<compile_context>
chip_gen: v6e
topology: v6e:2x2x1
jax: 0.10.0
libtpu: 0.0.40
codegen_flags: <defaults>
</compile_context>

<pallas_src>
import functools

import jax
import jax.numpy as jnp
from jax import lax
from jax.experimental import pallas as pl
from jax.experimental.pallas import tpu as pltpu

IN_C1 = 64           # representation channels
ATT_HIDDEN = 16      # hidden width of the attention-gate MLP
MLP_HIDDEN = 128     # hidden width of the residual MLP
OUT_C = 2            # each decoder emits 2 channels
POSE_W = 8           # padded pose width (approach 0:3 | beta 3:5 | dw 5:7 | pad)
BETA_LANE = 3
DW_LANE = 5
IN_C2_BETA = 3
IN_C2_DIST = 5
LEAKY_SLOPE = 0.1    # relu_negative_slope from the module ctor
EPS_NORM = 1e-12     # F.normalize eps
EPS_LN = 1e-5        # nn.LayerNorm eps
SUB_N = 128          # compute sub-block rows (bounds vreg live ranges)

# packed weight-slab row layout (rows are multiples of 16 -> bf16 tile aligned)
FC1_R0, FC1_R1 = 0, 64           # fc1_w   (64, 128)
FC2_R0, FC2_R1 = 64, 192         # fc2_w   (128, 64)  in cols 0:64
ATT_W2_R0, ATT_W2_R1 = 192, 208  # att_w2  (16, 64)   in cols 0:64
OUT_R0, OUT_R1 = 208, 272        # out_w   (64, 2)    in cols out_lane:out_lane+2
W_ROWS = 272
V_ROWS = 16


def _gelu(x):
    # TODO(synk): torch nn.GELU() is exact (erf); tanh approximation used here.
    return jax.nn.gelu(x, approximate=True)


def _layernorm(x, gamma, beta):
    mu = jnp.mean(x, axis=-1, keepdims=True)
    var = jnp.mean((x - mu) * (x - mu), axis=-1, keepdims=True)
    return (x - mu) * lax.rsqrt(var + EPS_LN) * gamma + beta


def _l2_normalize(x):
    # F.normalize(x, dim=1): x / max(||x||_2, eps).  Zero-padded lanes stay 0.
    norm = jnp.sqrt(jnp.sum(x * x, axis=-1, keepdims=True))
    return x / jnp.maximum(norm, EPS_NORM)


def _unpack_vec(v_ref, in_c2):
    """Hoist all small bias/LN/gate vectors out of the per-sub-block loop."""
    return dict(
        att_b1=v_ref[0:1, 0:ATT_HIDDEN],
        att_b2=v_ref[1:2, 0:IN_C1],
        ln1_g=v_ref[2:3, 0:IN_C1], ln1_b=v_ref[3:4, 0:IN_C1],
        fc1_b=v_ref[4:5, :],
        fc2_b=v_ref[5:6, 0:IN_C1],
        ln2_g=v_ref[6:7, 0:IN_C1], ln2_b=v_ref[7:8, 0:IN_C1],
        out_b=v_ref[8:9, 0:POSE_W],
        att_w1=[v_ref[9 + c:10 + c, 0:ATT_HIDDEN] for c in range(in_c2)],
    )


def _decode(x1, gate_cols, w_ref, vec):
    """att_res_mlp_LN_sparse(x1:[T,64], x2:list of [T,1] cols) -> [T, POSE_W].

    The output head is pre-placed into its own lane range of an 8-wide slab,
    so the result already sits at its final pose lanes (other lanes are 0).
    """
    # attention gate: K <= 5 -> VPU broadcast-FMAs instead of a wasteful MXU dot
    a = vec["att_b1"]                                    # (1, 16)
    for w1_row, col in zip(vec["att_w1"], gate_cols):
        a = a + col * w1_row                             # (T,1)*(1,16) -> (T,16)
    a = _gelu(a)
    att = jax.nn.sigmoid(
        jnp.dot(a.astype(jnp.bfloat16), w_ref[ATT_W2_R0:ATT_W2_R1, 0:IN_C1],
                preferred_element_type=jnp.float32) + vec["att_b2"])

    h = x1 * att                                         # gated features [T, 64]

    # residual MLP block with LayerNorm (bf16 MXU operands, f32 accumulate)
    r = _layernorm(h, vec["ln1_g"], vec["ln1_b"])
    r = jnp.dot(r.astype(jnp.bfloat16), w_ref[FC1_R0:FC1_R1, :],
                preferred_element_type=jnp.float32) + vec["fc1_b"]
    r = _gelu(r)
    r = jnp.dot(r.astype(jnp.bfloat16), w_ref[FC2_R0:FC2_R1, 0:IN_C1],
                preferred_element_type=jnp.float32) + vec["fc2_b"]
    r = jnp.where(r >= 0, r, LEAKY_SLOPE * r)            # leaky_relu(0.1)
    h = h + r

    o = _layernorm(h, vec["ln2_g"], vec["ln2_b"])
    return jnp.dot(o.astype(jnp.bfloat16), w_ref[OUT_R0:OUT_R1, 0:POSE_W],
                   preferred_element_type=jnp.float32) + vec["out_b"]


def _grasp_kernel(rep_ref, app_ref, wb_ref, vb_ref, wd_ref, vd_ref, out_ref):
    """Fused GripperGraspSampler forward for one tile of N points."""
    vec_b = _unpack_vec(vb_ref, IN_C2_BETA)
    vec_d = _unpack_vec(vd_ref, IN_C2_DIST)
    n_sub = rep_ref.shape[0] // SUB_N

    def body(j, carry):
        r0 = pl.multiple_of(j * SUB_N, SUB_N)
        rep = rep_ref[pl.ds(r0, SUB_N), :]                  # (SUB_N, 64) f32
        app = app_ref[pl.ds(r0, SUB_N), :]                  # (SUB_N, 8), lanes 0:3

        app_n = _l2_normalize(app)                          # F.normalize(approach)
        gate_app = [app_n[:, c:c + 1] for c in range(3)]

        beta = _decode(rep, gate_app, wb_ref, vec_b)        # lanes 3:5
        beta_n = _l2_normalize(beta)                        # F.normalize(beta)
        gate_beta = [beta_n[:, BETA_LANE + c:BETA_LANE + c + 1] for c in range(2)]

        dw = _decode(rep, gate_app + gate_beta, wd_ref, vec_d)   # lanes 5:7
        # use_sig defaults to False -> no sigmoid on dist_width.

        # pose = cat([approach, beta, dist_width], dim=1): lane ranges are
        # disjoint (zeros elsewhere), so a single add builds the pose slab.
        out_ref[pl.ds(r0, SUB_N), :] = app_n + beta_n + dw
        return carry

    lax.fori_loop(0, n_sub, body, 0, unroll=True)


def make_decoder_params(key, in_c2):
    """Deterministic raw parameters for one att_res_mlp_LN_sparse decoder."""
    ks = jax.random.split(key, 5)

    def lin(k, fan_in, shape):
        return (jax.random.normal(k, shape, jnp.float32) /
                jnp.sqrt(jnp.float32(fan_in)))

    return [
        lin(ks[0], in_c2, (in_c2, ATT_HIDDEN)), jnp.zeros((1, ATT_HIDDEN), jnp.float32),
        lin(ks[1], ATT_HIDDEN, (ATT_HIDDEN, IN_C1)), jnp.zeros((1, IN_C1), jnp.float32),
        jnp.ones((1, IN_C1), jnp.float32), jnp.zeros((1, IN_C1), jnp.float32),   # LN1
        lin(ks[2], IN_C1, (IN_C1, MLP_HIDDEN)), jnp.zeros((1, MLP_HIDDEN), jnp.float32),
        lin(ks[3], MLP_HIDDEN, (MLP_HIDDEN, IN_C1)), jnp.zeros((1, IN_C1), jnp.float32),
        jnp.ones((1, IN_C1), jnp.float32), jnp.zeros((1, IN_C1), jnp.float32),   # LN2
        lin(ks[4], IN_C1, (IN_C1, OUT_C)), jnp.zeros((1, OUT_C), jnp.float32),
    ]


def pack_decoder_params(params, in_c2, out_lane):
    """Pack 14 raw arrays into one bf16 weight slab + one f32 vector slab."""
    (att_w1, att_b1, att_w2, att_b2,
     ln1_g, ln1_b, fc1_w, fc1_b, fc2_w, fc2_b,
     ln2_g, ln2_b, out_w, out_b) = params

    w = jnp.zeros((W_ROWS, 128), jnp.float32)
    w = w.at[FC1_R0:FC1_R1, :].set(fc1_w)
    w = w.at[FC2_R0:FC2_R1, 0:IN_C1].set(fc2_w)
    w = w.at[ATT_W2_R0:ATT_W2_R1, 0:IN_C1].set(att_w2)
    w = w.at[OUT_R0:OUT_R1, out_lane:out_lane + OUT_C].set(out_w)

    v = jnp.zeros((V_ROWS, 128), jnp.float32)
    v = v.at[0, 0:ATT_HIDDEN].set(att_b1.reshape(-1))
    v = v.at[1, 0:IN_C1].set(att_b2.reshape(-1))
    v = v.at[2, 0:IN_C1].set(ln1_g.reshape(-1))
    v = v.at[3, 0:IN_C1].set(ln1_b.reshape(-1))
    v = v.at[4, :].set(fc1_b.reshape(-1))
    v = v.at[5, 0:IN_C1].set(fc2_b.reshape(-1))
    v = v.at[6, 0:IN_C1].set(ln2_g.reshape(-1))
    v = v.at[7, 0:IN_C1].set(ln2_b.reshape(-1))
    v = v.at[8, out_lane:out_lane + OUT_C].set(out_b.reshape(-1))
    v = v.at[9:9 + in_c2, 0:ATT_HIDDEN].set(att_w1)
    return w.astype(jnp.bfloat16), v


@functools.partial(jax.jit, static_argnames=("tile_n",))
def gripper_grasp_sampler(rep, approach, w_beta, v_beta, w_dist, v_dist,
                          tile_n=512):
    n, c1 = rep.shape
    assert c1 == IN_C1 and approach.shape == (n, 3)
    assert tile_n % SUB_N == 0 and tile_n >= SUB_N

    # keep >= 2 grid steps when n allows it (so the "parallel" axis can shard
    # across both v7x TensorCores), otherwise just big enough to cover n.
    half = SUB_N * (-(-n // (2 * SUB_N)))
    tile = max(SUB_N, min(tile_n, half))
    n_pad = tile * pl.cdiv(n, tile)

    rep_p = rep.astype(jnp.float32)
    if n_pad != n:
        rep_p = jnp.pad(rep_p, ((0, n_pad - n), (0, 0)))
    # approach padded to POSE_W lanes; decoder heads write into their own lane
    # ranges so the pose needs no concatenation (in-kernel or external).
    app_p = jnp.pad(approach.astype(jnp.float32),
                    ((0, n_pad - n), (0, POSE_W - 3)))

    const2d = lambda i: (0, 0)   # resident parameter slabs (no re-DMA per step)
    pose8 = pl.pallas_call(
        _grasp_kernel,
        out_shape=jax.ShapeDtypeStruct((n_pad, POSE_W), jnp.float32),
        grid=(n_pad // tile,),
        in_specs=[
            pl.BlockSpec((tile, IN_C1), lambda i: (i, 0)),    # representation_2d
            pl.BlockSpec((tile, POSE_W), lambda i: (i, 0)),   # approach (padded)
            pl.BlockSpec((W_ROWS, 128), const2d),             # beta weight slab
            pl.BlockSpec((V_ROWS, 128), const2d),             # beta vector slab
            pl.BlockSpec((W_ROWS, 128), const2d),             # dist weight slab
            pl.BlockSpec((V_ROWS, 128), const2d),             # dist vector slab
        ],
        out_specs=pl.BlockSpec((tile, POSE_W), lambda i: (i, 0)),
        compiler_params=pltpu.CompilerParams(
            dimension_semantics=("parallel",)),
    )(rep_p, app_p, w_beta, v_beta, w_dist, v_dist)

    # pose = cat([approach, beta, dist_width], dim=1) -> [N, 7]
    return pose8[:n, :7]


if __name__ == "__main__":
    key = jax.random.PRNGKey(0)
    k_rep, k_app, k_beta, k_dist = jax.random.split(key, 4)

    N = 300   # deliberately not a multiple of the tile: exercises padding path
    rep = jax.random.normal(k_rep, (N, IN_C1), jnp.float32)
    approach = jax.random.normal(k_app, (N, 3), jnp.float32)

    beta_raw = make_decoder_params(k_beta, in_c2=IN_C2_BETA)   # beta_decoder
    dist_raw = make_decoder_params(k_dist, in_c2=IN_C2_DIST)   # dist_width_decoder
    w_beta, v_beta = pack_decoder_params(beta_raw, IN_C2_BETA, BETA_LANE)
    w_dist, v_dist = pack_decoder_params(dist_raw, IN_C2_DIST, DW_LANE)

    pose = gripper_grasp_sampler(rep, approach, w_beta, v_beta, w_dist, v_dist)
    jax.block_until_ready(pose)

    assert pose.shape == (N, 7) and pose.dtype == jnp.float32
    assert bool(jnp.all(jnp.isfinite(pose)))
    # first 3 pose columns are F.normalize(approach) -> unit norm
    assert bool(jnp.allclose(jnp.linalg.norm(pose[:, :3], axis=1), 1.0, atol=1e-4))
    print("KERNEL_OK")
</pallas_src>

<mosaic_0001>
module attributes {stable_mosaic.version = 11 : i64} {
  func.func @_grasp_kernel(%arg0: i32, %arg1: memref<256x64xf32, #tpu.memory_space<vmem>>, %arg2: memref<256x8xf32, #tpu.memory_space<vmem>>, %arg3: memref<272x128xbf16, #tpu.memory_space<vmem>>, %arg4: memref<16x128xf32, #tpu.memory_space<vmem>>, %arg5: memref<272x128xbf16, #tpu.memory_space<vmem>>, %arg6: memref<16x128xf32, #tpu.memory_space<vmem>>, %arg7: memref<256x8xf32, #tpu.memory_space<vmem>>) attributes {dimension_semantics = [#tpu.dimension_semantics<parallel>], iteration_bounds = array<i64: 2>, scalar_prefetch = 0 : i64, scratch_operands = 0 : i64, tpu.core_type = #tpu.core_type<tc>, window_params = [{transform_indices = @transform_0, window_bounds = array<i64: 256, 64>}, {transform_indices = @transform_1, window_bounds = array<i64: 256, 8>}, {pipeline_mode = #tpu.pipeline_mode<synchronous>, transform_indices = @transform_2, window_bounds = array<i64: 272, 128>}, {pipeline_mode = #tpu.pipeline_mode<synchronous>, transform_indices = @transform_3, window_bounds = array<i64: 16, 128>}, {pipeline_mode = #tpu.pipeline_mode<synchronous>, transform_indices = @transform_4, window_bounds = array<i64: 272, 128>}, {pipeline_mode = #tpu.pipeline_mode<synchronous>, transform_indices = @transform_5, window_bounds = array<i64: 16, 128>}, {transform_indices = @transform_6, window_bounds = array<i64: 256, 8>}]} {
    %c0 = arith.constant 0 : index
    %c0_0 = arith.constant 0 : index
    %0 = vector.load %arg4[%c0, %c0_0] : memref<16x128xf32, #tpu.memory_space<vmem>>, vector<1x16xf32>
    %c1 = arith.constant 1 : index
    %c0_1 = arith.constant 0 : index
    %1 = vector.load %arg4[%c1, %c0_1] : memref<16x128xf32, #tpu.memory_space<vmem>>, vector<1x64xf32>
    %c2 = arith.constant 2 : index
    %c0_2 = arith.constant 0 : index
    %2 = vector.load %arg4[%c2, %c0_2] : memref<16x128xf32, #tpu.memory_space<vmem>>, vector<1x64xf32>
    %c3 = arith.constant 3 : index
    %c0_3 = arith.constant 0 : index
    %3 = vector.load %arg4[%c3, %c0_3] : memref<16x128xf32, #tpu.memory_space<vmem>>, vector<1x64xf32>
    %c4 = arith.constant 4 : index
    %c0_4 = arith.constant 0 : index
    %4 = vector.load %arg4[%c4, %c0_4] : memref<16x128xf32, #tpu.memory_space<vmem>>, vector<1x128xf32>
    %c5 = arith.constant 5 : index
    %c0_5 = arith.constant 0 : index
    %5 = vector.load %arg4[%c5, %c0_5] : memref<16x128xf32, #tpu.memory_space<vmem>>, vector<1x64xf32>
    %c6 = arith.constant 6 : index
    %c0_6 = arith.constant 0 : index
    %6 = vector.load %arg4[%c6, %c0_6] : memref<16x128xf32, #tpu.memory_space<vmem>>, vector<1x64xf32>
    %c7 = arith.constant 7 : index
    %c0_7 = arith.constant 0 : index
    %7 = vector.load %arg4[%c7, %c0_7] : memref<16x128xf32, #tpu.memory_space<vmem>>, vector<1x64xf32>
    %c8 = arith.constant 8 : index
    %c0_8 = arith.constant 0 : index
    %8 = vector.load %arg4[%c8, %c0_8] : memref<16x128xf32, #tpu.memory_space<vmem>>, vector<1x8xf32>
    %c9 = arith.constant 9 : index
    %c0_9 = arith.constant 0 : index
    %9 = vector.load %arg4[%c9, %c0_9] : memref<16x128xf32, #tpu.memory_space<vmem>>, vector<1x16xf32>
    %c10 = arith.constant 10 : index
    %c0_10 = arith.constant 0 : index
    %10 = vector.load %arg4[%c10, %c0_10] : memref<16x128xf32, #tpu.memory_space<vmem>>, vector<1x16xf32>
    %c11 = arith.constant 11 : index
    %c0_11 = arith.constant 0 : index
    %11 = vector.load %arg4[%c11, %c0_11] : memref<16x128xf32, #tpu.memory_space<vmem>>, vector<1x16xf32>
    %c0_12 = arith.constant 0 : index
    %c0_13 = arith.constant 0 : index
    %12 = vector.load %arg6[%c0_12, %c0_13] : memref<16x128xf32, #tpu.memory_space<vmem>>, vector<1x16xf32>
    %c1_14 = arith.constant 1 : index
    %c0_15 = arith.constant 0 : index
    %13 = vector.load %arg6[%c1_14, %c0_15] : memref<16x128xf32, #tpu.memory_space<vmem>>, vector<1x64xf32>
    %c2_16 = arith.constant 2 : index
    %c0_17 = arith.constant 0 : index
    %14 = vector.load %arg6[%c2_16, %c0_17] : memref<16x128xf32, #tpu.memory_space<vmem>>, vector<1x64xf32>
    %c3_18 = arith.constant 3 : index
    %c0_19 = arith.constant 0 : index
    %15 = vector.load %arg6[%c3_18, %c0_19] : memref<16x128xf32, #tpu.memory_space<vmem>>, vector<1x64xf32>
    %c4_20 = arith.constant 4 : index
    %c0_21 = arith.constant 0 : index
    %16 = vector.load %arg6[%c4_20, %c0_21] : memref<16x128xf32, #tpu.memory_space<vmem>>, vector<1x128xf32>
    %c5_22 = arith.constant 5 : index
    %c0_23 = arith.constant 0 : index
    %17 = vector.load %arg6[%c5_22, %c0_23] : memref<16x128xf32, #tpu.memory_space<vmem>>, vector<1x64xf32>
    %c6_24 = arith.constant 6 : index
    %c0_25 = arith.constant 0 : index
    %18 = vector.load %arg6[%c6_24, %c0_25] : memref<16x128xf32, #tpu.memory_space<vmem>>, vector<1x64xf32>
    %c7_26 = arith.constant 7 : index
    %c0_27 = arith.constant 0 : index
    %19 = vector.load %arg6[%c7_26, %c0_27] : memref<16x128xf32, #tpu.memory_space<vmem>>, vector<1x64xf32>
    %c8_28 = arith.constant 8 : index
    %c0_29 = arith.constant 0 : index
    %20 = vector.load %arg6[%c8_28, %c0_29] : memref<16x128xf32, #tpu.memory_space<vmem>>, vector<1x8xf32>
    %c9_30 = arith.constant 9 : index
    %c0_31 = arith.constant 0 : index
    %21 = vector.load %arg6[%c9_30, %c0_31] : memref<16x128xf32, #tpu.memory_space<vmem>>, vector<1x16xf32>
    %c10_32 = arith.constant 10 : index
    %c0_33 = arith.constant 0 : index
    %22 = vector.load %arg6[%c10_32, %c0_33] : memref<16x128xf32, #tpu.memory_space<vmem>>, vector<1x16xf32>
    %c11_34 = arith.constant 11 : index
    %c0_35 = arith.constant 0 : index
    %23 = vector.load %arg6[%c11_34, %c0_35] : memref<16x128xf32, #tpu.memory_space<vmem>>, vector<1x16xf32>
    %c12 = arith.constant 12 : index
    %c0_36 = arith.constant 0 : index
    %24 = vector.load %arg6[%c12, %c0_36] : memref<16x128xf32, #tpu.memory_space<vmem>>, vector<1x16xf32>
    %c13 = arith.constant 13 : index
    %c0_37 = arith.constant 0 : index
    %25 = vector.load %arg6[%c13, %c0_37] : memref<16x128xf32, #tpu.memory_space<vmem>>, vector<1x16xf32>
    %c0_i32 = arith.constant 0 : i32
    %c128_i32 = arith.constant 128 : i32
    %26 = arith.muli %c0_i32, %c128_i32 : i32
    %27 = tpu.assume_multiple %26, 128 : i32
    %28 = arith.index_cast %27 : i32 to index
    %c0_38 = arith.constant 0 : index
    %29 = vector.load %arg1[%28, %c0_38] : memref<256x64xf32, #tpu.memory_space<vmem>>, vector<128x64xf32>
    %30 = arith.index_cast %27 : i32 to index
    %c0_39 = arith.constant 0 : index
    %31 = vector.load %arg2[%30, %c0_39] : memref<256x8xf32, #tpu.memory_space<vmem>>, vector<128x8xf32>
    %32 = arith.mulf %31, %31 : vector<128x8xf32>
    %cst = arith.constant dense<0.000000e+00> : vector<128xf32>
    %33 = vector.multi_reduction <add>, %32, %cst [1] : vector<128x8xf32> to vector<128xf32>
    %34 = vector.shape_cast %33 : vector<128xf32> to vector<128x1xf32>
    %35 = math.sqrt %34 : vector<128x1xf32>
    %cst_40 = arith.constant 9.99999996E-13 : f32
    %36 = vector.broadcast %cst_40 : f32 to vector<128x1xf32>
    %37 = arith.maximumf %35, %36 : vector<128x1xf32>
    %38 = vector.broadcast %37 : vector<128x1xf32> to vector<128x8xf32>
    %39 = arith.divf %31, %38 : vector<128x8xf32>
    %40 = vector.extract_strided_slice %39 {offsets = [0, 0], sizes = [128, 1], strides = [1, 1]} : vector<128x8xf32> to vector<128x1xf32>
    %41 = vector.extract_strided_slice %39 {offsets = [0, 1], sizes = [128, 1], strides = [1, 1]} : vector<128x8xf32> to vector<128x1xf32>
    %42 = vector.extract_strided_slice %39 {offsets = [0, 2], sizes = [128, 1], strides = [1, 1]} : vector<128x8xf32> to vector<128x1xf32>
    %43 = vector.broadcast %40 : vector<128x1xf32> to vector<128x16xf32>
    %44 = vector.broadcast %9 : vector<1x16xf32> to vector<128x16xf32>
    %45 = arith.mulf %43, %44 : vector<128x16xf32>
    %46 = vector.broadcast %0 : vector<1x16xf32> to vector<128x16xf32>
    %47 = arith.addf %46, %45 : vector<128x16xf32>
    %48 = vector.broadcast %41 : vector<128x1xf32> to vector<128x16xf32>
    %49 = vector.broadcast %10 : vector<1x16xf32> to vector<128x16xf32>
    %50 = arith.mulf %48, %49 : vector<128x16xf32>
    %51 = arith.addf %47, %50 : vector<128x16xf32>
    %52 = vector.broadcast %42 : vector<128x1xf32> to vector<128x16xf32>
    %53 = vector.broadcast %11 : vector<1x16xf32> to vector<128x16xf32>
    %54 = arith.mulf %52, %53 : vector<128x16xf32>
    %55 = arith.addf %51, %54 : vector<128x16xf32>
    %56 = arith.mulf %55, %55 : vector<128x16xf32>
    %57 = arith.mulf %55, %56 : vector<128x16xf32>
    %cst_41 = arith.constant 4.471500e-02 : f32
    %58 = vector.broadcast %cst_41 : f32 to vector<128x16xf32>
    %59 = arith.mulf %58, %57 : vector<128x16xf32>
    %60 = arith.addf %55, %59 : vector<128x16xf32>
    %cst_42 = arith.constant 0.797884583 : f32
    %61 = vector.broadcast %cst_42 : f32 to vector<128x16xf32>
    %62 = arith.mulf %61, %60 : vector<128x16xf32>
    %63 = math.tanh %62 : vector<128x16xf32>
    %cst_43 = arith.constant 1.000000e+00 : f32
    %64 = vector.broadcast %cst_43 : f32 to vector<128x16xf32>
    %65 = arith.addf %64, %63 : vector<128x16xf32>
    %cst_44 = arith.constant 5.000000e-01 : f32
    %66 = vector.broadcast %cst_44 : f32 to vector<128x16xf32>
    %67 = arith.mulf %66, %65 : vector<128x16xf32>
    %68 = arith.mulf %55, %67 : vector<128x16xf32>
    %69 = arith.truncf %68 : vector<128x16xf32> to vector<128x16xbf16>
    %c192 = arith.constant 192 : index
    %c0_45 = arith.constant 0 : index
    %70 = vector.load %arg3[%c192, %c0_45] : memref<272x128xbf16, #tpu.memory_space<vmem>>, vector<16x64xbf16>
    %cst_46 = arith.constant dense<0.000000e+00> : vector<128x64xf32>
    %71 = tpu.matmul %69, %70, %cst_46 {dimension_numbers = #tpu.dot_dimension_numbers<[1], [0], [0], [1], [0, 0, 1, 1], [], []>} : vector<128x16xbf16>, vector<16x64xbf16>, vector<128x64xf32> -> vector<128x64xf32>
    %72 = vector.broadcast %1 : vector<1x64xf32> to vector<128x64xf32>
    %73 = arith.addf %71, %72 : vector<128x64xf32>
    %74 = arith.negf %73 : vector<128x64xf32>
    %75 = math.exp %74 : vector<128x64xf32>
    %cst_47 = arith.constant 1.000000e+00 : f32
    %76 = vector.broadcast %cst_47 : f32 to vector<128x64xf32>
    %77 = arith.addf %76, %75 : vector<128x64xf32>
    %78 = arith.divf %76, %77 : vector<128x64xf32>
    %79 = arith.mulf %29, %78 : vector<128x64xf32>
    %cst_48 = arith.constant dense<0.000000e+00> : vector<128xf32>
    %80 = vector.multi_reduction <add>, %79, %cst_48 [1] : vector<128x64xf32> to vector<128xf32>
    %81 = vector.shape_cast %80 : vector<128xf32> to vector<128x1xf32>
    %cst_49 = arith.constant 6.400000e+01 : f32
    %82 = vector.broadcast %cst_49 : f32 to vector<128x1xf32>
    %83 = arith.divf %81, %82 : vector<128x1xf32>
    %84 = vector.broadcast %83 : vector<128x1xf32> to vector<128x64xf32>
    %85 = arith.subf %79, %84 : vector<128x64xf32>
    %86 = vector.broadcast %83 : vector<128x1xf32> to vector<128x64xf32>
    %87 = arith.subf %79, %86 : vector<128x64xf32>
    %88 = arith.mulf %85, %87 : vector<128x64xf32>
    %cst_50 = arith.constant dense<0.000000e+00> : vector<128xf32>
    %89 = vector.multi_reduction <add>, %88, %cst_50 [1] : vector<128x64xf32> to vector<128xf32>
    %90 = vector.shape_cast %89 : vector<128xf32> to vector<128x1xf32>
    %cst_51 = arith.constant 6.400000e+01 : f32
    %91 = vector.broadcast %cst_51 : f32 to vector<128x1xf32>
    %92 = arith.divf %90, %91 : vector<128x1xf32>
    %93 = vector.broadcast %83 : vector<128x1xf32> to vector<128x64xf32>
    %94 = arith.subf %79, %93 : vector<128x64xf32>
    %cst_52 = arith.constant 9.99999974E-6 : f32
    %95 = vector.broadcast %cst_52 : f32 to vector<128x1xf32>
    %96 = arith.addf %92, %95 : vector<128x1xf32>
    %97 = math.rsqrt %96 : vector<128x1xf32>
    %98 = vector.broadcast %97 : vector<128x1xf32> to vector<128x64xf32>
    %99 = arith.mulf %94, %98 : vector<128x64xf32>
    %100 = vector.broadcast %2 : vector<1x64xf32> to vector<128x64xf32>
    %101 = arith.mulf %99, %100 : vector<128x64xf32>
    %102 = vector.broadcast %3 : vector<1x64xf32> to vector<128x64xf32>
    %103 = arith.addf %101, %102 : vector<128x64xf32>
    %104 = arith.truncf %103 : vector<128x64xf32> to vector<128x64xbf16>
    %c0_53 = arith.constant 0 : index
    %c0_54 = arith.constant 0 : index
    %105 = vector.load %arg3[%c0_53, %c0_54] : memref<272x128xbf16, #tpu.memory_space<vmem>>, vector<64x128xbf16>
    %cst_55 = arith.constant dense<0.000000e+00> : vector<128x128xf32>
    %106 = tpu.matmul %104, %105, %cst_55 {dimension_numbers = #tpu.dot_dimension_numbers<[1], [0], [0], [1], [0, 0, 1, 1], [], []>} : vector<128x64xbf16>, vector<64x128xbf16>, vector<128x128xf32> -> vector<128x128xf32>
    %107 = vector.broadcast %4 : vector<1x128xf32> to vector<128x128xf32>
    %108 = arith.addf %106, %107 : vector<128x128xf32>
    %109 = arith.mulf %108, %108 : vector<128x128xf32>
    %110 = arith.mulf %108, %109 : vector<128x128xf32>
    %cst_56 = arith.constant 4.471500e-02 : f32
    %111 = vector.broadcast %cst_56 : f32 to vector<128x128xf32>
    %112 = arith.mulf %111, %110 : vector<128x128xf32>
    %113 = arith.addf %108, %112 : vector<128x128xf32>
    %cst_57 = arith.constant 0.797884583 : f32
    %114 = vector.broadcast %cst_57 : f32 to vector<128x128xf32>
    %115 = arith.mulf %114, %113 : vector<128x128xf32>
    %116 = math.tanh %115 : vector<128x128xf32>
    %cst_58 = arith.constant 1.000000e+00 : f32
    %117 = vector.broadcast %cst_58 : f32 to vector<128x128xf32>
    %118 = arith.addf %117, %116 : vector<128x128xf32>
    %cst_59 = arith.constant 5.000000e-01 : f32
    %119 = vector.broadcast %cst_59 : f32 to vector<128x128xf32>
    %120 = arith.mulf %119, %118 : vector<128x128xf32>
    %121 = arith.mulf %108, %120 : vector<128x128xf32>
    %122 = arith.truncf %121 : vector<128x128xf32> to vector<128x128xbf16>
    %c64 = arith.constant 64 : index
    %c0_60 = arith.constant 0 : index
    %123 = vector.load %arg3[%c64, %c0_60] : memref<272x128xbf16, #tpu.memory_space<vmem>>, vector<128x64xbf16>
    %cst_61 = arith.constant dense<0.000000e+00> : vector<128x64xf32>
    %124 = tpu.matmul %122, %123, %cst_61 {dimension_numbers = #tpu.dot_dimension_numbers<[1], [0], [0], [1], [0, 0, 1, 1], [], []>} : vector<128x128xbf16>, vector<128x64xbf16>, vector<128x64xf32> -> vector<128x64xf32>
    %125 = vector.broadcast %5 : vector<1x64xf32> to vector<128x64xf32>
    %126 = arith.addf %124, %125 : vector<128x64xf32>
    %cst_62 = arith.constant 0.000000e+00 : f32
    %127 = vector.broadcast %cst_62 : f32 to vector<128x64xf32>
    %128 = arith.cmpf oge, %126, %127 : vector<128x64xf32>
    %cst_63 = arith.constant 1.000000e-01 : f32
    %129 = vector.broadcast %cst_63 : f32 to vector<128x64xf32>
    %130 = arith.mulf %129, %126 : vector<128x64xf32>
    %131 = arith.select %128, %126, %130 : vector<128x64xi1>, vector<128x64xf32>
    %132 = arith.addf %79, %131 : vector<128x64xf32>
    %cst_64 = arith.constant dense<0.000000e+00> : vector<128xf32>
    %133 = vector.multi_reduction <add>, %132, %cst_64 [1] : vector<128x64xf32> to vector<128xf32>
    %134 = vector.shape_cast %133 : vector<128xf32> to vector<128x1xf32>
    %cst_65 = arith.constant 6.400000e+01 : f32
    %135 = vector.broadcast %cst_65 : f32 to vector<128x1xf32>
    %136 = arith.divf %134, %135 : vector<128x1xf32>
    %137 = vector.broadcast %136 : vector<128x1xf32> to vector<128x64xf32>
    %138 = arith.subf %132, %137 : vector<128x64xf32>
    %139 = vector.broadcast %136 : vector<128x1xf32> to vector<128x64xf32>
    %140 = arith.subf %132, %139 : vector<128x64xf32>
    %141 = arith.mulf %138, %140 : vector<128x64xf32>
    %cst_66 = arith.constant dense<0.000000e+00> : vector<128xf32>
    %142 = vector.multi_reduction <add>, %141, %cst_66 [1] : vector<128x64xf32> to vector<128xf32>
    %143 = vector.shape_cast %142 : vector<128xf32> to vector<128x1xf32>
    %cst_67 = arith.constant 6.400000e+01 : f32
    %144 = vector.broadcast %cst_67 : f32 to vector<128x1xf32>
    %145 = arith.divf %143, %144 : vector<128x1xf32>
    %146 = vector.broadcast %136 : vector<128x1xf32> to vector<128x64xf32>
    %147 = arith.subf %132, %146 : vector<128x64xf32>
    %cst_68 = arith.constant 9.99999974E-6 : f32
    %148 = vector.broadcast %cst_68 : f32 to vector<128x1xf32>
    %149 = arith.addf %145, %148 : vector<128x1xf32>
    %150 = math.rsqrt %149 : vector<128x1xf32>
    %151 = vector.broadcast %150 : vector<128x1xf32> to vector<128x64xf32>
    %152 = arith.mulf %147, %151 : vector<128x64xf32>
    %153 = vector.broadcast %6 : vector<1x64xf32> to vector<128x64xf32>
    %154 = arith.mulf %152, %153 : vector<128x64xf32>
    %155 = vector.broadcast %7 : vector<1x64xf32> to vector<128x64xf32>
    %156 = arith.addf %154, %155 : vector<128x64xf32>
    %157 = arith.truncf %156 : vector<128x64xf32> to vector<128x64xbf16>
    %c208 = arith.constant 208 : index
    %c0_69 = arith.constant 0 : index
    %158 = vector.load %arg3[%c208, %c0_69] : memref<272x128xbf16, #tpu.memory_space<vmem>>, vector<64x8xbf16>
    %cst_70 = arith.constant dense<0.000000e+00> : vector<128x8xf32>
    %159 = tpu.matmul %157, %158, %cst_70 {dimension_numbers = #tpu.dot_dimension_numbers<[1], [0], [0], [1], [0, 0, 1, 1], [], []>} : vector<128x64xbf16>, vector<64x8xbf16>, vector<128x8xf32> -> vector<128x8xf32>
    %160 = vector.broadcast %8 : vector<1x8xf32> to vector<128x8xf32>
    %161 = arith.addf %159, %160 : vector<128x8xf32>
    %162 = arith.mulf %161, %161 : vector<128x8xf32>
    %cst_71 = arith.constant dense<0.000000e+00> : vector<128xf32>
    %163 = vector.multi_reduction <add>, %162, %cst_71 [1] : vector<128x8xf32> to vector<128xf32>
    %164 = vector.shape_cast %163 : vector<128xf32> to vector<128x1xf32>
    %165 = math.sqrt %164 : vector<128x1xf32>
    %cst_72 = arith.constant 9.99999996E-13 : f32
    %166 = vector.broadcast %cst_72 : f32 to vector<128x1xf32>
    %167 = arith.maximumf %165, %166 : vector<128x1xf32>
    %168 = vector.broadcast %167 : vector<128x1xf32> to vector<128x8xf32>
    %169 = arith.divf %161, %168 : vector<128x8xf32>
    %170 = vector.extract_strided_slice %169 {offsets = [0, 3], sizes = [128, 1], strides = [1, 1]} : vector<128x8xf32> to vector<128x1xf32>
    %171 = vector.extract_strided_slice %169 {offsets = [0, 4], sizes = [128, 1], strides = [1, 1]} : vector<128x8xf32> to vector<128x1xf32>
    %172 = vector.broadcast %40 : vector<128x1xf32> to vector<128x16xf32>
    %173 = vector.broadcast %21 : vector<1x16xf32> to vector<128x16xf32>
    %174 = arith.mulf %172, %173 : vector<128x16xf32>
    %175 = vector.broadcast %12 : vector<1x16xf32> to vector<128x16xf32>
    %176 = arith.addf %175, %174 : vector<128x16xf32>
    %177 = vector.broadcast %41 : vector<128x1xf32> to vector<128x16xf32>
    %178 = vector.broadcast %22 : vector<1x16xf32> to vector<128x16xf32>
    %179 = arith.mulf %177, %178 : vector<128x16xf32>
    %180 = arith.addf %176, %179 : vector<128x16xf32>
    %181 = vector.broadcast %42 : vector<128x1xf32> to vector<128x16xf32>
    %182 = vector.broadcast %23 : vector<1x16xf32> to vector<128x16xf32>
    %183 = arith.mulf %181, %182 : vector<128x16xf32>
    %184 = arith.addf %180, %183 : vector<128x16xf32>
    %185 = vector.broadcast %170 : vector<128x1xf32> to vector<128x16xf32>
    %186 = vector.broadcast %24 : vector<1x16xf32> to vector<128x16xf32>
    %187 = arith.mulf %185, %186 : vector<128x16xf32>
    %188 = arith.addf %184, %187 : vector<128x16xf32>
    %189 = vector.broadcast %171 : vector<128x1xf32> to vector<128x16xf32>
    %190 = vector.broadcast %25 : vector<1x16xf32> to vector<128x16xf32>
    %191 = arith.mulf %189, %190 : vector<128x16xf32>
    %192 = arith.addf %188, %191 : vector<128x16xf32>
    %193 = arith.mulf %192, %192 : vector<128x16xf32>
    %194 = arith.mulf %192, %193 : vector<128x16xf32>
    %cst_73 = arith.constant 4.471500e-02 : f32
    %195 = vector.broadcast %cst_73 : f32 to vector<128x16xf32>
    %196 = arith.mulf %195, %194 : vector<128x16xf32>
    %197 = arith.addf %192, %196 : vector<128x16xf32>
    %cst_74 = arith.constant 0.797884583 : f32
    %198 = vector.broadcast %cst_74 : f32 to vector<128x16xf32>
    %199 = arith.mulf %198, %197 : vector<128x16xf32>
    %200 = math.tanh %199 : vector<128x16xf32>
    %cst_75 = arith.constant 1.000000e+00 : f32
    %201 = vector.broadcast %cst_75 : f32 to vector<128x16xf32>
    %202 = arith.addf %201, %200 : vector<128x16xf32>
    %cst_76 = arith.constant 5.000000e-01 : f32
    %203 = vector.broadcast %cst_76 : f32 to vector<128x16xf32>
    %204 = arith.mulf %203, %202 : vector<128x16xf32>
    %205 = arith.mulf %192, %204 : vector<128x16xf32>
    %206 = arith.truncf %205 : vector<128x16xf32> to vector<128x16xbf16>
    %c192_77 = arith.constant 192 : index
    %c0_78 = arith.constant 0 : index
    %207 = vector.load %arg5[%c192_77, %c0_78] : memref<272x128xbf16, #tpu.memory_space<vmem>>, vector<16x64xbf16>
    %cst_79 = arith.constant dense<0.000000e+00> : vector<128x64xf32>
    %208 = tpu.matmul %206, %207, %cst_79 {dimension_numbers = #tpu.dot_dimension_numbers<[1], [0], [0], [1], [0, 0, 1, 1], [], []>} : vector<128x16xbf16>, vector<16x64xbf16>, vector<128x64xf32> -> vector<128x64xf32>
    %209 = vector.broadcast %13 : vector<1x64xf32> to vector<128x64xf32>
    %210 = arith.addf %208, %209 : vector<128x64xf32>
    %211 = arith.negf %210 : vector<128x64xf32>
    %212 = math.exp %211 : vector<128x64xf32>
    %cst_80 = arith.constant 1.000000e+00 : f32
    %213 = vector.broadcast %cst_80 : f32 to vector<128x64xf32>
    %214 = arith.addf %213, %212 : vector<128x64xf32>
    %215 = arith.divf %213, %214 : vector<128x64xf32>
    %216 = arith.mulf %29, %215 : vector<128x64xf32>
    %cst_81 = arith.constant dense<0.000000e+00> : vector<128xf32>
    %217 = vector.multi_reduction <add>, %216, %cst_81 [1] : vector<128x64xf32> to vector<128xf32>
    %218 = vector.shape_cast %217 : vector<128xf32> to vector<128x1xf32>
    %cst_82 = arith.constant 6.400000e+01 : f32
    %219 = vector.broadcast %cst_82 : f32 to vector<128x1xf32>
    %220 = arith.divf %218, %219 : vector<128x1xf32>
    %221 = vector.broadcast %220 : vector<128x1xf32> to vector<128x64xf32>
    %222 = arith.subf %216, %221 : vector<128x64xf32>
    %223 = vector.broadcast %220 : vector<128x1xf32> to vector<128x64xf32>
    %224 = arith.subf %216, %223 : vector<128x64xf32>
    %225 = arith.mulf %222, %224 : vector<128x64xf32>
    %cst_83 = arith.constant dense<0.000000e+00> : vector<128xf32>
    %226 = vector.multi_reduction <add>, %225, %cst_83 [1] : vector<128x64xf32> to vector<128xf32>
    %227 = vector.shape_cast %226 : vector<128xf32> to vector<128x1xf32>
    %cst_84 = arith.constant 6.400000e+01 : f32
    %228 = vector.broadcast %cst_84 : f32 to vector<128x1xf32>
    %229 = arith.divf %227, %228 : vector<128x1xf32>
    %230 = vector.broadcast %220 : vector<128x1xf32> to vector<128x64xf32>
    %231 = arith.subf %216, %230 : vector<128x64xf32>
    %cst_85 = arith.constant 9.99999974E-6 : f32
    %232 = vector.broadcast %cst_85 : f32 to vector<128x1xf32>
    %233 = arith.addf %229, %232 : vector<128x1xf32>
    %234 = math.rsqrt %233 : vector<128x1xf32>
    %235 = vector.broadcast %234 : vector<128x1xf32> to vector<128x64xf32>
    %236 = arith.mulf %231, %235 : vector<128x64xf32>
    %237 = vector.broadcast %14 : vector<1x64xf32> to vector<128x64xf32>
    %238 = arith.mulf %236, %237 : vector<128x64xf32>
    %239 = vector.broadcast %15 : vector<1x64xf32> to vector<128x64xf32>
    %240 = arith.addf %238, %239 : vector<128x64xf32>
    %241 = arith.truncf %240 : vector<128x64xf32> to vector<128x64xbf16>
    %c0_86 = arith.constant 0 : index
    %c0_87 = arith.constant 0 : index
    %242 = vector.load %arg5[%c0_86, %c0_87] : memref<272x128xbf16, #tpu.memory_space<vmem>>, vector<64x128xbf16>
    %cst_88 = arith.constant dense<0.000000e+00> : vector<128x128xf32>
    %243 = tpu.matmul %241, %242, %cst_88 {dimension_numbers = #tpu.dot_dimension_numbers<[1], [0], [0], [1], [0, 0, 1, 1], [], []>} : vector<128x64xbf16>, vector<64x128xbf16>, vector<128x128xf32> -> vector<128x128xf32>
    %244 = vector.broadcast %16 : vector<1x128xf32> to vector<128x128xf32>
    %245 = arith.addf %243, %244 : vector<128x128xf32>
    %246 = arith.mulf %245, %245 : vector<128x128xf32>
    %247 = arith.mulf %245, %246 : vector<128x128xf32>
    %cst_89 = arith.constant 4.471500e-02 : f32
    %248 = vector.broadcast %cst_89 : f32 to vector<128x128xf32>
    %249 = arith.mulf %248, %247 : vector<128x128xf32>
    %250 = arith.addf %245, %249 : vector<128x128xf32>
    %cst_90 = arith.constant 0.797884583 : f32
    %251 = vector.broadcast %cst_90 : f32 to vector<128x128xf32>
    %252 = arith.mulf %251, %250 : vector<128x128xf32>
    %253 = math.tanh %252 : vector<128x128xf32>
    %cst_91 = arith.constant 1.000000e+00 : f32
    %254 = vector.broadcast %cst_91 : f32 to vector<128x128xf32>
    %255 = arith.addf %254, %253 : vector<128x128xf32>
    %cst_92 = arith.constant 5.000000e-01 : f32
    %256 = vector.broadcast %cst_92 : f32 to vector<128x128xf32>
    %257 = arith.mulf %256, %255 : vector<128x128xf32>
    %258 = arith.mulf %245, %257 : vector<128x128xf32>
    %259 = arith.truncf %258 : vector<128x128xf32> to vector<128x128xbf16>
    %c64_93 = arith.constant 64 : index
    %c0_94 = arith.constant 0 : index
    %260 = vector.load %arg5[%c64_93, %c0_94] : memref<272x128xbf16, #tpu.memory_space<vmem>>, vector<128x64xbf16>
    %cst_95 = arith.constant dense<0.000000e+00> : vector<128x64xf32>
    %261 = tpu.matmul %259, %260, %cst_95 {dimension_numbers = #tpu.dot_dimension_numbers<[1], [0], [0], [1], [0, 0, 1, 1], [], []>} : vector<128x128xbf16>, vector<128x64xbf16>, vector<128x64xf32> -> vector<128x64xf32>
    %262 = vector.broadcast %17 : vector<1x64xf32> to vector<128x64xf32>
    %263 = arith.addf %261, %262 : vector<128x64xf32>
    %cst_96 = arith.constant 0.000000e+00 : f32
    %264 = vector.broadcast %cst_96 : f32 to vector<128x64xf32>
    %265 = arith.cmpf oge, %263, %264 : vector<128x64xf32>
    %cst_97 = arith.constant 1.000000e-01 : f32
    %266 = vector.broadcast %cst_97 : f32 to vector<128x64xf32>
    %267 = arith.mulf %266, %263 : vector<128x64xf32>
    %268 = arith.select %265, %263, %267 : vector<128x64xi1>, vector<128x64xf32>
    %269 = arith.addf %216, %268 : vector<128x64xf32>
    %cst_98 = arith.constant dense<0.000000e+00> : vector<128xf32>
    %270 = vector.multi_reduction <add>, %269, %cst_98 [1] : vector<128x64xf32> to vector<128xf32>
    %271 = vector.shape_cast %270 : vector<128xf32> to vector<128x1xf32>
    %cst_99 = arith.constant 6.400000e+01 : f32
    %272 = vector.broadcast %cst_99 : f32 to vector<128x1xf32>
    %273 = arith.divf %271, %272 : vector<128x1xf32>
    %274 = vector.broadcast %273 : vector<128x1xf32> to vector<128x64xf32>
    %275 = arith.subf %269, %274 : vector<128x64xf32>
    %276 = vector.broadcast %273 : vector<128x1xf32> to vector<128x64xf32>
    %277 = arith.subf %269, %276 : vector<128x64xf32>
    %278 = arith.mulf %275, %277 : vector<128x64xf32>
    %cst_100 = arith.constant dense<0.000000e+00> : vector<128xf32>
    %279 = vector.multi_reduction <add>, %278, %cst_100 [1] : vector<128x64xf32> to vector<128xf32>
    %280 = vector.shape_cast %279 : vector<128xf32> to vector<128x1xf32>
    %cst_101 = arith.constant 6.400000e+01 : f32
    %281 = vector.broadcast %cst_101 : f32 to vector<128x1xf32>
    %282 = arith.divf %280, %281 : vector<128x1xf32>
    %283 = vector.broadcast %273 : vector<128x1xf32> to vector<128x64xf32>
    %284 = arith.subf %269, %283 : vector<128x64xf32>
    %cst_102 = arith.constant 9.99999974E-6 : f32
    %285 = vector.broadcast %cst_102 : f32 to vector<128x1xf32>
    %286 = arith.addf %282, %285 : vector<128x1xf32>
    %287 = math.rsqrt %286 : vector<128x1xf32>
    %288 = vector.broadcast %287 : vector<128x1xf32> to vector<128x64xf32>
    %289 = arith.mulf %284, %288 : vector<128x64xf32>
    %290 = vector.broadcast %18 : vector<1x64xf32> to vector<128x64xf32>
    %291 = arith.mulf %289, %290 : vector<128x64xf32>
    %292 = vector.broadcast %19 : vector<1x64xf32> to vector<128x64xf32>
    %293 = arith.addf %291, %292 : vector<128x64xf32>
    %294 = arith.truncf %293 : vector<128x64xf32> to vector<128x64xbf16>
    %c208_103 = arith.constant 208 : index
    %c0_104 = arith.constant 0 : index
    %295 = vector.load %arg5[%c208_103, %c0_104] : memref<272x128xbf16, #tpu.memory_space<vmem>>, vector<64x8xbf16>
    %cst_105 = arith.constant dense<0.000000e+00> : vector<128x8xf32>
    %296 = tpu.matmul %294, %295, %cst_105 {dimension_numbers = #tpu.dot_dimension_numbers<[1], [0], [0], [1], [0, 0, 1, 1], [], []>} : vector<128x64xbf16>, vector<64x8xbf16>, vector<128x8xf32> -> vector<128x8xf32>
    %297 = vector.broadcast %20 : vector<1x8xf32> to vector<128x8xf32>
    %298 = arith.addf %296, %297 : vector<128x8xf32>
    %299 = arith.addf %39, %169 : vector<128x8xf32>
    %300 = arith.addf %299, %298 : vector<128x8xf32>
    %301 = arith.index_cast %27 : i32 to index
    %c0_106 = arith.constant 0 : index
    %302 = vector.load %arg7[%301, %c0_106] : memref<256x8xf32, #tpu.memory_space<vmem>>, vector<128x8xf32>
    tpu.vector_store %arg7[%301, %c0_106], %300 {strides = array<i32>} : memref<256x8xf32, #tpu.memory_space<vmem>>, vector<128x8xf32>,
    %c1_i32 = arith.constant 1 : i32
    %c128_i32_107 = arith.constant 128 : i32
    %303 = arith.muli %c1_i32, %c128_i32_107 : i32
    %304 = tpu.assume_multiple %303, 128 : i32
    %305 = arith.index_cast %304 : i32 to index
    %c0_108 = arith.constant 0 : index
    %306 = vector.load %arg1[%305, %c0_108] : memref<256x64xf32, #tpu.memory_space<vmem>>, vector<128x64xf32>
    %307 = arith.index_cast %304 : i32 to index
    %c0_109 = arith.constant 0 : index
    %308 = vector.load %arg2[%307, %c0_109] : memref<256x8xf32, #tpu.memory_space<vmem>>, vector<128x8xf32>
    %309 = arith.mulf %308, %308 : vector<128x8xf32>
    %cst_110 = arith.constant dense<0.000000e+00> : vector<128xf32>
    %310 = vector.multi_reduction <add>, %309, %cst_110 [1] : vector<128x8xf32> to vector<128xf32>
    %311 = vector.shape_cast %310 : vector<128xf32> to vector<128x1xf32>
    %312 = math.sqrt %311 : vector<128x1xf32>
    %cst_111 = arith.constant 9.99999996E-13 : f32
    %313 = vector.broadcast %cst_111 : f32 to vector<128x1xf32>
    %314 = arith.maximumf %312, %313 : vector<128x1xf32>
    %315 = vector.broadcast %314 : vector<128x1xf32> to vector<128x8xf32>
    %316 = arith.divf %308, %315 : vector<128x8xf32>
    %317 = vector.extract_strided_slice %316 {offsets = [0, 0], sizes = [128, 1], strides = [1, 1]} : vector<128x8xf32> to vector<128x1xf32>
    %318 = vector.extract_strided_slice %316 {offsets = [0, 1], sizes = [128, 1], strides = [1, 1]} : vector<128x8xf32> to vector<128x1xf32>
    %319 = vector.extract_strided_slice %316 {offsets = [0, 2], sizes = [128, 1], strides = [1, 1]} : vector<128x8xf32> to vector<128x1xf32>
    %320 = vector.broadcast %317 : vector<128x1xf32> to vector<128x16xf32>
    %321 = vector.broadcast %9 : vector<1x16xf32> to vector<128x16xf32>
    %322 = arith.mulf %320, %321 : vector<128x16xf32>
    %323 = vector.broadcast %0 : vector<1x16xf32> to vector<128x16xf32>
    %324 = arith.addf %323, %322 : vector<128x16xf32>
    %325 = vector.broadcast %318 : vector<128x1xf32> to vector<128x16xf32>
    %326 = vector.broadcast %10 : vector<1x16xf32> to vector<128x16xf32>
    %327 = arith.mulf %325, %326 : vector<128x16xf32>
    %328 = arith.addf %324, %327 : vector<128x16xf32>
    %329 = vector.broadcast %319 : vector<128x1xf32> to vector<128x16xf32>
    %330 = vector.broadcast %11 : vector<1x16xf32> to vector<128x16xf32>
    %331 = arith.mulf %329, %330 : vector<128x16xf32>
    %332 = arith.addf %328, %331 : vector<128x16xf32>
    %333 = arith.mulf %332, %332 : vector<128x16xf32>
    %334 = arith.mulf %332, %333 : vector<128x16xf32>
    %cst_112 = arith.constant 4.471500e-02 : f32
    %335 = vector.broadcast %cst_112 : f32 to vector<128x16xf32>
    %336 = arith.mulf %335, %334 : vector<128x16xf32>
    %337 = arith.addf %332, %336 : vector<128x16xf32>
    %cst_113 = arith.constant 0.797884583 : f32
    %338 = vector.broadcast %cst_113 : f32 to vector<128x16xf32>
    %339 = arith.mulf %338, %337 : vector<128x16xf32>
    %340 = math.tanh %339 : vector<128x16xf32>
    %cst_114 = arith.constant 1.000000e+00 : f32
    %341 = vector.broadcast %cst_114 : f32 to vector<128x16xf32>
    %342 = arith.addf %341, %340 : vector<128x16xf32>
    %cst_115 = arith.constant 5.000000e-01 : f32
    %343 = vector.broadcast %cst_115 : f32 to vector<128x16xf32>
    %344 = arith.mulf %343, %342 : vector<128x16xf32>
    %345 = arith.mulf %332, %344 : vector<128x16xf32>
    %346 = arith.truncf %345 : vector<128x16xf32> to vector<128x16xbf16>
    %c192_116 = arith.constant 192 : index
    %c0_117 = arith.constant 0 : index
    %347 = vector.load %arg3[%c192_116, %c0_117] : memref<272x128xbf16, #tpu.memory_space<vmem>>, vector<16x64xbf16>
    %cst_118 = arith.constant dense<0.000000e+00> : vector<128x64xf32>
    %348 = tpu.matmul %346, %347, %cst_118 {dimension_numbers = #tpu.dot_dimension_numbers<[1], [0], [0], [1], [0, 0, 1, 1], [], []>} : vector<128x16xbf16>, vector<16x64xbf16>, vector<128x64xf32> -> vector<128x64xf32>
    %349 = vector.broadcast %1 : vector<1x64xf32> to vector<128x64xf32>
    %350 = arith.addf %348, %349 : vector<128x64xf32>
    %351 = arith.negf %350 : vector<128x64xf32>
    %352 = math.exp %351 : vector<128x64xf32>
    %cst_119 = arith.constant 1.000000e+00 : f32
    %353 = vector.broadcast %cst_119 : f32 to vector<128x64xf32>
    %354 = arith.addf %353, %352 : vector<128x64xf32>
    %355 = arith.divf %353, %354 : vector<128x64xf32>
    %356 = arith.mulf %306, %355 : vector<128x64xf32>
    %cst_120 = arith.constant dense<0.000000e+00> : vector<128xf32>
    %357 = vector.multi_reduction <add>, %356, %cst_120 [1] : vector<128x64xf32> to vector<128xf32>
    %358 = vector.shape_cast %357 : vector<128xf32> to vector<128x1xf32>
    %cst_121 = arith.constant 6.400000e+01 : f32
    %359 = vector.broadcast %cst_121 : f32 to vector<128x1xf32>
    %360 = arith.divf %358, %359 : vector<128x1xf32>
    %361 = vector.broadcast %360 : vector<128x1xf32> to vector<128x64xf32>
    %362 = arith.subf %356, %361 : vector<128x64xf32>
    %363 = vector.broadcast %360 : vector<128x1xf32> to vector<128x64xf32>
    %364 = arith.subf %356, %363 : vector<128x64xf32>
    %365 = arith.mulf %362, %364 : vector<128x64xf32>
    %cst_122 = arith.constant dense<0.000000e+00> : vector<128xf32>
    %366 = vector.multi_reduction <add>, %365, %cst_122 [1] : vector<128x64xf32> to vector<128xf32>
    %367 = vector.shape_cast %366 : vector<128xf32> to vector<128x1xf32>
    %cst_123 = arith.constant 6.400000e+01 : f32
    %368 = vector.broadcast %cst_123 : f32 to vector<128x1xf32>
    %369 = arith.divf %367, %368 : vector<128x1xf32>
    %370 = vector.broadcast %360 : vector<128x1xf32> to vector<128x64xf32>
    %371 = arith.subf %356, %370 : vector<128x64xf32>
    %cst_124 = arith.constant 9.99999974E-6 : f32
    %372 = vector.broadcast %cst_124 : f32 to vector<128x1xf32>
    %373 = arith.addf %369, %372 : vector<128x1xf32>
    %374 = math.rsqrt %373 : vector<128x1xf32>
    %375 = vector.broadcast %374 : vector<128x1xf32> to vector<128x64xf32>
    %376 = arith.mulf %371, %375 : vector<128x64xf32>
    %377 = vector.broadcast %2 : vector<1x64xf32> to vector<128x64xf32>
    %378 = arith.mulf %376, %377 : vector<128x64xf32>
    %379 = vector.broadcast %3 : vector<1x64xf32> to vector<128x64xf32>
    %380 = arith.addf %378, %379 : vector<128x64xf32>
    %381 = arith.truncf %380 : vector<128x64xf32> to vector<128x64xbf16>
    %c0_125 = arith.constant 0 : index
    %c0_126 = arith.constant 0 : index
    %382 = vector.load %arg3[%c0_125, %c0_126] : memref<272x128xbf16, #tpu.memory_space<vmem>>, vector<64x128xbf16>
    %cst_127 = arith.constant dense<0.000000e+00> : vector<128x128xf32>
    %383 = tpu.matmul %381, %382, %cst_127 {dimension_numbers = #tpu.dot_dimension_numbers<[1], [0], [0], [1], [0, 0, 1, 1], [], []>} : vector<128x64xbf16>, vector<64x128xbf16>, vector<128x128xf32> -> vector<128x128xf32>
    %384 = vector.broadcast %4 : vector<1x128xf32> to vector<128x128xf32>
    %385 = arith.addf %383, %384 : vector<128x128xf32>
    %386 = arith.mulf %385, %385 : vector<128x128xf32>
    %387 = arith.mulf %385, %386 : vector<128x128xf32>
    %cst_128 = arith.constant 4.471500e-02 : f32
    %388 = vector.broadcast %cst_128 : f32 to vector<128x128xf32>
    %389 = arith.mulf %388, %387 : vector<128x128xf32>
    %390 = arith.addf %385, %389 : vector<128x128xf32>
    %cst_129 = arith.constant 0.797884583 : f32
    %391 = vector.broadcast %cst_129 : f32 to vector<128x128xf32>
    %392 = arith.mulf %391, %390 : vector<128x128xf32>
    %393 = math.tanh %392 : vector<128x128xf32>
    %cst_130 = arith.constant 1.000000e+00 : f32
    %394 = vector.broadcast %cst_130 : f32 to vector<128x128xf32>
    %395 = arith.addf %394, %393 : vector<128x128xf32>
    %cst_131 = arith.constant 5.000000e-01 : f32
    %396 = vector.broadcast %cst_131 : f32 to vector<128x128xf32>
    %397 = arith.mulf %396, %395 : vector<128x128xf32>
    %398 = arith.mulf %385, %397 : vector<128x128xf32>
    %399 = arith.truncf %398 : vector<128x128xf32> to vector<128x128xbf16>
    %c64_132 = arith.constant 64 : index
    %c0_133 = arith.constant 0 : index
    %400 = vector.load %arg3[%c64_132, %c0_133] : memref<272x128xbf16, #tpu.memory_space<vmem>>, vector<128x64xbf16>
    %cst_134 = arith.constant dense<0.000000e+00> : vector<128x64xf32>
    %401 = tpu.matmul %399, %400, %cst_134 {dimension_numbers = #tpu.dot_dimension_numbers<[1], [0], [0], [1], [0, 0, 1, 1], [], []>} : vector<128x128xbf16>, vector<128x64xbf16>, vector<128x64xf32> -> vector<128x64xf32>
    %402 = vector.broadcast %5 : vector<1x64xf32> to vector<128x64xf32>
    %403 = arith.addf %401, %402 : vector<128x64xf32>
    %cst_135 = arith.constant 0.000000e+00 : f32
    %404 = vector.broadcast %cst_135 : f32 to vector<128x64xf32>
    %405 = arith.cmpf oge, %403, %404 : vector<128x64xf32>
    %cst_136 = arith.constant 1.000000e-01 : f32
    %406 = vector.broadcast %cst_136 : f32 to vector<128x64xf32>
    %407 = arith.mulf %406, %403 : vector<128x64xf32>
    %408 = arith.select %405, %403, %407 : vector<128x64xi1>, vector<128x64xf32>
    %409 = arith.addf %356, %408 : vector<128x64xf32>
    %cst_137 = arith.constant dense<0.000000e+00> : vector<128xf32>
    %410 = vector.multi_reduction <add>, %409, %cst_137 [1] : vector<128x64xf32> to vector<128xf32>
    %411 = vector.shape_cast %410 : vector<128xf32> to vector<128x1xf32>
    %cst_138 = arith.constant 6.400000e+01 : f32
    %412 = vector.broadcast %cst_138 : f32 to vector<128x1xf32>
    %413 = arith.divf %411, %412 : vector<128x1xf32>
    %414 = vector.broadcast %413 : vector<128x1xf32> to vector<128x64xf32>
    %415 = arith.subf %409, %414 : vector<128x64xf32>
    %416 = vector.broadcast %413 : vector<128x1xf32> to vector<128x64xf32>
    %417 = arith.subf %409, %416 : vector<128x64xf32>
    %418 = arith.mulf %415, %417 : vector<128x64xf32>
    %cst_139 = arith.constant dense<0.000000e+00> : vector<128xf32>
    %419 = vector.multi_reduction <add>, %418, %cst_139 [1] : vector<128x64xf32> to vector<128xf32>
    %420 = vector.shape_cast %419 : vector<128xf32> to vector<128x1xf32>
    %cst_140 = arith.constant 6.400000e+01 : f32
    %421 = vector.broadcast %cst_140 : f32 to vector<128x1xf32>
    %422 = arith.divf %420, %421 : vector<128x1xf32>
    %423 = vector.broadcast %413 : vector<128x1xf32> to vector<128x64xf32>
    %424 = arith.subf %409, %423 : vector<128x64xf32>
    %cst_141 = arith.constant 9.99999974E-6 : f32
    %425 = vector.broadcast %cst_141 : f32 to vector<128x1xf32>
    %426 = arith.addf %422, %425 : vector<128x1xf32>
    %427 = math.rsqrt %426 : vector<128x1xf32>
    %428 = vector.broadcast %427 : vector<128x1xf32> to vector<128x64xf32>
    %429 = arith.mulf %424, %428 : vector<128x64xf32>
    %430 = vector.broadcast %6 : vector<1x64xf32> to vector<128x64xf32>
    %431 = arith.mulf %429, %430 : vector<128x64xf32>
    %432 = vector.broadcast %7 : vector<1x64xf32> to vector<128x64xf32>
    %433 = arith.addf %431, %432 : vector<128x64xf32>
    %434 = arith.truncf %433 : vector<128x64xf32> to vector<128x64xbf16>
    %c208_142 = arith.constant 208 : index
    %c0_143 = arith.constant 0 : index
    %435 = vector.load %arg3[%c208_142, %c0_143] : memref<272x128xbf16, #tpu.memory_space<vmem>>, vector<64x8xbf16>
    %cst_144 = arith.constant dense<0.000000e+00> : vector<128x8xf32>
    %436 = tpu.matmul %434, %435, %cst_144 {dimension_numbers = #tpu.dot_dimension_numbers<[1], [0], [0], [1], [0, 0, 1, 1], [], []>} : vector<128x64xbf16>, vector<64x8xbf16>, vector<128x8xf32> -> vector<128x8xf32>
    %437 = vector.broadcast %8 : vector<1x8xf32> to vector<128x8xf32>
    %438 = arith.addf %436, %437 : vector<128x8xf32>
    %439 = arith.mulf %438, %438 : vector<128x8xf32>
    %cst_145 = arith.constant dense<0.000000e+00> : vector<128xf32>
    %440 = vector.multi_reduction <add>, %439, %cst_145 [1] : vector<128x8xf32> to vector<128xf32>
    %441 = vector.shape_cast %440 : vector<128xf32> to vector<128x1xf32>
    %442 = math.sqrt %441 : vector<128x1xf32>
    %cst_146 = arith.constant 9.99999996E-13 : f32
    %443 = vector.broadcast %cst_146 : f32 to vector<128x1xf32>
    %444 = arith.maximumf %442, %443 : vector<128x1xf32>
    %445 = vector.broadcast %444 : vector<128x1xf32> to vector<128x8xf32>
    %446 = arith.divf %438, %445 : vector<128x8xf32>
    %447 = vector.extract_strided_slice %446 {offsets = [0, 3], sizes = [128, 1], strides = [1, 1]} : vector<128x8xf32> to vector<128x1xf32>
    %448 = vector.extract_strided_slice %446 {offsets = [0, 4], sizes = [128, 1], strides = [1, 1]} : vector<128x8xf32> to vector<128x1xf32>
    %449 = vector.broadcast %317 : vector<128x1xf32> to vector<128x16xf32>
    %450 = vector.broadcast %21 : vector<1x16xf32> to vector<128x16xf32>
    %451 = arith.mulf %449, %450 : vector<128x16xf32>
    %452 = vector.broadcast %12 : vector<1x16xf32> to vector<128x16xf32>
    %453 = arith.addf %452, %451 : vector<128x16xf32>
    %454 = vector.broadcast %318 : vector<128x1xf32> to vector<128x16xf32>
    %455 = vector.broadcast %22 : vector<1x16xf32> to vector<128x16xf32>
    %456 = arith.mulf %454, %455 : vector<128x16xf32>
    %457 = arith.addf %453, %456 : vector<128x16xf32>
    %458 = vector.broadcast %319 : vector<128x1xf32> to vector<128x16xf32>
    %459 = vector.broadcast %23 : vector<1x16xf32> to vector<128x16xf32>
    %460 = arith.mulf %458, %459 : vector<128x16xf32>
    %461 = arith.addf %457, %460 : vector<128x16xf32>
    %462 = vector.broadcast %447 : vector<128x1xf32> to vector<128x16xf32>
    %463 = vector.broadcast %24 : vector<1x16xf32> to vector<128x16xf32>
    %464 = arith.mulf %462, %463 : vector<128x16xf32>
    %465 = arith.addf %461, %464 : vector<128x16xf32>
    %466 = vector.broadcast %448 : vector<128x1xf32> to vector<128x16xf32>
    %467 = vector.broadcast %25 : vector<1x16xf32> to vector<128x16xf32>
    %468 = arith.mulf %466, %467 : vector<128x16xf32>
    %469 = arith.addf %465, %468 : vector<128x16xf32>
    %470 = arith.mulf %469, %469 : vector<128x16xf32>
    %471 = arith.mulf %469, %470 : vector<128x16xf32>
    %cst_147 = arith.constant 4.471500e-02 : f32
    %472 = vector.broadcast %cst_147 : f32 to vector<128x16xf32>
    %473 = arith.mulf %472, %471 : vector<128x16xf32>
    %474 = arith.addf %469, %473 : vector<128x16xf32>
    %cst_148 = arith.constant 0.797884583 : f32
    %475 = vector.broadcast %cst_148 : f32 to vector<128x16xf32>
    %476 = arith.mulf %475, %474 : vector<128x16xf32>
    %477 = math.tanh %476 : vector<128x16xf32>
    %cst_149 = arith.constant 1.000000e+00 : f32
    %478 = vector.broadcast %cst_149 : f32 to vector<128x16xf32>
    %479 = arith.addf %478, %477 : vector<128x16xf32>
    %cst_150 = arith.constant 5.000000e-01 : f32
    %480 = vector.broadcast %cst_150 : f32 to vector<128x16xf32>
    %481 = arith.mulf %480, %479 : vector<128x16xf32>
    %482 = arith.mulf %469, %481 : vector<128x16xf32>
    %483 = arith.truncf %482 : vector<128x16xf32> to vector<128x16xbf16>
    %c192_151 = arith.constant 192 : index
    %c0_152 = arith.constant 0 : index
    %484 = vector.load %arg5[%c192_151, %c0_152] : memref<272x128xbf16, #tpu.memory_space<vmem>>, vector<16x64xbf16>
    %cst_153 = arith.constant dense<0.000000e+00> : vector<128x64xf32>
    %485 = tpu.matmul %483, %484, %cst_153 {dimension_numbers = #tpu.dot_dimension_numbers<[1], [0], [0], [1], [0, 0, 1, 1], [], []>} : vector<128x16xbf16>, vector<16x64xbf16>, vector<128x64xf32> -> vector<128x64xf32>
    %486 = vector.broadcast %13 : vector<1x64xf32> to vector<128x64xf32>
    %487 = arith.addf %485, %486 : vector<128x64xf32>
    %488 = arith.negf %487 : vector<128x64xf32>
    %489 = math.exp %488 : vector<128x64xf32>
    %cst_154 = arith.constant 1.000000e+00 : f32
    %490 = vector.broadcast %cst_154 : f32 to vector<128x64xf32>
    %491 = arith.addf %490, %489 : vector<128x64xf32>
    %492 = arith.divf %490, %491 : vector<128x64xf32>
    %493 = arith.mulf %306, %492 : vector<128x64xf32>
    %cst_155 = arith.constant dense<0.000000e+00> : vector<128xf32>
    %494 = vector.multi_reduction <add>, %493, %cst_155 [1] : vector<128x64xf32> to vector<128xf32>
    %495 = vector.shape_cast %494 : vector<128xf32> to vector<128x1xf32>
    %cst_156 = arith.constant 6.400000e+01 : f32
    %496 = vector.broadcast %cst_156 : f32 to vector<128x1xf32>
    %497 = arith.divf %495, %496 : vector<128x1xf32>
    %498 = vector.broadcast %497 : vector<128x1xf32> to vector<128x64xf32>
    %499 = arith.subf %493, %498 : vector<128x64xf32>
    %500 = vector.broadcast %497 : vector<128x1xf32> to vector<128x64xf32>
    %501 = arith.subf %493, %500 : vector<128x64xf32>
    %502 = arith.mulf %499, %501 : vector<128x64xf32>
    %cst_157 = arith.constant dense<0.000000e+00> : vector<128xf32>
    %503 = vector.multi_reduction <add>, %502, %cst_157 [1] : vector<128x64xf32> to vector<128xf32>
    %504 = vector.shape_cast %503 : vector<128xf32> to vector<128x1xf32>
    %cst_158 = arith.constant 6.400000e+01 : f32
    %505 = vector.broadcast %cst_158 : f32 to vector<128x1xf32>
    %506 = arith.divf %504, %505 : vector<128x1xf32>
    %507 = vector.broadcast %497 : vector<128x1xf32> to vector<128x64xf32>
    %508 = arith.subf %493, %507 : vector<128x64xf32>
    %cst_159 = arith.constant 9.99999974E-6 : f32
    %509 = vector.broadcast %cst_159 : f32 to vector<128x1xf32>
    %510 = arith.addf %506, %509 : vector<128x1xf32>
    %511 = math.rsqrt %510 : vector<128x1xf32>
    %512 = vector.broadcast %511 : vector<128x1xf32> to vector<128x64xf32>
    %513 = arith.mulf %508, %512 : vector<128x64xf32>
    %514 = vector.broadcast %14 : vector<1x64xf32> to vector<128x64xf32>
    %515 = arith.mulf %513, %514 : vector<128x64xf32>
    %516 = vector.broadcast %15 : vector<1x64xf32> to vector<128x64xf32>
    %517 = arith.addf %515, %516 : vector<128x64xf32>
    %518 = arith.truncf %517 : vector<128x64xf32> to vector<128x64xbf16>
    %c0_160 = arith.constant 0 : index
    %c0_161 = arith.constant 0 : index
    %519 = vector.load %arg5[%c0_160, %c0_161] : memref<272x128xbf16, #tpu.memory_space<vmem>>, vector<64x128xbf16>
    %cst_162 = arith.constant dense<0.000000e+00> : vector<128x128xf32>
    %520 = tpu.matmul %518, %519, %cst_162 {dimension_numbers = #tpu.dot_dimension_numbers<[1], [0], [0], [1], [0, 0, 1, 1], [], []>} : vector<128x64xbf16>, vector<64x128xbf16>, vector<128x128xf32> -> vector<128x128xf32>
    %521 = vector.broadcast %16 : vector<1x128xf32> to vector<128x128xf32>
    %522 = arith.addf %520, %521 : vector<128x128xf32>
    %523 = arith.mulf %522, %522 : vector<128x128xf32>
    %524 = arith.mulf %522, %523 : vector<128x128xf32>
    %cst_163 = arith.constant 4.471500e-02 : f32
    %525 = vector.broadcast %cst_163 : f32 to vector<128x128xf32>
    %526 = arith.mulf %525, %524 : vector<128x128xf32>
    %527 = arith.addf %522, %526 : vector<128x128xf32>
    %cst_164 = arith.constant 0.797884583 : f32
    %528 = vector.broadcast %cst_164 : f32 to vector<128x128xf32>
    %529 = arith.mulf %528, %527 : vector<128x128xf32>
    %530 = math.tanh %529 : vector<128x128xf32>
    %cst_165 = arith.constant 1.000000e+00 : f32
    %531 = vector.broadcast %cst_165 : f32 to vector<128x128xf32>
    %532 = arith.addf %531, %530 : vector<128x128xf32>
    %cst_166 = arith.constant 5.000000e-01 : f32
    %533 = vector.broadcast %cst_166 : f32 to vector<128x128xf32>
    %534 = arith.mulf %533, %532 : vector<128x128xf32>
    %535 = arith.mulf %522, %534 : vector<128x128xf32>
    %536 = arith.truncf %535 : vector<128x128xf32> to vector<128x128xbf16>
    %c64_167 = arith.constant 64 : index
    %c0_168 = arith.constant 0 : index
    %537 = vector.load %arg5[%c64_167, %c0_168] : memref<272x128xbf16, #tpu.memory_space<vmem>>, vector<128x64xbf16>
    %cst_169 = arith.constant dense<0.000000e+00> : vector<128x64xf32>
    %538 = tpu.matmul %536, %537, %cst_169 {dimension_numbers = #tpu.dot_dimension_numbers<[1], [0], [0], [1], [0, 0, 1, 1], [], []>} : vector<128x128xbf16>, vector<128x64xbf16>, vector<128x64xf32> -> vector<128x64xf32>
    %539 = vector.broadcast %17 : vector<1x64xf32> to vector<128x64xf32>
    %540 = arith.addf %538, %539 : vector<128x64xf32>
    %cst_170 = arith.constant 0.000000e+00 : f32
    %541 = vector.broadcast %cst_170 : f32 to vector<128x64xf32>
    %542 = arith.cmpf oge, %540, %541 : vector<128x64xf32>
    %cst_171 = arith.constant 1.000000e-01 : f32
    %543 = vector.broadcast %cst_171 : f32 to vector<128x64xf32>
    %544 = arith.mulf %543, %540 : vector<128x64xf32>
    %545 = arith.select %542, %540, %544 : vector<128x64xi1>, vector<128x64xf32>
    %546 = arith.addf %493, %545 : vector<128x64xf32>
    %cst_172 = arith.constant dense<0.000000e+00> : vector<128xf32>
    %547 = vector.multi_reduction <add>, %546, %cst_172 [1] : vector<128x64xf32> to vector<128xf32>
    %548 = vector.shape_cast %547 : vector<128xf32> to vector<128x1xf32>
    %cst_173 = arith.constant 6.400000e+01 : f32
    %549 = vector.broadcast %cst_173 : f32 to vector<128x1xf32>
    %550 = arith.divf %548, %549 : vector<128x1xf32>
    %551 = vector.broadcast %550 : vector<128x1xf32> to vector<128x64xf32>
    %552 = arith.subf %546, %551 : vector<128x64xf32>
    %553 = vector.broadcast %550 : vector<128x1xf32> to vector<128x64xf32>
    %554 = arith.subf %546, %553 : vector<128x64xf32>
    %555 = arith.mulf %552, %554 : vector<128x64xf32>
    %cst_174 = arith.constant dense<0.000000e+00> : vector<128xf32>
    %556 = vector.multi_reduction <add>, %555, %cst_174 [1] : vector<128x64xf32> to vector<128xf32>
    %557 = vector.shape_cast %556 : vector<128xf32> to vector<128x1xf32>
    %cst_175 = arith.constant 6.400000e+01 : f32
    %558 = vector.broadcast %cst_175 : f32 to vector<128x1xf32>
    %559 = arith.divf %557, %558 : vector<128x1xf32>
    %560 = vector.broadcast %550 : vector<128x1xf32> to vector<128x64xf32>
    %561 = arith.subf %546, %560 : vector<128x64xf32>
    %cst_176 = arith.constant 9.99999974E-6 : f32
    %562 = vector.broadcast %cst_176 : f32 to vector<128x1xf32>
    %563 = arith.addf %559, %562 : vector<128x1xf32>
    %564 = math.rsqrt %563 : vector<128x1xf32>
    %565 = vector.broadcast %564 : vector<128x1xf32> to vector<128x64xf32>
    %566 = arith.mulf %561, %565 : vector<128x64xf32>
    %567 = vector.broadcast %18 : vector<1x64xf32> to vector<128x64xf32>
    %568 = arith.mulf %566, %567 : vector<128x64xf32>
    %569 = vector.broadcast %19 : vector<1x64xf32> to vector<128x64xf32>
    %570 = arith.addf %568, %569 : vector<128x64xf32>
    %571 = arith.truncf %570 : vector<128x64xf32> to vector<128x64xbf16>
    %c208_177 = arith.constant 208 : index
    %c0_178 = arith.constant 0 : index
    %572 = vector.load %arg5[%c208_177, %c0_178] : memref<272x128xbf16, #tpu.memory_space<vmem>>, vector<64x8xbf16>
    %cst_179 = arith.constant dense<0.000000e+00> : vector<128x8xf32>
    %573 = tpu.matmul %571, %572, %cst_179 {dimension_numbers = #tpu.dot_dimension_numbers<[1], [0], [0], [1], [0, 0, 1, 1], [], []>} : vector<128x64xbf16>, vector<64x8xbf16>, vector<128x8xf32> -> vector<128x8xf32>
    %574 = vector.broadcast %20 : vector<1x8xf32> to vector<128x8xf32>
    %575 = arith.addf %573, %574 : vector<128x8xf32>
    %576 = arith.addf %316, %446 : vector<128x8xf32>
    %577 = arith.addf %576, %575 : vector<128x8xf32>
    %578 = arith.index_cast %304 : i32 to index
    %c0_180 = arith.constant 0 : index
    %579 = vector.load %arg7[%578, %c0_180] : memref<256x8xf32, #tpu.memory_space<vmem>>, vector<128x8xf32>
    tpu.vector_store %arg7[%578, %c0_180], %577 {strides = array<i32>} : memref<256x8xf32, #tpu.memory_space<vmem>>, vector<128x8xf32>,
    %c2_i32 = arith.constant 2 : i32
    return
  }
  func.func @transform_0(%arg0: i32) -> (i32, i32) {
    %c0_i32 = arith.constant 0 : i32
    %c0_i32_0 = arith.constant 0 : i32
    return %arg0, %c0_i32 : i32, i32
  }
  func.func @transform_1(%arg0: i32) -> (i32, i32) {
    %c0_i32 = arith.constant 0 : i32
    %c0_i32_0 = arith.constant 0 : i32
    return %arg0, %c0_i32 : i32, i32
  }
  func.func @transform_2(%arg0: i32) -> (i32, i32) {
    %c0_i32 = arith.constant 0 : i32
    %c0_i32_0 = arith.constant 0 : i32
    %c0_i32_1 = arith.constant 0 : i32
    return %c0_i32, %c0_i32_0 : i32, i32
  }
  func.func @transform_3(%arg0: i32) -> (i32, i32) {
    %c0_i32 = arith.constant 0 : i32
    %c0_i32_0 = arith.constant 0 : i32
    %c0_i32_1 = arith.constant 0 : i32
    return %c0_i32, %c0_i32_0 : i32, i32
  }
  func.func @transform_4(%arg0: i32) -> (i32, i32) {
    %c0_i32 = arith.constant 0 : i32
    %c0_i32_0 = arith.constant 0 : i32
    %c0_i32_1 = arith.constant 0 : i32
    return %c0_i32, %c0_i32_0 : i32, i32
  }
  func.func @transform_5(%arg0: i32) -> (i32, i32) {
    %c0_i32 = arith.constant 0 : i32
    %c0_i32_0 = arith.constant 0 : i32
    %c0_i32_1 = arith.constant 0 : i32
    return %c0_i32, %c0_i32_0 : i32, i32
  }
  func.func @transform_6(%arg0: i32) -> (i32, i32) {
    %c0_i32 = arith.constant 0 : i32
    %c0_i32_0 = arith.constant 0 : i32
    return %arg0, %c0_i32 : i32, i32
  }
}

</mosaic_0001>

<llo_original>
// kernel: gripper_grasp_sampler.1
$region0: #{gripper_grasp_sampler.1}
  #allocation0 [shape = 'u32[]', space=smem, size = 0x4, offset = 0x4, fixed_abs, tag = 'smem constant byte address 0x4 - core index']
  #allocation1 [shape = 'u32[144,128]{1,0:T(1,128)}', space=vmem, size = 0x12000, scoped, tag = 'internal scratch']
  %s0 = inlined_call_operand.vmem [shape: f32[512,64], index: 0, kind: input, shape index: {}]
  %s1 = inlined_call_operand.vmem [shape: f32[512,8], index: 1, kind: input, shape index: {}]
  %s2 = inlined_call_operand.vmem [shape: bf16[272,128], index: 2, kind: input, shape index: {}]
  %s3 = inlined_call_operand.vmem [shape: f32[16,128], index: 3, kind: input, shape index: {}]
  %s4 = inlined_call_operand.vmem [shape: bf16[272,128], index: 4, kind: input, shape index: {}]
  %s5 = inlined_call_operand.vmem [shape: f32[16,128], index: 5, kind: input, shape index: {}]
  %s6 = inlined_call_operand.vmem [shape: f32[512,8], index: 6, kind: output, shape index: {}]
  %s7 = sld [smem:[#allocation0]]
  $region57: #{gripper_grasp_sampler.1} parent=0
    _
  %s9 = ssub.s32 1, %s7
  %s10 = scalar_select 0, %s9, %s7
  loop: start=0, step=1, limit=4
  $region2: #{gripper_grasp_sampler.1} parent=0 // loop_pre_header
    _
  $region3: #{gripper_grasp_sampler.1} parent=0 // loop_header
    %s12 = sphi 0, %s16
    %p13 = scmp.ge.s32.totalorder %s12, 4
    %s22 = sphi 0, %s24
    %s25 = sphi 0, %s22
    %s26 = sphi 0, %s25
    %s42 = sphi 0, %s26
    %s48 = sphi 0, %s50
    %s51 = sphi 0, %s48
    %s52 = sphi 0, %s51
    %s68 = sphi 0, %s52
    %s72 = sphi 0, %s72
    %s74 = sphi 0, %s72
    %s75 = sphi 0, %s74
    %s89 = sphi 0, %s75
    %s93 = sphi 0, %s93
    %s95 = sphi 0, %s93
    %s96 = sphi 0, %s95
    %s110 = sphi 0, %s96
    %s114 = sphi 0, %s114
    %s116 = sphi 0, %s114
    %s117 = sphi 0, %s116
    %s131 = sphi 0, %s117
    %s135 = sphi 0, %s135
    %s137 = sphi 0, %s135
    %s138 = sphi 0, %s137
    %s152 = sphi 0, %s138
    %s158 = sphi 0, %s160
    %s161 = sphi 0, %s158
    %s162 = sphi 0, %s161
    %s178 = sphi 0, %s162
  $region4: #{gripper_grasp_sampler.1} parent=0 // loop_header_branch
    %15 = sbr.rel (%p13) target = $region8
  $region5: #{gripper_grasp_sampler.1} parent=0 // loop_body
    %s17 = ssub.s32 %s12, 1
    %s18 = ssub.s32 %s12, 2
    %s19 = sadd.s32 %s12, 1
    %s20 = ssub.s32 %s12, %s19
    %p21 = scmp.eq.s32.totalorder %s20, 0
    %s23 = sadd.s32 %s22, 1
    %s24 = scalar_select %p21, %s22, %s23
    %p27 = pneg %p21
    %p28 = scmp.eq.s32.totalorder %s12, 1
    %p29 = por %p27, %p28
    %p30 = scmp.ne.s32.totalorder %s22, %s25
    %p31 = scmp.eq.s32.totalorder %s12, 0
    %p32 = por %p30, %p31
    %p33 = scmp.ne.s32.totalorder %s22, %s25
    %p34 = scmp.eq.s32.totalorder %s17, 1
    %p35 = por %p33, %p34
    %p36 = scmp.ne.s32.totalorder %s25, %s26
    %p37 = scmp.eq.s32.totalorder %s17, 0
    %p38 = por %p36, %p37
    %p39 = scmp.ne.s32.totalorder %s25, %s26
    %p40 = scmp.eq.s32.totalorder %s18, 1
    %p41 = por %p39, %p40
    %p43 = scmp.ne.s32.totalorder %s26, %s42
    %p44 = scmp.eq.s32.totalorder %s18, 0
    %p45 = por %p43, %p44
    %s46 = ssub.s32 %s12, %s19
    %p47 = scmp.eq.s32.totalorder %s46, 0
    %s49 = sadd.s32 %s48, 1
    %s50 = scalar_select %p47, %s48, %s49
    %p53 = pneg %p47
    %p54 = scmp.eq.s32.totalorder %s12, 1
    %p55 = por %p53, %p54
    %p56 = scmp.ne.s32.totalorder %s48, %s51
    %p57 = scmp.eq.s32.totalorder %s12, 0
    %p58 = por %p56, %p57
    %p59 = scmp.ne.s32.totalorder %s48, %s51
    %p60 = scmp.eq.s32.totalorder %s17, 1
    %p61 = por %p59, %p60
    %p62 = scmp.ne.s32.totalorder %s51, %s52
    %p63 = scmp.eq.s32.totalorder %s17, 0
    %p64 = por %p62, %p63
    %p65 = scmp.ne.s32.totalorder %s51, %s52
    %p66 = scmp.eq.s32.totalorder %s18, 1
    %p67 = por %p65, %p66
    %p69 = scmp.ne.s32.totalorder %s52, %s68
    %p70 = scmp.eq.s32.totalorder %s18, 0
    %p71 = por %p69, %p70
    %s73 = sadd.s32 %s72, 1
    %p76 = scmp.eq.s32.totalorder %s12, 1
    %p77 = scmp.ne.s32.totalorder %s72, %s74
    %p78 = scmp.eq.s32.totalorder %s12, 0
    %p79 = por %p77, %p78
    %p80 = scmp.ne.s32.totalorder %s72, %s74
    %p81 = scmp.eq.s32.totalorder %s17, 1
    %p82 = por %p80, %p81
    %p83 = scmp.ne.s32.totalorder %s74, %s75
    %p84 = scmp.eq.s32.totalorder %s17, 0
    %p85 = por %p83, %p84
    %p86 = scmp.ne.s32.totalorder %s74, %s75
    %p87 = scmp.eq.s32.totalorder %s18, 1
    %p88 = por %p86, %p87
    %p90 = scmp.ne.s32.totalorder %s75, %s89
    %p91 = scmp.eq.s32.totalorder %s18, 0
    %p92 = por %p90, %p91
    %s94 = sadd.s32 %s93, 1
    %p97 = scmp.eq.s32.totalorder %s12, 1
    %p98 = scmp.ne.s32.totalorder %s93, %s95
    %p99 = scmp.eq.s32.totalorder %s12, 0
    %p100 = por %p98, %p99
    %p101 = scmp.ne.s32.totalorder %s93, %s95
    %p102 = scmp.eq.s32.totalorder %s17, 1
    %p103 = por %p101, %p102
    %p104 = scmp.ne.s32.totalorder %s95, %s96
    %p105 = scmp.eq.s32.totalorder %s17, 0
    %p106 = por %p104, %p105
    %p107 = scmp.ne.s32.totalorder %s95, %s96
    %p108 = scmp.eq.s32.totalorder %s18, 1
    %p109 = por %p107, %p108
    %p111 = scmp.ne.s32.totalorder %s96, %s110
    %p112 = scmp.eq.s32.totalorder %s18, 0
    %p113 = por %p111, %p112
    %s115 = sadd.s32 %s114, 1
    %p118 = scmp.eq.s32.totalorder %s12, 1
    %p119 = scmp.ne.s32.totalorder %s114, %s116
    %p120 = scmp.eq.s32.totalorder %s12, 0
    %p121 = por %p119, %p120
    %p122 = scmp.ne.s32.totalorder %s114, %s116
    %p123 = scmp.eq.s32.totalorder %s17, 1
    %p124 = por %p122, %p123
    %p125 = scmp.ne.s32.totalorder %s116, %s117
    %p126 = scmp.eq.s32.totalorder %s17, 0
    %p127 = por %p125, %p126
    %p128 = scmp.ne.s32.totalorder %s116, %s117
    %p129 = scmp.eq.s32.totalorder %s18, 1
    %p130 = por %p128, %p129
    %p132 = scmp.ne.s32.totalorder %s117, %s131
    %p133 = scmp.eq.s32.totalorder %s18, 0
    %p134 = por %p132, %p133
    %s136 = sadd.s32 %s135, 1
    %p139 = scmp.eq.s32.totalorder %s12, 1
    %p140 = scmp.ne.s32.totalorder %s135, %s137
    %p141 = scmp.eq.s32.totalorder %s12, 0
    %p142 = por %p140, %p141
    %p143 = scmp.ne.s32.totalorder %s135, %s137
    %p144 = scmp.eq.s32.totalorder %s17, 1
    %p145 = por %p143, %p144
    %p146 = scmp.ne.s32.totalorder %s137, %s138
    %p147 = scmp.eq.s32.totalorder %s17, 0
    %p148 = por %p146, %p147
    %p149 = scmp.ne.s32.totalorder %s137, %s138
    %p150 = scmp.eq.s32.totalorder %s18, 1
    %p151 = por %p149, %p150
    %p153 = scmp.ne.s32.totalorder %s138, %s152
    %p154 = scmp.eq.s32.totalorder %s18, 0
    %p155 = por %p153, %p154
    %s156 = ssub.s32 %s12, %s19
    %p157 = scmp.eq.s32.totalorder %s156, 0
    %s159 = sadd.s32 %s158, 1
    %s160 = scalar_select %p157, %s158, %s159
    %p163 = pneg %p157
    %p164 = scmp.eq.s32.totalorder %s12, 1
    %p165 = por %p163, %p164
    %p166 = scmp.ne.s32.totalorder %s158, %s161
    %p167 = scmp.eq.s32.totalorder %s12, 0
    %p168 = por %p166, %p167
    %p169 = scmp.ne.s32.totalorder %s158, %s161
    %p170 = scmp.eq.s32.totalorder %s17, 1
    %p171 = por %p169, %p170
    %p172 = scmp.ne.s32.totalorder %s161, %s162
    %p173 = scmp.eq.s32.totalorder %s17, 0
    %p174 = por %p172, %p173
    %p175 = scmp.ne.s32.totalorder %s161, %s162
    %p176 = scmp.eq.s32.totalorder %s18, 1
    %p177 = por %p175, %p176
    %p179 = scmp.ne.s32.totalorder %s162, %s178
    %p180 = scmp.eq.s32.totalorder %s18, 0
    %p181 = por %p179, %p180
    %p182 = scmp.le.s32.totalorder 1, %s12
    %p183 = scmp.lt.s32.totalorder %s12, 3
    %p184 = pnand %p182, %p183
    %p185 = pneg %p184
    // Predicated region
    $region9: #{gripper_grasp_sampler.1} parent=5 // pred_check
      _
    $region10: #{gripper_grasp_sampler.1} parent=5 // pred_check_branch
      %187 = sbr.rel (%p184) target = $region12
    $region11: #{gripper_grasp_sampler.1} parent=5 // pred_region
      %s188 = ssub.s32 %s12, 1
      // Predicated region
      $region13: #{gripper_grasp_sampler.1} parent=11 // pred_check
        %p189 = pneg %p85
      $region14: #{gripper_grasp_sampler.1} parent=11 // pred_check_branch
        %191 = sbr.rel (%p189) target = $region16
      $region15: #{gripper_grasp_sampler.1} parent=11 // pred_region
        _
      $region16: #{gripper_grasp_sampler.1} parent=11 // pred_fallthru
        _
      // Predicated region
      $region17: #{gripper_grasp_sampler.1} parent=11 // pred_check
        %p192 = pneg %p106
      $region18: #{gripper_grasp_sampler.1} parent=11 // pred_check_branch
        %194 = sbr.rel (%p192) target = $region20
      $region19: #{gripper_grasp_sampler.1} parent=11 // pred_region
        _
      $region20: #{gripper_grasp_sampler.1} parent=11 // pred_fallthru
        _
      // Predicated region
      $region21: #{gripper_grasp_sampler.1} parent=11 // pred_check
        %p195 = pneg %p127
      $region22: #{gripper_grasp_sampler.1} parent=11 // pred_check_branch
        %197 = sbr.rel (%p195) target = $region24
      $region23: #{gripper_grasp_sampler.1} parent=11 // pred_region
        _
      $region24: #{gripper_grasp_sampler.1} parent=11 // pred_fallthru
        _
      // Predicated region
      $region25: #{gripper_grasp_sampler.1} parent=11 // pred_check
        %p198 = pneg %p148
      $region26: #{gripper_grasp_sampler.1} parent=11 // pred_check_branch
        %200 = sbr.rel (%p198) target = $region28
      $region27: #{gripper_grasp_sampler.1} parent=11 // pred_region
        _
      $region28: #{gripper_grasp_sampler.1} parent=11 // pred_fallthru
        _
    $region12: #{gripper_grasp_sampler.1} parent=5 // pred_fallthru
      _
    %p201 = scmp.lt.s32.totalorder %s12, 2
    // Predicated region
    $region29: #{gripper_grasp_sampler.1} parent=5 // pred_check
      %p202 = pneg %p201
    $region30: #{gripper_grasp_sampler.1} parent=5 // pred_check_branch
      %204 = sbr.rel (%p202) target = $region32
    $region31: #{gripper_grasp_sampler.1} parent=5 // pred_region
      // Predicated region
      $region33: #{gripper_grasp_sampler.1} parent=31 // pred_check
        %p205 = pneg %p32
      $region34: #{gripper_grasp_sampler.1} parent=31 // pred_check_branch
        %207 = sbr.rel (%p205) target = $region36
      $region35: #{gripper_grasp_sampler.1} parent=31 // pred_region
        %s208 = smul.u32 32, %s12
        %p209 = scmp.lt.s32.totalorder %s208, 63
        %s210 = scalar_select %p209, %s208, 63
        %s211 = smul.addr %s210, 8
        %s212 = scalar_lea.vmem %s0, %s211
        %s213 = smul.u32 32, %s12
      $region36: #{gripper_grasp_sampler.1} parent=31 // pred_fallthru
        _
      // Predicated region
      $region37: #{gripper_grasp_sampler.1} parent=31 // pred_check
        %p214 = pneg %p58
      $region38: #{gripper_grasp_sampler.1} parent=31 // pred_check_branch
        %216 = sbr.rel (%p214) target = $region40
      $region39: #{gripper_grasp_sampler.1} parent=31 // pred_region
        %s217 = smul.u32 32, %s12
        %p218 = scmp.lt.s32.totalorder %s217, 63
        %s219 = scalar_select %p218, %s217, 63
        %s220 = smul.addr %s219, 8
        %s221 = scalar_lea.vmem %s1, %s220
        %s222 = smul.u32 32, %s12
      $region40: #{gripper_grasp_sampler.1} parent=31 // pred_fallthru
        _
    $region32: #{gripper_grasp_sampler.1} parent=5 // pred_fallthru
      _
    %p223 = scmp.le.s32.totalorder 1, %s12
    %p224 = scmp.lt.s32.totalorder %s12, 3
    %p225 = pnand %p223, %p224
    %p226 = pneg %p225
    // Predicated region
    $region41: #{gripper_grasp_sampler.1} parent=5 // pred_check
      _
    $region42: #{gripper_grasp_sampler.1} parent=5 // pred_check_branch
      %228 = sbr.rel (%p225) target = $region44
    $region43: #{gripper_grasp_sampler.1} parent=5 // pred_region
      %s229 = ssub.s32 %s12, 1
      %s230 = smul.u32 32, %s17
      %p231 = scmp.lt.s32.totalorder %s230, 63
      %s232 = scalar_select %p231, %s230, 63
      %s233 = smul.addr %s232, 8
      %s234 = scalar_lea.vmem %s0, %s233
      %p235 = pneg %p38
      %p236 = pneg %p35
      %s237 = smul.u32 32, %s17
      %p238 = scmp.lt.s32.totalorder %s237, 63
      %s239 = scalar_select %p238, %s237, 63
      %s240 = smul.addr %s239, 8
      %s241 = scalar_lea.vmem %s1, %s240
      %p242 = pneg %p64
      %p243 = pneg %p61
      %p244 = pneg %p85
      %p245 = pneg %p82
      %p246 = pneg %p106
      %p247 = pneg %p103
      %p248 = pneg %p127
      %p249 = pneg %p124
      %p250 = pneg %p148
      %p251 = pneg %p145
      %p252 = pneg %p174
      %p253 = pneg %p171
      %s254 = smul.u32 32, %s17
      %p255 = scmp.lt.s32.totalorder %s254, 63
      %s256 = scalar_select %p255, %s254, 63
      %s257 = smul.addr %s256, 8
      %s258 = scalar_lea.vmem %s6, %s257
      %s259 = smul.u32 32, %s17
      %p260 = scmp.lt.s32.totalorder %s259, 63
      %s261 = scalar_select %p260, %s259, 63
      %s262 = smul.addr %s261, 8
      %s263 = scalar_lea.vmem %s0, %s262
      %s264 = smul.u32 32, %s17
      %s265 = smul.u32 32, %s17
      %p266 = scmp.lt.s32.totalorder %s265, 63
      %s267 = scalar_select %p266, %s265, 63
      %s268 = smul.addr %s267, 8
      %s269 = scalar_lea.vmem %s1, %s268
      %s270 = smul.u32 32, %s17
      %s271 = smul.u32 32, %s17
      %p272 = scmp.lt.s32.totalorder %s271, 63
      %s273 = scalar_select %p272, %s271, 63
      %s274 = smul.addr %s273, 8
      %s275 = scalar_lea.vmem %s6, %s274
      %s276 = smul.u32 32, %s17
      %v278 = vld [vmem:[%s3] sm:$0x1]
      %v279 = vld [vmem:[%s3 + $0x1] sm:$0x1]
      %v280 = vld [vmem:[%s3 + $0x2] sm:$0x1]
      %v281 = vld [vmem:[%s3 + $0x3] sm:$0x1]
      %v282 = vld [vmem:[%s3 + $0x4] sm:$0x1]
      %v283 = vld [vmem:[%s3 + $0x5] sm:$0x1]
      %v284 = vld [vmem:[%s3 + $0x6] sm:$0x1]
      %v285 = vld [vmem:[%s3 + $0x7] sm:$0x1]
      %v286 = vld [vmem:[%s3 + $0x8] sm:$0x1]
      %v287 = vld [vmem:[%s3 + $0x9] sm:$0x1]
      %v288 = vld [vmem:[%s3 + $0xa] sm:$0x1]
      %v289 = vld [vmem:[%s3 + $0xb] sm:$0x1]
      %v290 = vld [vmem:[%s5] sm:$0x1]
      %v291 = vld [vmem:[%s5 + $0x1] sm:$0x1]
      %v292 = vld [vmem:[%s5 + $0x2] sm:$0x1]
      %v293 = vld [vmem:[%s5 + $0x3] sm:$0x1]
      %v294 = vld [vmem:[%s5 + $0x4] sm:$0x1]
      %v295 = vld [vmem:[%s5 + $0x5] sm:$0x1]
      %v296 = vld [vmem:[%s5 + $0x6] sm:$0x1]
      %v297 = vld [vmem:[%s5 + $0x7] sm:$0x1]
      %v298 = vld [vmem:[%s5 + $0x8] sm:$0x1]
      %v299 = vld [vmem:[%s5 + $0x9] sm:$0x1]
      %v300 = vld [vmem:[%s5 + $0xa] sm:$0x1]
      %v301 = vld [vmem:[%s5 + $0xb] sm:$0x1]
      %v302 = vld [vmem:[%s5 + $0xc] sm:$0x1]
      %v303 = vld [vmem:[%s5 + $0xd] sm:$0x1]
      %v304 = vld [vmem:[%s263] sm:$0xff]
      %v305 = vld [vmem:[%s263 + $0x8] sm:$0xff]
      %v306 = vld [vmem:[%s263 + $0x10] sm:$0xff]
      %v307 = vld [vmem:[%s263 + $0x18] sm:$0xff]
      %v308 = vld [vmem:[%s263 + $0x20] sm:$0xff]
      %v309 = vld [vmem:[%s263 + $0x28] sm:$0xff]
      %v310 = vld [vmem:[%s263 + $0x30] sm:$0xff]
      %v311 = vld [vmem:[%s263 + $0x38] sm:$0xff]
      %v312 = vld [vmem:[%s263 + $0x40] sm:$0xff]
      %v313 = vld [vmem:[%s263 + $0x48] sm:$0xff]
      %v314 = vld [vmem:[%s263 + $0x50] sm:$0xff]
      %v315 = vld [vmem:[%s263 + $0x58] sm:$0xff]
      %v316 = vld [vmem:[%s263 + $0x60] sm:$0xff]
      %v317 = vld [vmem:[%s263 + $0x68] sm:$0xff]
      %v318 = vld [vmem:[%s263 + $0x70] sm:$0xff]
      %v319 = vld [vmem:[%s263 + $0x78] sm:$0xff]
      %v320 = vld [vmem:[%s269] sm:$0xff]
      %v321 = vld [vmem:[%s269 + $0x8] sm:$0xff]
      %v322 = vld [vmem:[%s269 + $0x10] sm:$0xff]
      %v323 = vld [vmem:[%s269 + $0x18] sm:$0xff]
      %v324 = vld [vmem:[%s269 + $0x20] sm:$0xff]
      %v325 = vld [vmem:[%s269 + $0x28] sm:$0xff]
      %v326 = vld [vmem:[%s269 + $0x30] sm:$0xff]
      %v327 = vld [vmem:[%s269 + $0x38] sm:$0xff]
      %v328 = vld [vmem:[%s269 + $0x40] sm:$0xff]
      %v329 = vld [vmem:[%s269 + $0x48] sm:$0xff]
      %v330 = vld [vmem:[%s269 + $0x50] sm:$0xff]
      %v331 = vld [vmem:[%s269 + $0x58] sm:$0xff]
      %v332 = vld [vmem:[%s269 + $0x60] sm:$0xff]
      %v333 = vld [vmem:[%s269 + $0x68] sm:$0xff]
      %v334 = vld [vmem:[%s269 + $0x70] sm:$0xff]
      %v335 = vld [vmem:[%s269 + $0x78] sm:$0xff]
      %v336 = vmul.f32 %v320, %v320
      %v337 = vmul.f32 %v321, %v321
      %v338 = vmul.f32 %v322, %v322
      %v339 = vmul.f32 %v323, %v323
      %v340 = vmul.f32 %v324, %v324
      %v341 = vmul.f32 %v325, %v325
      %v342 = vmul.f32 %v326, %v326
      %v343 = vmul.f32 %v327, %v327
      %v344 = vmul.f32 %v328, %v328
      %v345 = vmul.f32 %v329, %v329
      %v346 = vmul.f32 %v330, %v330
      %v347 = vmul.f32 %v331, %v331
      %v348 = vmul.f32 %v332, %v332
      %v349 = vmul.f32 %v333, %v333
      %v350 = vmul.f32 %v334, %v334
      %v351 = vmul.f32 %v335, %v335
      %vm352 = vcmask 64512
      %v353 = vsel %vm352, %v336, 0.0
      %354 = vadd.xlane.f32.xlu0 %v353
      %v355 = vpop.xlane.xlu0 %354
      %v356 = vsel %vm352, %v337, 0.0
      %357 = vadd.xlane.f32.xlu0 %v356
      %v358 = vpop.xlane.xlu0 %357
      %v359 = vsel %vm352, %v338, 0.0
      %360 = vadd.xlane.f32.xlu0 %v359
      %v361 = vpop.xlane.xlu0 %360
      %v362 = vsel %vm352, %v339, 0.0
      %363 = vadd.xlane.f32.xlu0 %v362
      %v364 = vpop.xlane.xlu0 %363
      %v365 = vsel %vm352, %v340, 0.0
      %366 = vadd.xlane.f32.xlu0 %v365
      %v367 = vpop.xlane.xlu0 %366
      %v368 = vsel %vm352, %v341, 0.0
      %369 = vadd.xlane.f32.xlu0 %v368
      %v370 = vpop.xlane.xlu0 %369
      %v371 = vsel %vm352, %v342, 0.0
      %372 = vadd.xlane.f32.xlu0 %v371
      %v373 = vpop.xlane.xlu0 %372
      %v374 = vsel %vm352, %v343, 0.0
      %375 = vadd.xlane.f32.xlu0 %v374
      %v376 = vpop.xlane.xlu0 %375
      %v377 = vsel %vm352, %v344, 0.0
      %378 = vadd.xlane.f32.xlu0 %v377
      %v379 = vpop.xlane.xlu0 %378
      %v380 = vsel %vm352, %v345, 0.0
      %381 = vadd.xlane.f32.xlu0 %v380
      %v382 = vpop.xlane.xlu0 %381
      %v383 = vsel %vm352, %v346, 0.0
      %384 = vadd.xlane.f32.xlu0 %v383
      %v385 = vpop.xlane.xlu0 %384
      %v386 = vsel %vm352, %v347, 0.0
      %387 = vadd.xlane.f32.xlu0 %v386
      %v388 = vpop.xlane.xlu0 %387
      %v389 = vsel %vm352, %v348, 0.0
      %390 = vadd.xlane.f32.xlu0 %v389
      %v391 = vpop.xlane.xlu0 %390
      %v392 = vsel %vm352, %v349, 0.0
      %393 = vadd.xlane.f32.xlu0 %v392
      %v394 = vpop.xlane.xlu0 %393
      %v395 = vsel %vm352, %v350, 0.0
      %396 = vadd.xlane.f32.xlu0 %v395
      %v397 = vpop.xlane.xlu0 %396
      %v398 = vsel %vm352, %v351, 0.0
      %399 = vadd.xlane.f32.xlu0 %v398
      %v400 = vpop.xlane.xlu0 %399
      %v401 = vrsqrt.pop %v355
      %v402 = vmul.f32 %v355, %v401
      %vm403 = vcmp.eq.f32.partialorder %v355, inf
      %v404 = vsel %vm403, %v355, %v402
      %vm405 = vcmp.eq.f32.partialorder %v355, 0.0
      %v406 = vand.u32 %v355, 2147483648
      %v407 = vsel %vm405, %v406, %v404
      %v408 = vrsqrt.pop %v358
      %v409 = vmul.f32 %v358, %v408
      %vm410 = vcmp.eq.f32.partialorder %v358, inf
      %v411 = vsel %vm410, %v358, %v409
      %vm412 = vcmp.eq.f32.partialorder %v358, 0.0
      %v413 = vand.u32 %v358, 2147483648
      %v414 = vsel %vm412, %v413, %v411
      %v415 = vrsqrt.pop %v361
      %v416 = vmul.f32 %v361, %v415
      %vm417 = vcmp.eq.f32.partialorder %v361, inf
      %v418 = vsel %vm417, %v361, %v416
      %vm419 = vcmp.eq.f32.partialorder %v361, 0.0
      %v420 = vand.u32 %v361, 2147483648
      %v421 = vsel %vm419, %v420, %v418
      %v422 = vrsqrt.pop %v364
      %v423 = vmul.f32 %v364, %v422
      %vm424 = vcmp.eq.f32.partialorder %v364, inf
      %v425 = vsel %vm424, %v364, %v423
      %vm426 = vcmp.eq.f32.partialorder %v364, 0.0
      %v427 = vand.u32 %v364, 2147483648
      %v428 = vsel %vm426, %v427, %v425
      %v429 = vrsqrt.pop %v367
      %v430 = vmul.f32 %v367, %v429
      %vm431 = vcmp.eq.f32.partialorder %v367, inf
      %v432 = vsel %vm431, %v367, %v430
      %vm433 = vcmp.eq.f32.partialorder %v367, 0.0
      %v434 = vand.u32 %v367, 2147483648
      %v435 = vsel %vm433, %v434, %v432
      %v436 = vrsqrt.pop %v370
      %v437 = vmul.f32 %v370, %v436
      %vm438 = vcmp.eq.f32.partialorder %v370, inf
      %v439 = vsel %vm438, %v370, %v437
      %vm440 = vcmp.eq.f32.partialorder %v370, 0.0
      %v441 = vand.u32 %v370, 2147483648
      %v442 = vsel %vm440, %v441, %v439
      %v443 = vrsqrt.pop %v373
      %v444 = vmul.f32 %v373, %v443
      %vm445 = vcmp.eq.f32.partialorder %v373, inf
      %v446 = vsel %vm445, %v373, %v444
      %vm447 = vcmp.eq.f32.partialorder %v373, 0.0
      %v448 = vand.u32 %v373, 2147483648
      %v449 = vsel %vm447, %v448, %v446
      %v450 = vrsqrt.pop %v376
      %v451 = vmul.f32 %v376, %v450
      %vm452 = vcmp.eq.f32.partialorder %v376, inf
      %v453 = vsel %vm452, %v376, %v451
      %vm454 = vcmp.eq.f32.partialorder %v376, 0.0
      %v455 = vand.u32 %v376, 2147483648
      %v456 = vsel %vm454, %v455, %v453
      %v457 = vrsqrt.pop %v379
      %v458 = vmul.f32 %v379, %v457
      %vm459 = vcmp.eq.f32.partialorder %v379, inf
      %v460 = vsel %vm459, %v379, %v458
      %vm461 = vcmp.eq.f32.partialorder %v379, 0.0
      %v462 = vand.u32 %v379, 2147483648
      %v463 = vsel %vm461, %v462, %v460
      %v464 = vrsqrt.pop %v382
      %v465 = vmul.f32 %v382, %v464
      %vm466 = vcmp.eq.f32.partialorder %v382, inf
      %v467 = vsel %vm466, %v382, %v465
      %vm468 = vcmp.eq.f32.partialorder %v382, 0.0
      %v469 = vand.u32 %v382, 2147483648
      %v470 = vsel %vm468, %v469, %v467
      %v471 = vrsqrt.pop %v385
      %v472 = vmul.f32 %v385, %v471
      %vm473 = vcmp.eq.f32.partialorder %v385, inf
      %v474 = vsel %vm473, %v385, %v472
      %vm475 = vcmp.eq.f32.partialorder %v385, 0.0
      %v476 = vand.u32 %v385, 2147483648
      %v477 = vsel %vm475, %v476, %v474
      %v478 = vrsqrt.pop %v388
      %v479 = vmul.f32 %v388, %v478
      %vm480 = vcmp.eq.f32.partialorder %v388, inf
      %v481 = vsel %vm480, %v388, %v479
      %vm482 = vcmp.eq.f32.partialorder %v388, 0.0
      %v483 = vand.u32 %v388, 2147483648
      %v484 = vsel %vm482, %v483, %v481
      %v485 = vrsqrt.pop %v391
      %v486 = vmul.f32 %v391, %v485
      %vm487 = vcmp.eq.f32.partialorder %v391, inf
      %v488 = vsel %vm487, %v391, %v486
      %vm489 = vcmp.eq.f32.partialorder %v391, 0.0
      %v490 = vand.u32 %v391, 2147483648
      %v491 = vsel %vm489, %v490, %v488
      %v492 = vrsqrt.pop %v394
      %v493 = vmul.f32 %v394, %v492
      %vm494 = vcmp.eq.f32.partialorder %v394, inf
      %v495 = vsel %vm494, %v394, %v493
      %vm496 = vcmp.eq.f32.partialorder %v394, 0.0
      %v497 = vand.u32 %v394, 2147483648
      %v498 = vsel %vm496, %v497, %v495
      %v499 = vrsqrt.pop %v397
      %v500 = vmul.f32 %v397, %v499
      %vm501 = vcmp.eq.f32.partialorder %v397, inf
      %v502 = vsel %vm501, %v397, %v500
      %vm503 = vcmp.eq.f32.partialorder %v397, 0.0
      %v504 = vand.u32 %v397, 2147483648
      %v505 = vsel %vm503, %v504, %v502
      %v506 = vrsqrt.pop %v400
      %v507 = vmul.f32 %v400, %v506
      %vm508 = vcmp.eq.f32.partialorder %v400, inf
      %v509 = vsel %vm508, %v400, %v507
      %vm510 = vcmp.eq.f32.partialorder %v400, 0.0
      %v511 = vand.u32 %v400, 2147483648
      %v512 = vsel %vm510, %v511, %v509
      %v513 = vmax.f32 %v407, 1e-12
      %v514 = vmax.f32 %v414, 1e-12
      %v515 = vmax.f32 %v421, 1e-12
      %v516 = vmax.f32 %v428, 1e-12
      %v517 = vmax.f32 %v435, 1e-12
      %v518 = vmax.f32 %v442, 1e-12
      %v519 = vmax.f32 %v449, 1e-12
      %v520 = vmax.f32 %v456, 1e-12
      %v521 = vmax.f32 %v463, 1e-12
      %v522 = vmax.f32 %v470, 1e-12
      %v523 = vmax.f32 %v477, 1e-12
      %v524 = vmax.f32 %v484, 1e-12
      %v525 = vmax.f32 %v491, 1e-12
      %v526 = vmax.f32 %v498, 1e-12
      %v527 = vmax.f32 %v505, 1e-12
      %v528 = vmax.f32 %v512, 1e-12
      %v529 = vrcp.pop %v513
      %v530 = vmul.f32 %v320, %v529
      %v531 = vrcp.pop %v514
      %v532 = vmul.f32 %v321, %v531
      %v533 = vrcp.pop %v515
      %v534 = vmul.f32 %v322, %v533
      %v535 = vrcp.pop %v516
      %v536 = vmul.f32 %v323, %v535
      %v537 = vrcp.pop %v517
      %v538 = vmul.f32 %v324, %v537
      %v539 = vrcp.pop %v518
      %v540 = vmul.f32 %v325, %v539
      %v541 = vrcp.pop %v519
      %v542 = vmul.f32 %v326, %v541
      %v543 = vrcp.pop %v520
      %v544 = vmul.f32 %v327, %v543
      %v545 = vrcp.pop %v521
      %v546 = vmul.f32 %v328, %v545
      %v547 = vrcp.pop %v522
      %v548 = vmul.f32 %v329, %v547
      %v549 = vrcp.pop %v523
      %v550 = vmul.f32 %v330, %v549
      %v551 = vrcp.pop %v524
      %v552 = vmul.f32 %v331, %v551
      %v553 = vrcp.pop %v525
      %v554 = vmul.f32 %v332, %v553
      %v555 = vrcp.pop %v526
      %v556 = vmul.f32 %v333, %v555
      %v557 = vrcp.pop %v527
      %v558 = vmul.f32 %v334, %v557
      %v559 = vrcp.pop %v528
      %v560 = vmul.f32 %v335, %v559
      %562 = vset.pattern.permute.xlu0 0
      %563 = vperm.xlu0 %562, %v530
      %v564 = vpop.permute.xlu0 %563
      %567 = vset.pattern.permute.xlu0 0
      %568 = vperm.xlu0 %567, %v532
      %v569 = vpop.permute.xlu0 %568
      %572 = vset.pattern.permute.xlu0 0
      %573 = vperm.xlu0 %572, %v534
      %v574 = vpop.permute.xlu0 %573
      %577 = vset.pattern.permute.xlu0 0
      %578 = vperm.xlu0 %577, %v536
      %v579 = vpop.permute.xlu0 %578
      %582 = vset.pattern.permute.xlu0 0
      %583 = vperm.xlu0 %582, %v538
      %v584 = vpop.permute.xlu0 %583
      %587 = vset.pattern.permute.xlu0 0
      %588 = vperm.xlu0 %587, %v540
      %v589 = vpop.permute.xlu0 %588
      %592 = vset.pattern.permute.xlu0 0
      %593 = vperm.xlu0 %592, %v542
      %v594 = vpop.permute.xlu0 %593
      %597 = vset.pattern.permute.xlu0 0
      %598 = vperm.xlu0 %597, %v544
      %v599 = vpop.permute.xlu0 %598
      %602 = vset.pattern.permute.xlu0 0
      %603 = vperm.xlu0 %602, %v546
      %v604 = vpop.permute.xlu0 %603
      %607 = vset.pattern.permute.xlu0 0
      %608 = vperm.xlu0 %607, %v548
      %v609 = vpop.permute.xlu0 %608
      %612 = vset.pattern.permute.xlu0 0
      %613 = vperm.xlu0 %612, %v550
      %v614 = vpop.permute.xlu0 %613
      %617 = vset.pattern.permute.xlu0 0
      %618 = vperm.xlu0 %617, %v552
      %v619 = vpop.permute.xlu0 %618
      %622 = vset.pattern.permute.xlu0 0
      %623 = vperm.xlu0 %622, %v554
      %v624 = vpop.permute.xlu0 %623
      %627 = vset.pattern.permute.xlu0 0
      %628 = vperm.xlu0 %627, %v556
      %v629 = vpop.permute.xlu0 %628
      %632 = vset.pattern.permute.xlu0 0
      %633 = vperm.xlu0 %632, %v558
      %v634 = vpop.permute.xlu0 %633
      %637 = vset.pattern.permute.xlu0 0
      %638 = vperm.xlu0 %637, %v560
      %v639 = vpop.permute.xlu0 %638
      %v641 = vlaneseq
      %v642 = vshrl.u32 %v641, 7
      %v643 = vsub.s32 0, %v642
      %v644 = vrot.slane %v287, %v643
      %v645 = vmul.f32 %v564, %v644
      %v646 = vmul.f32 %v569, %v644
      %v647 = vmul.f32 %v574, %v644
      %v648 = vmul.f32 %v579, %v644
      %v649 = vmul.f32 %v584, %v644
      %v650 = vmul.f32 %v589, %v644
      %v651 = vmul.f32 %v594, %v644
      %v652 = vmul.f32 %v599, %v644
      %v653 = vmul.f32 %v604, %v644
      %v654 = vmul.f32 %v609, %v644
      %v655 = vmul.f32 %v614, %v644
      %v656 = vmul.f32 %v619, %v644
      %v657 = vmul.f32 %v624, %v644
      %v658 = vmul.f32 %v629, %v644
      %v659 = vmul.f32 %v634, %v644
      %v660 = vmul.f32 %v639, %v644
      %v661 = vlaneseq
      %v662 = vshrl.u32 %v661, 7
      %v663 = vsub.s32 0, %v662
      %v664 = vrot.slane %v278, %v663
      %v665 = vadd.f32 %v664, %v645
      %v666 = vadd.f32 %v664, %v646
      %v667 = vadd.f32 %v664, %v647
      %v668 = vadd.f32 %v664, %v648
      %v669 = vadd.f32 %v664, %v649
      %v670 = vadd.f32 %v664, %v650
      %v671 = vadd.f32 %v664, %v651
      %v672 = vadd.f32 %v664, %v652
      %v673 = vadd.f32 %v664, %v653
      %v674 = vadd.f32 %v664, %v654
      %v675 = vadd.f32 %v664, %v655
      %v676 = vadd.f32 %v664, %v656
      %v677 = vadd.f32 %v664, %v657
      %v678 = vadd.f32 %v664, %v658
      %v679 = vadd.f32 %v664, %v659
      %v680 = vadd.f32 %v664, %v660
      %681 = vset.pattern.permute.xlu0 1
      %682 = vperm.xlu0 %681, %v530
      %v683 = vpop.permute.xlu0 %682
      %685 = vset.pattern.permute.xlu0 1
      %686 = vperm.xlu0 %685, %v532
      %v687 = vpop.permute.xlu0 %686
      %689 = vset.pattern.permute.xlu0 1
      %690 = vperm.xlu0 %689, %v534
      %v691 = vpop.permute.xlu0 %690
      %693 = vset.pattern.permute.xlu0 1
      %694 = vperm.xlu0 %693, %v536
      %v695 = vpop.permute.xlu0 %694
      %697 = vset.pattern.permute.xlu0 1
      %698 = vperm.xlu0 %697, %v538
      %v699 = vpop.permute.xlu0 %698
      %701 = vset.pattern.permute.xlu0 1
      %702 = vperm.xlu0 %701, %v540
      %v703 = vpop.permute.xlu0 %702
      %705 = vset.pattern.permute.xlu0 1
      %706 = vperm.xlu0 %705, %v542
      %v707 = vpop.permute.xlu0 %706
      %709 = vset.pattern.permute.xlu0 1
      %710 = vperm.xlu0 %709, %v544
      %v711 = vpop.permute.xlu0 %710
      %713 = vset.pattern.permute.xlu0 1
      %714 = vperm.xlu0 %713, %v546
      %v715 = vpop.permute.xlu0 %714
      %717 = vset.pattern.permute.xlu0 1
      %718 = vperm.xlu0 %717, %v548
      %v719 = vpop.permute.xlu0 %718
      %721 = vset.pattern.permute.xlu0 1
      %722 = vperm.xlu0 %721, %v550
      %v723 = vpop.permute.xlu0 %722
      %725 = vset.pattern.permute.xlu0 1
      %726 = vperm.xlu0 %725, %v552
      %v727 = vpop.permute.xlu0 %726
      %729 = vset.pattern.permute.xlu0 1
      %730 = vperm.xlu0 %729, %v554
      %v731 = vpop.permute.xlu0 %730
      %733 = vset.pattern.permute.xlu0 1
      %734 = vperm.xlu0 %733, %v556
      %v735 = vpop.permute.xlu0 %734
      %737 = vset.pattern.permute.xlu0 1
      %738 = vperm.xlu0 %737, %v558
      %v739 = vpop.permute.xlu0 %738
      %741 = vset.pattern.permute.xlu0 1
      %742 = vperm.xlu0 %741, %v560
      %v743 = vpop.permute.xlu0 %742
      %v745 = vlaneseq
      %v746 = vshrl.u32 %v745, 7
      %v747 = vsub.s32 0, %v746
      %v748 = vrot.slane %v288, %v747
      %v749 = vmul.f32 %v683, %v748
      %v750 = vmul.f32 %v687, %v748
      %v751 = vmul.f32 %v691, %v748
      %v752 = vmul.f32 %v695, %v748
      %v753 = vmul.f32 %v699, %v748
      %v754 = vmul.f32 %v703, %v748
      %v755 = vmul.f32 %v707, %v748
      %v756 = vmul.f32 %v711, %v748
      %v757 = vmul.f32 %v715, %v748
      %v758 = vmul.f32 %v719, %v748
      %v759 = vmul.f32 %v723, %v748
      %v760 = vmul.f32 %v727, %v748
      %v761 = vmul.f32 %v731, %v748
      %v762 = vmul.f32 %v735, %v748
      %v763 = vmul.f32 %v739, %v748
      %v764 = vmul.f32 %v743, %v748
      %v765 = vadd.f32 %v665, %v749
      %v766 = vadd.f32 %v666, %v750
      %v767 = vadd.f32 %v667, %v751
      %v768 = vadd.f32 %v668, %v752
      %v769 = vadd.f32 %v669, %v753
      %v770 = vadd.f32 %v670, %v754
      %v771 = vadd.f32 %v671, %v755
      %v772 = vadd.f32 %v672, %v756
      %v773 = vadd.f32 %v673, %v757
      %v774 = vadd.f32 %v674, %v758
      %v775 = vadd.f32 %v675, %v759
      %v776 = vadd.f32 %v676, %v760
      %v777 = vadd.f32 %v677, %v761
      %v778 = vadd.f32 %v678, %v762
      %v779 = vadd.f32 %v679, %v763
      %v780 = vadd.f32 %v680, %v764
      %781 = vset.pattern.permute.xlu0 2
      %782 = vperm.xlu0 %781, %v530
      %v783 = vpop.permute.xlu0 %782
      %785 = vset.pattern.permute.xlu0 2
      %786 = vperm.xlu0 %785, %v532
      %v787 = vpop.permute.xlu0 %786
      %789 = vset.pattern.permute.xlu0 2
      %790 = vperm.xlu0 %789, %v534
      %v791 = vpop.permute.xlu0 %790
      %793 = vset.pattern.permute.xlu0 2
      %794 = vperm.xlu0 %793, %v536
      %v795 = vpop.permute.xlu0 %794
      %797 = vset.pattern.permute.xlu0 2
      %798 = vperm.xlu0 %797, %v538
      %v799 = vpop.permute.xlu0 %798
      %801 = vset.pattern.permute.xlu0 2
      %802 = vperm.xlu0 %801, %v540
      %v803 = vpop.permute.xlu0 %802
      %805 = vset.pattern.permute.xlu0 2
      %806 = vperm.xlu0 %805, %v542
      %v807 = vpop.permute.xlu0 %806
      %809 = vset.pattern.permute.xlu0 2
      %810 = vperm.xlu0 %809, %v544
      %v811 = vpop.permute.xlu0 %810
      %813 = vset.pattern.permute.xlu0 2
      %814 = vperm.xlu0 %813, %v546
      %v815 = vpop.permute.xlu0 %814
      %817 = vset.pattern.permute.xlu0 2
      %818 = vperm.xlu0 %817, %v548
      %v819 = vpop.permute.xlu0 %818
      %821 = vset.pattern.permute.xlu0 2
      %822 = vperm.xlu0 %821, %v550
      %v823 = vpop.permute.xlu0 %822
      %825 = vset.pattern.permute.xlu0 2
      %826 = vperm.xlu0 %825, %v552
      %v827 = vpop.permute.xlu0 %826
      %829 = vset.pattern.permute.xlu0 2
      %830 = vperm.xlu0 %829, %v554
      %v831 = vpop.permute.xlu0 %830
      %833 = vset.pattern.permute.xlu0 2
      %834 = vperm.xlu0 %833, %v556
      %v835 = vpop.permute.xlu0 %834
      %837 = vset.pattern.permute.xlu0 2
      %838 = vperm.xlu0 %837, %v558
      %v839 = vpop.permute.xlu0 %838
      %841 = vset.pattern.permute.xlu0 2
      %842 = vperm.xlu0 %841, %v560
      %v843 = vpop.permute.xlu0 %842
      %v845 = vlaneseq
      %v846 = vshrl.u32 %v845, 7
      %v847 = vsub.s32 0, %v846
      %v848 = vrot.slane %v289, %v847
      %v849 = vmul.f32 %v783, %v848
      %v850 = vmul.f32 %v787, %v848
      %v851 = vmul.f32 %v791, %v848
      %v852 = vmul.f32 %v795, %v848
      %v853 = vmul.f32 %v799, %v848
      %v854 = vmul.f32 %v803, %v848
      %v855 = vmul.f32 %v807, %v848
      %v856 = vmul.f32 %v811, %v848
      %v857 = vmul.f32 %v815, %v848
      %v858 = vmul.f32 %v819, %v848
      %v859 = vmul.f32 %v823, %v848
      %v860 = vmul.f32 %v827, %v848
      %v861 = vmul.f32 %v831, %v848
      %v862 = vmul.f32 %v835, %v848
      %v863 = vmul.f32 %v839, %v848
      %v864 = vmul.f32 %v843, %v848
      %v865 = vadd.f32 %v765, %v849
      %v866 = vadd.f32 %v766, %v850
      %v867 = vadd.f32 %v767, %v851
      %v868 = vadd.f32 %v768, %v852
      %v869 = vadd.f32 %v769, %v853
      %v870 = vadd.f32 %v770, %v854
      %v871 = vadd.f32 %v771, %v855
      %v872 = vadd.f32 %v772, %v856
      %v873 = vadd.f32 %v773, %v857
      %v874 = vadd.f32 %v774, %v858
      %v875 = vadd.f32 %v775, %v859
      %v876 = vadd.f32 %v776, %v860
      %v877 = vadd.f32 %v777, %v861
      %v878 = vadd.f32 %v778, %v862
      %v879 = vadd.f32 %v779, %v863
      %v880 = vadd.f32 %v780, %v864
      %v881 = vmul.f32 %v865, %v865
      %v882 = vmul.f32 %v866, %v866
      %v883 = vmul.f32 %v867, %v867
      %v884 = vmul.f32 %v868, %v868
      %v885 = vmul.f32 %v869, %v869
      %v886 = vmul.f32 %v870, %v870
      %v887 = vmul.f32 %v871, %v871
      %v888 = vmul.f32 %v872, %v872
      %v889 = vmul.f32 %v873, %v873
      %v890 = vmul.f32 %v874, %v874
      %v891 = vmul.f32 %v875, %v875
      %v892 = vmul.f32 %v876, %v876
      %v893 = vmul.f32 %v877, %v877
      %v894 = vmul.f32 %v878, %v878
      %v895 = vmul.f32 %v879, %v879
      %v896 = vmul.f32 %v880, %v880
      %v897 = vmul.f32 %v865, %v881
      %v898 = vmul.f32 %v866, %v882
      %v899 = vmul.f32 %v867, %v883
      %v900 = vmul.f32 %v868, %v884
      %v901 = vmul.f32 %v869, %v885
      %v902 = vmul.f32 %v870, %v886
      %v903 = vmul.f32 %v871, %v887
      %v904 = vmul.f32 %v872, %v888
      %v905 = vmul.f32 %v873, %v889
      %v906 = vmul.f32 %v874, %v890
      %v907 = vmul.f32 %v875, %v891
      %v908 = vmul.f32 %v876, %v892
      %v909 = vmul.f32 %v877, %v893
      %v910 = vmul.f32 %v878, %v894
      %v911 = vmul.f32 %v879, %v895
      %v912 = vmul.f32 %v880, %v896
      %v913 = vmul.f32 %v897, 0.044715
      %v914 = vmul.f32 %v898, 0.044715
      %v915 = vmul.f32 %v899, 0.044715
      %v916 = vmul.f32 %v900, 0.044715
      %v917 = vmul.f32 %v901, 0.044715
      %v918 = vmul.f32 %v902, 0.044715
      %v919 = vmul.f32 %v903, 0.044715
      %v920 = vmul.f32 %v904, 0.044715
      %v921 = vmul.f32 %v905, 0.044715
      %v922 = vmul.f32 %v906, 0.044715
      %v923 = vmul.f32 %v907, 0.044715
      %v924 = vmul.f32 %v908, 0.044715
      %v925 = vmul.f32 %v909, 0.044715
      %v926 = vmul.f32 %v910, 0.044715
      %v927 = vmul.f32 %v911, 0.044715
      %v928 = vmul.f32 %v912, 0.044715
      %v929 = vadd.f32 %v865, %v913
      %v930 = vadd.f32 %v866, %v914
      %v931 = vadd.f32 %v867, %v915
      %v932 = vadd.f32 %v868, %v916
      %v933 = vadd.f32 %v869, %v917
      %v934 = vadd.f32 %v870, %v918
      %v935 = vadd.f32 %v871, %v919
      %v936 = vadd.f32 %v872, %v920
      %v937 = vadd.f32 %v873, %v921
      %v938 = vadd.f32 %v874, %v922
      %v939 = vadd.f32 %v875, %v923
      %v940 = vadd.f32 %v876, %v924
      %v941 = vadd.f32 %v877, %v925
      %v942 = vadd.f32 %v878, %v926
      %v943 = vadd.f32 %v879, %v927
      %v944 = vadd.f32 %v880, %v928
      %v945 = vmul.f32 %v929, 0.7978846
      %v946 = vmul.f32 %v930, 0.7978846
      %v947 = vmul.f32 %v931, 0.7978846
      %v948 = vmul.f32 %v932, 0.7978846
      %v949 = vmul.f32 %v933, 0.7978846
      %v950 = vmul.f32 %v934, 0.7978846
      %v951 = vmul.f32 %v935, 0.7978846
      %v952 = vmul.f32 %v936, 0.7978846
      %v953 = vmul.f32 %v937, 0.7978846
      %v954 = vmul.f32 %v938, 0.7978846
      %v955 = vmul.f32 %v939, 0.7978846
      %v956 = vmul.f32 %v940, 0.7978846
      %v957 = vmul.f32 %v941, 0.7978846
      %v958 = vmul.f32 %v942, 0.7978846
      %v959 = vmul.f32 %v943, 0.7978846
      %v960 = vmul.f32 %v944, 0.7978846
      %v961 = vtanh.pop %v945
      %v962 = vtanh.pop %v946
      %v963 = vtanh.pop %v947
      %v964 = vtanh.pop %v948
      %v965 = vtanh.pop %v949
      %v966 = vtanh.pop %v950
      %v967 = vtanh.pop %v951
      %v968 = vtanh.pop %v952
      %v969 = vtanh.pop %v953
      %v970 = vtanh.pop %v954
      %v971 = vtanh.pop %v955
      %v972 = vtanh.pop %v956
      %v973 = vtanh.pop %v957
      %v974 = vtanh.pop %v958
      %v975 = vtanh.pop %v959
      %v976 = vtanh.pop %v960
      %v977 = vadd.f32 %v961, 1.0
      %v978 = vadd.f32 %v962, 1.0
      %v979 = vadd.f32 %v963, 1.0
      %v980 = vadd.f32 %v964, 1.0
      %v981 = vadd.f32 %v965, 1.0
      %v982 = vadd.f32 %v966, 1.0
      %v983 = vadd.f32 %v967, 1.0
      %v984 = vadd.f32 %v968, 1.0
      %v985 = vadd.f32 %v969, 1.0
      %v986 = vadd.f32 %v970, 1.0
      %v987 = vadd.f32 %v971, 1.0
      %v988 = vadd.f32 %v972, 1.0
      %v989 = vadd.f32 %v973, 1.0
      %v990 = vadd.f32 %v974, 1.0
      %v991 = vadd.f32 %v975, 1.0
      %v992 = vadd.f32 %v976, 1.0
      %v993 = vmul.f32 %v977, 0.5
      %v994 = vmul.f32 %v978, 0.5
      %v995 = vmul.f32 %v979, 0.5
      %v996 = vmul.f32 %v980, 0.5
      %v997 = vmul.f32 %v981, 0.5
      %v998 = vmul.f32 %v982, 0.5
      %v999 = vmul.f32 %v983, 0.5
      %v1000 = vmul.f32 %v984, 0.5
      %v1001 = vmul.f32 %v985, 0.5
      %v1002 = vmul.f32 %v986, 0.5
      %v1003 = vmul.f32 %v987, 0.5
      %v1004 = vmul.f32 %v988, 0.5
      %v1005 = vmul.f32 %v989, 0.5
      %v1006 = vmul.f32 %v990, 0.5
      %v1007 = vmul.f32 %v991, 0.5
      %v1008 = vmul.f32 %v992, 0.5
      %v1009 = vmul.f32 %v865, %v993
      %v1010 = vmul.f32 %v866, %v994
      %v1011 = vmul.f32 %v867, %v995
      %v1012 = vmul.f32 %v868, %v996
      %v1013 = vmul.f32 %v869, %v997
      %v1014 = vmul.f32 %v870, %v998
      %v1015 = vmul.f32 %v871, %v999
      %v1016 = vmul.f32 %v872, %v1000
      %v1017 = vmul.f32 %v873, %v1001
      %v1018 = vmul.f32 %v874, %v1002
      %v1019 = vmul.f32 %v875, %v1003
      %v1020 = vmul.f32 %v876, %v1004
      %v1021 = vmul.f32 %v877, %v1005
      %v1022 = vmul.f32 %v878, %v1006
      %v1023 = vmul.f32 %v879, %v1007
      %v1024 = vmul.f32 %v880, %v1008
      %v1025 = vpack.c.bf16 %v1010, %v1009
      %v1026 = vpack.c.bf16 %v1012, %v1011
      %v1027 = vpack.c.bf16 %v1014, %v1013
      %v1028 = vpack.c.bf16 %v1016, %v1015
      %v1029 = vpack.c.bf16 %v1018, %v1017
      %v1030 = vpack.c.bf16 %v1020, %v1019
      %v1031 = vpack.c.bf16 %v1022, %v1021
      %v1032 = vpack.c.bf16 %v1024, %v1023
      %v1033 = vld [vmem:[%s2 + $0x60] sm:$0xf]
      %v1034 = vld [vmem:[%s2 + $0x64] sm:$0xf]
      %v1035 = vlaneseq
      %v1036 = vshrl.u32 %v1035, 7
      %v1037 = vsub.s32 0, %v1036
      %v1038 = vrot.slane %v279, %v1037
      %v1041 = vunpack.c.l.b16 %v1033
      %v1042 = vunpack.c.l.b16 %v1034
      %v1043 = vpack.c.b16 %v1042, %v1041
      %vm1045 = vcmask 130048
      %v1047 = vsel %vm1045, %v1025, 0
      %v1050 = vsel %vm1045, %v1026, 0
      %v1053 = vsel %vm1045, %v1027, 0
      %v1056 = vsel %vm1045, %v1028, 0
      %v1059 = vsel %vm1045, %v1029, 0
      %v1062 = vsel %vm1045, %v1030, 0
      %v1065 = vsel %vm1045, %v1031, 0
      %v1068 = vsel %vm1045, %v1032, 0
      %1070 = vmatprep.subr.bf16.mxu0 0
      %1071 = vmatpush1.bf16.msra.mxu0 0
      %1072 = vmatprep.subr.bf16.mxu0 0
      %1073 = vmatpush1.bf16.msra.mxu0 0
      %1074 = vmatprep.subr.bf16.mxu0 0
      %1075 = vmatpush1.bf16.msra.mxu0 0
      %1076 = vmatprep.subr.bf16.mxu0 0
      %1077 = vmatpush1.bf16.msra.mxu0 0
      %1078 = vmatprep.subr.bf16.mxu0 0
      %1079 = vmatpush1.bf16.msra.mxu0 0
      %1080 = vmatprep.subr.bf16.mxu0 0
      %1081 = vmatpush1.bf16.msra.mxu0 0
      %1082 = vmatprep.subr.bf16.mxu0 0
      %1083 = vmatpush1.bf16.msra.mxu0 0
      %1084 = vmatprep.subr.bf16.mxu0 0
      %1085 = vmatpush1.bf16.msra.mxu0 %v1043
      %1086 = vmatprep.subr.bf16.mxu0 0
      %1087 = vmatpush2.bf16.msra.mxu0 0
      %1088 = vmatprep.subr.bf16.mxu0 0
      %1089 = vmatpush2.bf16.msra.mxu0 0
      %1090 = vmatprep.subr.bf16.mxu0 0
      %1091 = vmatpush2.bf16.msra.mxu0 0
      %1092 = vmatprep.subr.bf16.mxu0 0
      %1093 = vmatpush2.bf16.msra.mxu0 0
      %1094 = vmatprep.subr.bf16.mxu0 0
      %1095 = vmatpush2.bf16.msra.mxu0 0
      %1096 = vmatprep.subr.bf16.mxu0 0
      %1097 = vmatpush2.bf16.msra.mxu0 0
      %1098 = vmatprep.subr.bf16.mxu0 0
      %1099 = vmatpush2.bf16.msra.mxu0 0
      %1100 = vmatprep.subr.bf16.mxu0 0
      %1101 = vmatpush2.bf16.msra.mxu0 0
      %1102 = vmatprep.mubr.bf16.mxu0 0
      %1103 = vmatmul.mubr.bf16.gmra.mxu0 %v1047
      %v1104 = vpop.f32.mrf.mxu0
      %v1105 = vadd.f32 %v1038, %v1104
      %v1106 = vpop.f32.mrf.mxu0
      %v1107 = vpop.f32.mrf.mxu0
      %v1108 = vadd.f32 %v1038, %v1107
      %v1109 = vpop.f32.mrf.mxu0
      %1110 = vmatprep.mubr.bf16.mxu0 0
      %1111 = vmatmul.mubr.bf16.gmra.mxu0 %v1050
      %v1112 = vpop.f32.mrf.mxu0
      %v1113 = vadd.f32 %v1038, %v1112
      %v1114 = vpop.f32.mrf.mxu0
      %v1115 = vpop.f32.mrf.mxu0
      %v1116 = vadd.f32 %v1038, %v1115
      %v1117 = vpop.f32.mrf.mxu0
      %1118 = vmatprep.mubr.bf16.mxu0 0
      %1119 = vmatmul.mubr.bf16.gmra.mxu0 %v1053
      %v1120 = vpop.f32.mrf.mxu0
      %v1121 = vadd.f32 %v1038, %v1120
      %v1122 = vpop.f32.mrf.mxu0
      %v1123 = vpop.f32.mrf.mxu0
      %v1124 = vadd.f32 %v1038, %v1123
      %v1125 = vpop.f32.mrf.mxu0
      %1126 = vmatprep.mubr.bf16.mxu0 0
      %1127 = vmatmul.mubr.bf16.gmra.mxu0 %v1056
      %v1128 = vpop.f32.mrf.mxu0
      %v1129 = vadd.f32 %v1038, %v1128
      %v1130 = vpop.f32.mrf.mxu0
      %v1131 = vpop.f32.mrf.mxu0
      %v1132 = vadd.f32 %v1038, %v1131
      %v1133 = vpop.f32.mrf.mxu0
      %1134 = vmatprep.mubr.bf16.mxu0 0
      %1135 = vmatmul.mubr.bf16.gmra.mxu0 %v1059
      %v1136 = vpop.f32.mrf.mxu0
      %v1137 = vadd.f32 %v1038, %v1136
      %v1138 = vpop.f32.mrf.mxu0
      %v1139 = vpop.f32.mrf.mxu0
      %v1140 = vadd.f32 %v1038, %v1139
      %v1141 = vpop.f32.mrf.mxu0
      %1142 = vmatprep.mubr.bf16.mxu0 0
      %1143 = vmatmul.mubr.bf16.gmra.mxu0 %v1062
      %v1144 = vpop.f32.mrf.mxu0
      %v1145 = vadd.f32 %v1038, %v1144
      %v1146 = vpop.f32.mrf.mxu0
      %v1147 = vpop.f32.mrf.mxu0
      %v1148 = vadd.f32 %v1038, %v1147
      %v1149 = vpop.f32.mrf.mxu0
      %1150 = vmatprep.mubr.bf16.mxu0 0
      %1151 = vmatmul.mubr.bf16.gmra.mxu0 %v1065
      %v1152 = vpop.f32.mrf.mxu0
      %v1153 = vadd.f32 %v1038, %v1152
      %v1154 = vpop.f32.mrf.mxu0
      %v1155 = vpop.f32.mrf.mxu0
      %v1156 = vadd.f32 %v1038, %v1155
      %v1157 = vpop.f32.mrf.mxu0
      %1158 = vmatprep.mubr.bf16.mxu0 0
      %1159 = vmatmul.mubr.bf16.gmra.mxu0 %v1068
      %v1160 = vpop.f32.mrf.mxu0
      %v1161 = vadd.f32 %v1038, %v1160
      %v1162 = vpop.f32.mrf.mxu0
      %v1163 = vpop.f32.mrf.mxu0
      %v1164 = vadd.f32 %v1038, %v1163
      %v1165 = vpop.f32.mrf.mxu0
      %1166 = vdwg.mxu0
      %v1167 = vxor.u32 %v1105, 2147483648
      %v1168 = vxor.u32 %v1108, 2147483648
      %v1169 = vxor.u32 %v1113, 2147483648
      %v1170 = vxor.u32 %v1116, 2147483648
      %v1171 = vxor.u32 %v1121, 2147483648
      %v1172 = vxor.u32 %v1124, 2147483648
      %v1173 = vxor.u32 %v1129, 2147483648
      %v1174 = vxor.u32 %v1132, 2147483648
      %v1175 = vxor.u32 %v1137, 2147483648
      %v1176 = vxor.u32 %v1140, 2147483648
      %v1177 = vxor.u32 %v1145, 2147483648
      %v1178 = vxor.u32 %v1148, 2147483648
      %v1179 = vxor.u32 %v1153, 2147483648
      %v1180 = vxor.u32 %v1156, 2147483648
      %v1181 = vxor.u32 %v1161, 2147483648
      %v1182 = vxor.u32 %v1164, 2147483648
      %v1183 = vmul.f32 %v1167, 1.442695
      %v1184 = vpow.pop %v1183
      %v1185 = vmul.f32 %v1168, 1.442695
      %v1186 = vpow.pop %v1185
      %v1187 = vmul.f32 %v1169, 1.442695
      %v1188 = vpow.pop %v1187
      %v1189 = vmul.f32 %v1170, 1.442695
      %v1190 = vpow.pop %v1189
      %v1191 = vmul.f32 %v1171, 1.442695
      %v1192 = vpow.pop %v1191
      %v1193 = vmul.f32 %v1172, 1.442695
      %v1194 = vpow.pop %v1193
      %v1195 = vmul.f32 %v1173, 1.442695
      %v1196 = vpow.pop %v1195
      %v1197 = vmul.f32 %v1174, 1.442695
      %v1198 = vpow.pop %v1197
      %v1199 = vmul.f32 %v1175, 1.442695
      %v1200 = vpow.pop %v1199
      %v1201 = vmul.f32 %v1176, 1.442695
      %v1202 = vpow.pop %v1201
      %v1203 = vmul.f32 %v1177, 1.442695
      %v1204 = vpow.pop %v1203
      %v1205 = vmul.f32 %v1178, 1.442695
      %v1206 = vpow.pop %v1205
      %v1207 = vmul.f32 %v1179, 1.442695
      %v1208 = vpow.pop %v1207
      %v1209 = vmul.f32 %v1180, 1.442695
      %v1210 = vpow.pop %v1209
      %v1211 = vmul.f32 %v1181, 1.442695
      %v1212 = vpow.pop %v1211
      %v1213 = vmul.f32 %v1182, 1.442695
      %v1214 = vpow.pop %v1213
      %v1215 = vadd.f32 %v1184, 1.0
      %v1216 = vadd.f32 %v1186, 1.0
      %v1217 = vadd.f32 %v1188, 1.0
      %v1218 = vadd.f32 %v1190, 1.0
      %v1219 = vadd.f32 %v1192, 1.0
      %v1220 = vadd.f32 %v1194, 1.0
      %v1221 = vadd.f32 %v1196, 1.0
      %v1222 = vadd.f32 %v1198, 1.0
      %v1223 = vadd.f32 %v1200, 1.0
      %v1224 = vadd.f32 %v1202, 1.0
      %v1225 = vadd.f32 %v1204, 1.0
      %v1226 = vadd.f32 %v1206, 1.0
      %v1227 = vadd.f32 %v1208, 1.0
      %v1228 = vadd.f32 %v1210, 1.0
      %v1229 = vadd.f32 %v1212, 1.0
      %v1230 = vadd.f32 %v1214, 1.0
      %v1231 = vrcp.pop %v1215
      %v1232 = vmul.f32 1.0, %v1231
      %v1233 = vrcp.pop %v1216
      %v1234 = vmul.f32 1.0, %v1233
      %v1235 = vrcp.pop %v1217
      %v1236 = vmul.f32 1.0, %v1235
      %v1237 = vrcp.pop %v1218
      %v1238 = vmul.f32 1.0, %v1237
      %v1239 = vrcp.pop %v1219
      %v1240 = vmul.f32 1.0, %v1239
      %v1241 = vrcp.pop %v1220
      %v1242 = vmul.f32 1.0, %v1241
      %v1243 = vrcp.pop %v1221
      %v1244 = vmul.f32 1.0, %v1243
      %v1245 = vrcp.pop %v1222
      %v1246 = vmul.f32 1.0, %v1245
      %v1247 = vrcp.pop %v1223
      %v1248 = vmul.f32 1.0, %v1247
      %v1249 = vrcp.pop %v1224
      %v1250 = vmul.f32 1.0, %v1249
      %v1251 = vrcp.pop %v1225
      %v1252 = vmul.f32 1.0, %v1251
      %v1253 = vrcp.pop %v1226
      %v1254 = vmul.f32 1.0, %v1253
      %v1255 = vrcp.pop %v1227
      %v1256 = vmul.f32 1.0, %v1255
      %v1257 = vrcp.pop %v1228
      %v1258 = vmul.f32 1.0, %v1257
      %v1259 = vrcp.pop %v1229
      %v1260 = vmul.f32 1.0, %v1259
      %v1261 = vrcp.pop %v1230
      %v1262 = vmul.f32 1.0, %v1261
      %v1263 = vmul.f32 %v304, %v1232
      %v1264 = vmul.f32 %v305, %v1234
      %v1265 = vmul.f32 %v306, %v1236
      %v1266 = vmul.f32 %v307, %v1238
      %v1267 = vmul.f32 %v308, %v1240
      %v1268 = vmul.f32 %v309, %v1242
      %v1269 = vmul.f32 %v310, %v1244
      %v1270 = vmul.f32 %v311, %v1246
      %v1271 = vmul.f32 %v312, %v1248
      %v1272 = vmul.f32 %v313, %v1250
      %v1273 = vmul.f32 %v314, %v1252
      %v1274 = vmul.f32 %v315, %v1254
      %v1275 = vmul.f32 %v316, %v1256
      %v1276 = vmul.f32 %v317, %v1258
      %v1277 = vmul.f32 %v318, %v1260
      %v1278 = vmul.f32 %v319, %v1262
      %vm1279 = vcmask 523264
      %v1280 = vsel %vm1279, %v1263, 0.0
      %1281 = vadd.xlane.f32.xlu0 %v1280
      %v1282 = vpop.xlane.xlu0 %1281
      %v1283 = vsel %vm1279, %v1264, 0.0
      %1284 = vadd.xlane.f32.xlu0 %v1283
      %v1285 = vpop.xlane.xlu0 %1284
      %v1286 = vsel %vm1279, %v1265, 0.0
      %1287 = vadd.xlane.f32.xlu0 %v1286
      %v1288 = vpop.xlane.xlu0 %1287
      %v1289 = vsel %vm1279, %v1266, 0.0
      %1290 = vadd.xlane.f32.xlu0 %v1289
      %v1291 = vpop.xlane.xlu0 %1290
      %v1292 = vsel %vm1279, %v1267, 0.0
      %1293 = vadd.xlane.f32.xlu0 %v1292
      %v1294 = vpop.xlane.xlu0 %1293
      %v1295 = vsel %vm1279, %v1268, 0.0
      %1296 = vadd.xlane.f32.xlu0 %v1295
      %v1297 = vpop.xlane.xlu0 %1296
      %v1298 = vsel %vm1279, %v1269, 0.0
      %1299 = vadd.xlane.f32.xlu0 %v1298
      %v1300 = vpop.xlane.xlu0 %1299
      %v1301 = vsel %vm1279, %v1270, 0.0
      %1302 = vadd.xlane.f32.xlu0 %v1301
      %v1303 = vpop.xlane.xlu0 %1302
      %v1304 = vsel %vm1279, %v1271, 0.0
      %1305 = vadd.xlane.f32.xlu0 %v1304
      %v1306 = vpop.xlane.xlu0 %1305
      %v1307 = vsel %vm1279, %v1272, 0.0
      %1308 = vadd.xlane.f32.xlu0 %v1307
      %v1309 = vpop.xlane.xlu0 %1308
      %v1310 = vsel %vm1279, %v1273, 0.0
      %1311 = vadd.xlane.f32.xlu0 %v1310
      %v1312 = vpop.xlane.xlu0 %1311
      %v1313 = vsel %vm1279, %v1274, 0.0
      %1314 = vadd.xlane.f32.xlu0 %v1313
      %v1315 = vpop.xlane.xlu0 %1314
      %v1316 = vsel %vm1279, %v1275, 0.0
      %1317 = vadd.xlane.f32.xlu0 %v1316
      %v1318 = vpop.xlane.xlu0 %1317
      %v1319 = vsel %vm1279, %v1276, 0.0
      %1320 = vadd.xlane.f32.xlu0 %v1319
      %v1321 = vpop.xlane.xlu0 %1320
      %v1322 = vsel %vm1279, %v1277, 0.0
      %1323 = vadd.xlane.f32.xlu0 %v1322
      %v1324 = vpop.xlane.xlu0 %1323
      %v1325 = vsel %vm1279, %v1278, 0.0
      %1326 = vadd.xlane.f32.xlu0 %v1325
      %v1327 = vpop.xlane.xlu0 %1326
      %v1328 = vrcp.pop 64.0
      %v1329 = vmul.f32 %v1282, %v1328
      %v1330 = vmul.f32 %v1285, %v1328
      %v1331 = vmul.f32 %v1288, %v1328
      %v1332 = vmul.f32 %v1291, %v1328
      %v1333 = vmul.f32 %v1294, %v1328
      %v1334 = vmul.f32 %v1297, %v1328
      %v1335 = vmul.f32 %v1300, %v1328
      %v1336 = vmul.f32 %v1303, %v1328
      %v1337 = vmul.f32 %v1306, %v1328
      %v1338 = vmul.f32 %v1309, %v1328
      %v1339 = vmul.f32 %v1312, %v1328
      %v1340 = vmul.f32 %v1315, %v1328
      %v1341 = vmul.f32 %v1318, %v1328
      %v1342 = vmul.f32 %v1321, %v1328
      %v1343 = vmul.f32 %v1324, %v1328
      %v1344 = vmul.f32 %v1327, %v1328
      %v1345 = vsub.f32 %v1263, %v1329
      %v1346 = vsub.f32 %v1264, %v1330
      %v1347 = vsub.f32 %v1265, %v1331
      %v1348 = vsub.f32 %v1266, %v1332
      %v1349 = vsub.f32 %v1267, %v1333
      %v1350 = vsub.f32 %v1268, %v1334
      %v1351 = vsub.f32 %v1269, %v1335
      %v1352 = vsub.f32 %v1270, %v1336
      %v1353 = vsub.f32 %v1271, %v1337
      %v1354 = vsub.f32 %v1272, %v1338
      %v1355 = vsub.f32 %v1273, %v1339
      %v1356 = vsub.f32 %v1274, %v1340
      %v1357 = vsub.f32 %v1275, %v1341
      %v1358 = vsub.f32 %v1276, %v1342
      %v1359 = vsub.f32 %v1277, %v1343
      %v1360 = vsub.f32 %v1278, %v1344
      %v1361 = vmul.f32 %v1345, %v1345
      %v1362 = vmul.f32 %v1346, %v1346
      %v1363 = vmul.f32 %v1347, %v1347
      %v1364 = vmul.f32 %v1348, %v1348
      %v1365 = vmul.f32 %v1349, %v1349
      %v1366 = vmul.f32 %v1350, %v1350
      %v1367 = vmul.f32 %v1351, %v1351
      %v1368 = vmul.f32 %v1352, %v1352
      %v1369 = vmul.f32 %v1353, %v1353
      %v1370 = vmul.f32 %v1354, %v1354
      %v1371 = vmul.f32 %v1355, %v1355
      %v1372 = vmul.f32 %v1356, %v1356
      %v1373 = vmul.f32 %v1357, %v1357
      %v1374 = vmul.f32 %v1358, %v1358
      %v1375 = vmul.f32 %v1359, %v1359
      %v1376 = vmul.f32 %v1360, %v1360
      %v1377 = vsel %vm1279, %v1361, 0.0
      %1378 = vadd.xlane.f32.xlu0 %v1377
      %v1379 = vpop.xlane.xlu0 %1378
      %v1380 = vsel %vm1279, %v1362, 0.0
      %1381 = vadd.xlane.f32.xlu0 %v1380
      %v1382 = vpop.xlane.xlu0 %1381
      %v1383 = vsel %vm1279, %v1363, 0.0
      %1384 = vadd.xlane.f32.xlu0 %v1383
      %v1385 = vpop.xlane.xlu0 %1384
      %v1386 = vsel %vm1279, %v1364, 0.0
      %1387 = vadd.xlane.f32.xlu0 %v1386
      %v1388 = vpop.xlane.xlu0 %1387
      %v1389 = vsel %vm1279, %v1365, 0.0
      %1390 = vadd.xlane.f32.xlu0 %v1389
      %v1391 = vpop.xlane.xlu0 %1390
      %v1392 = vsel %vm1279, %v1366, 0.0
      %1393 = vadd.xlane.f32.xlu0 %v1392
      %v1394 = vpop.xlane.xlu0 %1393
      %v1395 = vsel %vm1279, %v1367, 0.0
      %1396 = vadd.xlane.f32.xlu0 %v1395
      %v1397 = vpop.xlane.xlu0 %1396
      %v1398 = vsel %vm1279, %v1368, 0.0
      %1399 = vadd.xlane.f32.xlu0 %v1398
      %v1400 = vpop.xlane.xlu0 %1399
      %v1401 = vsel %vm1279, %v1369, 0.0
      %1402 = vadd.xlane.f32.xlu0 %v1401
      %v1403 = vpop.xlane.xlu0 %1402
      %v1404 = vsel %vm1279, %v1370, 0.0
      %1405 = vadd.xlane.f32.xlu0 %v1404
      %v1406 = vpop.xlane.xlu0 %1405
      %v1407 = vsel %vm1279, %v1371, 0.0
      %1408 = vadd.xlane.f32.xlu0 %v1407
      %v1409 = vpop.xlane.xlu0 %1408
      %v1410 = vsel %vm1279, %v1372, 0.0
      %1411 = vadd.xlane.f32.xlu0 %v1410
      %v1412 = vpop.xlane.xlu0 %1411
      %v1413 = vsel %vm1279, %v1373, 0.0
      %1414 = vadd.xlane.f32.xlu0 %v1413
      %v1415 = vpop.xlane.xlu0 %1414
      %v1416 = vsel %vm1279, %v1374, 0.0
      %1417 = vadd.xlane.f32.xlu0 %v1416
      %v1418 = vpop.xlane.xlu0 %1417
      %v1419 = vsel %vm1279, %v1375, 0.0
      %1420 = vadd.xlane.f32.xlu0 %v1419
      %v1421 = vpop.xlane.xlu0 %1420
      %v1422 = vsel %vm1279, %v1376, 0.0
      %1423 = vadd.xlane.f32.xlu0 %v1422
      %v1424 = vpop.xlane.xlu0 %1423
      %v1425 = vmul.f32 %v1379, %v1328
      %v1426 = vmul.f32 %v1382, %v1328
      %v1427 = vmul.f32 %v1385, %v1328
      %v1428 = vmul.f32 %v1388, %v1328
      %v1429 = vmul.f32 %v1391, %v1328
      %v1430 = vmul.f32 %v1394, %v1328
      %v1431 = vmul.f32 %v1397, %v1328
      %v1432 = vmul.f32 %v1400, %v1328
      %v1433 = vmul.f32 %v1403, %v1328
      %v1434 = vmul.f32 %v1406, %v1328
      %v1435 = vmul.f32 %v1409, %v1328
      %v1436 = vmul.f32 %v1412, %v1328
      %v1437 = vmul.f32 %v1415, %v1328
      %v1438 = vmul.f32 %v1418, %v1328
      %v1439 = vmul.f32 %v1421, %v1328
      %v1440 = vmul.f32 %v1424, %v1328
      %v1441 = vadd.f32 %v1425, 1e-05
      %v1442 = vadd.f32 %v1426, 1e-05
      %v1443 = vadd.f32 %v1427, 1e-05
      %v1444 = vadd.f32 %v1428, 1e-05
      %v1445 = vadd.f32 %v1429, 1e-05
      %v1446 = vadd.f32 %v1430, 1e-05
      %v1447 = vadd.f32 %v1431, 1e-05
      %v1448 = vadd.f32 %v1432, 1e-05
      %v1449 = vadd.f32 %v1433, 1e-05
      %v1450 = vadd.f32 %v1434, 1e-05
      %v1451 = vadd.f32 %v1435, 1e-05
      %v1452 = vadd.f32 %v1436, 1e-05
      %v1453 = vadd.f32 %v1437, 1e-05
      %v1454 = vadd.f32 %v1438, 1e-05
      %v1455 = vadd.f32 %v1439, 1e-05
      %v1456 = vadd.f32 %v1440, 1e-05
      %v1457 = vrsqrt.pop %v1441
      %v1458 = vrsqrt.pop %v1442
      %v1459 = vrsqrt.pop %v1443
      %v1460 = vrsqrt.pop %v1444
      %v1461 = vrsqrt.pop %v1445
      %v1462 = vrsqrt.pop %v1446
      %v1463 = vrsqrt.pop %v1447
      %v1464 = vrsqrt.pop %v1448
      %v1465 = vrsqrt.pop %v1449
      %v1466 = vrsqrt.pop %v1450
      %v1467 = vrsqrt.pop %v1451
      %v1468 = vrsqrt.pop %v1452
      %v1469 = vrsqrt.pop %v1453
      %v1470 = vrsqrt.pop %v1454
      %v1471 = vrsqrt.pop %v1455
      %v1472 = vrsqrt.pop %v1456
      %v1473 = vmul.f32 %v1345, %v1457
      %v1474 = vmul.f32 %v1346, %v1458
      %v1475 = vmul.f32 %v1347, %v1459
      %v1476 = vmul.f32 %v1348, %v1460
      %v1477 = vmul.f32 %v1349, %v1461
      %v1478 = vmul.f32 %v1350, %v1462
      %v1479 = vmul.f32 %v1351, %v1463
      %v1480 = vmul.f32 %v1352, %v1464
      %v1481 = vmul.f32 %v1353, %v1465
      %v1482 = vmul.f32 %v1354, %v1466
      %v1483 = vmul.f32 %v1355, %v1467
      %v1484 = vmul.f32 %v1356, %v1468
      %v1485 = vmul.f32 %v1357, %v1469
      %v1486 = vmul.f32 %v1358, %v1470
      %v1487 = vmul.f32 %v1359, %v1471
      %v1488 = vmul.f32 %v1360, %v1472
      %v1489 = vlaneseq
      %v1490 = vshrl.u32 %v1489, 7
      %v1491 = vsub.s32 0, %v1490
      %v1492 = vrot.slane %v280, %v1491
      %v1493 = vmul.f32 %v1473, %v1492
      %v1494 = vmul.f32 %v1474, %v1492
      %v1495 = vmul.f32 %v1475, %v1492
      %v1496 = vmul.f32 %v1476, %v1492
      %v1497 = vmul.f32 %v1477, %v1492
      %v1498 = vmul.f32 %v1478, %v1492
      %v1499 = vmul.f32 %v1479, %v1492
      %v1500 = vmul.f32 %v1480, %v1492
      %v1501 = vmul.f32 %v1481, %v1492
      %v1502 = vmul.f32 %v1482, %v1492
      %v1503 = vmul.f32 %v1483, %v1492
      %v1504 = vmul.f32 %v1484, %v1492
      %v1505 = vmul.f32 %v1485, %v1492
      %v1506 = vmul.f32 %v1486, %v1492
      %v1507 = vmul.f32 %v1487, %v1492
      %v1508 = vmul.f32 %v1488, %v1492
      %v1509 = vlaneseq
      %v1510 = vshrl.u32 %v1509, 7
      %v1511 = vsub.s32 0, %v1510
      %v1512 = vrot.slane %v281, %v1511
      %v1513 = vadd.f32 %v1493, %v1512
      %v1514 = vadd.f32 %v1494, %v1512
      %v1515 = vadd.f32 %v1495, %v1512
      %v1516 = vadd.f32 %v1496, %v1512
      %v1517 = vadd.f32 %v1497, %v1512
      %v1518 = vadd.f32 %v1498, %v1512
      %v1519 = vadd.f32 %v1499, %v1512
      %v1520 = vadd.f32 %v1500, %v1512
      %v1521 = vadd.f32 %v1501, %v1512
      %v1522 = vadd.f32 %v1502, %v1512
      %v1523 = vadd.f32 %v1503, %v1512
      %v1524 = vadd.f32 %v1504, %v1512
      %v1525 = vadd.f32 %v1505, %v1512
      %v1526 = vadd.f32 %v1506, %v1512
      %v1527 = vadd.f32 %v1507, %v1512
      %v1528 = vadd.f32 %v1508, %v1512
      %v1529 = vpack.c.bf16 %v1514, %v1513
      %v1530 = vpack.c.bf16 %v1516, %v1515
      %v1531 = vpack.c.bf16 %v1518, %v1517
      %v1532 = vpack.c.bf16 %v1520, %v1519
      %v1533 = vpack.c.bf16 %v1522, %v1521
      %v1534 = vpack.c.bf16 %v1524, %v1523
      %v1535 = vpack.c.bf16 %v1526, %v1525
      %v1536 = vpack.c.bf16 %v1528, %v1527
      %v1537 = vld [vmem:[%s2] sm:$0xf]
      %v1538 = vld [vmem:[%s2 + $0x4] sm:$0xf]
      %v1539 = vld [vmem:[%s2 + $0x8] sm:$0xf]
      %v1540 = vld [vmem:[%s2 + $0xc] sm:$0xf]
      %v1541 = vld [vmem:[%s2 + $0x10] sm:$0xf]
      %v1542 = vld [vmem:[%s2 + $0x14] sm:$0xf]
      %v1543 = vld [vmem:[%s2 + $0x18] sm:$0xf]
      %v1544 = vld [vmem:[%s2 + $0x1c] sm:$0xf]
      %v1545 = vlaneseq
      %v1546 = vshrl.u32 %v1545, 7
      %v1547 = vsub.s32 0, %v1546
      %v1548 = vrot.slane %v282, %v1547
      %v1557 = vunpack.c.l.b16 %v1537
      %v1558 = vunpack.c.l.b16 %v1538
      %v1559 = vunpack.c.l.b16 %v1539
      %v1560 = vunpack.c.l.b16 %v1540
      %v1561 = vunpack.c.l.b16 %v1541
      %v1562 = vunpack.c.l.b16 %v1542
      %v1563 = vunpack.c.l.b16 %v1543
      %v1564 = vunpack.c.l.b16 %v1544
      %v1565 = vpack.c.b16 %v1558, %v1557
      %v1566 = vpack.c.b16 %v1560, %v1559
      %v1567 = vpack.c.b16 %v1562, %v1561
      %v1568 = vpack.c.b16 %v1564, %v1563
      %v1574 = vsel %vm1279, %v1529, 0
      %v1577 = vsel %vm1279, %v1530, 0
      %v1580 = vsel %vm1279, %v1531, 0
      %v1583 = vsel %vm1279, %v1532, 0
      %v1586 = vsel %vm1279, %v1533, 0
      %v1589 = vsel %vm1279, %v1534, 0
      %v1592 = vsel %vm1279, %v1535, 0
      %v1595 = vsel %vm1279, %v1536, 0
      %1597 = vmatprep.subr.bf16.mxu0 0
      %1598 = vmatpush1.bf16.msra.mxu0 0
      %1599 = vmatprep.subr.bf16.mxu0 0
      %1600 = vmatpush1.bf16.msra.mxu0 0
      %1601 = vmatprep.subr.bf16.mxu0 0
      %1602 = vmatpush1.bf16.msra.mxu0 0
      %1603 = vmatprep.subr.bf16.mxu0 0
      %1604 = vmatpush1.bf16.msra.mxu0 0
      %1605 = vmatprep.subr.bf16.mxu0 0
      %1606 = vmatpush1.bf16.msra.mxu0 %v1568
      %1607 = vmatprep.subr.bf16.mxu0 0
      %1608 = vmatpush1.bf16.msra.mxu0 %v1567
      %1609 = vmatprep.subr.bf16.mxu0 0
      %1610 = vmatpush1.bf16.msra.mxu0 %v1566
      %1611 = vmatprep.subr.bf16.mxu0 0
      %1612 = vmatpush1.bf16.msra.mxu0 %v1565
      %1613 = vmatprep.subr.bf16.mxu0 0
      %1614 = vmatpush2.bf16.msra.mxu0 0
      %1615 = vmatprep.subr.bf16.mxu0 0
      %1616 = vmatpush2.bf16.msra.mxu0 0
      %1617 = vmatprep.subr.bf16.mxu0 0
      %1618 = vmatpush2.bf16.msra.mxu0 0
      %1619 = vmatprep.subr.bf16.mxu0 0
      %1620 = vmatpush2.bf16.msra.mxu0 0
      %1621 = vmatprep.subr.bf16.mxu0 0
      %1622 = vmatpush2.bf16.msra.mxu0 0
      %1623 = vmatprep.subr.bf16.mxu0 0
      %1624 = vmatpush2.bf16.msra.mxu0 0
      %1625 = vmatprep.subr.bf16.mxu0 0
      %1626 = vmatpush2.bf16.msra.mxu0 0
      %1627 = vmatprep.subr.bf16.mxu0 0
      %1628 = vmatpush2.bf16.msra.mxu0 0
      %1629 = vmatprep.mubr.bf16.mxu0 0
      %1630 = vmatmul.mubr.bf16.gmra.mxu0 %v1574
      %v1631 = vpop.f32.mrf.mxu0
      %v1632 = vadd.f32 %v1548, %v1631
      %v1633 = vpop.f32.mrf.mxu0
      %v1634 = vpop.f32.mrf.mxu0
      %v1635 = vadd.f32 %v1548, %v1634
      %v1636 = vpop.f32.mrf.mxu0
      %1637 = vmatprep.mubr.bf16.mxu0 0
      %1638 = vmatmul.mubr.bf16.gmra.mxu0 %v1577
      %v1639 = vpop.f32.mrf.mxu0
      %v1640 = vadd.f32 %v1548, %v1639
      %v1641 = vpop.f32.mrf.mxu0
      %v1642 = vpop.f32.mrf.mxu0
      %v1643 = vadd.f32 %v1548, %v1642
      %v1644 = vpop.f32.mrf.mxu0
      %1645 = vmatprep.mubr.bf16.mxu0 0
      %1646 = vmatmul.mubr.bf16.gmra.mxu0 %v1580
      %v1647 = vpop.f32.mrf.mxu0
      %v1648 = vadd.f32 %v1548, %v1647
      %v1649 = vpop.f32.mrf.mxu0
      %v1650 = vpop.f32.mrf.mxu0
      %v1651 = vadd.f32 %v1548, %v1650
      %v1652 = vpop.f32.mrf.mxu0
      %1653 = vmatprep.mubr.bf16.mxu0 0
      %1654 = vmatmul.mubr.bf16.gmra.mxu0 %v1583
      %v1655 = vpop.f32.mrf.mxu0
      %v1656 = vadd.f32 %v1548, %v1655
      %v1657 = vpop.f32.mrf.mxu0
      %v1658 = vpop.f32.mrf.mxu0
      %v1659 = vadd.f32 %v1548, %v1658
      %v1660 = vpop.f32.mrf.mxu0
      %1661 = vmatprep.mubr.bf16.mxu0 0
      %1662 = vmatmul.mubr.bf16.gmra.mxu0 %v1586
      %v1663 = vpop.f32.mrf.mxu0
      %v1664 = vadd.f32 %v1548, %v1663
      %v1665 = vpop.f32.mrf.mxu0
      %v1666 = vpop.f32.mrf.mxu0
      %v1667 = vadd.f32 %v1548, %v1666
      %v1668 = vpop.f32.mrf.mxu0
      %1669 = vmatprep.mubr.bf16.mxu0 0
      %1670 = vmatmul.mubr.bf16.gmra.mxu0 %v1589
      %v1671 = vpop.f32.mrf.mxu0
      %v1672 = vadd.f32 %v1548, %v1671
      %v1673 = vpop.f32.mrf.mxu0
      %v1674 = vpop.f32.mrf.mxu0
      %v1675 = vadd.f32 %v1548, %v1674
      %v1676 = vpop.f32.mrf.mxu0
      %1677 = vmatprep.mubr.bf16.mxu0 0
      %1678 = vmatmul.mubr.bf16.gmra.mxu0 %v1592
      %v1679 = vpop.f32.mrf.mxu0
      %v1680 = vadd.f32 %v1548, %v1679
      %v1681 = vpop.f32.mrf.mxu0
      %v1682 = vpop.f32.mrf.mxu0
      %v1683 = vadd.f32 %v1548, %v1682
      %v1684 = vpop.f32.mrf.mxu0
      %1685 = vmatprep.mubr.bf16.mxu0 0
      %1686 = vmatmul.mubr.bf16.gmra.mxu0 %v1595
      %v1687 = vpop.f32.mrf.mxu0
      %v1688 = vadd.f32 %v1548, %v1687
      %v1689 = vpop.f32.mrf.mxu0
      %v1690 = vpop.f32.mrf.mxu0
      %v1691 = vadd.f32 %v1548, %v1690
      %v1692 = vpop.f32.mrf.mxu0
      %1693 = vdwg.mxu0
      %v1694 = vmul.f32 %v1632, %v1632
      %v1695 = vmul.f32 %v1635, %v1635
      %v1696 = vmul.f32 %v1640, %v1640
      %v1697 = vmul.f32 %v1643, %v1643
      %v1698 = vmul.f32 %v1648, %v1648
      %v1699 = vmul.f32 %v1651, %v1651
      %v1700 = vmul.f32 %v1656, %v1656
      %v1701 = vmul.f32 %v1659, %v1659
      %v1702 = vmul.f32 %v1664, %v1664
      %v1703 = vmul.f32 %v1667, %v1667
      %v1704 = vmul.f32 %v1672, %v1672
      %v1705 = vmul.f32 %v1675, %v1675
      %v1706 = vmul.f32 %v1680, %v1680
      %v1707 = vmul.f32 %v1683, %v1683
      %v1708 = vmul.f32 %v1688, %v1688
      %v1709 = vmul.f32 %v1691, %v1691
      %v1710 = vmul.f32 %v1632, %v1694
      %v1711 = vmul.f32 %v1635, %v1695
      %v1712 = vmul.f32 %v1640, %v1696
      %v1713 = vmul.f32 %v1643, %v1697
      %v1714 = vmul.f32 %v1648, %v1698
      %v1715 = vmul.f32 %v1651, %v1699
      %v1716 = vmul.f32 %v1656, %v1700
      %v1717 = vmul.f32 %v1659, %v1701
      %v1718 = vmul.f32 %v1664, %v1702
      %v1719 = vmul.f32 %v1667, %v1703
      %v1720 = vmul.f32 %v1672, %v1704
      %v1721 = vmul.f32 %v1675, %v1705
      %v1722 = vmul.f32 %v1680, %v1706
      %v1723 = vmul.f32 %v1683, %v1707
      %v1724 = vmul.f32 %v1688, %v1708
      %v1725 = vmul.f32 %v1691, %v1709
      %v1726 = vmul.f32 %v1710, 0.044715
      %v1727 = vmul.f32 %v1711, 0.044715
      %v1728 = vmul.f32 %v1712, 0.044715
      %v1729 = vmul.f32 %v1713, 0.044715
      %v1730 = vmul.f32 %v1714, 0.044715
      %v1731 = vmul.f32 %v1715, 0.044715
      %v1732 = vmul.f32 %v1716, 0.044715
      %v1733 = vmul.f32 %v1717, 0.044715
      %v1734 = vmul.f32 %v1718, 0.044715
      %v1735 = vmul.f32 %v1719, 0.044715
      %v1736 = vmul.f32 %v1720, 0.044715
      %v1737 = vmul.f32 %v1721, 0.044715
      %v1738 = vmul.f32 %v1722, 0.044715
      %v1739 = vmul.f32 %v1723, 0.044715
      %v1740 = vmul.f32 %v1724, 0.044715
      %v1741 = vmul.f32 %v1725, 0.044715
      %v1742 = vadd.f32 %v1632, %v1726
      %v1743 = vadd.f32 %v1635, %v1727
      %v1744 = vadd.f32 %v1640, %v1728
      %v1745 = vadd.f32 %v1643, %v1729
      %v1746 = vadd.f32 %v1648, %v1730
      %v1747 = vadd.f32 %v1651, %v1731
      %v1748 = vadd.f32 %v1656, %v1732
      %v1749 = vadd.f32 %v1659, %v1733
      %v1750 = vadd.f32 %v1664, %v1734
      %v1751 = vadd.f32 %v1667, %v1735
      %v1752 = vadd.f32 %v1672, %v1736
      %v1753 = vadd.f32 %v1675, %v1737
      %v1754 = vadd.f32 %v1680, %v1738
      %v1755 = vadd.f32 %v1683, %v1739
      %v1756 = vadd.f32 %v1688, %v1740
      %v1757 = vadd.f32 %v1691, %v1741
      %v1758 = vmul.f32 %v1742, 0.7978846
      %v1759 = vmul.f32 %v1743, 0.7978846
      %v1760 = vmul.f32 %v1744, 0.7978846
      %v1761 = vmul.f32 %v1745, 0.7978846
      %v1762 = vmul.f32 %v1746, 0.7978846
      %v1763 = vmul.f32 %v1747, 0.7978846
      %v1764 = vmul.f32 %v1748, 0.7978846
      %v1765 = vmul.f32 %v1749, 0.7978846
      %v1766 = vmul.f32 %v1750, 0.7978846
      %v1767 = vmul.f32 %v1751, 0.7978846
      %v1768 = vmul.f32 %v1752, 0.7978846
      %v1769 = vmul.f32 %v1753, 0.7978846
      %v1770 = vmul.f32 %v1754, 0.7978846
      %v1771 = vmul.f32 %v1755, 0.7978846
      %v1772 = vmul.f32 %v1756, 0.7978846
      %v1773 = vmul.f32 %v1757, 0.7978846
      %v1774 = vtanh.pop %v1758
      %v1775 = vtanh.pop %v1759
      %v1776 = vtanh.pop %v1760
      %v1777 = vtanh.pop %v1761
      %v1778 = vtanh.pop %v1762
      %v1779 = vtanh.pop %v1763
      %v1780 = vtanh.pop %v1764
      %v1781 = vtanh.pop %v1765
      %v1782 = vtanh.pop %v1766
      %v1783 = vtanh.pop %v1767
      %v1784 = vtanh.pop %v1768
      %v1785 = vtanh.pop %v1769
      %v1786 = vtanh.pop %v1770
      %v1787 = vtanh.pop %v1771
      %v1788 = vtanh.pop %v1772
      %v1789 = vtanh.pop %v1773
      %v1790 = vadd.f32 %v1774, 1.0
      %v1791 = vadd.f32 %v1775, 1.0
      %v1792 = vadd.f32 %v1776, 1.0
      %v1793 = vadd.f32 %v1777, 1.0
      %v1794 = vadd.f32 %v1778, 1.0
      %v1795 = vadd.f32 %v1779, 1.0
      %v1796 = vadd.f32 %v1780, 1.0
      %v1797 = vadd.f32 %v1781, 1.0
      %v1798 = vadd.f32 %v1782, 1.0
      %v1799 = vadd.f32 %v1783, 1.0
      %v1800 = vadd.f32 %v1784, 1.0
      %v1801 = vadd.f32 %v1785, 1.0
      %v1802 = vadd.f32 %v1786, 1.0
      %v1803 = vadd.f32 %v1787, 1.0
      %v1804 = vadd.f32 %v1788, 1.0
      %v1805 = vadd.f32 %v1789, 1.0
      %v1806 = vmul.f32 %v1790, 0.5
      %v1807 = vmul.f32 %v1791, 0.5
      %v1808 = vmul.f32 %v1792, 0.5
      %v1809 = vmul.f32 %v1793, 0.5
      %v1810 = vmul.f32 %v1794, 0.5
      %v1811 = vmul.f32 %v1795, 0.5
      %v1812 = vmul.f32 %v1796, 0.5
      %v1813 = vmul.f32 %v1797, 0.5
      %v1814 = vmul.f32 %v1798, 0.5
      %v1815 = vmul.f32 %v1799, 0.5
      %v1816 = vmul.f32 %v1800, 0.5
      %v1817 = vmul.f32 %v1801, 0.5
      %v1818 = vmul.f32 %v1802, 0.5
      %v1819 = vmul.f32 %v1803, 0.5
      %v1820 = vmul.f32 %v1804, 0.5
      %v1821 = vmul.f32 %v1805, 0.5
      %v1822 = vmul.f32 %v1632, %v1806
      %v1823 = vmul.f32 %v1635, %v1807
      %v1824 = vmul.f32 %v1640, %v1808
      %v1825 = vmul.f32 %v1643, %v1809
      %v1826 = vmul.f32 %v1648, %v1810
      %v1827 = vmul.f32 %v1651, %v1811
      %v1828 = vmul.f32 %v1656, %v1812
      %v1829 = vmul.f32 %v1659, %v1813
      %v1830 = vmul.f32 %v1664, %v1814
      %v1831 = vmul.f32 %v1667, %v1815
      %v1832 = vmul.f32 %v1672, %v1816
      %v1833 = vmul.f32 %v1675, %v1817
      %v1834 = vmul.f32 %v1680, %v1818
      %v1835 = vmul.f32 %v1683, %v1819
      %v1836 = vmul.f32 %v1688, %v1820
      %v1837 = vmul.f32 %v1691, %v1821
      %v1838 = vpack.c.bf16 %v1823, %v1822
      %v1839 = vpack.c.bf16 %v1825, %v1824
      %v1840 = vpack.c.bf16 %v1827, %v1826
      %v1841 = vpack.c.bf16 %v1829, %v1828
      %v1842 = vpack.c.bf16 %v1831, %v1830
      %v1843 = vpack.c.bf16 %v1833, %v1832
      %v1844 = vpack.c.bf16 %v1835, %v1834
      %v1845 = vpack.c.bf16 %v1837, %v1836
      %v1846 = vld [vmem:[%s2 + $0x20] sm:$0xf]
      %v1847 = vld [vmem:[%s2 + $0x24] sm:$0xf]
      %v1848 = vld [vmem:[%s2 + $0x28] sm:$0xf]
      %v1849 = vld [vmem:[%s2 + $0x2c] sm:$0xf]
      %v1850 = vld [vmem:[%s2 + $0x30] sm:$0xf]
      %v1851 = vld [vmem:[%s2 + $0x34] sm:$0xf]
      %v1852 = vld [vmem:[%s2 + $0x38] sm:$0xf]
      %v1853 = vld [vmem:[%s2 + $0x3c] sm:$0xf]
      %v1854 = vld [vmem:[%s2 + $0x40] sm:$0xf]
      %v1855 = vld [vmem:[%s2 + $0x44] sm:$0xf]
      %v1856 = vld [vmem:[%s2 + $0x48] sm:$0xf]
      %v1857 = vld [vmem:[%s2 + $0x4c] sm:$0xf]
      %v1858 = vld [vmem:[%s2 + $0x50] sm:$0xf]
      %v1859 = vld [vmem:[%s2 + $0x54] sm:$0xf]
      %v1860 = vld [vmem:[%s2 + $0x58] sm:$0xf]
      %v1861 = vld [vmem:[%s2 + $0x5c] sm:$0xf]
      %v1862 = vlaneseq
      %v1863 = vshrl.u32 %v1862, 7
      %v1864 = vsub.s32 0, %v1863
      %v1865 = vrot.slane %v283, %v1864
      %v1882 = vunpack.c.l.b16 %v1846
      %v1883 = vunpack.c.l.b16 %v1847
      %v1884 = vunpack.c.l.b16 %v1848
      %v1885 = vunpack.c.l.b16 %v1849
      %v1886 = vunpack.c.l.b16 %v1850
      %v1887 = vunpack.c.l.b16 %v1851
      %v1888 = vunpack.c.l.b16 %v1852
      %v1889 = vunpack.c.l.b16 %v1853
      %v1890 = vunpack.c.l.b16 %v1854
      %v1891 = vunpack.c.l.b16 %v1855
      %v1892 = vunpack.c.l.b16 %v1856
      %v1893 = vunpack.c.l.b16 %v1857
      %v1894 = vunpack.c.l.b16 %v1858
      %v1895 = vunpack.c.l.b16 %v1859
      %v1896 = vunpack.c.l.b16 %v1860
      %v1897 = vunpack.c.l.b16 %v1861
      %v1898 = vpack.c.b16 %v1883, %v1882
      %v1899 = vpack.c.b16 %v1885, %v1884
      %v1900 = vpack.c.b16 %v1887, %v1886
      %v1901 = vpack.c.b16 %v1889, %v1888
      %v1902 = vpack.c.b16 %v1891, %v1890
      %v1903 = vpack.c.b16 %v1893, %v1892
      %v1904 = vpack.c.b16 %v1895, %v1894
      %v1905 = vpack.c.b16 %v1897, %v1896
      %1914 = vmatprep.subr.bf16.mxu0 0
      %1915 = vmatpush1.bf16.msra.mxu0 %v1905
      %1916 = vmatprep.subr.bf16.mxu0 0
      %1917 = vmatpush1.bf16.msra.mxu0 %v1904
      %1918 = vmatprep.subr.bf16.mxu0 0
      %1919 = vmatpush1.bf16.msra.mxu0 %v1903
      %1920 = vmatprep.subr.bf16.mxu0 0
      %1921 = vmatpush1.bf16.msra.mxu0 %v1902
      %1922 = vmatprep.subr.bf16.mxu0 0
      %1923 = vmatpush1.bf16.msra.mxu0 %v1901
      %1924 = vmatprep.subr.bf16.mxu0 0
      %1925 = vmatpush1.bf16.msra.mxu0 %v1900
      %1926 = vmatprep.subr.bf16.mxu0 0
      %1927 = vmatpush1.bf16.msra.mxu0 %v1899
      %1928 = vmatprep.subr.bf16.mxu0 0
      %1929 = vmatpush1.bf16.msra.mxu0 %v1898
      %1930 = vmatprep.subr.bf16.mxu0 0
      %1931 = vmatpush2.bf16.msra.mxu0 0
      %1932 = vmatprep.subr.bf16.mxu0 0
      %1933 = vmatpush2.bf16.msra.mxu0 0
      %1934 = vmatprep.subr.bf16.mxu0 0
      %1935 = vmatpush2.bf16.msra.mxu0 0
      %1936 = vmatprep.subr.bf16.mxu0 0
      %1937 = vmatpush2.bf16.msra.mxu0 0
      %1938 = vmatprep.subr.bf16.mxu0 0
      %1939 = vmatpush2.bf16.msra.mxu0 0
      %1940 = vmatprep.subr.bf16.mxu0 0
      %1941 = vmatpush2.bf16.msra.mxu0 0
      %1942 = vmatprep.subr.bf16.mxu0 0
      %1943 = vmatpush2.bf16.msra.mxu0 0
      %1944 = vmatprep.subr.bf16.mxu0 0
      %1945 = vmatpush2.bf16.msra.mxu0 0
      %1946 = vmatprep.mubr.bf16.mxu0 0
      %1947 = vmatmul.mubr.bf16.gmra.mxu0 %v1838
      %v1948 = vpop.f32.mrf.mxu0
      %v1949 = vadd.f32 %v1865, %v1948
      %v1950 = vpop.f32.mrf.mxu0
      %v1951 = vpop.f32.mrf.mxu0
      %v1952 = vadd.f32 %v1865, %v1951
      %v1953 = vpop.f32.mrf.mxu0
      %1954 = vmatprep.mubr.bf16.mxu0 0
      %1955 = vmatmul.mubr.bf16.gmra.mxu0 %v1839
      %v1956 = vpop.f32.mrf.mxu0
      %v1957 = vadd.f32 %v1865, %v1956
      %v1958 = vpop.f32.mrf.mxu0
      %v1959 = vpop.f32.mrf.mxu0
      %v1960 = vadd.f32 %v1865, %v1959
      %v1961 = vpop.f32.mrf.mxu0
      %1962 = vmatprep.mubr.bf16.mxu0 0
      %1963 = vmatmul.mubr.bf16.gmra.mxu0 %v1840
      %v1964 = vpop.f32.mrf.mxu0
      %v1965 = vadd.f32 %v1865, %v1964
      %v1966 = vpop.f32.mrf.mxu0
      %v1967 = vpop.f32.mrf.mxu0
      %v1968 = vadd.f32 %v1865, %v1967
      %v1969 = vpop.f32.mrf.mxu0
      %1970 = vmatprep.mubr.bf16.mxu0 0
      %1971 = vmatmul.mubr.bf16.gmra.mxu0 %v1841
      %v1972 = vpop.f32.mrf.mxu0
      %v1973 = vadd.f32 %v1865, %v1972
      %v1974 = vpop.f32.mrf.mxu0
      %v1975 = vpop.f32.mrf.mxu0
      %v1976 = vadd.f32 %v1865, %v1975
      %v1977 = vpop.f32.mrf.mxu0
      %1978 = vmatprep.mubr.bf16.mxu0 0
      %1979 = vmatmul.mubr.bf16.gmra.mxu0 %v1842
      %v1980 = vpop.f32.mrf.mxu0
      %v1981 = vadd.f32 %v1865, %v1980
      %v1982 = vpop.f32.mrf.mxu0
      %v1983 = vpop.f32.mrf.mxu0
      %v1984 = vadd.f32 %v1865, %v1983
      %v1985 = vpop.f32.mrf.mxu0
      %1986 = vmatprep.mubr.bf16.mxu0 0
      %1987 = vmatmul.mubr.bf16.gmra.mxu0 %v1843
      %v1988 = vpop.f32.mrf.mxu0
      %v1989 = vadd.f32 %v1865, %v1988
      %v1990 = vpop.f32.mrf.mxu0
      %v1991 = vpop.f32.mrf.mxu0
      %v1992 = vadd.f32 %v1865, %v1991
      %v1993 = vpop.f32.mrf.mxu0
      %1994 = vmatprep.mubr.bf16.mxu0 0
      %1995 = vmatmul.mubr.bf16.gmra.mxu0 %v1844
      %v1996 = vpop.f32.mrf.mxu0
      %v1997 = vadd.f32 %v1865, %v1996
      %v1998 = vpop.f32.mrf.mxu0
      %v1999 = vpop.f32.mrf.mxu0
      %v2000 = vadd.f32 %v1865, %v1999
      %v2001 = vpop.f32.mrf.mxu0
      %2002 = vmatprep.mubr.bf16.mxu0 0
      %2003 = vmatmul.mubr.bf16.gmra.mxu0 %v1845
      %v2004 = vpop.f32.mrf.mxu0
      %v2005 = vadd.f32 %v1865, %v2004
      %v2006 = vpop.f32.mrf.mxu0
      %v2007 = vpop.f32.mrf.mxu0
      %v2008 = vadd.f32 %v1865, %v2007
      %v2009 = vpop.f32.mrf.mxu0
      %2010 = vdwg.mxu0
      %vm2011 = vcmp.ge.f32.partialorder %v1949, 0.0
      %vm2012 = vcmp.ge.f32.partialorder %v1952, 0.0
      %vm2013 = vcmp.ge.f32.partialorder %v1957, 0.0
      %vm2014 = vcmp.ge.f32.partialorder %v1960, 0.0
      %vm2015 = vcmp.ge.f32.partialorder %v1965, 0.0
      %vm2016 = vcmp.ge.f32.partialorder %v1968, 0.0
      %vm2017 = vcmp.ge.f32.partialorder %v1973, 0.0
      %vm2018 = vcmp.ge.f32.partialorder %v1976, 0.0
      %vm2019 = vcmp.ge.f32.partialorder %v1981, 0.0
      %vm2020 = vcmp.ge.f32.partialorder %v1984, 0.0
      %vm2021 = vcmp.ge.f32.partialorder %v1989, 0.0
      %vm2022 = vcmp.ge.f32.partialorder %v1992, 0.0
      %vm2023 = vcmp.ge.f32.partialorder %v1997, 0.0
      %vm2024 = vcmp.ge.f32.partialorder %v2000, 0.0
      %vm2025 = vcmp.ge.f32.partialorder %v2005, 0.0
      %vm2026 = vcmp.ge.f32.partialorder %v2008, 0.0
      %v2027 = vmul.f32 %v1949, 0.1
      %v2028 = vmul.f32 %v1952, 0.1
      %v2029 = vmul.f32 %v1957, 0.1
      %v2030 = vmul.f32 %v1960, 0.1
      %v2031 = vmul.f32 %v1965, 0.1
      %v2032 = vmul.f32 %v1968, 0.1
      %v2033 = vmul.f32 %v1973, 0.1
      %v2034 = vmul.f32 %v1976, 0.1
      %v2035 = vmul.f32 %v1981, 0.1
      %v2036 = vmul.f32 %v1984, 0.1
      %v2037 = vmul.f32 %v1989, 0.1
      %v2038 = vmul.f32 %v1992, 0.1
      %v2039 = vmul.f32 %v1997, 0.1
      %v2040 = vmul.f32 %v2000, 0.1
      %v2041 = vmul.f32 %v2005, 0.1
      %v2042 = vmul.f32 %v2008, 0.1
      %v2043 = vsel %vm2011, %v1949, %v2027
      %v2044 = vsel %vm2012, %v1952, %v2028
      %v2045 = vsel %vm2013, %v1957, %v2029
      %v2046 = vsel %vm2014, %v1960, %v2030
      %v2047 = vsel %vm2015, %v1965, %v2031
      %v2048 = vsel %vm2016, %v1968, %v2032
      %v2049 = vsel %vm2017, %v1973, %v2033
      %v2050 = vsel %vm2018, %v1976, %v2034
      %v2051 = vsel %vm2019, %v1981, %v2035
      %v2052 = vsel %vm2020, %v1984, %v2036
      %v2053 = vsel %vm2021, %v1989, %v2037
      %v2054 = vsel %vm2022, %v1992, %v2038
      %v2055 = vsel %vm2023, %v1997, %v2039
      %v2056 = vsel %vm2024, %v2000, %v2040
      %v2057 = vsel %vm2025, %v2005, %v2041
      %v2058 = vsel %vm2026, %v2008, %v2042
      %v2059 = vadd.f32 %v1263, %v2043
      %v2060 = vadd.f32 %v1264, %v2044
      %v2061 = vadd.f32 %v1265, %v2045
      %v2062 = vadd.f32 %v1266, %v2046
      %v2063 = vadd.f32 %v1267, %v2047
      %v2064 = vadd.f32 %v1268, %v2048
      %v2065 = vadd.f32 %v1269, %v2049
      %v2066 = vadd.f32 %v1270, %v2050
      %v2067 = vadd.f32 %v1271, %v2051
      %v2068 = vadd.f32 %v1272, %v2052
      %v2069 = vadd.f32 %v1273, %v2053
      %v2070 = vadd.f32 %v1274, %v2054
      %v2071 = vadd.f32 %v1275, %v2055
      %v2072 = vadd.f32 %v1276, %v2056
      %v2073 = vadd.f32 %v1277, %v2057
      %v2074 = vadd.f32 %v1278, %v2058
      %v2075 = vsel %vm1279, %v2059, 0.0
      %2076 = vadd.xlane.f32.xlu0 %v2075
      %v2077 = vpop.xlane.xlu0 %2076
      %v2078 = vsel %vm1279, %v2060, 0.0
      %2079 = vadd.xlane.f32.xlu0 %v2078
      %v2080 = vpop.xlane.xlu0 %2079
      %v2081 = vsel %vm1279, %v2061, 0.0
      %2082 = vadd.xlane.f32.xlu0 %v2081
      %v2083 = vpop.xlane.xlu0 %2082
      %v2084 = vsel %vm1279, %v2062, 0.0
      %2085 = vadd.xlane.f32.xlu0 %v2084
      %v2086 = vpop.xlane.xlu0 %2085
      %v2087 = vsel %vm1279, %v2063, 0.0
      %2088 = vadd.xlane.f32.xlu0 %v2087
      %v2089 = vpop.xlane.xlu0 %2088
      %v2090 = vsel %vm1279, %v2064, 0.0
      %2091 = vadd.xlane.f32.xlu0 %v2090
      %v2092 = vpop.xlane.xlu0 %2091
      %v2093 = vsel %vm1279, %v2065, 0.0
      %2094 = vadd.xlane.f32.xlu0 %v2093
      %v2095 = vpop.xlane.xlu0 %2094
      %v2096 = vsel %vm1279, %v2066, 0.0
      %2097 = vadd.xlane.f32.xlu0 %v2096
      %v2098 = vpop.xlane.xlu0 %2097
      %v2099 = vsel %vm1279, %v2067, 0.0
      %2100 = vadd.xlane.f32.xlu0 %v2099
      %v2101 = vpop.xlane.xlu0 %2100
      %v2102 = vsel %vm1279, %v2068, 0.0
      %2103 = vadd.xlane.f32.xlu0 %v2102
      %v2104 = vpop.xlane.xlu0 %2103
      %v2105 = vsel %vm1279, %v2069, 0.0
      %2106 = vadd.xlane.f32.xlu0 %v2105
      %v2107 = vpop.xlane.xlu0 %2106
      %v2108 = vsel %vm1279, %v2070, 0.0
      %2109 = vadd.xlane.f32.xlu0 %v2108
      %v2110 = vpop.xlane.xlu0 %2109
      %v2111 = vsel %vm1279, %v2071, 0.0
      %2112 = vadd.xlane.f32.xlu0 %v2111
      %v2113 = vpop.xlane.xlu0 %2112
      %v2114 = vsel %vm1279, %v2072, 0.0
      %2115 = vadd.xlane.f32.xlu0 %v2114
      %v2116 = vpop.xlane.xlu0 %2115
      %v2117 = vsel %vm1279, %v2073, 0.0
      %2118 = vadd.xlane.f32.xlu0 %v2117
      %v2119 = vpop.xlane.xlu0 %2118
      %v2120 = vsel %vm1279, %v2074, 0.0
      %2121 = vadd.xlane.f32.xlu0 %v2120
      %v2122 = vpop.xlane.xlu0 %2121
      %v2123 = vmul.f32 %v2077, %v1328
      %v2124 = vmul.f32 %v2080, %v1328
      %v2125 = vmul.f32 %v2083, %v1328
      %v2126 = vmul.f32 %v2086, %v1328
      %v2127 = vmul.f32 %v2089, %v1328
      %v2128 = vmul.f32 %v2092, %v1328
      %v2129 = vmul.f32 %v2095, %v1328
      %v2130 = vmul.f32 %v2098, %v1328
      %v2131 = vmul.f32 %v2101, %v1328
      %v2132 = vmul.f32 %v2104, %v1328
      %v2133 = vmul.f32 %v2107, %v1328
      %v2134 = vmul.f32 %v2110, %v1328
      %v2135 = vmul.f32 %v2113, %v1328
      %v2136 = vmul.f32 %v2116, %v1328
      %v2137 = vmul.f32 %v2119, %v1328
      %v2138 = vmul.f32 %v2122, %v1328
      %v2139 = vsub.f32 %v2059, %v2123
      %v2140 = vsub.f32 %v2060, %v2124
      %v2141 = vsub.f32 %v2061, %v2125
      %v2142 = vsub.f32 %v2062, %v2126
      %v2143 = vsub.f32 %v2063, %v2127
      %v2144 = vsub.f32 %v2064, %v2128
      %v2145 = vsub.f32 %v2065, %v2129
      %v2146 = vsub.f32 %v2066, %v2130
      %v2147 = vsub.f32 %v2067, %v2131
      %v2148 = vsub.f32 %v2068, %v2132
      %v2149 = vsub.f32 %v2069, %v2133
      %v2150 = vsub.f32 %v2070, %v2134
      %v2151 = vsub.f32 %v2071, %v2135
      %v2152 = vsub.f32 %v2072, %v2136
      %v2153 = vsub.f32 %v2073, %v2137
      %v2154 = vsub.f32 %v2074, %v2138
      %v2155 = vmul.f32 %v2139, %v2139
      %v2156 = vmul.f32 %v2140, %v2140
      %v2157 = vmul.f32 %v2141, %v2141
      %v2158 = vmul.f32 %v2142, %v2142
      %v2159 = vmul.f32 %v2143, %v2143
      %v2160 = vmul.f32 %v2144, %v2144
      %v2161 = vmul.f32 %v2145, %v2145
      %v2162 = vmul.f32 %v2146, %v2146
      %v2163 = vmul.f32 %v2147, %v2147
      %v2164 = vmul.f32 %v2148, %v2148
      %v2165 = vmul.f32 %v2149, %v2149
      %v2166 = vmul.f32 %v2150, %v2150
      %v2167 = vmul.f32 %v2151, %v2151
      %v2168 = vmul.f32 %v2152, %v2152
      %v2169 = vmul.f32 %v2153, %v2153
      %v2170 = vmul.f32 %v2154, %v2154
      %v2171 = vsel %vm1279, %v2155, 0.0
      %2172 = vadd.xlane.f32.xlu0 %v2171
      %v2173 = vpop.xlane.xlu0 %2172
      %v2174 = vsel %vm1279, %v2156, 0.0
      %2175 = vadd.xlane.f32.xlu0 %v2174
      %v2176 = vpop.xlane.xlu0 %2175
      %v2177 = vsel %vm1279, %v2157, 0.0
      %2178 = vadd.xlane.f32.xlu0 %v2177
      %v2179 = vpop.xlane.xlu0 %2178
      %v2180 = vsel %vm1279, %v2158, 0.0
      %2181 = vadd.xlane.f32.xlu0 %v2180
      %v2182 = vpop.xlane.xlu0 %2181
      %v2183 = vsel %vm1279, %v2159, 0.0
      %2184 = vadd.xlane.f32.xlu0 %v2183
      %v2185 = vpop.xlane.xlu0 %2184
      %v2186 = vsel %vm1279, %v2160, 0.0
      %2187 = vadd.xlane.f32.xlu0 %v2186
      %v2188 = vpop.xlane.xlu0 %2187
      %v2189 = vsel %vm1279, %v2161, 0.0
      %2190 = vadd.xlane.f32.xlu0 %v2189
      %v2191 = vpop.xlane.xlu0 %2190
      %v2192 = vsel %vm1279, %v2162, 0.0
      %2193 = vadd.xlane.f32.xlu0 %v2192
      %v2194 = vpop.xlane.xlu0 %2193
      %v2195 = vsel %vm1279, %v2163, 0.0
      %2196 = vadd.xlane.f32.xlu0 %v2195
      %v2197 = vpop.xlane.xlu0 %2196
      %v2198 = vsel %vm1279, %v2164, 0.0
      %2199 = vadd.xlane.f32.xlu0 %v2198
      %v2200 = vpop.xlane.xlu0 %2199
      %v2201 = vsel %vm1279, %v2165, 0.0
      %2202 = vadd.xlane.f32.xlu0 %v2201
      %v2203 = vpop.xlane.xlu0 %2202
      %v2204 = vsel %vm1279, %v2166, 0.0
      %2205 = vadd.xlane.f32.xlu0 %v2204
      %v2206 = vpop.xlane.xlu0 %2205
      %v2207 = vsel %vm1279, %v2167, 0.0
      %2208 = vadd.xlane.f32.xlu0 %v2207
      %v2209 = vpop.xlane.xlu0 %2208
      %v2210 = vsel %vm1279, %v2168, 0.0
      %2211 = vadd.xlane.f32.xlu0 %v2210
      %v2212 = vpop.xlane.xlu0 %2211
      %v2213 = vsel %vm1279, %v2169, 0.0
      %2214 = vadd.xlane.f32.xlu0 %v2213
      %v2215 = vpop.xlane.xlu0 %2214
      %v2216 = vsel %vm1279, %v2170, 0.0
      %2217 = vadd.xlane.f32.xlu0 %v2216
      %v2218 = vpop.xlane.xlu0 %2217
      %v2219 = vmul.f32 %v2173, %v1328
      %v2220 = vmul.f32 %v2176, %v1328
      %v2221 = vmul.f32 %v2179, %v1328
      %v2222 = vmul.f32 %v2182, %v1328
      %v2223 = vmul.f32 %v2185, %v1328
      %v2224 = vmul.f32 %v2188, %v1328
      %v2225 = vmul.f32 %v2191, %v1328
      %v2226 = vmul.f32 %v2194, %v1328
      %v2227 = vmul.f32 %v2197, %v1328
      %v2228 = vmul.f32 %v2200, %v1328
      %v2229 = vmul.f32 %v2203, %v1328
      %v2230 = vmul.f32 %v2206, %v1328
      %v2231 = vmul.f32 %v2209, %v1328
      %v2232 = vmul.f32 %v2212, %v1328
      %v2233 = vmul.f32 %v2215, %v1328
      %v2234 = vmul.f32 %v2218, %v1328
      %v2235 = vadd.f32 %v2219, 1e-05
      %v2236 = vadd.f32 %v2220, 1e-05
      %v2237 = vadd.f32 %v2221, 1e-05
      %v2238 = vadd.f32 %v2222, 1e-05
      %v2239 = vadd.f32 %v2223, 1e-05
      %v2240 = vadd.f32 %v2224, 1e-05
      %v2241 = vadd.f32 %v2225, 1e-05
      %v2242 = vadd.f32 %v2226, 1e-05
      %v2243 = vadd.f32 %v2227, 1e-05
      %v2244 = vadd.f32 %v2228, 1e-05
      %v2245 = vadd.f32 %v2229, 1e-05
      %v2246 = vadd.f32 %v2230, 1e-05
      %v2247 = vadd.f32 %v2231, 1e-05
      %v2248 = vadd.f32 %v2232, 1e-05
      %v2249 = vadd.f32 %v2233, 1e-05
      %v2250 = vadd.f32 %v2234, 1e-05
      %v2251 = vrsqrt.pop %v2235
      %v2252 = vrsqrt.pop %v2236
      %v2253 = vrsqrt.pop %v2237
      %v2254 = vrsqrt.pop %v2238
      %v2255 = vrsqrt.pop %v2239
      %v2256 = vrsqrt.pop %v2240
      %v2257 = vrsqrt.pop %v2241
      %v2258 = vrsqrt.pop %v2242
      %v2259 = vrsqrt.pop %v2243
      %v2260 = vrsqrt.pop %v2244
      %v2261 = vrsqrt.pop %v2245
      %v2262 = vrsqrt.pop %v2246
      %v2263 = vrsqrt.pop %v2247
      %v2264 = vrsqrt.pop %v2248
      %v2265 = vrsqrt.pop %v2249
      %v2266 = vrsqrt.pop %v2250
      %v2267 = vmul.f32 %v2139, %v2251
      %v2268 = vmul.f32 %v2140, %v2252
      %v2269 = vmul.f32 %v2141, %v2253
      %v2270 = vmul.f32 %v2142, %v2254
      %v2271 = vmul.f32 %v2143, %v2255
      %v2272 = vmul.f32 %v2144, %v2256
      %v2273 = vmul.f32 %v2145, %v2257
      %v2274 = vmul.f32 %v2146, %v2258
      %v2275 = vmul.f32 %v2147, %v2259
      %v2276 = vmul.f32 %v2148, %v2260
      %v2277 = vmul.f32 %v2149, %v2261
      %v2278 = vmul.f32 %v2150, %v2262
      %v2279 = vmul.f32 %v2151, %v2263
      %v2280 = vmul.f32 %v2152, %v2264
      %v2281 = vmul.f32 %v2153, %v2265
      %v2282 = vmul.f32 %v2154, %v2266
      %v2283 = vlaneseq
      %v2284 = vshrl.u32 %v2283, 7
      %v2285 = vsub.s32 0, %v2284
      %v2286 = vrot.slane %v284, %v2285
      %v2287 = vmul.f32 %v2267, %v2286
      %v2288 = vmul.f32 %v2268, %v2286
      %v2289 = vmul.f32 %v2269, %v2286
      %v2290 = vmul.f32 %v2270, %v2286
      %v2291 = vmul.f32 %v2271, %v2286
      %v2292 = vmul.f32 %v2272, %v2286
      %v2293 = vmul.f32 %v2273, %v2286
      %v2294 = vmul.f32 %v2274, %v2286
      %v2295 = vmul.f32 %v2275, %v2286
      %v2296 = vmul.f32 %v2276, %v2286
      %v2297 = vmul.f32 %v2277, %v2286
      %v2298 = vmul.f32 %v2278, %v2286
      %v2299 = vmul.f32 %v2279, %v2286
      %v2300 = vmul.f32 %v2280, %v2286
      %v2301 = vmul.f32 %v2281, %v2286
      %v2302 = vmul.f32 %v2282, %v2286
      %v2303 = vlaneseq
      %v2304 = vshrl.u32 %v2303, 7
      %v2305 = vsub.s32 0, %v2304
      %v2306 = vrot.slane %v285, %v2305
      %v2307 = vadd.f32 %v2287, %v2306
      %v2308 = vadd.f32 %v2288, %v2306
      %v2309 = vadd.f32 %v2289, %v2306
      %v2310 = vadd.f32 %v2290, %v2306
      %v2311 = vadd.f32 %v2291, %v2306
      %v2312 = vadd.f32 %v2292, %v2306
      %v2313 = vadd.f32 %v2293, %v2306
      %v2314 = vadd.f32 %v2294, %v2306
      %v2315 = vadd.f32 %v2295, %v2306
      %v2316 = vadd.f32 %v2296, %v2306
      %v2317 = vadd.f32 %v2297, %v2306
      %v2318 = vadd.f32 %v2298, %v2306
      %v2319 = vadd.f32 %v2299, %v2306
      %v2320 = vadd.f32 %v2300, %v2306
      %v2321 = vadd.f32 %v2301, %v2306
      %v2322 = vadd.f32 %v2302, %v2306
      %v2323 = vpack.c.bf16 %v2308, %v2307
      %v2324 = vpack.c.bf16 %v2310, %v2309
      %v2325 = vpack.c.bf16 %v2312, %v2311
      %v2326 = vpack.c.bf16 %v2314, %v2313
      %v2327 = vpack.c.bf16 %v2316, %v2315
      %v2328 = vpack.c.bf16 %v2318, %v2317
      %v2329 = vpack.c.bf16 %v2320, %v2319
      %v2330 = vpack.c.bf16 %v2322, %v2321
      %v2331 = vld [vmem:[%s2 + $0x68] sm:$0xf]
      %v2332 = vld [vmem:[%s2 + $0x6c] sm:$0xf]
      %v2333 = vld [vmem:[%s2 + $0x70] sm:$0xf]
      %v2334 = vld [vmem:[%s2 + $0x74] sm:$0xf]
      %v2335 = vld [vmem:[%s2 + $0x78] sm:$0xf]
      %v2336 = vld [vmem:[%s2 + $0x7c] sm:$0xf]
      %v2337 = vld [vmem:[%s2 + $0x80] sm:$0xf]
      %v2338 = vld [vmem:[%s2 + $0x84] sm:$0xf]
      %v2339 = vlaneseq
      %v2340 = vshrl.u32 %v2339, 7
      %v2341 = vsub.s32 0, %v2340
      %v2342 = vrot.slane %v286, %v2341
      %v2351 = vunpack.c.l.b16 %v2331
      %v2352 = vunpack.c.l.b16 %v2332
      %v2353 = vunpack.c.l.b16 %v2333
      %v2354 = vunpack.c.l.b16 %v2334
      %v2355 = vunpack.c.l.b16 %v2335
      %v2356 = vunpack.c.l.b16 %v2336
      %v2357 = vunpack.c.l.b16 %v2337
      %v2358 = vunpack.c.l.b16 %v2338
      %v2359 = vpack.c.b16 %v2352, %v2351
      %v2360 = vpack.c.b16 %v2354, %v2353
      %v2361 = vpack.c.b16 %v2356, %v2355
      %v2362 = vpack.c.b16 %v2358, %v2357
      %v2368 = vsel %vm1279, %v2323, 0
      %v2371 = vsel %vm1279, %v2324, 0
      %v2374 = vsel %vm1279, %v2325, 0
      %v2377 = vsel %vm1279, %v2326, 0
      %v2380 = vsel %vm1279, %v2327, 0
      %v2383 = vsel %vm1279, %v2328, 0
      %v2386 = vsel %vm1279, %v2329, 0
      %v2389 = vsel %vm1279, %v2330, 0
      %2391 = vmatprep.subr.bf16.mxu0 0
      %2392 = vmatpush1.bf16.msra.mxu0 0
      %2393 = vmatprep.subr.bf16.mxu0 0
      %2394 = vmatpush1.bf16.msra.mxu0 0
      %2395 = vmatprep.subr.bf16.mxu0 0
      %2396 = vmatpush1.bf16.msra.mxu0 0
      %2397 = vmatprep.subr.bf16.mxu0 0
      %2398 = vmatpush1.bf16.msra.mxu0 0
      %2399 = vmatprep.subr.bf16.mxu0 0
      %2400 = vmatpush1.bf16.msra.mxu0 %v2362
      %2401 = vmatprep.subr.bf16.mxu0 0
      %2402 = vmatpush1.bf16.msra.mxu0 %v2361
      %2403 = vmatprep.subr.bf16.mxu0 0
      %2404 = vmatpush1.bf16.msra.mxu0 %v2360
      %2405 = vmatprep.subr.bf16.mxu0 0
      %2406 = vmatpush1.bf16.msra.mxu0 %v2359
      %2407 = vmatprep.subr.bf16.mxu0 0
      %2408 = vmatpush2.bf16.msra.mxu0 0
      %2409 = vmatprep.subr.bf16.mxu0 0
      %2410 = vmatpush2.bf16.msra.mxu0 0
      %2411 = vmatprep.subr.bf16.mxu0 0
      %2412 = vmatpush2.bf16.msra.mxu0 0
      %2413 = vmatprep.subr.bf16.mxu0 0
      %2414 = vmatpush2.bf16.msra.mxu0 0
      %2415 = vmatprep.subr.bf16.mxu0 0
      %2416 = vmatpush2.bf16.msra.mxu0 0
      %2417 = vmatprep.subr.bf16.mxu0 0
      %2418 = vmatpush2.bf16.msra.mxu0 0
      %2419 = vmatprep.subr.bf16.mxu0 0
      %2420 = vmatpush2.bf16.msra.mxu0 0
      %2421 = vmatprep.subr.bf16.mxu0 0
      %2422 = vmatpush2.bf16.msra.mxu0 0
      %2423 = vmatprep.mubr.bf16.mxu0 0
      %2424 = vmatmul.mubr.bf16.gmra.mxu0 %v2368
      %v2425 = vpop.f32.mrf.mxu0
      %v2426 = vadd.f32 %v2342, %v2425
      %v2427 = vpop.f32.mrf.mxu0
      %v2428 = vpop.f32.mrf.mxu0
      %v2429 = vadd.f32 %v2342, %v2428
      %v2430 = vpop.f32.mrf.mxu0
      %2431 = vmatprep.mubr.bf16.mxu0 0
      %2432 = vmatmul.mubr.bf16.gmra.mxu0 %v2371
      %v2433 = vpop.f32.mrf.mxu0
      %v2434 = vadd.f32 %v2342, %v2433
      %v2435 = vpop.f32.mrf.mxu0
      %v2436 = vpop.f32.mrf.mxu0
      %v2437 = vadd.f32 %v2342, %v2436
      %v2438 = vpop.f32.mrf.mxu0
      %2439 = vmatprep.mubr.bf16.mxu0 0
      %2440 = vmatmul.mubr.bf16.gmra.mxu0 %v2374
      %v2441 = vpop.f32.mrf.mxu0
      %v2442 = vadd.f32 %v2342, %v2441
      %v2443 = vpop.f32.mrf.mxu0
      %v2444 = vpop.f32.mrf.mxu0
      %v2445 = vadd.f32 %v2342, %v2444
      %v2446 = vpop.f32.mrf.mxu0
      %2447 = vmatprep.mubr.bf16.mxu0 0
      %2448 = vmatmul.mubr.bf16.gmra.mxu0 %v2377
      %v2449 = vpop.f32.mrf.mxu0
      %v2450 = vadd.f32 %v2342, %v2449
      %v2451 = vpop.f32.mrf.mxu0
      %v2452 = vpop.f32.mrf.mxu0
      %v2453 = vadd.f32 %v2342, %v2452
      %v2454 = vpop.f32.mrf.mxu0
      %2455 = vmatprep.mubr.bf16.mxu0 0
      %2456 = vmatmul.mubr.bf16.gmra.mxu0 %v2380
      %v2457 = vpop.f32.mrf.mxu0
      %v2458 = vadd.f32 %v2342, %v2457
      %v2459 = vpop.f32.mrf.mxu0
      %v2460 = vpop.f32.mrf.mxu0
      %v2461 = vadd.f32 %v2342, %v2460
      %v2462 = vpop.f32.mrf.mxu0
      %2463 = vmatprep.mubr.bf16.mxu0 0
      %2464 = vmatmul.mubr.bf16.gmra.mxu0 %v2383
      %v2465 = vpop.f32.mrf.mxu0
      %v2466 = vadd.f32 %v2342, %v2465
      %v2467 = vpop.f32.mrf.mxu0
      %v2468 = vpop.f32.mrf.mxu0
      %v2469 = vadd.f32 %v2342, %v2468
      %v2470 = vpop.f32.mrf.mxu0
      %2471 = vmatprep.mubr.bf16.mxu0 0
      %2472 = vmatmul.mubr.bf16.gmra.mxu0 %v2386
      %v2473 = vpop.f32.mrf.mxu0
      %v2474 = vadd.f32 %v2342, %v2473
      %v2475 = vpop.f32.mrf.mxu0
      %v2476 = vpop.f32.mrf.mxu0
      %v2477 = vadd.f32 %v2342, %v2476
      %v2478 = vpop.f32.mrf.mxu0
      %2479 = vmatprep.mubr.bf16.mxu0 0
      %2480 = vmatmul.mubr.bf16.gmra.mxu0 %v2389
      %v2481 = vpop.f32.mrf.mxu0
      %v2482 = vadd.f32 %v2342, %v2481
      %v2483 = vpop.f32.mrf.mxu0
      %v2484 = vpop.f32.mrf.mxu0
      %v2485 = vadd.f32 %v2342, %v2484
      %v2486 = vpop.f32.mrf.mxu0
      %2487 = vdwg.mxu0
      %v2488 = vmul.f32 %v2426, %v2426
      %v2489 = vmul.f32 %v2429, %v2429
      %v2490 = vmul.f32 %v2434, %v2434
      %v2491 = vmul.f32 %v2437, %v2437
      %v2492 = vmul.f32 %v2442, %v2442
      %v2493 = vmul.f32 %v2445, %v2445
      %v2494 = vmul.f32 %v2450, %v2450
      %v2495 = vmul.f32 %v2453, %v2453
      %v2496 = vmul.f32 %v2458, %v2458
      %v2497 = vmul.f32 %v2461, %v2461
      %v2498 = vmul.f32 %v2466, %v2466
      %v2499 = vmul.f32 %v2469, %v2469
      %v2500 = vmul.f32 %v2474, %v2474
      %v2501 = vmul.f32 %v2477, %v2477
      %v2502 = vmul.f32 %v2482, %v2482
      %v2503 = vmul.f32 %v2485, %v2485
      %v2504 = vsel %vm352, %v2488, 0.0
      %2505 = vadd.xlane.f32.xlu0 %v2504
      %v2506 = vpop.xlane.xlu0 %2505
      %v2507 = vsel %vm352, %v2489, 0.0
      %2508 = vadd.xlane.f32.xlu0 %v2507
      %v2509 = vpop.xlane.xlu0 %2508
      %v2510 = vsel %vm352, %v2490, 0.0
      %2511 = vadd.xlane.f32.xlu0 %v2510
      %v2512 = vpop.xlane.xlu0 %2511
      %v2513 = vsel %vm352, %v2491, 0.0
      %2514 = vadd.xlane.f32.xlu0 %v2513
      %v2515 = vpop.xlane.xlu0 %2514
      %v2516 = vsel %vm352, %v2492, 0.0
      %2517 = vadd.xlane.f32.xlu0 %v2516
      %v2518 = vpop.xlane.xlu0 %2517
      %v2519 = vsel %vm352, %v2493, 0.0
      %2520 = vadd.xlane.f32.xlu0 %v2519
      %v2521 = vpop.xlane.xlu0 %2520
      %v2522 = vsel %vm352, %v2494, 0.0
      %2523 = vadd.xlane.f32.xlu0 %v2522
      %v2524 = vpop.xlane.xlu0 %2523
      %v2525 = vsel %vm352, %v2495, 0.0
      %2526 = vadd.xlane.f32.xlu0 %v2525
      %v2527 = vpop.xlane.xlu0 %2526
      %v2528 = vsel %vm352, %v2496, 0.0
      %2529 = vadd.xlane.f32.xlu0 %v2528
      %v2530 = vpop.xlane.xlu0 %2529
      %v2531 = vsel %vm352, %v2497, 0.0
      %2532 = vadd.xlane.f32.xlu0 %v2531
      %v2533 = vpop.xlane.xlu0 %2532
      %v2534 = vsel %vm352, %v2498, 0.0
      %2535 = vadd.xlane.f32.xlu0 %v2534
      %v2536 = vpop.xlane.xlu0 %2535
      %v2537 = vsel %vm352, %v2499, 0.0
      %2538 = vadd.xlane.f32.xlu0 %v2537
      %v2539 = vpop.xlane.xlu0 %2538
      %v2540 = vsel %vm352, %v2500, 0.0
      %2541 = vadd.xlane.f32.xlu0 %v2540
      %v2542 = vpop.xlane.xlu0 %2541
      %v2543 = vsel %vm352, %v2501, 0.0
      %2544 = vadd.xlane.f32.xlu0 %v2543
      %v2545 = vpop.xlane.xlu0 %2544
      %v2546 = vsel %vm352, %v2502, 0.0
      %2547 = vadd.xlane.f32.xlu0 %v2546
      %v2548 = vpop.xlane.xlu0 %2547
      %v2549 = vsel %vm352, %v2503, 0.0
      %2550 = vadd.xlane.f32.xlu0 %v2549
      %v2551 = vpop.xlane.xlu0 %2550
      %v2552 = vrsqrt.pop %v2506
      %v2553 = vmul.f32 %v2506, %v2552
      %vm2554 = vcmp.eq.f32.partialorder %v2506, inf
      %v2555 = vsel %vm2554, %v2506, %v2553
      %vm2556 = vcmp.eq.f32.partialorder %v2506, 0.0
      %v2557 = vand.u32 %v2506, 2147483648
      %v2558 = vsel %vm2556, %v2557, %v2555
      %v2559 = vrsqrt.pop %v2509
      %v2560 = vmul.f32 %v2509, %v2559
      %vm2561 = vcmp.eq.f32.partialorder %v2509, inf
      %v2562 = vsel %vm2561, %v2509, %v2560
      %vm2563 = vcmp.eq.f32.partialorder %v2509, 0.0
      %v2564 = vand.u32 %v2509, 2147483648
      %v2565 = vsel %vm2563, %v2564, %v2562
      %v2566 = vrsqrt.pop %v2512
      %v2567 = vmul.f32 %v2512, %v2566
      %vm2568 = vcmp.eq.f32.partialorder %v2512, inf
      %v2569 = vsel %vm2568, %v2512, %v2567
      %vm2570 = vcmp.eq.f32.partialorder %v2512, 0.0
      %v2571 = vand.u32 %v2512, 2147483648
      %v2572 = vsel %vm2570, %v2571, %v2569
      %v2573 = vrsqrt.pop %v2515
      %v2574 = vmul.f32 %v2515, %v2573
      %vm2575 = vcmp.eq.f32.partialorder %v2515, inf
      %v2576 = vsel %vm2575, %v2515, %v2574
      %vm2577 = vcmp.eq.f32.partialorder %v2515, 0.0
      %v2578 = vand.u32 %v2515, 2147483648
      %v2579 = vsel %vm2577, %v2578, %v2576
      %v2580 = vrsqrt.pop %v2518
      %v2581 = vmul.f32 %v2518, %v2580
      %vm2582 = vcmp.eq.f32.partialorder %v2518, inf
      %v2583 = vsel %vm2582, %v2518, %v2581
      %vm2584 = vcmp.eq.f32.partialorder %v2518, 0.0
      %v2585 = vand.u32 %v2518, 2147483648
      %v2586 = vsel %vm2584, %v2585, %v2583
      %v2587 = vrsqrt.pop %v2521
      %v2588 = vmul.f32 %v2521, %v2587
      %vm2589 = vcmp.eq.f32.partialorder %v2521, inf
      %v2590 = vsel %vm2589, %v2521, %v2588
      %vm2591 = vcmp.eq.f32.partialorder %v2521, 0.0
      %v2592 = vand.u32 %v2521, 2147483648
      %v2593 = vsel %vm2591, %v2592, %v2590
      %v2594 = vrsqrt.pop %v2524
      %v2595 = vmul.f32 %v2524, %v2594
      %vm2596 = vcmp.eq.f32.partialorder %v2524, inf
      %v2597 = vsel %vm2596, %v2524, %v2595
      %vm2598 = vcmp.eq.f32.partialorder %v2524, 0.0
      %v2599 = vand.u32 %v2524, 2147483648
      %v2600 = vsel %vm2598, %v2599, %v2597
      %v2601 = vrsqrt.pop %v2527
      %v2602 = vmul.f32 %v2527, %v2601
      %vm2603 = vcmp.eq.f32.partialorder %v2527, inf
      %v2604 = vsel %vm2603, %v2527, %v2602
      %vm2605 = vcmp.eq.f32.partialorder %v2527, 0.0
      %v2606 = vand.u32 %v2527, 2147483648
      %v2607 = vsel %vm2605, %v2606, %v2604
      %v2608 = vrsqrt.pop %v2530
      %v2609 = vmul.f32 %v2530, %v2608
      %vm2610 = vcmp.eq.f32.partialorder %v2530, inf
      %v2611 = vsel %vm2610, %v2530, %v2609
      %vm2612 = vcmp.eq.f32.partialorder %v2530, 0.0
      %v2613 = vand.u32 %v2530, 2147483648
      %v2614 = vsel %vm2612, %v2613, %v2611
      %v2615 = vrsqrt.pop %v2533
      %v2616 = vmul.f32 %v2533, %v2615
      %vm2617 = vcmp.eq.f32.partialorder %v2533, inf
      %v2618 = vsel %vm2617, %v2533, %v2616
      %vm2619 = vcmp.eq.f32.partialorder %v2533, 0.0
      %v2620 = vand.u32 %v2533, 2147483648
      %v2621 = vsel %vm2619, %v2620, %v2618
      %v2622 = vrsqrt.pop %v2536
      %v2623 = vmul.f32 %v2536, %v2622
      %vm2624 = vcmp.eq.f32.partialorder %v2536, inf
      %v2625 = vsel %vm2624, %v2536, %v2623
      %vm2626 = vcmp.eq.f32.partialorder %v2536, 0.0
      %v2627 = vand.u32 %v2536, 2147483648
      %v2628 = vsel %vm2626, %v2627, %v2625
      %v2629 = vrsqrt.pop %v2539
      %v2630 = vmul.f32 %v2539, %v2629
      %vm2631 = vcmp.eq.f32.partialorder %v2539, inf
      %v2632 = vsel %vm2631, %v2539, %v2630
      %vm2633 = vcmp.eq.f32.partialorder %v2539, 0.0
      %v2634 = vand.u32 %v2539, 2147483648
      %v2635 = vsel %vm2633, %v2634, %v2632
      %v2636 = vrsqrt.pop %v2542
      %v2637 = vmul.f32 %v2542, %v2636
      %vm2638 = vcmp.eq.f32.partialorder %v2542, inf
      %v2639 = vsel %vm2638, %v2542, %v2637
      %vm2640 = vcmp.eq.f32.partialorder %v2542, 0.0
      %v2641 = vand.u32 %v2542, 2147483648
      %v2642 = vsel %vm2640, %v2641, %v2639
      %v2643 = vrsqrt.pop %v2545
      %v2644 = vmul.f32 %v2545, %v2643
      %vm2645 = vcmp.eq.f32.partialorder %v2545, inf
      %v2646 = vsel %vm2645, %v2545, %v2644
      %vm2647 = vcmp.eq.f32.partialorder %v2545, 0.0
      %v2648 = vand.u32 %v2545, 2147483648
      %v2649 = vsel %vm2647, %v2648, %v2646
      %v2650 = vrsqrt.pop %v2548
      %v2651 = vmul.f32 %v2548, %v2650
      %vm2652 = vcmp.eq.f32.partialorder %v2548, inf
      %v2653 = vsel %vm2652, %v2548, %v2651
      %vm2654 = vcmp.eq.f32.partialorder %v2548, 0.0
      %v2655 = vand.u32 %v2548, 2147483648
      %v2656 = vsel %vm2654, %v2655, %v2653
      %v2657 = vrsqrt.pop %v2551
      %v2658 = vmul.f32 %v2551, %v2657
      %vm2659 = vcmp.eq.f32.partialorder %v2551, inf
      %v2660 = vsel %vm2659, %v2551, %v2658
      %vm2661 = vcmp.eq.f32.partialorder %v2551, 0.0
      %v2662 = vand.u32 %v2551, 2147483648
      %v2663 = vsel %vm2661, %v2662, %v2660
      %v2664 = vmax.f32 %v2558, 1e-12
      %v2665 = vmax.f32 %v2565, 1e-12
      %v2666 = vmax.f32 %v2572, 1e-12
      %v2667 = vmax.f32 %v2579, 1e-12
      %v2668 = vmax.f32 %v2586, 1e-12
      %v2669 = vmax.f32 %v2593, 1e-12
      %v2670 = vmax.f32 %v2600, 1e-12
      %v2671 = vmax.f32 %v2607, 1e-12
      %v2672 = vmax.f32 %v2614, 1e-12
      %v2673 = vmax.f32 %v2621, 1e-12
      %v2674 = vmax.f32 %v2628, 1e-12
      %v2675 = vmax.f32 %v2635, 1e-12
      %v2676 = vmax.f32 %v2642, 1e-12
      %v2677 = vmax.f32 %v2649, 1e-12
      %v2678 = vmax.f32 %v2656, 1e-12
      %v2679 = vmax.f32 %v2663, 1e-12
      %v2680 = vrcp.pop %v2664
      %v2681 = vmul.f32 %v2426, %v2680
      %v2682 = vrcp.pop %v2665
      %v2683 = vmul.f32 %v2429, %v2682
      %v2684 = vrcp.pop %v2666
      %v2685 = vmul.f32 %v2434, %v2684
      %v2686 = vrcp.pop %v2667
      %v2687 = vmul.f32 %v2437, %v2686
      %v2688 = vrcp.pop %v2668
      %v2689 = vmul.f32 %v2442, %v2688
      %v2690 = vrcp.pop %v2669
      %v2691 = vmul.f32 %v2445, %v2690
      %v2692 = vrcp.pop %v2670
      %v2693 = vmul.f32 %v2450, %v2692
      %v2694 = vrcp.pop %v2671
      %v2695 = vmul.f32 %v2453, %v2694
      %v2696 = vrcp.pop %v2672
      %v2697 = vmul.f32 %v2458, %v2696
      %v2698 = vrcp.pop %v2673
      %v2699 = vmul.f32 %v2461, %v2698
      %v2700 = vrcp.pop %v2674
      %v2701 = vmul.f32 %v2466, %v2700
      %v2702 = vrcp.pop %v2675
      %v2703 = vmul.f32 %v2469, %v2702
      %v2704 = vrcp.pop %v2676
      %v2705 = vmul.f32 %v2474, %v2704
      %v2706 = vrcp.pop %v2677
      %v2707 = vmul.f32 %v2477, %v2706
      %v2708 = vrcp.pop %v2678
      %v2709 = vmul.f32 %v2482, %v2708
      %v2710 = vrcp.pop %v2679
      %v2711 = vmul.f32 %v2485, %v2710
      %v2712 = vlaneseq
      %v2713 = vshrl.u32 %v2712, 7
      %v2714 = vsub.s32 0, %v2713
      %v2715 = vrot.slane %v299, %v2714
      %v2716 = vmul.f32 %v564, %v2715
      %v2717 = vmul.f32 %v569, %v2715
      %v2718 = vmul.f32 %v574, %v2715
      %v2719 = vmul.f32 %v579, %v2715
      %v2720 = vmul.f32 %v584, %v2715
      %v2721 = vmul.f32 %v589, %v2715
      %v2722 = vmul.f32 %v594, %v2715
      %v2723 = vmul.f32 %v599, %v2715
      %v2724 = vmul.f32 %v604, %v2715
      %v2725 = vmul.f32 %v609, %v2715
      %v2726 = vmul.f32 %v614, %v2715
      %v2727 = vmul.f32 %v619, %v2715
      %v2728 = vmul.f32 %v624, %v2715
      %v2729 = vmul.f32 %v629, %v2715
      %v2730 = vmul.f32 %v634, %v2715
      %v2731 = vmul.f32 %v639, %v2715
      %v2732 = vlaneseq
      %v2733 = vshrl.u32 %v2732, 7
      %v2734 = vsub.s32 0, %v2733
      %v2735 = vrot.slane %v290, %v2734
      %v2736 = vadd.f32 %v2735, %v2716
      %v2737 = vadd.f32 %v2735, %v2717
      %v2738 = vadd.f32 %v2735, %v2718
      %v2739 = vadd.f32 %v2735, %v2719
      %v2740 = vadd.f32 %v2735, %v2720
      %v2741 = vadd.f32 %v2735, %v2721
      %v2742 = vadd.f32 %v2735, %v2722
      %v2743 = vadd.f32 %v2735, %v2723
      %v2744 = vadd.f32 %v2735, %v2724
      %v2745 = vadd.f32 %v2735, %v2725
      %v2746 = vadd.f32 %v2735, %v2726
      %v2747 = vadd.f32 %v2735, %v2727
      %v2748 = vadd.f32 %v2735, %v2728
      %v2749 = vadd.f32 %v2735, %v2729
      %v2750 = vadd.f32 %v2735, %v2730
      %v2751 = vadd.f32 %v2735, %v2731
      %v2752 = vlaneseq
      %v2753 = vshrl.u32 %v2752, 7
      %v2754 = vsub.s32 0, %v2753
      %v2755 = vrot.slane %v300, %v2754
      %v2756 = vmul.f32 %v683, %v2755
      %v2757 = vmul.f32 %v687, %v2755
      %v2758 = vmul.f32 %v691, %v2755
      %v2759 = vmul.f32 %v695, %v2755
      %v2760 = vmul.f32 %v699, %v2755
      %v2761 = vmul.f32 %v703, %v2755
      %v2762 = vmul.f32 %v707, %v2755
      %v2763 = vmul.f32 %v711, %v2755
      %v2764 = vmul.f32 %v715, %v2755
      %v2765 = vmul.f32 %v719, %v2755
      %v2766 = vmul.f32 %v723, %v2755
      %v2767 = vmul.f32 %v727, %v2755
      %v2768 = vmul.f32 %v731, %v2755
      %v2769 = vmul.f32 %v735, %v2755
      %v2770 = vmul.f32 %v739, %v2755
      %v2771 = vmul.f32 %v743, %v2755
      %v2772 = vadd.f32 %v2736, %v2756
      %v2773 = vadd.f32 %v2737, %v2757
      %v2774 = vadd.f32 %v2738, %v2758
      %v2775 = vadd.f32 %v2739, %v2759
      %v2776 = vadd.f32 %v2740, %v2760
      %v2777 = vadd.f32 %v2741, %v2761
      %v2778 = vadd.f32 %v2742, %v2762
      %v2779 = vadd.f32 %v2743, %v2763
      %v2780 = vadd.f32 %v2744, %v2764
      %v2781 = vadd.f32 %v2745, %v2765
      %v2782 = vadd.f32 %v2746, %v2766
      %v2783 = vadd.f32 %v2747, %v2767
      %v2784 = vadd.f32 %v2748, %v2768
      %v2785 = vadd.f32 %v2749, %v2769
      %v2786 = vadd.f32 %v2750, %v2770
      %v2787 = vadd.f32 %v2751, %v2771
      %v2788 = vlaneseq
      %v2789 = vshrl.u32 %v2788, 7
      %v2790 = vsub.s32 0, %v2789
      %v2791 = vrot.slane %v301, %v2790
      %v2792 = vmul.f32 %v783, %v2791
      %v2793 = vmul.f32 %v787, %v2791
      %v2794 = vmul.f32 %v791, %v2791
      %v2795 = vmul.f32 %v795, %v2791
      %v2796 = vmul.f32 %v799, %v2791
      %v2797 = vmul.f32 %v803, %v2791
      %v2798 = vmul.f32 %v807, %v2791
      %v2799 = vmul.f32 %v811, %v2791
      %v2800 = vmul.f32 %v815, %v2791
      %v2801 = vmul.f32 %v819, %v2791
      %v2802 = vmul.f32 %v823, %v2791
      %v2803 = vmul.f32 %v827, %v2791
      %v2804 = vmul.f32 %v831, %v2791
      %v2805 = vmul.f32 %v835, %v2791
      %v2806 = vmul.f32 %v839, %v2791
      %v2807 = vmul.f32 %v843, %v2791
      %v2808 = vadd.f32 %v2772, %v2792
      %v2809 = vadd.f32 %v2773, %v2793
      %v2810 = vadd.f32 %v2774, %v2794
      %v2811 = vadd.f32 %v2775, %v2795
      %v2812 = vadd.f32 %v2776, %v2796
      %v2813 = vadd.f32 %v2777, %v2797
      %v2814 = vadd.f32 %v2778, %v2798
      %v2815 = vadd.f32 %v2779, %v2799
      %v2816 = vadd.f32 %v2780, %v2800
      %v2817 = vadd.f32 %v2781, %v2801
      %v2818 = vadd.f32 %v2782, %v2802
      %v2819 = vadd.f32 %v2783, %v2803
      %v2820 = vadd.f32 %v2784, %v2804
      %v2821 = vadd.f32 %v2785, %v2805
      %v2822 = vadd.f32 %v2786, %v2806
      %v2823 = vadd.f32 %v2787, %v2807
      %2825 = vset.pattern.permute.xlu0 3
      %2826 = vperm.xlu0 %2825, %v2681
      %v2827 = vpop.permute.xlu0 %2826
      %2830 = vset.pattern.permute.xlu0 3
      %2831 = vperm.xlu0 %2830, %v2683
      %v2832 = vpop.permute.xlu0 %2831
      %2835 = vset.pattern.permute.xlu0 3
      %2836 = vperm.xlu0 %2835, %v2685
      %v2837 = vpop.permute.xlu0 %2836
      %2840 = vset.pattern.permute.xlu0 3
      %2841 = vperm.xlu0 %2840, %v2687
      %v2842 = vpop.permute.xlu0 %2841
      %2845 = vset.pattern.permute.xlu0 3
      %2846 = vperm.xlu0 %2845, %v2689
      %v2847 = vpop.permute.xlu0 %2846
      %2850 = vset.pattern.permute.xlu0 3
      %2851 = vperm.xlu0 %2850, %v2691
      %v2852 = vpop.permute.xlu0 %2851
      %2855 = vset.pattern.permute.xlu0 3
      %2856 = vperm.xlu0 %2855, %v2693
      %v2857 = vpop.permute.xlu0 %2856
      %2860 = vset.pattern.permute.xlu0 3
      %2861 = vperm.xlu0 %2860, %v2695
      %v2862 = vpop.permute.xlu0 %2861
      %2865 = vset.pattern.permute.xlu0 3
      %2866 = vperm.xlu0 %2865, %v2697
      %v2867 = vpop.permute.xlu0 %2866
      %2870 = vset.pattern.permute.xlu0 3
      %2871 = vperm.xlu0 %2870, %v2699
      %v2872 = vpop.permute.xlu0 %2871
      %2875 = vset.pattern.permute.xlu0 3
      %2876 = vperm.xlu0 %2875, %v2701
      %v2877 = vpop.permute.xlu0 %2876
      %2880 = vset.pattern.permute.xlu0 3
      %2881 = vperm.xlu0 %2880, %v2703
      %v2882 = vpop.permute.xlu0 %2881
      %2885 = vset.pattern.permute.xlu0 3
      %2886 = vperm.xlu0 %2885, %v2705
      %v2887 = vpop.permute.xlu0 %2886
      %2890 = vset.pattern.permute.xlu0 3
      %2891 = vperm.xlu0 %2890, %v2707
      %v2892 = vpop.permute.xlu0 %2891
      %2895 = vset.pattern.permute.xlu0 3
      %2896 = vperm.xlu0 %2895, %v2709
      %v2897 = vpop.permute.xlu0 %2896
      %2900 = vset.pattern.permute.xlu0 3
      %2901 = vperm.xlu0 %2900, %v2711
      %v2902 = vpop.permute.xlu0 %2901
      %v2904 = vlaneseq
      %v2905 = vshrl.u32 %v2904, 7
      %v2906 = vsub.s32 0, %v2905
      %v2907 = vrot.slane %v302, %v2906
      %v2908 = vmul.f32 %v2827, %v2907
      %v2909 = vmul.f32 %v2832, %v2907
      %v2910 = vmul.f32 %v2837, %v2907
      %v2911 = vmul.f32 %v2842, %v2907
      %v2912 = vmul.f32 %v2847, %v2907
      %v2913 = vmul.f32 %v2852, %v2907
      %v2914 = vmul.f32 %v2857, %v2907
      %v2915 = vmul.f32 %v2862, %v2907
      %v2916 = vmul.f32 %v2867, %v2907
      %v2917 = vmul.f32 %v2872, %v2907
      %v2918 = vmul.f32 %v2877, %v2907
      %v2919 = vmul.f32 %v2882, %v2907
      %v2920 = vmul.f32 %v2887, %v2907
      %v2921 = vmul.f32 %v2892, %v2907
      %v2922 = vmul.f32 %v2897, %v2907
      %v2923 = vmul.f32 %v2902, %v2907
      %v2924 = vadd.f32 %v2808, %v2908
      %v2925 = vadd.f32 %v2809, %v2909
      %v2926 = vadd.f32 %v2810, %v2910
      %v2927 = vadd.f32 %v2811, %v2911
      %v2928 = vadd.f32 %v2812, %v2912
      %v2929 = vadd.f32 %v2813, %v2913
      %v2930 = vadd.f32 %v2814, %v2914
      %v2931 = vadd.f32 %v2815, %v2915
      %v2932 = vadd.f32 %v2816, %v2916
      %v2933 = vadd.f32 %v2817, %v2917
      %v2934 = vadd.f32 %v2818, %v2918
      %v2935 = vadd.f32 %v2819, %v2919
      %v2936 = vadd.f32 %v2820, %v2920
      %v2937 = vadd.f32 %v2821, %v2921
      %v2938 = vadd.f32 %v2822, %v2922
      %v2939 = vadd.f32 %v2823, %v2923
      %2940 = vset.pattern.permute.xlu0 4
      %2941 = vperm.xlu0 %2940, %v2681
      %v2942 = vpop.permute.xlu0 %2941
      %2944 = vset.pattern.permute.xlu0 4
      %2945 = vperm.xlu0 %2944, %v2683
      %v2946 = vpop.permute.xlu0 %2945
      %2948 = vset.pattern.permute.xlu0 4
      %2949 = vperm.xlu0 %2948, %v2685
      %v2950 = vpop.permute.xlu0 %2949
      %2952 = vset.pattern.permute.xlu0 4
      %2953 = vperm.xlu0 %2952, %v2687
      %v2954 = vpop.permute.xlu0 %2953
      %2956 = vset.pattern.permute.xlu0 4
      %2957 = vperm.xlu0 %2956, %v2689
      %v2958 = vpop.permute.xlu0 %2957
      %2960 = vset.pattern.permute.xlu0 4
      %2961 = vperm.xlu0 %2960, %v2691
      %v2962 = vpop.permute.xlu0 %2961
      %2964 = vset.pattern.permute.xlu0 4
      %2965 = vperm.xlu0 %2964, %v2693
      %v2966 = vpop.permute.xlu0 %2965
      %2968 = vset.pattern.permute.xlu0 4
      %2969 = vperm.xlu0 %2968, %v2695
      %v2970 = vpop.permute.xlu0 %2969
      %2972 = vset.pattern.permute.xlu0 4
      %2973 = vperm.xlu0 %2972, %v2697
      %v2974 = vpop.permute.xlu0 %2973
      %2976 = vset.pattern.permute.xlu0 4
      %2977 = vperm.xlu0 %2976, %v2699
      %v2978 = vpop.permute.xlu0 %2977
      %2980 = vset.pattern.permute.xlu0 4
      %2981 = vperm.xlu0 %2980, %v2701
      %v2982 = vpop.permute.xlu0 %2981
      %2984 = vset.pattern.permute.xlu0 4
      %2985 = vperm.xlu0 %2984, %v2703
      %v2986 = vpop.permute.xlu0 %2985
      %2988 = vset.pattern.permute.xlu0 4
      %2989 = vperm.xlu0 %2988, %v2705
      %v2990 = vpop.permute.xlu0 %2989
      %2992 = vset.pattern.permute.xlu0 4
      %2993 = vperm.xlu0 %2992, %v2707
      %v2994 = vpop.permute.xlu0 %2993
      %2996 = vset.pattern.permute.xlu0 4
      %2997 = vperm.xlu0 %2996, %v2709
      %v2998 = vpop.permute.xlu0 %2997
      %3000 = vset.pattern.permute.xlu0 4
      %3001 = vperm.xlu0 %3000, %v2711
      %v3002 = vpop.permute.xlu0 %3001
      %v3004 = vlaneseq
      %v3005 = vshrl.u32 %v3004, 7
      %v3006 = vsub.s32 0, %v3005
      %v3007 = vrot.slane %v303, %v3006
      %v3008 = vmul.f32 %v2942, %v3007
      %v3009 = vmul.f32 %v2946, %v3007
      %v3010 = vmul.f32 %v2950, %v3007
      %v3011 = vmul.f32 %v2954, %v3007
      %v3012 = vmul.f32 %v2958, %v3007
      %v3013 = vmul.f32 %v2962, %v3007
      %v3014 = vmul.f32 %v2966, %v3007
      %v3015 = vmul.f32 %v2970, %v3007
      %v3016 = vmul.f32 %v2974, %v3007
      %v3017 = vmul.f32 %v2978, %v3007
      %v3018 = vmul.f32 %v2982, %v3007
      %v3019 = vmul.f32 %v2986, %v3007
      %v3020 = vmul.f32 %v2990, %v3007
      %v3021 = vmul.f32 %v2994, %v3007
      %v3022 = vmul.f32 %v2998, %v3007
      %v3023 = vmul.f32 %v3002, %v3007
      %v3024 = vadd.f32 %v2924, %v3008
      %v3025 = vadd.f32 %v2925, %v3009
      %v3026 = vadd.f32 %v2926, %v3010
      %v3027 = vadd.f32 %v2927, %v3011
      %v3028 = vadd.f32 %v2928, %v3012
      %v3029 = vadd.f32 %v2929, %v3013
      %v3030 = vadd.f32 %v2930, %v3014
      %v3031 = vadd.f32 %v2931, %v3015
      %v3032 = vadd.f32 %v2932, %v3016
      %v3033 = vadd.f32 %v2933, %v3017
      %v3034 = vadd.f32 %v2934, %v3018
      %v3035 = vadd.f32 %v2935, %v3019
      %v3036 = vadd.f32 %v2936, %v3020
      %v3037 = vadd.f32 %v2937, %v3021
      %v3038 = vadd.f32 %v2938, %v3022
      %v3039 = vadd.f32 %v2939, %v3023
      %v3040 = vmul.f32 %v3024, %v3024
      %v3041 = vmul.f32 %v3025, %v3025
      %v3042 = vmul.f32 %v3026, %v3026
      %v3043 = vmul.f32 %v3027, %v3027
      %v3044 = vmul.f32 %v3028, %v3028
      %v3045 = vmul.f32 %v3029, %v3029
      %v3046 = vmul.f32 %v3030, %v3030
      %v3047 = vmul.f32 %v3031, %v3031
      %v3048 = vmul.f32 %v3032, %v3032
      %v3049 = vmul.f32 %v3033, %v3033
      %v3050 = vmul.f32 %v3034, %v3034
      %v3051 = vmul.f32 %v3035, %v3035
      %v3052 = vmul.f32 %v3036, %v3036
      %v3053 = vmul.f32 %v3037, %v3037
      %v3054 = vmul.f32 %v3038, %v3038
      %v3055 = vmul.f32 %v3039, %v3039
      %v3056 = vmul.f32 %v3024, %v3040
      %v3057 = vmul.f32 %v3025, %v3041
      %v3058 = vmul.f32 %v3026, %v3042
      %v3059 = vmul.f32 %v3027, %v3043
      %v3060 = vmul.f32 %v3028, %v3044
      %v3061 = vmul.f32 %v3029, %v3045
      %v3062 = vmul.f32 %v3030, %v3046
      %v3063 = vmul.f32 %v3031, %v3047
      %v3064 = vmul.f32 %v3032, %v3048
      %v3065 = vmul.f32 %v3033, %v3049
      %v3066 = vmul.f32 %v3034, %v3050
      %v3067 = vmul.f32 %v3035, %v3051
      %v3068 = vmul.f32 %v3036, %v3052
      %v3069 = vmul.f32 %v3037, %v3053
      %v3070 = vmul.f32 %v3038, %v3054
      %v3071 = vmul.f32 %v3039, %v3055
      %v3072 = vmul.f32 %v3056, 0.044715
      %v3073 = vmul.f32 %v3057, 0.044715
      %v3074 = vmul.f32 %v3058, 0.044715
      %v3075 = vmul.f32 %v3059, 0.044715
      %v3076 = vmul.f32 %v3060, 0.044715
      %v3077 = vmul.f32 %v3061, 0.044715
      %v3078 = vmul.f32 %v3062, 0.044715
      %v3079 = vmul.f32 %v3063, 0.044715
      %v3080 = vmul.f32 %v3064, 0.044715
      %v3081 = vmul.f32 %v3065, 0.044715
      %v3082 = vmul.f32 %v3066, 0.044715
      %v3083 = vmul.f32 %v3067, 0.044715
      %v3084 = vmul.f32 %v3068, 0.044715
      %v3085 = vmul.f32 %v3069, 0.044715
      %v3086 = vmul.f32 %v3070, 0.044715
      %v3087 = vmul.f32 %v3071, 0.044715
      %v3088 = vadd.f32 %v3024, %v3072
      %v3089 = vadd.f32 %v3025, %v3073
      %v3090 = vadd.f32 %v3026, %v3074
      %v3091 = vadd.f32 %v3027, %v3075
      %v3092 = vadd.f32 %v3028, %v3076
      %v3093 = vadd.f32 %v3029, %v3077
      %v3094 = vadd.f32 %v3030, %v3078
      %v3095 = vadd.f32 %v3031, %v3079
      %v3096 = vadd.f32 %v3032, %v3080
      %v3097 = vadd.f32 %v3033, %v3081
      %v3098 = vadd.f32 %v3034, %v3082
      %v3099 = vadd.f32 %v3035, %v3083
      %v3100 = vadd.f32 %v3036, %v3084
      %v3101 = vadd.f32 %v3037, %v3085
      %v3102 = vadd.f32 %v3038, %v3086
      %v3103 = vadd.f32 %v3039, %v3087
      %v3104 = vmul.f32 %v3088, 0.7978846
      %v3105 = vmul.f32 %v3089, 0.7978846
      %v3106 = vmul.f32 %v3090, 0.7978846
      %v3107 = vmul.f32 %v3091, 0.7978846
      %v3108 = vmul.f32 %v3092, 0.7978846
      %v3109 = vmul.f32 %v3093, 0.7978846
      %v3110 = vmul.f32 %v3094, 0.7978846
      %v3111 = vmul.f32 %v3095, 0.7978846
      %v3112 = vmul.f32 %v3096, 0.7978846
      %v3113 = vmul.f32 %v3097, 0.7978846
      %v3114 = vmul.f32 %v3098, 0.7978846
      %v3115 = vmul.f32 %v3099, 0.7978846
      %v3116 = vmul.f32 %v3100, 0.7978846
      %v3117 = vmul.f32 %v3101, 0.7978846
      %v3118 = vmul.f32 %v3102, 0.7978846
      %v3119 = vmul.f32 %v3103, 0.7978846
      %v3120 = vtanh.pop %v3104
      %v3121 = vtanh.pop %v3105
      %v3122 = vtanh.pop %v3106
      %v3123 = vtanh.pop %v3107
      %v3124 = vtanh.pop %v3108
      %v3125 = vtanh.pop %v3109
      %v3126 = vtanh.pop %v3110
      %v3127 = vtanh.pop %v3111
      %v3128 = vtanh.pop %v3112
      %v3129 = vtanh.pop %v3113
      %v3130 = vtanh.pop %v3114
      %v3131 = vtanh.pop %v3115
      %v3132 = vtanh.pop %v3116
      %v3133 = vtanh.pop %v3117
      %v3134 = vtanh.pop %v3118
      %v3135 = vtanh.pop %v3119
      %v3136 = vadd.f32 %v3120, 1.0
      %v3137 = vadd.f32 %v3121, 1.0
      %v3138 = vadd.f32 %v3122, 1.0
      %v3139 = vadd.f32 %v3123, 1.0
      %v3140 = vadd.f32 %v3124, 1.0
      %v3141 = vadd.f32 %v3125, 1.0
      %v3142 = vadd.f32 %v3126, 1.0
      %v3143 = vadd.f32 %v3127, 1.0
      %v3144 = vadd.f32 %v3128, 1.0
      %v3145 = vadd.f32 %v3129, 1.0
      %v3146 = vadd.f32 %v3130, 1.0
      %v3147 = vadd.f32 %v3131, 1.0
      %v3148 = vadd.f32 %v3132, 1.0
      %v3149 = vadd.f32 %v3133, 1.0
      %v3150 = vadd.f32 %v3134, 1.0
      %v3151 = vadd.f32 %v3135, 1.0
      %v3152 = vmul.f32 %v3136, 0.5
      %v3153 = vmul.f32 %v3137, 0.5
      %v3154 = vmul.f32 %v3138, 0.5
      %v3155 = vmul.f32 %v3139, 0.5
      %v3156 = vmul.f32 %v3140, 0.5
      %v3157 = vmul.f32 %v3141, 0.5
      %v3158 = vmul.f32 %v3142, 0.5
      %v3159 = vmul.f32 %v3143, 0.5
      %v3160 = vmul.f32 %v3144, 0.5
      %v3161 = vmul.f32 %v3145, 0.5
      %v3162 = vmul.f32 %v3146, 0.5
      %v3163 = vmul.f32 %v3147, 0.5
      %v3164 = vmul.f32 %v3148, 0.5
      %v3165 = vmul.f32 %v3149, 0.5
      %v3166 = vmul.f32 %v3150, 0.5
      %v3167 = vmul.f32 %v3151, 0.5
      %v3168 = vmul.f32 %v3024, %v3152
      %v3169 = vmul.f32 %v3025, %v3153
      %v3170 = vmul.f32 %v3026, %v3154
      %v3171 = vmul.f32 %v3027, %v3155
      %v3172 = vmul.f32 %v3028, %v3156
      %v3173 = vmul.f32 %v3029, %v3157
      %v3174 = vmul.f32 %v3030, %v3158
      %v3175 = vmul.f32 %v3031, %v3159
      %v3176 = vmul.f32 %v3032, %v3160
      %v3177 = vmul.f32 %v3033, %v3161
      %v3178 = vmul.f32 %v3034, %v3162
      %v3179 = vmul.f32 %v3035, %v3163
      %v3180 = vmul.f32 %v3036, %v3164
      %v3181 = vmul.f32 %v3037, %v3165
      %v3182 = vmul.f32 %v3038, %v3166
      %v3183 = vmul.f32 %v3039, %v3167
      %v3184 = vpack.c.bf16 %v3169, %v3168
      %v3185 = vpack.c.bf16 %v3171, %v3170
      %v3186 = vpack.c.bf16 %v3173, %v3172
      %v3187 = vpack.c.bf16 %v3175, %v3174
      %v3188 = vpack.c.bf16 %v3177, %v3176
      %v3189 = vpack.c.bf16 %v3179, %v3178
      %v3190 = vpack.c.bf16 %v3181, %v3180
      %v3191 = vpack.c.bf16 %v3183, %v3182
      %v3192 = vld [vmem:[%s4 + $0x60] sm:$0xf]
      %v3193 = vld [vmem:[%s4 + $0x64] sm:$0xf]
      %v3194 = vlaneseq
      %v3195 = vshrl.u32 %v3194, 7
      %v3196 = vsub.s32 0, %v3195
      %v3197 = vrot.slane %v291, %v3196
      %v3200 = vunpack.c.l.b16 %v3192
      %v3201 = vunpack.c.l.b16 %v3193
      %v3202 = vpack.c.b16 %v3201, %v3200
      %v3205 = vsel %vm1045, %v3184, 0
      %v3208 = vsel %vm1045, %v3185, 0
      %v3211 = vsel %vm1045, %v3186, 0
      %v3214 = vsel %vm1045, %v3187, 0
      %v3217 = vsel %vm1045, %v3188, 0
      %v3220 = vsel %vm1045, %v3189, 0
      %v3223 = vsel %vm1045, %v3190, 0
      %v3226 = vsel %vm1045, %v3191, 0
      %3228 = vmatprep.subr.bf16.mxu0 0
      %3229 = vmatpush1.bf16.msra.mxu0 0
      %3230 = vmatprep.subr.bf16.mxu0 0
      %3231 = vmatpush1.bf16.msra.mxu0 0
      %3232 = vmatprep.subr.bf16.mxu0 0
      %3233 = vmatpush1.bf16.msra.mxu0 0
      %3234 = vmatprep.subr.bf16.mxu0 0
      %3235 = vmatpush1.bf16.msra.mxu0 0
      %3236 = vmatprep.subr.bf16.mxu0 0
      %3237 = vmatpush1.bf16.msra.mxu0 0
      %3238 = vmatprep.subr.bf16.mxu0 0
      %3239 = vmatpush1.bf16.msra.mxu0 0
      %3240 = vmatprep.subr.bf16.mxu0 0
      %3241 = vmatpush1.bf16.msra.mxu0 0
      %3242 = vmatprep.subr.bf16.mxu0 0
      %3243 = vmatpush1.bf16.msra.mxu0 %v3202
      %3244 = vmatprep.subr.bf16.mxu0 0
      %3245 = vmatpush2.bf16.msra.mxu0 0
      %3246 = vmatprep.subr.bf16.mxu0 0
      %3247 = vmatpush2.bf16.msra.mxu0 0
      %3248 = vmatprep.subr.bf16.mxu0 0
      %3249 = vmatpush2.bf16.msra.mxu0 0
      %3250 = vmatprep.subr.bf16.mxu0 0
      %3251 = vmatpush2.bf16.msra.mxu0 0
      %3252 = vmatprep.subr.bf16.mxu0 0
      %3253 = vmatpush2.bf16.msra.mxu0 0
      %3254 = vmatprep.subr.bf16.mxu0 0
      %3255 = vmatpush2.bf16.msra.mxu0 0
      %3256 = vmatprep.subr.bf16.mxu0 0
      %3257 = vmatpush2.bf16.msra.mxu0 0
      %3258 = vmatprep.subr.bf16.mxu0 0
      %3259 = vmatpush2.bf16.msra.mxu0 0
      %3260 = vmatprep.mubr.bf16.mxu0 0
      %3261 = vmatmul.mubr.bf16.gmra.mxu0 %v3205
      %v3262 = vpop.f32.mrf.mxu0
      %v3263 = vadd.f32 %v3197, %v3262
      %v3264 = vpop.f32.mrf.mxu0
      %v3265 = vpop.f32.mrf.mxu0
      %v3266 = vadd.f32 %v3197, %v3265
      %v3267 = vpop.f32.mrf.mxu0
      %3268 = vmatprep.mubr.bf16.mxu0 0
      %3269 = vmatmul.mubr.bf16.gmra.mxu0 %v3208
      %v3270 = vpop.f32.mrf.mxu0
      %v3271 = vadd.f32 %v3197, %v3270
      %v3272 = vpop.f32.mrf.mxu0
      %v3273 = vpop.f32.mrf.mxu0
      %v3274 = vadd.f32 %v3197, %v3273
      %v3275 = vpop.f32.mrf.mxu0
      %3276 = vmatprep.mubr.bf16.mxu0 0
      %3277 = vmatmul.mubr.bf16.gmra.mxu0 %v3211
      %v3278 = vpop.f32.mrf.mxu0
      %v3279 = vadd.f32 %v3197, %v3278
      %v3280 = vpop.f32.mrf.mxu0
      %v3281 = vpop.f32.mrf.mxu0
      %v3282 = vadd.f32 %v3197, %v3281
      %v3283 = vpop.f32.mrf.mxu0
      %3284 = vmatprep.mubr.bf16.mxu0 0
      %3285 = vmatmul.mubr.bf16.gmra.mxu0 %v3214
      %v3286 = vpop.f32.mrf.mxu0
      %v3287 = vadd.f32 %v3197, %v3286
      %v3288 = vpop.f32.mrf.mxu0
      %v3289 = vpop.f32.mrf.mxu0
      %v3290 = vadd.f32 %v3197, %v3289
      %v3291 = vpop.f32.mrf.mxu0
      %3292 = vmatprep.mubr.bf16.mxu0 0
      %3293 = vmatmul.mubr.bf16.gmra.mxu0 %v3217
      %v3294 = vpop.f32.mrf.mxu0
      %v3295 = vadd.f32 %v3197, %v3294
      %v3296 = vpop.f32.mrf.mxu0
      %v3297 = vpop.f32.mrf.mxu0
      %v3298 = vadd.f32 %v3197, %v3297
      %v3299 = vpop.f32.mrf.mxu0
      %3300 = vmatprep.mubr.bf16.mxu0 0
      %3301 = vmatmul.mubr.bf16.gmra.mxu0 %v3220
      %v3302 = vpop.f32.mrf.mxu0
      %v3303 = vadd.f32 %v3197, %v3302
      %v3304 = vpop.f32.mrf.mxu0
      %v3305 = vpop.f32.mrf.mxu0
      %v3306 = vadd.f32 %v3197, %v3305
      %v3307 = vpop.f32.mrf.mxu0
      %3308 = vmatprep.mubr.bf16.mxu0 0
      %3309 = vmatmul.mubr.bf16.gmra.mxu0 %v3223
      %v3310 = vpop.f32.mrf.mxu0
      %v3311 = vadd.f32 %v3197, %v3310
      %v3312 = vpop.f32.mrf.mxu0
      %v3313 = vpop.f32.mrf.mxu0
      %v3314 = vadd.f32 %v3197, %v3313
      %v3315 = vpop.f32.mrf.mxu0
      %3316 = vmatprep.mubr.bf16.mxu0 0
      %3317 = vmatmul.mubr.bf16.gmra.mxu0 %v3226
      %v3318 = vpop.f32.mrf.mxu0
      %v3319 = vadd.f32 %v3197, %v3318
      %v3320 = vpop.f32.mrf.mxu0
      %v3321 = vpop.f32.mrf.mxu0
      %v3322 = vadd.f32 %v3197, %v3321
      %v3323 = vpop.f32.mrf.mxu0
      %3324 = vdwg.mxu0
      %v3325 = vxor.u32 %v3263, 2147483648
      %v3326 = vxor.u32 %v3266, 2147483648
      %v3327 = vxor.u32 %v3271, 2147483648
      %v3328 = vxor.u32 %v3274, 2147483648
      %v3329 = vxor.u32 %v3279, 2147483648
      %v3330 = vxor.u32 %v3282, 2147483648
      %v3331 = vxor.u32 %v3287, 2147483648
      %v3332 = vxor.u32 %v3290, 2147483648
      %v3333 = vxor.u32 %v3295, 2147483648
      %v3334 = vxor.u32 %v3298, 2147483648
      %v3335 = vxor.u32 %v3303, 2147483648
      %v3336 = vxor.u32 %v3306, 2147483648
      %v3337 = vxor.u32 %v3311, 2147483648
      %v3338 = vxor.u32 %v3314, 2147483648
      %v3339 = vxor.u32 %v3319, 2147483648
      %v3340 = vxor.u32 %v3322, 2147483648
      %v3341 = vmul.f32 %v3325, 1.442695
      %v3342 = vpow.pop %v3341
      %v3343 = vmul.f32 %v3326, 1.442695
      %v3344 = vpow.pop %v3343
      %v3345 = vmul.f32 %v3327, 1.442695
      %v3346 = vpow.pop %v3345
      %v3347 = vmul.f32 %v3328, 1.442695
      %v3348 = vpow.pop %v3347
      %v3349 = vmul.f32 %v3329, 1.442695
      %v3350 = vpow.pop %v3349
      %v3351 = vmul.f32 %v3330, 1.442695
      %v3352 = vpow.pop %v3351
      %v3353 = vmul.f32 %v3331, 1.442695
      %v3354 = vpow.pop %v3353
      %v3355 = vmul.f32 %v3332, 1.442695
      %v3356 = vpow.pop %v3355
      %v3357 = vmul.f32 %v3333, 1.442695
      %v3358 = vpow.pop %v3357
      %v3359 = vmul.f32 %v3334, 1.442695
      %v3360 = vpow.pop %v3359
      %v3361 = vmul.f32 %v3335, 1.442695
      %v3362 = vpow.pop %v3361
      %v3363 = vmul.f32 %v3336, 1.442695
      %v3364 = vpow.pop %v3363
      %v3365 = vmul.f32 %v3337, 1.442695
      %v3366 = vpow.pop %v3365
      %v3367 = vmul.f32 %v3338, 1.442695
      %v3368 = vpow.pop %v3367
      %v3369 = vmul.f32 %v3339, 1.442695
      %v3370 = vpow.pop %v3369
      %v3371 = vmul.f32 %v3340, 1.442695
      %v3372 = vpow.pop %v3371
      %v3373 = vadd.f32 %v3342, 1.0
      %v3374 = vadd.f32 %v3344, 1.0
      %v3375 = vadd.f32 %v3346, 1.0
      %v3376 = vadd.f32 %v3348, 1.0
      %v3377 = vadd.f32 %v3350, 1.0
      %v3378 = vadd.f32 %v3352, 1.0
      %v3379 = vadd.f32 %v3354, 1.0
      %v3380 = vadd.f32 %v3356, 1.0
      %v3381 = vadd.f32 %v3358, 1.0
      %v3382 = vadd.f32 %v3360, 1.0
      %v3383 = vadd.f32 %v3362, 1.0
      %v3384 = vadd.f32 %v3364, 1.0
      %v3385 = vadd.f32 %v3366, 1.0
      %v3386 = vadd.f32 %v3368, 1.0
      %v3387 = vadd.f32 %v3370, 1.0
      %v3388 = vadd.f32 %v3372, 1.0
      %v3389 = vrcp.pop %v3373
      %v3390 = vmul.f32 1.0, %v3389
      %v3391 = vrcp.pop %v3374
      %v3392 = vmul.f32 1.0, %v3391
      %v3393 = vrcp.pop %v3375
      %v3394 = vmul.f32 1.0, %v3393
      %v3395 = vrcp.pop %v3376
      %v3396 = vmul.f32 1.0, %v3395
      %v3397 = vrcp.pop %v3377
      %v3398 = vmul.f32 1.0, %v3397
      %v3399 = vrcp.pop %v3378
      %v3400 = vmul.f32 1.0, %v3399
      %v3401 = vrcp.pop %v3379
      %v3402 = vmul.f32 1.0, %v3401
      %v3403 = vrcp.pop %v3380
      %v3404 = vmul.f32 1.0, %v3403
      %v3405 = vrcp.pop %v3381
      %v3406 = vmul.f32 1.0, %v3405
      %v3407 = vrcp.pop %v3382
      %v3408 = vmul.f32 1.0, %v3407
      %v3409 = vrcp.pop %v3383
      %v3410 = vmul.f32 1.0, %v3409
      %v3411 = vrcp.pop %v3384
      %v3412 = vmul.f32 1.0, %v3411
      %v3413 = vrcp.pop %v3385
      %v3414 = vmul.f32 1.0, %v3413
      %v3415 = vrcp.pop %v3386
      %v3416 = vmul.f32 1.0, %v3415
      %v3417 = vrcp.pop %v3387
      %v3418 = vmul.f32 1.0, %v3417
      %v3419 = vrcp.pop %v3388
      %v3420 = vmul.f32 1.0, %v3419
      %v3421 = vmul.f32 %v304, %v3390
      %v3422 = vmul.f32 %v305, %v3392
      %v3423 = vmul.f32 %v306, %v3394
      %v3424 = vmul.f32 %v307, %v3396
      %v3425 = vmul.f32 %v308, %v3398
      %v3426 = vmul.f32 %v309, %v3400
      %v3427 = vmul.f32 %v310, %v3402
      %v3428 = vmul.f32 %v311, %v3404
      %v3429 = vmul.f32 %v312, %v3406
      %v3430 = vmul.f32 %v313, %v3408
      %v3431 = vmul.f32 %v314, %v3410
      %v3432 = vmul.f32 %v315, %v3412
      %v3433 = vmul.f32 %v316, %v3414
      %v3434 = vmul.f32 %v317, %v3416
      %v3435 = vmul.f32 %v318, %v3418
      %v3436 = vmul.f32 %v319, %v3420
      %v3437 = vsel %vm1279, %v3421, 0.0
      %3438 = vadd.xlane.f32.xlu0 %v3437
      %v3439 = vpop.xlane.xlu0 %3438
      %v3440 = vsel %vm1279, %v3422, 0.0
      %3441 = vadd.xlane.f32.xlu0 %v3440
      %v3442 = vpop.xlane.xlu0 %3441
      %v3443 = vsel %vm1279, %v3423, 0.0
      %3444 = vadd.xlane.f32.xlu0 %v3443
      %v3445 = vpop.xlane.xlu0 %3444
      %v3446 = vsel %vm1279, %v3424, 0.0
      %3447 = vadd.xlane.f32.xlu0 %v3446
      %v3448 = vpop.xlane.xlu0 %3447
      %v3449 = vsel %vm1279, %v3425, 0.0
      %3450 = vadd.xlane.f32.xlu0 %v3449
      %v3451 = vpop.xlane.xlu0 %3450
      %v3452 = vsel %vm1279, %v3426, 0.0
      %3453 = vadd.xlane.f32.xlu0 %v3452
      %v3454 = vpop.xlane.xlu0 %3453
      %v3455 = vsel %vm1279, %v3427, 0.0
      %3456 = vadd.xlane.f32.xlu0 %v3455
      %v3457 = vpop.xlane.xlu0 %3456
      %v3458 = vsel %vm1279, %v3428, 0.0
      %3459 = vadd.xlane.f32.xlu0 %v3458
      %v3460 = vpop.xlane.xlu0 %3459
      %v3461 = vsel %vm1279, %v3429, 0.0
      %3462 = vadd.xlane.f32.xlu0 %v3461
      %v3463 = vpop.xlane.xlu0 %3462
      %v3464 = vsel %vm1279, %v3430, 0.0
      %3465 = vadd.xlane.f32.xlu0 %v3464
      %v3466 = vpop.xlane.xlu0 %3465
      %v3467 = vsel %vm1279, %v3431, 0.0
      %3468 = vadd.xlane.f32.xlu0 %v3467
      %v3469 = vpop.xlane.xlu0 %3468
      %v3470 = vsel %vm1279, %v3432, 0.0
      %3471 = vadd.xlane.f32.xlu0 %v3470
      %v3472 = vpop.xlane.xlu0 %3471
      %v3473 = vsel %vm1279, %v3433, 0.0
      %3474 = vadd.xlane.f32.xlu0 %v3473
      %v3475 = vpop.xlane.xlu0 %3474
      %v3476 = vsel %vm1279, %v3434, 0.0
      %3477 = vadd.xlane.f32.xlu0 %v3476
      %v3478 = vpop.xlane.xlu0 %3477
      %v3479 = vsel %vm1279, %v3435, 0.0
      %3480 = vadd.xlane.f32.xlu0 %v3479
      %v3481 = vpop.xlane.xlu0 %3480
      %v3482 = vsel %vm1279, %v3436, 0.0
      %3483 = vadd.xlane.f32.xlu0 %v3482
      %v3484 = vpop.xlane.xlu0 %3483
      %v3485 = vmul.f32 %v3439, %v1328
      %v3486 = vmul.f32 %v3442, %v1328
      %v3487 = vmul.f32 %v3445, %v1328
      %v3488 = vmul.f32 %v3448, %v1328
      %v3489 = vmul.f32 %v3451, %v1328
      %v3490 = vmul.f32 %v3454, %v1328
      %v3491 = vmul.f32 %v3457, %v1328
      %v3492 = vmul.f32 %v3460, %v1328
      %v3493 = vmul.f32 %v3463, %v1328
      %v3494 = vmul.f32 %v3466, %v1328
      %v3495 = vmul.f32 %v3469, %v1328
      %v3496 = vmul.f32 %v3472, %v1328
      %v3497 = vmul.f32 %v3475, %v1328
      %v3498 = vmul.f32 %v3478, %v1328
      %v3499 = vmul.f32 %v3481, %v1328
      %v3500 = vmul.f32 %v3484, %v1328
      %v3501 = vsub.f32 %v3421, %v3485
      %v3502 = vsub.f32 %v3422, %v3486
      %v3503 = vsub.f32 %v3423, %v3487
      %v3504 = vsub.f32 %v3424, %v3488
      %v3505 = vsub.f32 %v3425, %v3489
      %v3506 = vsub.f32 %v3426, %v3490
      %v3507 = vsub.f32 %v3427, %v3491
      %v3508 = vsub.f32 %v3428, %v3492
      %v3509 = vsub.f32 %v3429, %v3493
      %v3510 = vsub.f32 %v3430, %v3494
      %v3511 = vsub.f32 %v3431, %v3495
      %v3512 = vsub.f32 %v3432, %v3496
      %v3513 = vsub.f32 %v3433, %v3497
      %v3514 = vsub.f32 %v3434, %v3498
      %v3515 = vsub.f32 %v3435, %v3499
      %v3516 = vsub.f32 %v3436, %v3500
      %v3517 = vmul.f32 %v3501, %v3501
      %v3518 = vmul.f32 %v3502, %v3502
      %v3519 = vmul.f32 %v3503, %v3503
      %v3520 = vmul.f32 %v3504, %v3504
      %v3521 = vmul.f32 %v3505, %v3505
      %v3522 = vmul.f32 %v3506, %v3506
      %v3523 = vmul.f32 %v3507, %v3507
      %v3524 = vmul.f32 %v3508, %v3508
      %v3525 = vmul.f32 %v3509, %v3509
      %v3526 = vmul.f32 %v3510, %v3510
      %v3527 = vmul.f32 %v3511, %v3511
      %v3528 = vmul.f32 %v3512, %v3512
      %v3529 = vmul.f32 %v3513, %v3513
      %v3530 = vmul.f32 %v3514, %v3514
      %v3531 = vmul.f32 %v3515, %v3515
      %v3532 = vmul.f32 %v3516, %v3516
      %v3533 = vsel %vm1279, %v3517, 0.0
      %3534 = vadd.xlane.f32.xlu0 %v3533
      %v3535 = vpop.xlane.xlu0 %3534
      %v3536 = vsel %vm1279, %v3518, 0.0
      %3537 = vadd.xlane.f32.xlu0 %v3536
      %v3538 = vpop.xlane.xlu0 %3537
      %v3539 = vsel %vm1279, %v3519, 0.0
      %3540 = vadd.xlane.f32.xlu0 %v3539
      %v3541 = vpop.xlane.xlu0 %3540
      %v3542 = vsel %vm1279, %v3520, 0.0
      %3543 = vadd.xlane.f32.xlu0 %v3542
      %v3544 = vpop.xlane.xlu0 %3543
      %v3545 = vsel %vm1279, %v3521, 0.0
      %3546 = vadd.xlane.f32.xlu0 %v3545
      %v3547 = vpop.xlane.xlu0 %3546
      %v3548 = vsel %vm1279, %v3522, 0.0
      %3549 = vadd.xlane.f32.xlu0 %v3548
      %v3550 = vpop.xlane.xlu0 %3549
      %v3551 = vsel %vm1279, %v3523, 0.0
      %3552 = vadd.xlane.f32.xlu0 %v3551
      %v3553 = vpop.xlane.xlu0 %3552
      %v3554 = vsel %vm1279, %v3524, 0.0
      %3555 = vadd.xlane.f32.xlu0 %v3554
      %v3556 = vpop.xlane.xlu0 %3555
      %v3557 = vsel %vm1279, %v3525, 0.0
      %3558 = vadd.xlane.f32.xlu0 %v3557
      %v3559 = vpop.xlane.xlu0 %3558
      %v3560 = vsel %vm1279, %v3526, 0.0
      %3561 = vadd.xlane.f32.xlu0 %v3560
      %v3562 = vpop.xlane.xlu0 %3561
      %v3563 = vsel %vm1279, %v3527, 0.0
      %3564 = vadd.xlane.f32.xlu0 %v3563
      %v3565 = vpop.xlane.xlu0 %3564
      %v3566 = vsel %vm1279, %v3528, 0.0
      %3567 = vadd.xlane.f32.xlu0 %v3566
      %v3568 = vpop.xlane.xlu0 %3567
      %v3569 = vsel %vm1279, %v3529, 0.0
      %3570 = vadd.xlane.f32.xlu0 %v3569
      %v3571 = vpop.xlane.xlu0 %3570
      %v3572 = vsel %vm1279, %v3530, 0.0
      %3573 = vadd.xlane.f32.xlu0 %v3572
      %v3574 = vpop.xlane.xlu0 %3573
      %v3575 = vsel %vm1279, %v3531, 0.0
      %3576 = vadd.xlane.f32.xlu0 %v3575
      %v3577 = vpop.xlane.xlu0 %3576
      %v3578 = vsel %vm1279, %v3532, 0.0
      %3579 = vadd.xlane.f32.xlu0 %v3578
      %v3580 = vpop.xlane.xlu0 %3579
      %v3581 = vmul.f32 %v3535, %v1328
      %v3582 = vmul.f32 %v3538, %v1328
      %v3583 = vmul.f32 %v3541, %v1328
      %v3584 = vmul.f32 %v3544, %v1328
      %v3585 = vmul.f32 %v3547, %v1328
      %v3586 = vmul.f32 %v3550, %v1328
      %v3587 = vmul.f32 %v3553, %v1328
      %v3588 = vmul.f32 %v3556, %v1328
      %v3589 = vmul.f32 %v3559, %v1328
      %v3590 = vmul.f32 %v3562, %v1328
      %v3591 = vmul.f32 %v3565, %v1328
      %v3592 = vmul.f32 %v3568, %v1328
      %v3593 = vmul.f32 %v3571, %v1328
      %v3594 = vmul.f32 %v3574, %v1328
      %v3595 = vmul.f32 %v3577, %v1328
      %v3596 = vmul.f32 %v3580, %v1328
      %v3597 = vadd.f32 %v3581, 1e-05
      %v3598 = vadd.f32 %v3582, 1e-05
      %v3599 = vadd.f32 %v3583, 1e-05
      %v3600 = vadd.f32 %v3584, 1e-05
      %v3601 = vadd.f32 %v3585, 1e-05
      %v3602 = vadd.f32 %v3586, 1e-05
      %v3603 = vadd.f32 %v3587, 1e-05
      %v3604 = vadd.f32 %v3588, 1e-05
      %v3605 = vadd.f32 %v3589, 1e-05
      %v3606 = vadd.f32 %v3590, 1e-05
      %v3607 = vadd.f32 %v3591, 1e-05
      %v3608 = vadd.f32 %v3592, 1e-05
      %v3609 = vadd.f32 %v3593, 1e-05
      %v3610 = vadd.f32 %v3594, 1e-05
      %v3611 = vadd.f32 %v3595, 1e-05
      %v3612 = vadd.f32 %v3596, 1e-05
      %v3613 = vrsqrt.pop %v3597
      %v3614 = vrsqrt.pop %v3598
      %v3615 = vrsqrt.pop %v3599
      %v3616 = vrsqrt.pop %v3600
      %v3617 = vrsqrt.pop %v3601
      %v3618 = vrsqrt.pop %v3602
      %v3619 = vrsqrt.pop %v3603
      %v3620 = vrsqrt.pop %v3604
      %v3621 = vrsqrt.pop %v3605
      %v3622 = vrsqrt.pop %v3606
      %v3623 = vrsqrt.pop %v3607
      %v3624 = vrsqrt.pop %v3608
      %v3625 = vrsqrt.pop %v3609
      %v3626 = vrsqrt.pop %v3610
      %v3627 = vrsqrt.pop %v3611
      %v3628 = vrsqrt.pop %v3612
      %v3629 = vmul.f32 %v3501, %v3613
      %v3630 = vmul.f32 %v3502, %v3614
      %v3631 = vmul.f32 %v3503, %v3615
      %v3632 = vmul.f32 %v3504, %v3616
      %v3633 = vmul.f32 %v3505, %v3617
      %v3634 = vmul.f32 %v3506, %v3618
      %v3635 = vmul.f32 %v3507, %v3619
      %v3636 = vmul.f32 %v3508, %v3620
      %v3637 = vmul.f32 %v3509, %v3621
      %v3638 = vmul.f32 %v3510, %v3622
      %v3639 = vmul.f32 %v3511, %v3623
      %v3640 = vmul.f32 %v3512, %v3624
      %v3641 = vmul.f32 %v3513, %v3625
      %v3642 = vmul.f32 %v3514, %v3626
      %v3643 = vmul.f32 %v3515, %v3627
      %v3644 = vmul.f32 %v3516, %v3628
      %v3645 = vlaneseq
      %v3646 = vshrl.u32 %v3645, 7
      %v3647 = vsub.s32 0, %v3646
      %v3648 = vrot.slane %v292, %v3647
      %v3649 = vmul.f32 %v3629, %v3648
      %v3650 = vmul.f32 %v3630, %v3648
      %v3651 = vmul.f32 %v3631, %v3648
      %v3652 = vmul.f32 %v3632, %v3648
      %v3653 = vmul.f32 %v3633, %v3648
      %v3654 = vmul.f32 %v3634, %v3648
      %v3655 = vmul.f32 %v3635, %v3648
      %v3656 = vmul.f32 %v3636, %v3648
      %v3657 = vmul.f32 %v3637, %v3648
      %v3658 = vmul.f32 %v3638, %v3648
      %v3659 = vmul.f32 %v3639, %v3648
      %v3660 = vmul.f32 %v3640, %v3648
      %v3661 = vmul.f32 %v3641, %v3648
      %v3662 = vmul.f32 %v3642, %v3648
      %v3663 = vmul.f32 %v3643, %v3648
      %v3664 = vmul.f32 %v3644, %v3648
      %v3665 = vlaneseq
      %v3666 = vshrl.u32 %v3665, 7
      %v3667 = vsub.s32 0, %v3666
      %v3668 = vrot.slane %v293, %v3667
      %v3669 = vadd.f32 %v3649, %v3668
      %v3670 = vadd.f32 %v3650, %v3668
      %v3671 = vadd.f32 %v3651, %v3668
      %v3672 = vadd.f32 %v3652, %v3668
      %v3673 = vadd.f32 %v3653, %v3668
      %v3674 = vadd.f32 %v3654, %v3668
      %v3675 = vadd.f32 %v3655, %v3668
      %v3676 = vadd.f32 %v3656, %v3668
      %v3677 = vadd.f32 %v3657, %v3668
      %v3678 = vadd.f32 %v3658, %v3668
      %v3679 = vadd.f32 %v3659, %v3668
      %v3680 = vadd.f32 %v3660, %v3668
      %v3681 = vadd.f32 %v3661, %v3668
      %v3682 = vadd.f32 %v3662, %v3668
      %v3683 = vadd.f32 %v3663, %v3668
      %v3684 = vadd.f32 %v3664, %v3668
      %v3685 = vpack.c.bf16 %v3670, %v3669
      %v3686 = vpack.c.bf16 %v3672, %v3671
      %v3687 = vpack.c.bf16 %v3674, %v3673
      %v3688 = vpack.c.bf16 %v3676, %v3675
      %v3689 = vpack.c.bf16 %v3678, %v3677
      %v3690 = vpack.c.bf16 %v3680, %v3679
      %v3691 = vpack.c.bf16 %v3682, %v3681
      %v3692 = vpack.c.bf16 %v3684, %v3683
      %v3693 = vld [vmem:[%s4] sm:$0xf]
      %v3694 = vld [vmem:[%s4 + $0x4] sm:$0xf]
      %v3695 = vld [vmem:[%s4 + $0x8] sm:$0xf]
      %v3696 = vld [vmem:[%s4 + $0xc] sm:$0xf]
      %v3697 = vld [vmem:[%s4 + $0x10] sm:$0xf]
      %v3698 = vld [vmem:[%s4 + $0x14] sm:$0xf]
      %v3699 = vld [vmem:[%s4 + $0x18] sm:$0xf]
      %v3700 = vld [vmem:[%s4 + $0x1c] sm:$0xf]
      %v3701 = vlaneseq
      %v3702 = vshrl.u32 %v3701, 7
      %v3703 = vsub.s32 0, %v3702
      %v3704 = vrot.slane %v294, %v3703
      %v3713 = vunpack.c.l.b16 %v3693
      %v3714 = vunpack.c.l.b16 %v3694
      %v3715 = vunpack.c.l.b16 %v3695
      %v3716 = vunpack.c.l.b16 %v3696
      %v3717 = vunpack.c.l.b16 %v3697
      %v3718 = vunpack.c.l.b16 %v3698
      %v3719 = vunpack.c.l.b16 %v3699
      %v3720 = vunpack.c.l.b16 %v3700
      %v3721 = vpack.c.b16 %v3714, %v3713
      %v3722 = vpack.c.b16 %v3716, %v3715
      %v3723 = vpack.c.b16 %v3718, %v3717
      %v3724 = vpack.c.b16 %v3720, %v3719
      %v3730 = vsel %vm1279, %v3685, 0
      %v3733 = vsel %vm1279, %v3686, 0
      %v3736 = vsel %vm1279, %v3687, 0
      %v3739 = vsel %vm1279, %v3688, 0
      %v3742 = vsel %vm1279, %v3689, 0
      %v3745 = vsel %vm1279, %v3690, 0
      %v3748 = vsel %vm1279, %v3691, 0
      %v3751 = vsel %vm1279, %v3692, 0
      %3753 = vmatprep.subr.bf16.mxu0 0
      %3754 = vmatpush1.bf16.msra.mxu0 0
      %3755 = vmatprep.subr.bf16.mxu0 0
      %3756 = vmatpush1.bf16.msra.mxu0 0
      %3757 = vmatprep.subr.bf16.mxu0 0
      %3758 = vmatpush1.bf16.msra.mxu0 0
      %3759 = vmatprep.subr.bf16.mxu0 0
      %3760 = vmatpush1.bf16.msra.mxu0 0
      %3761 = vmatprep.subr.bf16.mxu0 0
      %3762 = vmatpush1.bf16.msra.mxu0 %v3724
      %3763 = vmatprep.subr.bf16.mxu0 0
      %3764 = vmatpush1.bf16.msra.mxu0 %v3723
      %3765 = vmatprep.subr.bf16.mxu0 0
      %3766 = vmatpush1.bf16.msra.mxu0 %v3722
      %3767 = vmatprep.subr.bf16.mxu0 0
      %3768 = vmatpush1.bf16.msra.mxu0 %v3721
      %3769 = vmatprep.subr.bf16.mxu0 0
      %3770 = vmatpush2.bf16.msra.mxu0 0
      %3771 = vmatprep.subr.bf16.mxu0 0
      %3772 = vmatpush2.bf16.msra.mxu0 0
      %3773 = vmatprep.subr.bf16.mxu0 0
      %3774 = vmatpush2.bf16.msra.mxu0 0
      %3775 = vmatprep.subr.bf16.mxu0 0
      %3776 = vmatpush2.bf16.msra.mxu0 0
      %3777 = vmatprep.subr.bf16.mxu0 0
      %3778 = vmatpush2.bf16.msra.mxu0 0
      %3779 = vmatprep.subr.bf16.mxu0 0
      %3780 = vmatpush2.bf16.msra.mxu0 0
      %3781 = vmatprep.subr.bf16.mxu0 0
      %3782 = vmatpush2.bf16.msra.mxu0 0
      %3783 = vmatprep.subr.bf16.mxu0 0
      %3784 = vmatpush2.bf16.msra.mxu0 0
      %3785 = vmatprep.mubr.bf16.mxu0 0
      %3786 = vmatmul.mubr.bf16.gmra.mxu0 %v3730
      %v3787 = vpop.f32.mrf.mxu0
      %v3788 = vadd.f32 %v3704, %v3787
      %v3789 = vpop.f32.mrf.mxu0
      %v3790 = vpop.f32.mrf.mxu0
      %v3791 = vadd.f32 %v3704, %v3790
      %v3792 = vpop.f32.mrf.mxu0
      %3793 = vmatprep.mubr.bf16.mxu0 0
      %3794 = vmatmul.mubr.bf16.gmra.mxu0 %v3733
      %v3795 = vpop.f32.mrf.mxu0
      %v3796 = vadd.f32 %v3704, %v3795
      %v3797 = vpop.f32.mrf.mxu0
      %v3798 = vpop.f32.mrf.mxu0
      %v3799 = vadd.f32 %v3704, %v3798
      %v3800 = vpop.f32.mrf.mxu0
      %3801 = vmatprep.mubr.bf16.mxu0 0
      %3802 = vmatmul.mubr.bf16.gmra.mxu0 %v3736
      %v3803 = vpop.f32.mrf.mxu0
      %v3804 = vadd.f32 %v3704, %v3803
      %v3805 = vpop.f32.mrf.mxu0
      %v3806 = vpop.f32.mrf.mxu0
      %v3807 = vadd.f32 %v3704, %v3806
      %v3808 = vpop.f32.mrf.mxu0
      %3809 = vmatprep.mubr.bf16.mxu0 0
      %3810 = vmatmul.mubr.bf16.gmra.mxu0 %v3739
      %v3811 = vpop.f32.mrf.mxu0
      %v3812 = vadd.f32 %v3704, %v3811
      %v3813 = vpop.f32.mrf.mxu0
      %v3814 = vpop.f32.mrf.mxu0
      %v3815 = vadd.f32 %v3704, %v3814
      %v3816 = vpop.f32.mrf.mxu0
      %3817 = vmatprep.mubr.bf16.mxu0 0
      %3818 = vmatmul.mubr.bf16.gmra.mxu0 %v3742
      %v3819 = vpop.f32.mrf.mxu0
      %v3820 = vadd.f32 %v3704, %v3819
      %v3821 = vpop.f32.mrf.mxu0
      %v3822 = vpop.f32.mrf.mxu0
      %v3823 = vadd.f32 %v3704, %v3822
      %v3824 = vpop.f32.mrf.mxu0
      %3825 = vmatprep.mubr.bf16.mxu0 0
      %3826 = vmatmul.mubr.bf16.gmra.mxu0 %v3745
      %v3827 = vpop.f32.mrf.mxu0
      %v3828 = vadd.f32 %v3704, %v3827
      %v3829 = vpop.f32.mrf.mxu0
      %v3830 = vpop.f32.mrf.mxu0
      %v3831 = vadd.f32 %v3704, %v3830
      %v3832 = vpop.f32.mrf.mxu0
      %3833 = vmatprep.mubr.bf16.mxu0 0
      %3834 = vmatmul.mubr.bf16.gmra.mxu0 %v3748
      %v3835 = vpop.f32.mrf.mxu0
      %v3836 = vadd.f32 %v3704, %v3835
      %v3837 = vpop.f32.mrf.mxu0
      %v3838 = vpop.f32.mrf.mxu0
      %v3839 = vadd.f32 %v3704, %v3838
      %v3840 = vpop.f32.mrf.mxu0
      %3841 = vmatprep.mubr.bf16.mxu0 0
      %3842 = vmatmul.mubr.bf16.gmra.mxu0 %v3751
      %v3843 = vpop.f32.mrf.mxu0
      %v3844 = vadd.f32 %v3704, %v3843
      %v3845 = vpop.f32.mrf.mxu0
      %v3846 = vpop.f32.mrf.mxu0
      %v3847 = vadd.f32 %v3704, %v3846
      %v3848 = vpop.f32.mrf.mxu0
      %3849 = vdwg.mxu0
      %v3850 = vmul.f32 %v3788, %v3788
      %v3851 = vmul.f32 %v3791, %v3791
      %v3852 = vmul.f32 %v3796, %v3796
      %v3853 = vmul.f32 %v3799, %v3799
      %v3854 = vmul.f32 %v3804, %v3804
      %v3855 = vmul.f32 %v3807, %v3807
      %v3856 = vmul.f32 %v3812, %v3812
      %v3857 = vmul.f32 %v3815, %v3815
      %v3858 = vmul.f32 %v3820, %v3820
      %v3859 = vmul.f32 %v3823, %v3823
      %v3860 = vmul.f32 %v3828, %v3828
      %v3861 = vmul.f32 %v3831, %v3831
      %v3862 = vmul.f32 %v3836, %v3836
      %v3863 = vmul.f32 %v3839, %v3839
      %v3864 = vmul.f32 %v3844, %v3844
      %v3865 = vmul.f32 %v3847, %v3847
      %v3866 = vmul.f32 %v3788, %v3850
      %v3867 = vmul.f32 %v3791, %v3851
      %v3868 = vmul.f32 %v3796, %v3852
      %v3869 = vmul.f32 %v3799, %v3853
      %v3870 = vmul.f32 %v3804, %v3854
      %v3871 = vmul.f32 %v3807, %v3855
      %v3872 = vmul.f32 %v3812, %v3856
      %v3873 = vmul.f32 %v3815, %v3857
      %v3874 = vmul.f32 %v3820, %v3858
      %v3875 = vmul.f32 %v3823, %v3859
      %v3876 = vmul.f32 %v3828, %v3860
      %v3877 = vmul.f32 %v3831, %v3861
      %v3878 = vmul.f32 %v3836, %v3862
      %v3879 = vmul.f32 %v3839, %v3863
      %v3880 = vmul.f32 %v3844, %v3864
      %v3881 = vmul.f32 %v3847, %v3865
      %v3882 = vmul.f32 %v3866, 0.044715
      %v3883 = vmul.f32 %v3867, 0.044715
      %v3884 = vmul.f32 %v3868, 0.044715
      %v3885 = vmul.f32 %v3869, 0.044715
      %v3886 = vmul.f32 %v3870, 0.044715
      %v3887 = vmul.f32 %v3871, 0.044715
      %v3888 = vmul.f32 %v3872, 0.044715
      %v3889 = vmul.f32 %v3873, 0.044715
      %v3890 = vmul.f32 %v3874, 0.044715
      %v3891 = vmul.f32 %v3875, 0.044715
      %v3892 = vmul.f32 %v3876, 0.044715
      %v3893 = vmul.f32 %v3877, 0.044715
      %v3894 = vmul.f32 %v3878, 0.044715
      %v3895 = vmul.f32 %v3879, 0.044715
      %v3896 = vmul.f32 %v3880, 0.044715
      %v3897 = vmul.f32 %v3881, 0.044715
      %v3898 = vadd.f32 %v3788, %v3882
      %v3899 = vadd.f32 %v3791, %v3883
      %v3900 = vadd.f32 %v3796, %v3884
      %v3901 = vadd.f32 %v3799, %v3885
      %v3902 = vadd.f32 %v3804, %v3886
      %v3903 = vadd.f32 %v3807, %v3887
      %v3904 = vadd.f32 %v3812, %v3888
      %v3905 = vadd.f32 %v3815, %v3889
      %v3906 = vadd.f32 %v3820, %v3890
      %v3907 = vadd.f32 %v3823, %v3891
      %v3908 = vadd.f32 %v3828, %v3892
      %v3909 = vadd.f32 %v3831, %v3893
      %v3910 = vadd.f32 %v3836, %v3894
      %v3911 = vadd.f32 %v3839, %v3895
      %v3912 = vadd.f32 %v3844, %v3896
      %v3913 = vadd.f32 %v3847, %v3897
      %v3914 = vmul.f32 %v3898, 0.7978846
      %v3915 = vmul.f32 %v3899, 0.7978846
      %v3916 = vmul.f32 %v3900, 0.7978846
      %v3917 = vmul.f32 %v3901, 0.7978846
      %v3918 = vmul.f32 %v3902, 0.7978846
      %v3919 = vmul.f32 %v3903, 0.7978846
      %v3920 = vmul.f32 %v3904, 0.7978846
      %v3921 = vmul.f32 %v3905, 0.7978846
      %v3922 = vmul.f32 %v3906, 0.7978846
      %v3923 = vmul.f32 %v3907, 0.7978846
      %v3924 = vmul.f32 %v3908, 0.7978846
      %v3925 = vmul.f32 %v3909, 0.7978846
      %v3926 = vmul.f32 %v3910, 0.7978846
      %v3927 = vmul.f32 %v3911, 0.7978846
      %v3928 = vmul.f32 %v3912, 0.7978846
      %v3929 = vmul.f32 %v3913, 0.7978846
      %v3930 = vtanh.pop %v3914
      %v3931 = vtanh.pop %v3915
      %v3932 = vtanh.pop %v3916
      %v3933 = vtanh.pop %v3917
      %v3934 = vtanh.pop %v3918
      %v3935 = vtanh.pop %v3919
      %v3936 = vtanh.pop %v3920
      %v3937 = vtanh.pop %v3921
      %v3938 = vtanh.pop %v3922
      %v3939 = vtanh.pop %v3923
      %v3940 = vtanh.pop %v3924
      %v3941 = vtanh.pop %v3925
      %v3942 = vtanh.pop %v3926
      %v3943 = vtanh.pop %v3927
      %v3944 = vtanh.pop %v3928
      %v3945 = vtanh.pop %v3929
      %v3946 = vadd.f32 %v3930, 1.0
      %v3947 = vadd.f32 %v3931, 1.0
      %v3948 = vadd.f32 %v3932, 1.0
      %v3949 = vadd.f32 %v3933, 1.0
      %v3950 = vadd.f32 %v3934, 1.0
      %v3951 = vadd.f32 %v3935, 1.0
      %v3952 = vadd.f32 %v3936, 1.0
      %v3953 = vadd.f32 %v3937, 1.0
      %v3954 = vadd.f32 %v3938, 1.0
      %v3955 = vadd.f32 %v3939, 1.0
      %v3956 = vadd.f32 %v3940, 1.0
      %v3957 = vadd.f32 %v3941, 1.0
      %v3958 = vadd.f32 %v3942, 1.0
      %v3959 = vadd.f32 %v3943, 1.0
      %v3960 = vadd.f32 %v3944, 1.0
      %v3961 = vadd.f32 %v3945, 1.0
      %v3962 = vmul.f32 %v3946, 0.5
      %v3963 = vmul.f32 %v3947, 0.5
      %v3964 = vmul.f32 %v3948, 0.5
      %v3965 = vmul.f32 %v3949, 0.5
      %v3966 = vmul.f32 %v3950, 0.5
      %v3967 = vmul.f32 %v3951, 0.5
      %v3968 = vmul.f32 %v3952, 0.5
      %v3969 = vmul.f32 %v3953, 0.5
      %v3970 = vmul.f32 %v3954, 0.5
      %v3971 = vmul.f32 %v3955, 0.5
      %v3972 = vmul.f32 %v3956, 0.5
      %v3973 = vmul.f32 %v3957, 0.5
      %v3974 = vmul.f32 %v3958, 0.5
      %v3975 = vmul.f32 %v3959, 0.5
      %v3976 = vmul.f32 %v3960, 0.5
      %v3977 = vmul.f32 %v3961, 0.5
      %v3978 = vmul.f32 %v3788, %v3962
      %v3979 = vmul.f32 %v3791, %v3963
      %v3980 = vmul.f32 %v3796, %v3964
      %v3981 = vmul.f32 %v3799, %v3965
      %v3982 = vmul.f32 %v3804, %v3966
      %v3983 = vmul.f32 %v3807, %v3967
      %v3984 = vmul.f32 %v3812, %v3968
      %v3985 = vmul.f32 %v3815, %v3969
      %v3986 = vmul.f32 %v3820, %v3970
      %v3987 = vmul.f32 %v3823, %v3971
      %v3988 = vmul.f32 %v3828, %v3972
      %v3989 = vmul.f32 %v3831, %v3973
      %v3990 = vmul.f32 %v3836, %v3974
      %v3991 = vmul.f32 %v3839, %v3975
      %v3992 = vmul.f32 %v3844, %v3976
      %v3993 = vmul.f32 %v3847, %v3977
      %v3994 = vpack.c.bf16 %v3979, %v3978
      %v3995 = vpack.c.bf16 %v3981, %v3980
      %v3996 = vpack.c.bf16 %v3983, %v3982
      %v3997 = vpack.c.bf16 %v3985, %v3984
      %v3998 = vpack.c.bf16 %v3987, %v3986
      %v3999 = vpack.c.bf16 %v3989, %v3988
      %v4000 = vpack.c.bf16 %v3991, %v3990
      %v4001 = vpack.c.bf16 %v3993, %v3992
      %v4002 = vld [vmem:[%s4 + $0x20] sm:$0xf]
      %v4003 = vld [vmem:[%s4 + $0x24] sm:$0xf]
      %v4004 = vld [vmem:[%s4 + $0x28] sm:$0xf]
      %v4005 = vld [vmem:[%s4 + $0x2c] sm:$0xf]
      %v4006 = vld [vmem:[%s4 + $0x30] sm:$0xf]
      %v4007 = vld [vmem:[%s4 + $0x34] sm:$0xf]
      %v4008 = vld [vmem:[%s4 + $0x38] sm:$0xf]
      %v4009 = vld [vmem:[%s4 + $0x3c] sm:$0xf]
      %v4010 = vld [vmem:[%s4 + $0x40] sm:$0xf]
      %v4011 = vld [vmem:[%s4 + $0x44] sm:$0xf]
      %v4012 = vld [vmem:[%s4 + $0x48] sm:$0xf]
      %v4013 = vld [vmem:[%s4 + $0x4c] sm:$0xf]
      %v4014 = vld [vmem:[%s4 + $0x50] sm:$0xf]
      %v4015 = vld [vmem:[%s4 + $0x54] sm:$0xf]
      %v4016 = vld [vmem:[%s4 + $0x58] sm:$0xf]
      %v4017 = vld [vmem:[%s4 + $0x5c] sm:$0xf]
      %v4018 = vlaneseq
      %v4019 = vshrl.u32 %v4018, 7
      %v4020 = vsub.s32 0, %v4019
      %v4021 = vrot.slane %v295, %v4020
      %v4038 = vunpack.c.l.b16 %v4002
      %v4039 = vunpack.c.l.b16 %v4003
      %v4040 = vunpack.c.l.b16 %v4004
      %v4041 = vunpack.c.l.b16 %v4005
      %v4042 = vunpack.c.l.b16 %v4006
      %v4043 = vunpack.c.l.b16 %v4007
      %v4044 = vunpack.c.l.b16 %v4008
      %v4045 = vunpack.c.l.b16 %v4009
      %v4046 = vunpack.c.l.b16 %v4010
      %v4047 = vunpack.c.l.b16 %v4011
      %v4048 = vunpack.c.l.b16 %v4012
      %v4049 = vunpack.c.l.b16 %v4013
      %v4050 = vunpack.c.l.b16 %v4014
      %v4051 = vunpack.c.l.b16 %v4015
      %v4052 = vunpack.c.l.b16 %v4016
      %v4053 = vunpack.c.l.b16 %v4017
      %v4054 = vpack.c.b16 %v4039, %v4038
      %v4055 = vpack.c.b16 %v4041, %v4040
      %v4056 = vpack.c.b16 %v4043, %v4042
      %v4057 = vpack.c.b16 %v4045, %v4044
      %v4058 = vpack.c.b16 %v4047, %v4046
      %v4059 = vpack.c.b16 %v4049, %v4048
      %v4060 = vpack.c.b16 %v4051, %v4050
      %v4061 = vpack.c.b16 %v4053, %v4052
      %4070 = vmatprep.subr.bf16.mxu0 0
      %4071 = vmatpush1.bf16.msra.mxu0 %v4061
      %4072 = vmatprep.subr.bf16.mxu0 0
      %4073 = vmatpush1.bf16.msra.mxu0 %v4060
      %4074 = vmatprep.subr.bf16.mxu0 0
      %4075 = vmatpush1.bf16.msra.mxu0 %v4059
      %4076 = vmatprep.subr.bf16.mxu0 0
      %4077 = vmatpush1.bf16.msra.mxu0 %v4058
      %4078 = vmatprep.subr.bf16.mxu0 0
      %4079 = vmatpush1.bf16.msra.mxu0 %v4057
      %4080 = vmatprep.subr.bf16.mxu0 0
      %4081 = vmatpush1.bf16.msra.mxu0 %v4056
      %4082 = vmatprep.subr.bf16.mxu0 0
      %4083 = vmatpush1.bf16.msra.mxu0 %v4055
      %4084 = vmatprep.subr.bf16.mxu0 0
      %4085 = vmatpush1.bf16.msra.mxu0 %v4054
      %4086 = vmatprep.subr.bf16.mxu0 0
      %4087 = vmatpush2.bf16.msra.mxu0 0
      %4088 = vmatprep.subr.bf16.mxu0 0
      %4089 = vmatpush2.bf16.msra.mxu0 0
      %4090 = vmatprep.subr.bf16.mxu0 0
      %4091 = vmatpush2.bf16.msra.mxu0 0
      %4092 = vmatprep.subr.bf16.mxu0 0
      %4093 = vmatpush2.bf16.msra.mxu0 0
      %4094 = vmatprep.subr.bf16.mxu0 0
      %4095 = vmatpush2.bf16.msra.mxu0 0
      %4096 = vmatprep.subr.bf16.mxu0 0
      %4097 = vmatpush2.bf16.msra.mxu0 0
      %4098 = vmatprep.subr.bf16.mxu0 0
      %4099 = vmatpush2.bf16.msra.mxu0 0
      %4100 = vmatprep.subr.bf16.mxu0 0
      %4101 = vmatpush2.bf16.msra.mxu0 0
      %4102 = vmatprep.mubr.bf16.mxu0 0
      %4103 = vmatmul.mubr.bf16.gmra.mxu0 %v3994
      %v4104 = vpop.f32.mrf.mxu0
      %v4105 = vadd.f32 %v4021, %v4104
      %v4106 = vpop.f32.mrf.mxu0
      %v4107 = vpop.f32.mrf.mxu0
      %v4108 = vadd.f32 %v4021, %v4107
      %v4109 = vpop.f32.mrf.mxu0
      %4110 = vmatprep.mubr.bf16.mxu0 0
      %4111 = vmatmul.mubr.bf16.gmra.mxu0 %v3995
      %v4112 = vpop.f32.mrf.mxu0
      %v4113 = vadd.f32 %v4021, %v4112
      %v4114 = vpop.f32.mrf.mxu0
      %v4115 = vpop.f32.mrf.mxu0
      %v4116 = vadd.f32 %v4021, %v4115
      %v4117 = vpop.f32.mrf.mxu0
      %4118 = vmatprep.mubr.bf16.mxu0 0
      %4119 = vmatmul.mubr.bf16.gmra.mxu0 %v3996
      %v4120 = vpop.f32.mrf.mxu0
      %v4121 = vadd.f32 %v4021, %v4120
      %v4122 = vpop.f32.mrf.mxu0
      %v4123 = vpop.f32.mrf.mxu0
      %v4124 = vadd.f32 %v4021, %v4123
      %v4125 = vpop.f32.mrf.mxu0
      %4126 = vmatprep.mubr.bf16.mxu0 0
      %4127 = vmatmul.mubr.bf16.gmra.mxu0 %v3997
      %v4128 = vpop.f32.mrf.mxu0
      %v4129 = vadd.f32 %v4021, %v4128
      %v4130 = vpop.f32.mrf.mxu0
      %v4131 = vpop.f32.mrf.mxu0
      %v4132 = vadd.f32 %v4021, %v4131
      %v4133 = vpop.f32.mrf.mxu0
      %4134 = vmatprep.mubr.bf16.mxu0 0
      %4135 = vmatmul.mubr.bf16.gmra.mxu0 %v3998
      %v4136 = vpop.f32.mrf.mxu0
      %v4137 = vadd.f32 %v4021, %v4136
      %v4138 = vpop.f32.mrf.mxu0
      %v4139 = vpop.f32.mrf.mxu0
      %v4140 = vadd.f32 %v4021, %v4139
      %v4141 = vpop.f32.mrf.mxu0
      %4142 = vmatprep.mubr.bf16.mxu0 0
      %4143 = vmatmul.mubr.bf16.gmra.mxu0 %v3999
      %v4144 = vpop.f32.mrf.mxu0
      %v4145 = vadd.f32 %v4021, %v4144
      %v4146 = vpop.f32.mrf.mxu0
      %v4147 = vpop.f32.mrf.mxu0
      %v4148 = vadd.f32 %v4021, %v4147
      %v4149 = vpop.f32.mrf.mxu0
      %4150 = vmatprep.mubr.bf16.mxu0 0
      %4151 = vmatmul.mubr.bf16.gmra.mxu0 %v4000
      %v4152 = vpop.f32.mrf.mxu0
      %v4153 = vadd.f32 %v4021, %v4152
      %v4154 = vpop.f32.mrf.mxu0
      %v4155 = vpop.f32.mrf.mxu0
      %v4156 = vadd.f32 %v4021, %v4155
      %v4157 = vpop.f32.mrf.mxu0
      %4158 = vmatprep.mubr.bf16.mxu0 0
      %4159 = vmatmul.mubr.bf16.gmra.mxu0 %v4001
      %v4160 = vpop.f32.mrf.mxu0
      %v4161 = vadd.f32 %v4021, %v4160
      %v4162 = vpop.f32.mrf.mxu0
      %v4163 = vpop.f32.mrf.mxu0
      %v4164 = vadd.f32 %v4021, %v4163
      %v4165 = vpop.f32.mrf.mxu0
      %4166 = vdwg.mxu0
      %vm4167 = vcmp.ge.f32.partialorder %v4105, 0.0
      %vm4168 = vcmp.ge.f32.partialorder %v4108, 0.0
      %vm4169 = vcmp.ge.f32.partialorder %v4113, 0.0
      %vm4170 = vcmp.ge.f32.partialorder %v4116, 0.0
      %vm4171 = vcmp.ge.f32.partialorder %v4121, 0.0
      %vm4172 = vcmp.ge.f32.partialorder %v4124, 0.0
      %vm4173 = vcmp.ge.f32.partialorder %v4129, 0.0
      %vm4174 = vcmp.ge.f32.partialorder %v4132, 0.0
      %vm4175 = vcmp.ge.f32.partialorder %v4137, 0.0
      %vm4176 = vcmp.ge.f32.partialorder %v4140, 0.0
      %vm4177 = vcmp.ge.f32.partialorder %v4145, 0.0
      %vm4178 = vcmp.ge.f32.partialorder %v4148, 0.0
      %vm4179 = vcmp.ge.f32.partialorder %v4153, 0.0
      %vm4180 = vcmp.ge.f32.partialorder %v4156, 0.0
      %vm4181 = vcmp.ge.f32.partialorder %v4161, 0.0
      %vm4182 = vcmp.ge.f32.partialorder %v4164, 0.0
      %v4183 = vmul.f32 %v4105, 0.1
      %v4184 = vmul.f32 %v4108, 0.1
      %v4185 = vmul.f32 %v4113, 0.1
      %v4186 = vmul.f32 %v4116, 0.1
      %v4187 = vmul.f32 %v4121, 0.1
      %v4188 = vmul.f32 %v4124, 0.1
      %v4189 = vmul.f32 %v4129, 0.1
      %v4190 = vmul.f32 %v4132, 0.1
      %v4191 = vmul.f32 %v4137, 0.1
      %v4192 = vmul.f32 %v4140, 0.1
      %v4193 = vmul.f32 %v4145, 0.1
      %v4194 = vmul.f32 %v4148, 0.1
      %v4195 = vmul.f32 %v4153, 0.1
      %v4196 = vmul.f32 %v4156, 0.1
      %v4197 = vmul.f32 %v4161, 0.1
      %v4198 = vmul.f32 %v4164, 0.1
      %v4199 = vsel %vm4167, %v4105, %v4183
      %v4200 = vsel %vm4168, %v4108, %v4184
      %v4201 = vsel %vm4169, %v4113, %v4185
      %v4202 = vsel %vm4170, %v4116, %v4186
      %v4203 = vsel %vm4171, %v4121, %v4187
      %v4204 = vsel %vm4172, %v4124, %v4188
      %v4205 = vsel %vm4173, %v4129, %v4189
      %v4206 = vsel %vm4174, %v4132, %v4190
      %v4207 = vsel %vm4175, %v4137, %v4191
      %v4208 = vsel %vm4176, %v4140, %v4192
      %v4209 = vsel %vm4177, %v4145, %v4193
      %v4210 = vsel %vm4178, %v4148, %v4194
      %v4211 = vsel %vm4179, %v4153, %v4195
      %v4212 = vsel %vm4180, %v4156, %v4196
      %v4213 = vsel %vm4181, %v4161, %v4197
      %v4214 = vsel %vm4182, %v4164, %v4198
      %v4215 = vadd.f32 %v3421, %v4199
      %v4216 = vadd.f32 %v3422, %v4200
      %v4217 = vadd.f32 %v3423, %v4201
      %v4218 = vadd.f32 %v3424, %v4202
      %v4219 = vadd.f32 %v3425, %v4203
      %v4220 = vadd.f32 %v3426, %v4204
      %v4221 = vadd.f32 %v3427, %v4205
      %v4222 = vadd.f32 %v3428, %v4206
      %v4223 = vadd.f32 %v3429, %v4207
      %v4224 = vadd.f32 %v3430, %v4208
      %v4225 = vadd.f32 %v3431, %v4209
      %v4226 = vadd.f32 %v3432, %v4210
      %v4227 = vadd.f32 %v3433, %v4211
      %v4228 = vadd.f32 %v3434, %v4212
      %v4229 = vadd.f32 %v3435, %v4213
      %v4230 = vadd.f32 %v3436, %v4214
      %v4231 = vsel %vm1279, %v4215, 0.0
      %4232 = vadd.xlane.f32.xlu0 %v4231
      %v4233 = vpop.xlane.xlu0 %4232
      %v4234 = vsel %vm1279, %v4216, 0.0
      %4235 = vadd.xlane.f32.xlu0 %v4234
      %v4236 = vpop.xlane.xlu0 %4235
      %v4237 = vsel %vm1279, %v4217, 0.0
      %4238 = vadd.xlane.f32.xlu0 %v4237
      %v4239 = vpop.xlane.xlu0 %4238
      %v4240 = vsel %vm1279, %v4218, 0.0
      %4241 = vadd.xlane.f32.xlu0 %v4240
      %v4242 = vpop.xlane.xlu0 %4241
      %v4243 = vsel %vm1279, %v4219, 0.0
      %4244 = vadd.xlane.f32.xlu0 %v4243
      %v4245 = vpop.xlane.xlu0 %4244
      %v4246 = vsel %vm1279, %v4220, 0.0
      %4247 = vadd.xlane.f32.xlu0 %v4246
      %v4248 = vpop.xlane.xlu0 %4247
      %v4249 = vsel %vm1279, %v4221, 0.0
      %4250 = vadd.xlane.f32.xlu0 %v4249
      %v4251 = vpop.xlane.xlu0 %4250
      %v4252 = vsel %vm1279, %v4222, 0.0
      %4253 = vadd.xlane.f32.xlu0 %v4252
      %v4254 = vpop.xlane.xlu0 %4253
      %v4255 = vsel %vm1279, %v4223, 0.0
      %4256 = vadd.xlane.f32.xlu0 %v4255
      %v4257 = vpop.xlane.xlu0 %4256
      %v4258 = vsel %vm1279, %v4224, 0.0
      %4259 = vadd.xlane.f32.xlu0 %v4258
      %v4260 = vpop.xlane.xlu0 %4259
      %v4261 = vsel %vm1279, %v4225, 0.0
      %4262 = vadd.xlane.f32.xlu0 %v4261
      %v4263 = vpop.xlane.xlu0 %4262
      %v4264 = vsel %vm1279, %v4226, 0.0
      %4265 = vadd.xlane.f32.xlu0 %v4264
      %v4266 = vpop.xlane.xlu0 %4265
      %v4267 = vsel %vm1279, %v4227, 0.0
      %4268 = vadd.xlane.f32.xlu0 %v4267
      %v4269 = vpop.xlane.xlu0 %4268
      %v4270 = vsel %vm1279, %v4228, 0.0
      %4271 = vadd.xlane.f32.xlu0 %v4270
      %v4272 = vpop.xlane.xlu0 %4271
      %v4273 = vsel %vm1279, %v4229, 0.0
      %4274 = vadd.xlane.f32.xlu0 %v4273
      %v4275 = vpop.xlane.xlu0 %4274
      %v4276 = vsel %vm1279, %v4230, 0.0
      %4277 = vadd.xlane.f32.xlu0 %v4276
      %v4278 = vpop.xlane.xlu0 %4277
      %v4279 = vmul.f32 %v4233, %v1328
      %v4280 = vmul.f32 %v4236, %v1328
      %v4281 = vmul.f32 %v4239, %v1328
      %v4282 = vmul.f32 %v4242, %v1328
      %v4283 = vmul.f32 %v4245, %v1328
      %v4284 = vmul.f32 %v4248, %v1328
      %v4285 = vmul.f32 %v4251, %v1328
      %v4286 = vmul.f32 %v4254, %v1328
      %v4287 = vmul.f32 %v4257, %v1328
      %v4288 = vmul.f32 %v4260, %v1328
      %v4289 = vmul.f32 %v4263, %v1328
      %v4290 = vmul.f32 %v4266, %v1328
      %v4291 = vmul.f32 %v4269, %v1328
      %v4292 = vmul.f32 %v4272, %v1328
      %v4293 = vmul.f32 %v4275, %v1328
      %v4294 = vmul.f32 %v4278, %v1328
      %v4295 = vsub.f32 %v4215, %v4279
      %v4296 = vsub.f32 %v4216, %v4280
      %v4297 = vsub.f32 %v4217, %v4281
      %v4298 = vsub.f32 %v4218, %v4282
      %v4299 = vsub.f32 %v4219, %v4283
      %v4300 = vsub.f32 %v4220, %v4284
      %v4301 = vsub.f32 %v4221, %v4285
      %v4302 = vsub.f32 %v4222, %v4286
      %v4303 = vsub.f32 %v4223, %v4287
      %v4304 = vsub.f32 %v4224, %v4288
      %v4305 = vsub.f32 %v4225, %v4289
      %v4306 = vsub.f32 %v4226, %v4290
      %v4307 = vsub.f32 %v4227, %v4291
      %v4308 = vsub.f32 %v4228, %v4292
      %v4309 = vsub.f32 %v4229, %v4293
      %v4310 = vsub.f32 %v4230, %v4294
      %v4311 = vmul.f32 %v4295, %v4295
      %v4312 = vmul.f32 %v4296, %v4296
      %v4313 = vmul.f32 %v4297, %v4297
      %v4314 = vmul.f32 %v4298, %v4298
      %v4315 = vmul.f32 %v4299, %v4299
      %v4316 = vmul.f32 %v4300, %v4300
      %v4317 = vmul.f32 %v4301, %v4301
      %v4318 = vmul.f32 %v4302, %v4302
      %v4319 = vmul.f32 %v4303, %v4303
      %v4320 = vmul.f32 %v4304, %v4304
      %v4321 = vmul.f32 %v4305, %v4305
      %v4322 = vmul.f32 %v4306, %v4306
      %v4323 = vmul.f32 %v4307, %v4307
      %v4324 = vmul.f32 %v4308, %v4308
      %v4325 = vmul.f32 %v4309, %v4309
      %v4326 = vmul.f32 %v4310, %v4310
      %v4327 = vsel %vm1279, %v4311, 0.0
      %4328 = vadd.xlane.f32.xlu0 %v4327
      %v4329 = vpop.xlane.xlu0 %4328
      %v4330 = vsel %vm1279, %v4312, 0.0
      %4331 = vadd.xlane.f32.xlu0 %v4330
      %v4332 = vpop.xlane.xlu0 %4331
      %v4333 = vsel %vm1279, %v4313, 0.0
      %4334 = vadd.xlane.f32.xlu0 %v4333
      %v4335 = vpop.xlane.xlu0 %4334
      %v4336 = vsel %vm1279, %v4314, 0.0
      %4337 = vadd.xlane.f32.xlu0 %v4336
      %v4338 = vpop.xlane.xlu0 %4337
      %v4339 = vsel %vm1279, %v4315, 0.0
      %4340 = vadd.xlane.f32.xlu0 %v4339
      %v4341 = vpop.xlane.xlu0 %4340
      %v4342 = vsel %vm1279, %v4316, 0.0
      %4343 = vadd.xlane.f32.xlu0 %v4342
      %v4344 = vpop.xlane.xlu0 %4343
      %v4345 = vsel %vm1279, %v4317, 0.0
      %4346 = vadd.xlane.f32.xlu0 %v4345
      %v4347 = vpop.xlane.xlu0 %4346
      %v4348 = vsel %vm1279, %v4318, 0.0
      %4349 = vadd.xlane.f32.xlu0 %v4348
      %v4350 = vpop.xlane.xlu0 %4349
      %v4351 = vsel %vm1279, %v4319, 0.0
      %4352 = vadd.xlane.f32.xlu0 %v4351
      %v4353 = vpop.xlane.xlu0 %4352
      %v4354 = vsel %vm1279, %v4320, 0.0
      %4355 = vadd.xlane.f32.xlu0 %v4354
      %v4356 = vpop.xlane.xlu0 %4355
      %v4357 = vsel %vm1279, %v4321, 0.0
      %4358 = vadd.xlane.f32.xlu0 %v4357
      %v4359 = vpop.xlane.xlu0 %4358
      %v4360 = vsel %vm1279, %v4322, 0.0
      %4361 = vadd.xlane.f32.xlu0 %v4360
      %v4362 = vpop.xlane.xlu0 %4361
      %v4363 = vsel %vm1279, %v4323, 0.0
      %4364 = vadd.xlane.f32.xlu0 %v4363
      %v4365 = vpop.xlane.xlu0 %4364
      %v4366 = vsel %vm1279, %v4324, 0.0
      %4367 = vadd.xlane.f32.xlu0 %v4366
      %v4368 = vpop.xlane.xlu0 %4367
      %v4369 = vsel %vm1279, %v4325, 0.0
      %4370 = vadd.xlane.f32.xlu0 %v4369
      %v4371 = vpop.xlane.xlu0 %4370
      %v4372 = vsel %vm1279, %v4326, 0.0
      %4373 = vadd.xlane.f32.xlu0 %v4372
      %v4374 = vpop.xlane.xlu0 %4373
      %v4375 = vmul.f32 %v4329, %v1328
      %v4376 = vmul.f32 %v4332, %v1328
      %v4377 = vmul.f32 %v4335, %v1328
      %v4378 = vmul.f32 %v4338, %v1328
      %v4379 = vmul.f32 %v4341, %v1328
      %v4380 = vmul.f32 %v4344, %v1328
      %v4381 = vmul.f32 %v4347, %v1328
      %v4382 = vmul.f32 %v4350, %v1328
      %v4383 = vmul.f32 %v4353, %v1328
      %v4384 = vmul.f32 %v4356, %v1328
      %v4385 = vmul.f32 %v4359, %v1328
      %v4386 = vmul.f32 %v4362, %v1328
      %v4387 = vmul.f32 %v4365, %v1328
      %v4388 = vmul.f32 %v4368, %v1328
      %v4389 = vmul.f32 %v4371, %v1328
      %v4390 = vmul.f32 %v4374, %v1328
      %v4391 = vadd.f32 %v4375, 1e-05
      %v4392 = vadd.f32 %v4376, 1e-05
      %v4393 = vadd.f32 %v4377, 1e-05
      %v4394 = vadd.f32 %v4378, 1e-05
      %v4395 = vadd.f32 %v4379, 1e-05
      %v4396 = vadd.f32 %v4380, 1e-05
      %v4397 = vadd.f32 %v4381, 1e-05
      %v4398 = vadd.f32 %v4382, 1e-05
      %v4399 = vadd.f32 %v4383, 1e-05
      %v4400 = vadd.f32 %v4384, 1e-05
      %v4401 = vadd.f32 %v4385, 1e-05
      %v4402 = vadd.f32 %v4386, 1e-05
      %v4403 = vadd.f32 %v4387, 1e-05
      %v4404 = vadd.f32 %v4388, 1e-05
      %v4405 = vadd.f32 %v4389, 1e-05
      %v4406 = vadd.f32 %v4390, 1e-05
      %v4407 = vrsqrt.pop %v4391
      %v4408 = vrsqrt.pop %v4392
      %v4409 = vrsqrt.pop %v4393
      %v4410 = vrsqrt.pop %v4394
      %v4411 = vrsqrt.pop %v4395
      %v4412 = vrsqrt.pop %v4396
      %v4413 = vrsqrt.pop %v4397
      %v4414 = vrsqrt.pop %v4398
      %v4415 = vrsqrt.pop %v4399
      %v4416 = vrsqrt.pop %v4400
      %v4417 = vrsqrt.pop %v4401
      %v4418 = vrsqrt.pop %v4402
      %v4419 = vrsqrt.pop %v4403
      %v4420 = vrsqrt.pop %v4404
      %v4421 = vrsqrt.pop %v4405
      %v4422 = vrsqrt.pop %v4406
      %v4423 = vmul.f32 %v4295, %v4407
      %v4424 = vmul.f32 %v4296, %v4408
      %v4425 = vmul.f32 %v4297, %v4409
      %v4426 = vmul.f32 %v4298, %v4410
      %v4427 = vmul.f32 %v4299, %v4411
      %v4428 = vmul.f32 %v4300, %v4412
      %v4429 = vmul.f32 %v4301, %v4413
      %v4430 = vmul.f32 %v4302, %v4414
      %v4431 = vmul.f32 %v4303, %v4415
      %v4432 = vmul.f32 %v4304, %v4416
      %v4433 = vmul.f32 %v4305, %v4417
      %v4434 = vmul.f32 %v4306, %v4418
      %v4435 = vmul.f32 %v4307, %v4419
      %v4436 = vmul.f32 %v4308, %v4420
      %v4437 = vmul.f32 %v4309, %v4421
      %v4438 = vmul.f32 %v4310, %v4422
      %v4439 = vlaneseq
      %v4440 = vshrl.u32 %v4439, 7
      %v4441 = vsub.s32 0, %v4440
      %v4442 = vrot.slane %v296, %v4441
      %v4443 = vmul.f32 %v4423, %v4442
      %v4444 = vmul.f32 %v4424, %v4442
      %v4445 = vmul.f32 %v4425, %v4442
      %v4446 = vmul.f32 %v4426, %v4442
      %v4447 = vmul.f32 %v4427, %v4442
      %v4448 = vmul.f32 %v4428, %v4442
      %v4449 = vmul.f32 %v4429, %v4442
      %v4450 = vmul.f32 %v4430, %v4442
      %v4451 = vmul.f32 %v4431, %v4442
      %v4452 = vmul.f32 %v4432, %v4442
      %v4453 = vmul.f32 %v4433, %v4442
      %v4454 = vmul.f32 %v4434, %v4442
      %v4455 = vmul.f32 %v4435, %v4442
      %v4456 = vmul.f32 %v4436, %v4442
      %v4457 = vmul.f32 %v4437, %v4442
      %v4458 = vmul.f32 %v4438, %v4442
      %v4459 = vlaneseq
      %v4460 = vshrl.u32 %v4459, 7
      %v4461 = vsub.s32 0, %v4460
      %v4462 = vrot.slane %v297, %v4461
      %v4463 = vadd.f32 %v4443, %v4462
      %v4464 = vadd.f32 %v4444, %v4462
      %v4465 = vadd.f32 %v4445, %v4462
      %v4466 = vadd.f32 %v4446, %v4462
      %v4467 = vadd.f32 %v4447, %v4462
      %v4468 = vadd.f32 %v4448, %v4462
      %v4469 = vadd.f32 %v4449, %v4462
      %v4470 = vadd.f32 %v4450, %v4462
      %v4471 = vadd.f32 %v4451, %v4462
      %v4472 = vadd.f32 %v4452, %v4462
      %v4473 = vadd.f32 %v4453, %v4462
      %v4474 = vadd.f32 %v4454, %v4462
      %v4475 = vadd.f32 %v4455, %v4462
      %v4476 = vadd.f32 %v4456, %v4462
      %v4477 = vadd.f32 %v4457, %v4462
      %v4478 = vadd.f32 %v4458, %v4462
      %v4479 = vpack.c.bf16 %v4464, %v4463
      %v4480 = vpack.c.bf16 %v4466, %v4465
      %v4481 = vpack.c.bf16 %v4468, %v4467
      %v4482 = vpack.c.bf16 %v4470, %v4469
      %v4483 = vpack.c.bf16 %v4472, %v4471
      %v4484 = vpack.c.bf16 %v4474, %v4473
      %v4485 = vpack.c.bf16 %v4476, %v4475
      %v4486 = vpack.c.bf16 %v4478, %v4477
      %v4487 = vld [vmem:[%s4 + $0x68] sm:$0xf]
      %v4488 = vld [vmem:[%s4 + $0x6c] sm:$0xf]
      %v4489 = vld [vmem:[%s4 + $0x70] sm:$0xf]
      %v4490 = vld [vmem:[%s4 + $0x74] sm:$0xf]
      %v4491 = vld [vmem:[%s4 + $0x78] sm:$0xf]
      %v4492 = vld [vmem:[%s4 + $0x7c] sm:$0xf]
      %v4493 = vld [vmem:[%s4 + $0x80] sm:$0xf]
      %v4494 = vld [vmem:[%s4 + $0x84] sm:$0xf]
      %v4495 = vlaneseq
      %v4496 = vshrl.u32 %v4495, 7
      %v4497 = vsub.s32 0, %v4496
      %v4498 = vrot.slane %v298, %v4497
      %v4507 = vunpack.c.l.b16 %v4487
      %v4508 = vunpack.c.l.b16 %v4488
      %v4509 = vunpack.c.l.b16 %v4489
      %v4510 = vunpack.c.l.b16 %v4490
      %v4511 = vunpack.c.l.b16 %v4491
      %v4512 = vunpack.c.l.b16 %v4492
      %v4513 = vunpack.c.l.b16 %v4493
      %v4514 = vunpack.c.l.b16 %v4494
      %v4515 = vpack.c.b16 %v4508, %v4507
      %v4516 = vpack.c.b16 %v4510, %v4509
      %v4517 = vpack.c.b16 %v4512, %v4511
      %v4518 = vpack.c.b16 %v4514, %v4513
      %v4524 = vsel %vm1279, %v4479, 0
      %v4527 = vsel %vm1279, %v4480, 0
      %v4530 = vsel %vm1279, %v4481, 0
      %v4533 = vsel %vm1279, %v4482, 0
      %v4536 = vsel %vm1279, %v4483, 0
      %v4539 = vsel %vm1279, %v4484, 0
      %v4542 = vsel %vm1279, %v4485, 0
      %v4545 = vsel %vm1279, %v4486, 0
      %4547 = vmatprep.subr.bf16.mxu0 0
      %4548 = vmatpush1.bf16.msra.mxu0 0
      %4549 = vmatprep.subr.bf16.mxu0 0
      %4550 = vmatpush1.bf16.msra.mxu0 0
      %4551 = vmatprep.subr.bf16.mxu0 0
      %4552 = vmatpush1.bf16.msra.mxu0 0
      %4553 = vmatprep.subr.bf16.mxu0 0
      %4554 = vmatpush1.bf16.msra.mxu0 0
      %4555 = vmatprep.subr.bf16.mxu0 0
      %4556 = vmatpush1.bf16.msra.mxu0 %v4518
      %4557 = vmatprep.subr.bf16.mxu0 0
      %4558 = vmatpush1.bf16.msra.mxu0 %v4517
      %4559 = vmatprep.subr.bf16.mxu0 0
      %4560 = vmatpush1.bf16.msra.mxu0 %v4516
      %4561 = vmatprep.subr.bf16.mxu0 0
      %4562 = vmatpush1.bf16.msra.mxu0 %v4515
      %4563 = vmatprep.subr.bf16.mxu0 0
      %4564 = vmatpush2.bf16.msra.mxu0 0
      %4565 = vmatprep.subr.bf16.mxu0 0
      %4566 = vmatpush2.bf16.msra.mxu0 0
      %4567 = vmatprep.subr.bf16.mxu0 0
      %4568 = vmatpush2.bf16.msra.mxu0 0
      %4569 = vmatprep.subr.bf16.mxu0 0
      %4570 = vmatpush2.bf16.msra.mxu0 0
      %4571 = vmatprep.subr.bf16.mxu0 0
      %4572 = vmatpush2.bf16.msra.mxu0 0
      %4573 = vmatprep.subr.bf16.mxu0 0
      %4574 = vmatpush2.bf16.msra.mxu0 0
      %4575 = vmatprep.subr.bf16.mxu0 0
      %4576 = vmatpush2.bf16.msra.mxu0 0
      %4577 = vmatprep.subr.bf16.mxu0 0
      %4578 = vmatpush2.bf16.msra.mxu0 0
      %4579 = vmatprep.mubr.bf16.mxu0 0
      %4580 = vmatmul.mubr.bf16.gmra.mxu0 %v4524
      %v4581 = vpop.f32.mrf.mxu0
      %v4582 = vadd.f32 %v4498, %v4581
      %v4583 = vpop.f32.mrf.mxu0
      %v4584 = vpop.f32.mrf.mxu0
      %v4585 = vadd.f32 %v4498, %v4584
      %v4586 = vpop.f32.mrf.mxu0
      %4587 = vmatprep.mubr.bf16.mxu0 0
      %4588 = vmatmul.mubr.bf16.gmra.mxu0 %v4527
      %v4589 = vpop.f32.mrf.mxu0
      %v4590 = vadd.f32 %v4498, %v4589
      %v4591 = vpop.f32.mrf.mxu0
      %v4592 = vpop.f32.mrf.mxu0
      %v4593 = vadd.f32 %v4498, %v4592
      %v4594 = vpop.f32.mrf.mxu0
      %4595 = vmatprep.mubr.bf16.mxu0 0
      %4596 = vmatmul.mubr.bf16.gmra.mxu0 %v4530
      %v4597 = vpop.f32.mrf.mxu0
      %v4598 = vadd.f32 %v4498, %v4597
      %v4599 = vpop.f32.mrf.mxu0
      %v4600 = vpop.f32.mrf.mxu0
      %v4601 = vadd.f32 %v4498, %v4600
      %v4602 = vpop.f32.mrf.mxu0
      %4603 = vmatprep.mubr.bf16.mxu0 0
      %4604 = vmatmul.mubr.bf16.gmra.mxu0 %v4533
      %v4605 = vpop.f32.mrf.mxu0
      %v4606 = vadd.f32 %v4498, %v4605
      %v4607 = vpop.f32.mrf.mxu0
      %v4608 = vpop.f32.mrf.mxu0
      %v4609 = vadd.f32 %v4498, %v4608
      %v4610 = vpop.f32.mrf.mxu0
      %4611 = vmatprep.mubr.bf16.mxu0 0
      %4612 = vmatmul.mubr.bf16.gmra.mxu0 %v4536
      %v4613 = vpop.f32.mrf.mxu0
      %v4614 = vadd.f32 %v4498, %v4613
      %v4615 = vpop.f32.mrf.mxu0
      %v4616 = vpop.f32.mrf.mxu0
      %v4617 = vadd.f32 %v4498, %v4616
      %v4618 = vpop.f32.mrf.mxu0
      %4619 = vmatprep.mubr.bf16.mxu0 0
      %4620 = vmatmul.mubr.bf16.gmra.mxu0 %v4539
      %v4621 = vpop.f32.mrf.mxu0
      %v4622 = vadd.f32 %v4498, %v4621
      %v4623 = vpop.f32.mrf.mxu0
      %v4624 = vpop.f32.mrf.mxu0
      %v4625 = vadd.f32 %v4498, %v4624
      %v4626 = vpop.f32.mrf.mxu0
      %4627 = vmatprep.mubr.bf16.mxu0 0
      %4628 = vmatmul.mubr.bf16.gmra.mxu0 %v4542
      %v4629 = vpop.f32.mrf.mxu0
      %v4630 = vadd.f32 %v4498, %v4629
      %v4631 = vpop.f32.mrf.mxu0
      %v4632 = vpop.f32.mrf.mxu0
      %v4633 = vadd.f32 %v4498, %v4632
      %v4634 = vpop.f32.mrf.mxu0
      %4635 = vmatprep.mubr.bf16.mxu0 0
      %4636 = vmatmul.mubr.bf16.gmra.mxu0 %v4545
      %v4637 = vpop.f32.mrf.mxu0
      %v4638 = vadd.f32 %v4498, %v4637
      %v4639 = vpop.f32.mrf.mxu0
      %v4640 = vpop.f32.mrf.mxu0
      %v4641 = vadd.f32 %v4498, %v4640
      %v4642 = vpop.f32.mrf.mxu0
      %4643 = vdwg.mxu0
      %v4644 = vadd.f32 %v530, %v2681
      %v4645 = vadd.f32 %v532, %v2683
      %v4646 = vadd.f32 %v534, %v2685
      %v4647 = vadd.f32 %v536, %v2687
      %v4648 = vadd.f32 %v538, %v2689
      %v4649 = vadd.f32 %v540, %v2691
      %v4650 = vadd.f32 %v542, %v2693
      %v4651 = vadd.f32 %v544, %v2695
      %v4652 = vadd.f32 %v546, %v2697
      %v4653 = vadd.f32 %v548, %v2699
      %v4654 = vadd.f32 %v550, %v2701
      %v4655 = vadd.f32 %v552, %v2703
      %v4656 = vadd.f32 %v554, %v2705
      %v4657 = vadd.f32 %v556, %v2707
      %v4658 = vadd.f32 %v558, %v2709
      %v4659 = vadd.f32 %v560, %v2711
      %v4660 = vadd.f32 %v4644, %v4582
      %v4661 = vadd.f32 %v4645, %v4585
      %v4662 = vadd.f32 %v4646, %v4590
      %v4663 = vadd.f32 %v4647, %v4593
      %v4664 = vadd.f32 %v4648, %v4598
      %v4665 = vadd.f32 %v4649, %v4601
      %v4666 = vadd.f32 %v4650, %v4606
      %v4667 = vadd.f32 %v4651, %v4609
      %v4668 = vadd.f32 %v4652, %v4614
      %v4669 = vadd.f32 %v4653, %v4617
      %v4670 = vadd.f32 %v4654, %v4622
      %v4671 = vadd.f32 %v4655, %v4625
      %v4672 = vadd.f32 %v4656, %v4630
      %v4673 = vadd.f32 %v4657, %v4633
      %v4674 = vadd.f32 %v4658, %v4638
      %v4675 = vadd.f32 %v4659, %v4641
      %4676 = vst.msk [vmem:[%s275] sm:$0xff] %vm352, %v4660
      %4677 = vst.msk [vmem:[%s275 + $0x8] sm:$0xff] %vm352, %v4661
      %4678 = vst.msk [vmem:[%s275 + $0x10] sm:$0xff] %vm352, %v4662
      %4679 = vst.msk [vmem:[%s275 + $0x18] sm:$0xff] %vm352, %v4663
      %4680 = vst.msk [vmem:[%s275 + $0x20] sm:$0xff] %vm352, %v4664
      %4681 = vst.msk [vmem:[%s275 + $0x28] sm:$0xff] %vm352, %v4665
      %4682 = vst.msk [vmem:[%s275 + $0x30] sm:$0xff] %vm352, %v4666
      %4683 = vst.msk [vmem:[%s275 + $0x38] sm:$0xff] %vm352, %v4667
      %4684 = vst.msk [vmem:[%s275 + $0x40] sm:$0xff] %vm352, %v4668
      %4685 = vst.msk [vmem:[%s275 + $0x48] sm:$0xff] %vm352, %v4669
      %4686 = vst.msk [vmem:[%s275 + $0x50] sm:$0xff] %vm352, %v4670
      %4687 = vst.msk [vmem:[%s275 + $0x58] sm:$0xff] %vm352, %v4671
      %4688 = vst.msk [vmem:[%s275 + $0x60] sm:$0xff] %vm352, %v4672
      %4689 = vst.msk [vmem:[%s275 + $0x68] sm:$0xff] %vm352, %v4673
      %4690 = vst.msk [vmem:[%s275 + $0x70] sm:$0xff] %vm352, %v4674
      %4691 = vst.msk [vmem:[%s275 + $0x78] sm:$0xff] %vm352, %v4675
      %s4692 = scalar_lea.vmem %s263, 128
      %v4693 = vld [vmem:[%s4692] sm:$0xff]
      %v4694 = vld [vmem:[%s4692 + $0x8] sm:$0xff]
      %v4695 = vld [vmem:[%s4692 + $0x10] sm:$0xff]
      %v4696 = vld [vmem:[%s4692 + $0x18] sm:$0xff]
      %v4697 = vld [vmem:[%s4692 + $0x20] sm:$0xff]
      %v4698 = vld [vmem:[%s4692 + $0x28] sm:$0xff]
      %v4699 = vld [vmem:[%s4692 + $0x30] sm:$0xff]
      %v4700 = vld [vmem:[%s4692 + $0x38] sm:$0xff]
      %v4701 = vld [vmem:[%s4692 + $0x40] sm:$0xff]
      %v4702 = vld [vmem:[%s4692 + $0x48] sm:$0xff]
      %v4703 = vld [vmem:[%s4692 + $0x50] sm:$0xff]
      %v4704 = vld [vmem:[%s4692 + $0x58] sm:$0xff]
      %v4705 = vld [vmem:[%s4692 + $0x60] sm:$0xff]
      %v4706 = vld [vmem:[%s4692 + $0x68] sm:$0xff]
      %v4707 = vld [vmem:[%s4692 + $0x70] sm:$0xff]
      %v4708 = vld [vmem:[%s4692 + $0x78] sm:$0xff]
      %s4709 = scalar_lea.vmem %s269, 128
      %v4710 = vld [vmem:[%s4709] sm:$0xff]
      %v4711 = vld [vmem:[%s4709 + $0x8] sm:$0xff]
      %v4712 = vld [vmem:[%s4709 + $0x10] sm:$0xff]
      %v4713 = vld [vmem:[%s4709 + $0x18] sm:$0xff]
      %v4714 = vld [vmem:[%s4709 + $0x20] sm:$0xff]
      %v4715 = vld [vmem:[%s4709 + $0x28] sm:$0xff]
      %v4716 = vld [vmem:[%s4709 + $0x30] sm:$0xff]
      %v4717 = vld [vmem:[%s4709 + $0x38] sm:$0xff]
      %v4718 = vld [vmem:[%s4709 + $0x40] sm:$0xff]
      %v4719 = vld [vmem:[%s4709 + $0x48] sm:$0xff]
      %v4720 = vld [vmem:[%s4709 + $0x50] sm:$0xff]
      %v4721 = vld [vmem:[%s4709 + $0x58] sm:$0xff]
      %v4722 = vld [vmem:[%s4709 + $0x60] sm:$0xff]
      %v4723 = vld [vmem:[%s4709 + $0x68] sm:$0xff]
      %v4724 = vld [vmem:[%s4709 + $0x70] sm:$0xff]
      %v4725 = vld [vmem:[%s4709 + $0x78] sm:$0xff]
      %v4726 = vmul.f32 %v4710, %v4710
      %v4727 = vmul.f32 %v4711, %v4711
      %v4728 = vmul.f32 %v4712, %v4712
      %v4729 = vmul.f32 %v4713, %v4713
      %v4730 = vmul.f32 %v4714, %v4714
      %v4731 = vmul.f32 %v4715, %v4715
      %v4732 = vmul.f32 %v4716, %v4716
      %v4733 = vmul.f32 %v4717, %v4717
      %v4734 = vmul.f32 %v4718, %v4718
      %v4735 = vmul.f32 %v4719, %v4719
      %v4736 = vmul.f32 %v4720, %v4720
      %v4737 = vmul.f32 %v4721, %v4721
      %v4738 = vmul.f32 %v4722, %v4722
      %v4739 = vmul.f32 %v4723, %v4723
      %v4740 = vmul.f32 %v4724, %v4724
      %v4741 = vmul.f32 %v4725, %v4725
      %v4742 = vsel %vm352, %v4726, 0.0
      %4743 = vadd.xlane.f32.xlu0 %v4742
      %v4744 = vpop.xlane.xlu0 %4743
      %v4745 = vsel %vm352, %v4727, 0.0
      %4746 = vadd.xlane.f32.xlu0 %v4745
      %v4747 = vpop.xlane.xlu0 %4746
      %v4748 = vsel %vm352, %v4728, 0.0
      %4749 = vadd.xlane.f32.xlu0 %v4748
      %v4750 = vpop.xlane.xlu0 %4749
      %v4751 = vsel %vm352, %v4729, 0.0
      %4752 = vadd.xlane.f32.xlu0 %v4751
      %v4753 = vpop.xlane.xlu0 %4752
      %v4754 = vsel %vm352, %v4730, 0.0
      %4755 = vadd.xlane.f32.xlu0 %v4754
      %v4756 = vpop.xlane.xlu0 %4755
      %v4757 = vsel %vm352, %v4731, 0.0
      %4758 = vadd.xlane.f32.xlu0 %v4757
      %v4759 = vpop.xlane.xlu0 %4758
      %v4760 = vsel %vm352, %v4732, 0.0
      %4761 = vadd.xlane.f32.xlu0 %v4760
      %v4762 = vpop.xlane.xlu0 %4761
      %v4763 = vsel %vm352, %v4733, 0.0
      %4764 = vadd.xlane.f32.xlu0 %v4763
      %v4765 = vpop.xlane.xlu0 %4764
      %v4766 = vsel %vm352, %v4734, 0.0
      %4767 = vadd.xlane.f32.xlu0 %v4766
      %v4768 = vpop.xlane.xlu0 %4767
      %v4769 = vsel %vm352, %v4735, 0.0
      %4770 = vadd.xlane.f32.xlu0 %v4769
      %v4771 = vpop.xlane.xlu0 %4770
      %v4772 = vsel %vm352, %v4736, 0.0
      %4773 = vadd.xlane.f32.xlu0 %v4772
      %v4774 = vpop.xlane.xlu0 %4773
      %v4775 = vsel %vm352, %v4737, 0.0
      %4776 = vadd.xlane.f32.xlu0 %v4775
      %v4777 = vpop.xlane.xlu0 %4776
      %v4778 = vsel %vm352, %v4738, 0.0
      %4779 = vadd.xlane.f32.xlu0 %v4778
      %v4780 = vpop.xlane.xlu0 %4779
      %v4781 = vsel %vm352, %v4739, 0.0
      %4782 = vadd.xlane.f32.xlu0 %v4781
      %v4783 = vpop.xlane.xlu0 %4782
      %v4784 = vsel %vm352, %v4740, 0.0
      %4785 = vadd.xlane.f32.xlu0 %v4784
      %v4786 = vpop.xlane.xlu0 %4785
      %v4787 = vsel %vm352, %v4741, 0.0
      %4788 = vadd.xlane.f32.xlu0 %v4787
      %v4789 = vpop.xlane.xlu0 %4788
      %v4790 = vrsqrt.pop %v4744
      %v4791 = vmul.f32 %v4744, %v4790
      %vm4792 = vcmp.eq.f32.partialorder %v4744, inf
      %v4793 = vsel %vm4792, %v4744, %v4791
      %vm4794 = vcmp.eq.f32.partialorder %v4744, 0.0
      %v4795 = vand.u32 %v4744, 2147483648
      %v4796 = vsel %vm4794, %v4795, %v4793
      %v4797 = vrsqrt.pop %v4747
      %v4798 = vmul.f32 %v4747, %v4797
      %vm4799 = vcmp.eq.f32.partialorder %v4747, inf
      %v4800 = vsel %vm4799, %v4747, %v4798
      %vm4801 = vcmp.eq.f32.partialorder %v4747, 0.0
      %v4802 = vand.u32 %v4747, 2147483648
      %v4803 = vsel %vm4801, %v4802, %v4800
      %v4804 = vrsqrt.pop %v4750
      %v4805 = vmul.f32 %v4750, %v4804
      %vm4806 = vcmp.eq.f32.partialorder %v4750, inf
      %v4807 = vsel %vm4806, %v4750, %v4805
      %vm4808 = vcmp.eq.f32.partialorder %v4750, 0.0
      %v4809 = vand.u32 %v4750, 2147483648
      %v4810 = vsel %vm4808, %v4809, %v4807
      %v4811 = vrsqrt.pop %v4753
      %v4812 = vmul.f32 %v4753, %v4811
      %vm4813 = vcmp.eq.f32.partialorder %v4753, inf
      %v4814 = vsel %vm4813, %v4753, %v4812
      %vm4815 = vcmp.eq.f32.partialorder %v4753, 0.0
      %v4816 = vand.u32 %v4753, 2147483648
      %v4817 = vsel %vm4815, %v4816, %v4814
      %v4818 = vrsqrt.pop %v4756
      %v4819 = vmul.f32 %v4756, %v4818
      %vm4820 = vcmp.eq.f32.partialorder %v4756, inf
      %v4821 = vsel %vm4820, %v4756, %v4819
      %vm4822 = vcmp.eq.f32.partialorder %v4756, 0.0
      %v4823 = vand.u32 %v4756, 2147483648
      %v4824 = vsel %vm4822, %v4823, %v4821
      %v4825 = vrsqrt.pop %v4759
      %v4826 = vmul.f32 %v4759, %v4825
      %vm4827 = vcmp.eq.f32.partialorder %v4759, inf
      %v4828 = vsel %vm4827, %v4759, %v4826
      %vm4829 = vcmp.eq.f32.partialorder %v4759, 0.0
      %v4830 = vand.u32 %v4759, 2147483648
      %v4831 = vsel %vm4829, %v4830, %v4828
      %v4832 = vrsqrt.pop %v4762
      %v4833 = vmul.f32 %v4762, %v4832
      %vm4834 = vcmp.eq.f32.partialorder %v4762, inf
      %v4835 = vsel %vm4834, %v4762, %v4833
      %vm4836 = vcmp.eq.f32.partialorder %v4762, 0.0
      %v4837 = vand.u32 %v4762, 2147483648
      %v4838 = vsel %vm4836, %v4837, %v4835
      %v4839 = vrsqrt.pop %v4765
      %v4840 = vmul.f32 %v4765, %v4839
      %vm4841 = vcmp.eq.f32.partialorder %v4765, inf
      %v4842 = vsel %vm4841, %v4765, %v4840
      %vm4843 = vcmp.eq.f32.partialorder %v4765, 0.0
      %v4844 = vand.u32 %v4765, 2147483648
      %v4845 = vsel %vm4843, %v4844, %v4842
      %v4846 = vrsqrt.pop %v4768
      %v4847 = vmul.f32 %v4768, %v4846
      %vm4848 = vcmp.eq.f32.partialorder %v4768, inf
      %v4849 = vsel %vm4848, %v4768, %v4847
      %vm4850 = vcmp.eq.f32.partialorder %v4768, 0.0
      %v4851 = vand.u32 %v4768, 2147483648
      %v4852 = vsel %vm4850, %v4851, %v4849
      %v4853 = vrsqrt.pop %v4771
      %v4854 = vmul.f32 %v4771, %v4853
      %vm4855 = vcmp.eq.f32.partialorder %v4771, inf
      %v4856 = vsel %vm4855, %v4771, %v4854
      %vm4857 = vcmp.eq.f32.partialorder %v4771, 0.0
      %v4858 = vand.u32 %v4771, 2147483648
      %v4859 = vsel %vm4857, %v4858, %v4856
      %v4860 = vrsqrt.pop %v4774
      %v4861 = vmul.f32 %v4774, %v4860
      %vm4862 = vcmp.eq.f32.partialorder %v4774, inf
      %v4863 = vsel %vm4862, %v4774, %v4861
      %vm4864 = vcmp.eq.f32.partialorder %v4774, 0.0
      %v4865 = vand.u32 %v4774, 2147483648
      %v4866 = vsel %vm4864, %v4865, %v4863
      %v4867 = vrsqrt.pop %v4777
      %v4868 = vmul.f32 %v4777, %v4867
      %vm4869 = vcmp.eq.f32.partialorder %v4777, inf
      %v4870 = vsel %vm4869, %v4777, %v4868
      %vm4871 = vcmp.eq.f32.partialorder %v4777, 0.0
      %v4872 = vand.u32 %v4777, 2147483648
      %v4873 = vsel %vm4871, %v4872, %v4870
      %v4874 = vrsqrt.pop %v4780
      %v4875 = vmul.f32 %v4780, %v4874
      %vm4876 = vcmp.eq.f32.partialorder %v4780, inf
      %v4877 = vsel %vm4876, %v4780, %v4875
      %vm4878 = vcmp.eq.f32.partialorder %v4780, 0.0
      %v4879 = vand.u32 %v4780, 2147483648
      %v4880 = vsel %vm4878, %v4879, %v4877
      %v4881 = vrsqrt.pop %v4783
      %v4882 = vmul.f32 %v4783, %v4881
      %vm4883 = vcmp.eq.f32.partialorder %v4783, inf
      %v4884 = vsel %vm4883, %v4783, %v4882
      %vm4885 = vcmp.eq.f32.partialorder %v4783, 0.0
      %v4886 = vand.u32 %v4783, 2147483648
      %v4887 = vsel %vm4885, %v4886, %v4884
      %v4888 = vrsqrt.pop %v4786
      %v4889 = vmul.f32 %v4786, %v4888
      %vm4890 = vcmp.eq.f32.partialorder %v4786, inf
      %v4891 = vsel %vm4890, %v4786, %v4889
      %vm4892 = vcmp.eq.f32.partialorder %v4786, 0.0
      %v4893 = vand.u32 %v4786, 2147483648
      %v4894 = vsel %vm4892, %v4893, %v4891
      %v4895 = vrsqrt.pop %v4789
      %v4896 = vmul.f32 %v4789, %v4895
      %vm4897 = vcmp.eq.f32.partialorder %v4789, inf
      %v4898 = vsel %vm4897, %v4789, %v4896
      %vm4899 = vcmp.eq.f32.partialorder %v4789, 0.0
      %v4900 = vand.u32 %v4789, 2147483648
      %v4901 = vsel %vm4899, %v4900, %v4898
      %v4902 = vmax.f32 %v4796, 1e-12
      %v4903 = vmax.f32 %v4803, 1e-12
      %v4904 = vmax.f32 %v4810, 1e-12
      %v4905 = vmax.f32 %v4817, 1e-12
      %v4906 = vmax.f32 %v4824, 1e-12
      %v4907 = vmax.f32 %v4831, 1e-12
      %v4908 = vmax.f32 %v4838, 1e-12
      %v4909 = vmax.f32 %v4845, 1e-12
      %v4910 = vmax.f32 %v4852, 1e-12
      %v4911 = vmax.f32 %v4859, 1e-12
      %v4912 = vmax.f32 %v4866, 1e-12
      %v4913 = vmax.f32 %v4873, 1e-12
      %v4914 = vmax.f32 %v4880, 1e-12
      %v4915 = vmax.f32 %v4887, 1e-12
      %v4916 = vmax.f32 %v4894, 1e-12
      %v4917 = vmax.f32 %v4901, 1e-12
      %v4918 = vrcp.pop %v4902
      %v4919 = vmul.f32 %v4710, %v4918
      %v4920 = vrcp.pop %v4903
      %v4921 = vmul.f32 %v4711, %v4920
      %v4922 = vrcp.pop %v4904
      %v4923 = vmul.f32 %v4712, %v4922
      %v4924 = vrcp.pop %v4905
      %v4925 = vmul.f32 %v4713, %v4924
      %v4926 = vrcp.pop %v4906
      %v4927 = vmul.f32 %v4714, %v4926
      %v4928 = vrcp.pop %v4907
      %v4929 = vmul.f32 %v4715, %v4928
      %v4930 = vrcp.pop %v4908
      %v4931 = vmul.f32 %v4716, %v4930
      %v4932 = vrcp.pop %v4909
      %v4933 = vmul.f32 %v4717, %v4932
      %v4934 = vrcp.pop %v4910
      %v4935 = vmul.f32 %v4718, %v4934
      %v4936 = vrcp.pop %v4911
      %v4937 = vmul.f32 %v4719, %v4936
      %v4938 = vrcp.pop %v4912
      %v4939 = vmul.f32 %v4720, %v4938
      %v4940 = vrcp.pop %v4913
      %v4941 = vmul.f32 %v4721, %v4940
      %v4942 = vrcp.pop %v4914
      %v4943 = vmul.f32 %v4722, %v4942
      %v4944 = vrcp.pop %v4915
      %v4945 = vmul.f32 %v4723, %v4944
      %v4946 = vrcp.pop %v4916
      %v4947 = vmul.f32 %v4724, %v4946
      %v4948 = vrcp.pop %v4917
      %v4949 = vmul.f32 %v4725, %v4948
      %4951 = vset.pattern.permute.xlu0 0
      %4952 = vperm.xlu0 %4951, %v4919
      %v4953 = vpop.permute.xlu0 %4952
      %4956 = vset.pattern.permute.xlu0 0
      %4957 = vperm.xlu0 %4956, %v4921
      %v4958 = vpop.permute.xlu0 %4957
      %4961 = vset.pattern.permute.xlu0 0
      %4962 = vperm.xlu0 %4961, %v4923
      %v4963 = vpop.permute.xlu0 %4962
      %4966 = vset.pattern.permute.xlu0 0
      %4967 = vperm.xlu0 %4966, %v4925
      %v4968 = vpop.permute.xlu0 %4967
      %4971 = vset.pattern.permute.xlu0 0
      %4972 = vperm.xlu0 %4971, %v4927
      %v4973 = vpop.permute.xlu0 %4972
      %4976 = vset.pattern.permute.xlu0 0
      %4977 = vperm.xlu0 %4976, %v4929
      %v4978 = vpop.permute.xlu0 %4977
      %4981 = vset.pattern.permute.xlu0 0
      %4982 = vperm.xlu0 %4981, %v4931
      %v4983 = vpop.permute.xlu0 %4982
      %4986 = vset.pattern.permute.xlu0 0
      %4987 = vperm.xlu0 %4986, %v4933
      %v4988 = vpop.permute.xlu0 %4987
      %4991 = vset.pattern.permute.xlu0 0
      %4992 = vperm.xlu0 %4991, %v4935
      %v4993 = vpop.permute.xlu0 %4992
      %4996 = vset.pattern.permute.xlu0 0
      %4997 = vperm.xlu0 %4996, %v4937
      %v4998 = vpop.permute.xlu0 %4997
      %5001 = vset.pattern.permute.xlu0 0
      %5002 = vperm.xlu0 %5001, %v4939
      %v5003 = vpop.permute.xlu0 %5002
      %5006 = vset.pattern.permute.xlu0 0
      %5007 = vperm.xlu0 %5006, %v4941
      %v5008 = vpop.permute.xlu0 %5007
      %5011 = vset.pattern.permute.xlu0 0
      %5012 = vperm.xlu0 %5011, %v4943
      %v5013 = vpop.permute.xlu0 %5012
      %5016 = vset.pattern.permute.xlu0 0
      %5017 = vperm.xlu0 %5016, %v4945
      %v5018 = vpop.permute.xlu0 %5017
      %5021 = vset.pattern.permute.xlu0 0
      %5022 = vperm.xlu0 %5021, %v4947
      %v5023 = vpop.permute.xlu0 %5022
      %5026 = vset.pattern.permute.xlu0 0
      %5027 = vperm.xlu0 %5026, %v4949
      %v5028 = vpop.permute.xlu0 %5027
      %v5030 = vmul.f32 %v4953, %v644
      %v5031 = vmul.f32 %v4958, %v644
      %v5032 = vmul.f32 %v4963, %v644
      %v5033 = vmul.f32 %v4968, %v644
      %v5034 = vmul.f32 %v4973, %v644
      %v5035 = vmul.f32 %v4978, %v644
      %v5036 = vmul.f32 %v4983, %v644
      %v5037 = vmul.f32 %v4988, %v644
      %v5038 = vmul.f32 %v4993, %v644
      %v5039 = vmul.f32 %v4998, %v644
      %v5040 = vmul.f32 %v5003, %v644
      %v5041 = vmul.f32 %v5008, %v644
      %v5042 = vmul.f32 %v5013, %v644
      %v5043 = vmul.f32 %v5018, %v644
      %v5044 = vmul.f32 %v5023, %v644
      %v5045 = vmul.f32 %v5028, %v644
      %v5046 = vadd.f32 %v664, %v5030
      %v5047 = vadd.f32 %v664, %v5031
      %v5048 = vadd.f32 %v664, %v5032
      %v5049 = vadd.f32 %v664, %v5033
      %v5050 = vadd.f32 %v664, %v5034
      %v5051 = vadd.f32 %v664, %v5035
      %v5052 = vadd.f32 %v664, %v5036
      %v5053 = vadd.f32 %v664, %v5037
      %v5054 = vadd.f32 %v664, %v5038
      %v5055 = vadd.f32 %v664, %v5039
      %v5056 = vadd.f32 %v664, %v5040
      %v5057 = vadd.f32 %v664, %v5041
      %v5058 = vadd.f32 %v664, %v5042
      %v5059 = vadd.f32 %v664, %v5043
      %v5060 = vadd.f32 %v664, %v5044
      %v5061 = vadd.f32 %v664, %v5045
      %5062 = vset.pattern.permute.xlu0 1
      %5063 = vperm.xlu0 %5062, %v4919
      %v5064 = vpop.permute.xlu0 %5063
      %5066 = vset.pattern.permute.xlu0 1
      %5067 = vperm.xlu0 %5066, %v4921
      %v5068 = vpop.permute.xlu0 %5067
      %5070 = vset.pattern.permute.xlu0 1
      %5071 = vperm.xlu0 %5070, %v4923
      %v5072 = vpop.permute.xlu0 %5071
      %5074 = vset.pattern.permute.xlu0 1
      %5075 = vperm.xlu0 %5074, %v4925
      %v5076 = vpop.permute.xlu0 %5075
      %5078 = vset.pattern.permute.xlu0 1
      %5079 = vperm.xlu0 %5078, %v4927
      %v5080 = vpop.permute.xlu0 %5079
      %5082 = vset.pattern.permute.xlu0 1
      %5083 = vperm.xlu0 %5082, %v4929
      %v5084 = vpop.permute.xlu0 %5083
      %5086 = vset.pattern.permute.xlu0 1
      %5087 = vperm.xlu0 %5086, %v4931
      %v5088 = vpop.permute.xlu0 %5087
      %5090 = vset.pattern.permute.xlu0 1
      %5091 = vperm.xlu0 %5090, %v4933
      %v5092 = vpop.permute.xlu0 %5091
      %5094 = vset.pattern.permute.xlu0 1
      %5095 = vperm.xlu0 %5094, %v4935
      %v5096 = vpop.permute.xlu0 %5095
      %5098 = vset.pattern.permute.xlu0 1
      %5099 = vperm.xlu0 %5098, %v4937
      %v5100 = vpop.permute.xlu0 %5099
      %5102 = vset.pattern.permute.xlu0 1
      %5103 = vperm.xlu0 %5102, %v4939
      %v5104 = vpop.permute.xlu0 %5103
      %5106 = vset.pattern.permute.xlu0 1
      %5107 = vperm.xlu0 %5106, %v4941
      %v5108 = vpop.permute.xlu0 %5107
      %5110 = vset.pattern.permute.xlu0 1
      %5111 = vperm.xlu0 %5110, %v4943
      %v5112 = vpop.permute.xlu0 %5111
      %5114 = vset.pattern.permute.xlu0 1
      %5115 = vperm.xlu0 %5114, %v4945
      %v5116 = vpop.permute.xlu0 %5115
      %5118 = vset.pattern.permute.xlu0 1
      %5119 = vperm.xlu0 %5118, %v4947
      %v5120 = vpop.permute.xlu0 %5119
      %5122 = vset.pattern.permute.xlu0 1
      %5123 = vperm.xlu0 %5122, %v4949
      %v5124 = vpop.permute.xlu0 %5123
      %v5126 = vmul.f32 %v5064, %v748
      %v5127 = vmul.f32 %v5068, %v748
      %v5128 = vmul.f32 %v5072, %v748
      %v5129 = vmul.f32 %v5076, %v748
      %v5130 = vmul.f32 %v5080, %v748
      %v5131 = vmul.f32 %v5084, %v748
      %v5132 = vmul.f32 %v5088, %v748
      %v5133 = vmul.f32 %v5092, %v748
      %v5134 = vmul.f32 %v5096, %v748
      %v5135 = vmul.f32 %v5100, %v748
      %v5136 = vmul.f32 %v5104, %v748
      %v5137 = vmul.f32 %v5108, %v748
      %v5138 = vmul.f32 %v5112, %v748
      %v5139 = vmul.f32 %v5116, %v748
      %v5140 = vmul.f32 %v5120, %v748
      %v5141 = vmul.f32 %v5124, %v748
      %v5142 = vadd.f32 %v5046, %v5126
      %v5143 = vadd.f32 %v5047, %v5127
      %v5144 = vadd.f32 %v5048, %v5128
      %v5145 = vadd.f32 %v5049, %v5129
      %v5146 = vadd.f32 %v5050, %v5130
      %v5147 = vadd.f32 %v5051, %v5131
      %v5148 = vadd.f32 %v5052, %v5132
      %v5149 = vadd.f32 %v5053, %v5133
      %v5150 = vadd.f32 %v5054, %v5134
      %v5151 = vadd.f32 %v5055, %v5135
      %v5152 = vadd.f32 %v5056, %v5136
      %v5153 = vadd.f32 %v5057, %v5137
      %v5154 = vadd.f32 %v5058, %v5138
      %v5155 = vadd.f32 %v5059, %v5139
      %v5156 = vadd.f32 %v5060, %v5140
      %v5157 = vadd.f32 %v5061, %v5141
      %5158 = vset.pattern.permute.xlu0 2
      %5159 = vperm.xlu0 %5158, %v4919
      %v5160 = vpop.permute.xlu0 %5159
      %5162 = vset.pattern.permute.xlu0 2
      %5163 = vperm.xlu0 %5162, %v4921
      %v5164 = vpop.permute.xlu0 %5163
      %5166 = vset.pattern.permute.xlu0 2
      %5167 = vperm.xlu0 %5166, %v4923
      %v5168 = vpop.permute.xlu0 %5167
      %5170 = vset.pattern.permute.xlu0 2
      %5171 = vperm.xlu0 %5170, %v4925
      %v5172 = vpop.permute.xlu0 %5171
      %5174 = vset.pattern.permute.xlu0 2
      %5175 = vperm.xlu0 %5174, %v4927
      %v5176 = vpop.permute.xlu0 %5175
      %5178 = vset.pattern.permute.xlu0 2
      %5179 = vperm.xlu0 %5178, %v4929
      %v5180 = vpop.permute.xlu0 %5179
      %5182 = vset.pattern.permute.xlu0 2
      %5183 = vperm.xlu0 %5182, %v4931
      %v5184 = vpop.permute.xlu0 %5183
      %5186 = vset.pattern.permute.xlu0 2
      %5187 = vperm.xlu0 %5186, %v4933
      %v5188 = vpop.permute.xlu0 %5187
      %5190 = vset.pattern.permute.xlu0 2
      %5191 = vperm.xlu0 %5190, %v4935
      %v5192 = vpop.permute.xlu0 %5191
      %5194 = vset.pattern.permute.xlu0 2
      %5195 = vperm.xlu0 %5194, %v4937
      %v5196 = vpop.permute.xlu0 %5195
      %5198 = vset.pattern.permute.xlu0 2
      %5199 = vperm.xlu0 %5198, %v4939
      %v5200 = vpop.permute.xlu0 %5199
      %5202 = vset.pattern.permute.xlu0 2
      %5203 = vperm.xlu0 %5202, %v4941
      %v5204 = vpop.permute.xlu0 %5203
      %5206 = vset.pattern.permute.xlu0 2
      %5207 = vperm.xlu0 %5206, %v4943
      %v5208 = vpop.permute.xlu0 %5207
      %5210 = vset.pattern.permute.xlu0 2
      %5211 = vperm.xlu0 %5210, %v4945
      %v5212 = vpop.permute.xlu0 %5211
      %5214 = vset.pattern.permute.xlu0 2
      %5215 = vperm.xlu0 %5214, %v4947
      %v5216 = vpop.permute.xlu0 %5215
      %5218 = vset.pattern.permute.xlu0 2
      %5219 = vperm.xlu0 %5218, %v4949
      %v5220 = vpop.permute.xlu0 %5219
      %v5222 = vmul.f32 %v5160, %v848
      %v5223 = vmul.f32 %v5164, %v848
      %v5224 = vmul.f32 %v5168, %v848
      %v5225 = vmul.f32 %v5172, %v848
      %v5226 = vmul.f32 %v5176, %v848
      %v5227 = vmul.f32 %v5180, %v848
      %v5228 = vmul.f32 %v5184, %v848
      %v5229 = vmul.f32 %v5188, %v848
      %v5230 = vmul.f32 %v5192, %v848
      %v5231 = vmul.f32 %v5196, %v848
      %v5232 = vmul.f32 %v5200, %v848
      %v5233 = vmul.f32 %v5204, %v848
      %v5234 = vmul.f32 %v5208, %v848
      %v5235 = vmul.f32 %v5212, %v848
      %v5236 = vmul.f32 %v5216, %v848
      %v5237 = vmul.f32 %v5220, %v848
      %v5238 = vadd.f32 %v5142, %v5222
      %v5239 = vadd.f32 %v5143, %v5223
      %v5240 = vadd.f32 %v5144, %v5224
      %v5241 = vadd.f32 %v5145, %v5225
      %v5242 = vadd.f32 %v5146, %v5226
      %v5243 = vadd.f32 %v5147, %v5227
      %v5244 = vadd.f32 %v5148, %v5228
      %v5245 = vadd.f32 %v5149, %v5229
      %v5246 = vadd.f32 %v5150, %v5230
      %v5247 = vadd.f32 %v5151, %v5231
      %v5248 = vadd.f32 %v5152, %v5232
      %v5249 = vadd.f32 %v5153, %v5233
      %v5250 = vadd.f32 %v5154, %v5234
      %v5251 = vadd.f32 %v5155, %v5235
      %v5252 = vadd.f32 %v5156, %v5236
      %v5253 = vadd.f32 %v5157, %v5237
      %v5254 = vmul.f32 %v5238, %v5238
      %v5255 = vmul.f32 %v5239, %v5239
      %v5256 = vmul.f32 %v5240, %v5240
      %v5257 = vmul.f32 %v5241, %v5241
      %v5258 = vmul.f32 %v5242, %v5242
      %v5259 = vmul.f32 %v5243, %v5243
      %v5260 = vmul.f32 %v5244, %v5244
      %v5261 = vmul.f32 %v5245, %v5245
      %v5262 = vmul.f32 %v5246, %v5246
      %v5263 = vmul.f32 %v5247, %v5247
      %v5264 = vmul.f32 %v5248, %v5248
      %v5265 = vmul.f32 %v5249, %v5249
      %v5266 = vmul.f32 %v5250, %v5250
      %v5267 = vmul.f32 %v5251, %v5251
      %v5268 = vmul.f32 %v5252, %v5252
      %v5269 = vmul.f32 %v5253, %v5253
      %v5270 = vmul.f32 %v5238, %v5254
      %v5271 = vmul.f32 %v5239, %v5255
      %v5272 = vmul.f32 %v5240, %v5256
      %v5273 = vmul.f32 %v5241, %v5257
      %v5274 = vmul.f32 %v5242, %v5258
      %v5275 = vmul.f32 %v5243, %v5259
      %v5276 = vmul.f32 %v5244, %v5260
      %v5277 = vmul.f32 %v5245, %v5261
      %v5278 = vmul.f32 %v5246, %v5262
      %v5279 = vmul.f32 %v5247, %v5263
      %v5280 = vmul.f32 %v5248, %v5264
      %v5281 = vmul.f32 %v5249, %v5265
      %v5282 = vmul.f32 %v5250, %v5266
      %v5283 = vmul.f32 %v5251, %v5267
      %v5284 = vmul.f32 %v5252, %v5268
      %v5285 = vmul.f32 %v5253, %v5269
      %v5286 = vmul.f32 %v5270, 0.044715
      %v5287 = vmul.f32 %v5271, 0.044715
      %v5288 = vmul.f32 %v5272, 0.044715
      %v5289 = vmul.f32 %v5273, 0.044715
      %v5290 = vmul.f32 %v5274, 0.044715
      %v5291 = vmul.f32 %v5275, 0.044715
      %v5292 = vmul.f32 %v5276, 0.044715
      %v5293 = vmul.f32 %v5277, 0.044715
      %v5294 = vmul.f32 %v5278, 0.044715
      %v5295 = vmul.f32 %v5279, 0.044715
      %v5296 = vmul.f32 %v5280, 0.044715
      %v5297 = vmul.f32 %v5281, 0.044715
      %v5298 = vmul.f32 %v5282, 0.044715
      %v5299 = vmul.f32 %v5283, 0.044715
      %v5300 = vmul.f32 %v5284, 0.044715
      %v5301 = vmul.f32 %v5285, 0.044715
      %v5302 = vadd.f32 %v5238, %v5286
      %v5303 = vadd.f32 %v5239, %v5287
      %v5304 = vadd.f32 %v5240, %v5288
      %v5305 = vadd.f32 %v5241, %v5289
      %v5306 = vadd.f32 %v5242, %v5290
      %v5307 = vadd.f32 %v5243, %v5291
      %v5308 = vadd.f32 %v5244, %v5292
      %v5309 = vadd.f32 %v5245, %v5293
      %v5310 = vadd.f32 %v5246, %v5294
      %v5311 = vadd.f32 %v5247, %v5295
      %v5312 = vadd.f32 %v5248, %v5296
      %v5313 = vadd.f32 %v5249, %v5297
      %v5314 = vadd.f32 %v5250, %v5298
      %v5315 = vadd.f32 %v5251, %v5299
      %v5316 = vadd.f32 %v5252, %v5300
      %v5317 = vadd.f32 %v5253, %v5301
      %v5318 = vmul.f32 %v5302, 0.7978846
      %v5319 = vmul.f32 %v5303, 0.7978846
      %v5320 = vmul.f32 %v5304, 0.7978846
      %v5321 = vmul.f32 %v5305, 0.7978846
      %v5322 = vmul.f32 %v5306, 0.7978846
      %v5323 = vmul.f32 %v5307, 0.7978846
      %v5324 = vmul.f32 %v5308, 0.7978846
      %v5325 = vmul.f32 %v5309, 0.7978846
      %v5326 = vmul.f32 %v5310, 0.7978846
      %v5327 = vmul.f32 %v5311, 0.7978846
      %v5328 = vmul.f32 %v5312, 0.7978846
      %v5329 = vmul.f32 %v5313, 0.7978846
      %v5330 = vmul.f32 %v5314, 0.7978846
      %v5331 = vmul.f32 %v5315, 0.7978846
      %v5332 = vmul.f32 %v5316, 0.7978846
      %v5333 = vmul.f32 %v5317, 0.7978846
      %v5334 = vtanh.pop %v5318
      %v5335 = vtanh.pop %v5319
      %v5336 = vtanh.pop %v5320
      %v5337 = vtanh.pop %v5321
      %v5338 = vtanh.pop %v5322
      %v5339 = vtanh.pop %v5323
      %v5340 = vtanh.pop %v5324
      %v5341 = vtanh.pop %v5325
      %v5342 = vtanh.pop %v5326
      %v5343 = vtanh.pop %v5327
      %v5344 = vtanh.pop %v5328
      %v5345 = vtanh.pop %v5329
      %v5346 = vtanh.pop %v5330
      %v5347 = vtanh.pop %v5331
      %v5348 = vtanh.pop %v5332
      %v5349 = vtanh.pop %v5333
      %v5350 = vadd.f32 %v5334, 1.0
      %v5351 = vadd.f32 %v5335, 1.0
      %v5352 = vadd.f32 %v5336, 1.0
      %v5353 = vadd.f32 %v5337, 1.0
      %v5354 = vadd.f32 %v5338, 1.0
      %v5355 = vadd.f32 %v5339, 1.0
      %v5356 = vadd.f32 %v5340, 1.0
      %v5357 = vadd.f32 %v5341, 1.0
      %v5358 = vadd.f32 %v5342, 1.0
      %v5359 = vadd.f32 %v5343, 1.0
      %v5360 = vadd.f32 %v5344, 1.0
      %v5361 = vadd.f32 %v5345, 1.0
      %v5362 = vadd.f32 %v5346, 1.0
      %v5363 = vadd.f32 %v5347, 1.0
      %v5364 = vadd.f32 %v5348, 1.0
      %v5365 = vadd.f32 %v5349, 1.0
      %v5366 = vmul.f32 %v5350, 0.5
      %v5367 = vmul.f32 %v5351, 0.5
      %v5368 = vmul.f32 %v5352, 0.5
      %v5369 = vmul.f32 %v5353, 0.5
      %v5370 = vmul.f32 %v5354, 0.5
      %v5371 = vmul.f32 %v5355, 0.5
      %v5372 = vmul.f32 %v5356, 0.5
      %v5373 = vmul.f32 %v5357, 0.5
      %v5374 = vmul.f32 %v5358, 0.5
      %v5375 = vmul.f32 %v5359, 0.5
      %v5376 = vmul.f32 %v5360, 0.5
      %v5377 = vmul.f32 %v5361, 0.5
      %v5378 = vmul.f32 %v5362, 0.5
      %v5379 = vmul.f32 %v5363, 0.5
      %v5380 = vmul.f32 %v5364, 0.5
      %v5381 = vmul.f32 %v5365, 0.5
      %v5382 = vmul.f32 %v5238, %v5366
      %v5383 = vmul.f32 %v5239, %v5367
      %v5384 = vmul.f32 %v5240, %v5368
      %v5385 = vmul.f32 %v5241, %v5369
      %v5386 = vmul.f32 %v5242, %v5370
      %v5387 = vmul.f32 %v5243, %v5371
      %v5388 = vmul.f32 %v5244, %v5372
      %v5389 = vmul.f32 %v5245, %v5373
      %v5390 = vmul.f32 %v5246, %v5374
      %v5391 = vmul.f32 %v5247, %v5375
      %v5392 = vmul.f32 %v5248, %v5376
      %v5393 = vmul.f32 %v5249, %v5377
      %v5394 = vmul.f32 %v5250, %v5378
      %v5395 = vmul.f32 %v5251, %v5379
      %v5396 = vmul.f32 %v5252, %v5380
      %v5397 = vmul.f32 %v5253, %v5381
      %v5398 = vpack.c.bf16 %v5383, %v5382
      %v5399 = vpack.c.bf16 %v5385, %v5384
      %v5400 = vpack.c.bf16 %v5387, %v5386
      %v5401 = vpack.c.bf16 %v5389, %v5388
      %v5402 = vpack.c.bf16 %v5391, %v5390
      %v5403 = vpack.c.bf16 %v5393, %v5392
      %v5404 = vpack.c.bf16 %v5395, %v5394
      %v5405 = vpack.c.bf16 %v5397, %v5396
      %v5406 = vld [vmem:[%s2 + $0x60] sm:$0xf]
      %v5407 = vld [vmem:[%s2 + $0x64] sm:$0xf]
      %v5410 = vunpack.c.l.b16 %v5406
      %v5411 = vunpack.c.l.b16 %v5407
      %v5412 = vpack.c.b16 %v5411, %v5410
      %v5415 = vsel %vm1045, %v5398, 0
      %v5418 = vsel %vm1045, %v5399, 0
      %v5421 = vsel %vm1045, %v5400, 0
      %v5424 = vsel %vm1045, %v5401, 0
      %v5427 = vsel %vm1045, %v5402, 0
      %v5430 = vsel %vm1045, %v5403, 0
      %v5433 = vsel %vm1045, %v5404, 0
      %v5436 = vsel %vm1045, %v5405, 0
      %5438 = vmatprep.subr.bf16.mxu0 0
      %5439 = vmatpush1.bf16.msra.mxu0 0
      %5440 = vmatprep.subr.bf16.mxu0 0
      %5441 = vmatpush1.bf16.msra.mxu0 0
      %5442 = vmatprep.subr.bf16.mxu0 0
      %5443 = vmatpush1.bf16.msra.mxu0 0
      %5444 = vmatprep.subr.bf16.mxu0 0
      %5445 = vmatpush1.bf16.msra.mxu0 0
      %5446 = vmatprep.subr.bf16.mxu0 0
      %5447 = vmatpush1.bf16.msra.mxu0 0
      %5448 = vmatprep.subr.bf16.mxu0 0
      %5449 = vmatpush1.bf16.msra.mxu0 0
      %5450 = vmatprep.subr.bf16.mxu0 0
      %5451 = vmatpush1.bf16.msra.mxu0 0
      %5452 = vmatprep.subr.bf16.mxu0 0
      %5453 = vmatpush1.bf16.msra.mxu0 %v5412
      %5454 = vmatprep.subr.bf16.mxu0 0
      %5455 = vmatpush2.bf16.msra.mxu0 0
      %5456 = vmatprep.subr.bf16.mxu0 0
      %5457 = vmatpush2.bf16.msra.mxu0 0
      %5458 = vmatprep.subr.bf16.mxu0 0
      %5459 = vmatpush2.bf16.msra.mxu0 0
      %5460 = vmatprep.subr.bf16.mxu0 0
      %5461 = vmatpush2.bf16.msra.mxu0 0
      %5462 = vmatprep.subr.bf16.mxu0 0
      %5463 = vmatpush2.bf16.msra.mxu0 0
      %5464 = vmatprep.subr.bf16.mxu0 0
      %5465 = vmatpush2.bf16.msra.mxu0 0
      %5466 = vmatprep.subr.bf16.mxu0 0
      %5467 = vmatpush2.bf16.msra.mxu0 0
      %5468 = vmatprep.subr.bf16.mxu0 0
      %5469 = vmatpush2.bf16.msra.mxu0 0
      %5470 = vmatprep.mubr.bf16.mxu0 0
      %5471 = vmatmul.mubr.bf16.gmra.mxu0 %v5415
      %v5472 = vpop.f32.mrf.mxu0
      %v5473 = vadd.f32 %v1038, %v5472
      %v5474 = vpop.f32.mrf.mxu0
      %v5475 = vpop.f32.mrf.mxu0
      %v5476 = vadd.f32 %v1038, %v5475
      %v5477 = vpop.f32.mrf.mxu0
      %5478 = vmatprep.mubr.bf16.mxu0 0
      %5479 = vmatmul.mubr.bf16.gmra.mxu0 %v5418
      %v5480 = vpop.f32.mrf.mxu0
      %v5481 = vadd.f32 %v1038, %v5480
      %v5482 = vpop.f32.mrf.mxu0
      %v5483 = vpop.f32.mrf.mxu0
      %v5484 = vadd.f32 %v1038, %v5483
      %v5485 = vpop.f32.mrf.mxu0
      %5486 = vmatprep.mubr.bf16.mxu0 0
      %5487 = vmatmul.mubr.bf16.gmra.mxu0 %v5421
      %v5488 = vpop.f32.mrf.mxu0
      %v5489 = vadd.f32 %v1038, %v5488
      %v5490 = vpop.f32.mrf.mxu0
      %v5491 = vpop.f32.mrf.mxu0
      %v5492 = vadd.f32 %v1038, %v5491
      %v5493 = vpop.f32.mrf.mxu0
      %5494 = vmatprep.mubr.bf16.mxu0 0
      %5495 = vmatmul.mubr.bf16.gmra.mxu0 %v5424
      %v5496 = vpop.f32.mrf.mxu0
      %v5497 = vadd.f32 %v1038, %v5496
      %v5498 = vpop.f32.mrf.mxu0
      %v5499 = vpop.f32.mrf.mxu0
      %v5500 = vadd.f32 %v1038, %v5499
      %v5501 = vpop.f32.mrf.mxu0
      %5502 = vmatprep.mubr.bf16.mxu0 0
      %5503 = vmatmul.mubr.bf16.gmra.mxu0 %v5427
      %v5504 = vpop.f32.mrf.mxu0
      %v5505 = vadd.f32 %v1038, %v5504
      %v5506 = vpop.f32.mrf.mxu0
      %v5507 = vpop.f32.mrf.mxu0
      %v5508 = vadd.f32 %v1038, %v5507
      %v5509 = vpop.f32.mrf.mxu0
      %5510 = vmatprep.mubr.bf16.mxu0 0
      %5511 = vmatmul.mubr.bf16.gmra.mxu0 %v5430
      %v5512 = vpop.f32.mrf.mxu0
      %v5513 = vadd.f32 %v1038, %v5512
      %v5514 = vpop.f32.mrf.mxu0
      %v5515 = vpop.f32.mrf.mxu0
      %v5516 = vadd.f32 %v1038, %v5515
      %v5517 = vpop.f32.mrf.mxu0
      %5518 = vmatprep.mubr.bf16.mxu0 0
      %5519 = vmatmul.mubr.bf16.gmra.mxu0 %v5433
      %v5520 = vpop.f32.mrf.mxu0
      %v5521 = vadd.f32 %v1038, %v5520
      %v5522 = vpop.f32.mrf.mxu0
      %v5523 = vpop.f32.mrf.mxu0
      %v5524 = vadd.f32 %v1038, %v5523
      %v5525 = vpop.f32.mrf.mxu0
      %5526 = vmatprep.mubr.bf16.mxu0 0
      %5527 = vmatmul.mubr.bf16.gmra.mxu0 %v5436
      %v5528 = vpop.f32.mrf.mxu0
      %v5529 = vadd.f32 %v1038, %v5528
      %v5530 = vpop.f32.mrf.mxu0
      %v5531 = vpop.f32.mrf.mxu0
      %v5532 = vadd.f32 %v1038, %v5531
      %v5533 = vpop.f32.mrf.mxu0
      %5534 = vdwg.mxu0
      %v5535 = vxor.u32 %v5473, 2147483648
      %v5536 = vxor.u32 %v5476, 2147483648
      %v5537 = vxor.u32 %v5481, 2147483648
      %v5538 = vxor.u32 %v5484, 2147483648
      %v5539 = vxor.u32 %v5489, 2147483648
      %v5540 = vxor.u32 %v5492, 2147483648
      %v5541 = vxor.u32 %v5497, 2147483648
      %v5542 = vxor.u32 %v5500, 2147483648
      %v5543 = vxor.u32 %v5505, 2147483648
      %v5544 = vxor.u32 %v5508, 2147483648
      %v5545 = vxor.u32 %v5513, 2147483648
      %v5546 = vxor.u32 %v5516, 2147483648
      %v5547 = vxor.u32 %v5521, 2147483648
      %v5548 = vxor.u32 %v5524, 2147483648
      %v5549 = vxor.u32 %v5529, 2147483648
      %v5550 = vxor.u32 %v5532, 2147483648
      %v5551 = vmul.f32 %v5535, 1.442695
      %v5552 = vpow.pop %v5551
      %v5553 = vmul.f32 %v5536, 1.442695
      %v5554 = vpow.pop %v5553
      %v5555 = vmul.f32 %v5537, 1.442695
      %v5556 = vpow.pop %v5555
      %v5557 = vmul.f32 %v5538, 1.442695
      %v5558 = vpow.pop %v5557
      %v5559 = vmul.f32 %v5539, 1.442695
      %v5560 = vpow.pop %v5559
      %v5561 = vmul.f32 %v5540, 1.442695
      %v5562 = vpow.pop %v5561
      %v5563 = vmul.f32 %v5541, 1.442695
      %v5564 = vpow.pop %v5563
      %v5565 = vmul.f32 %v5542, 1.442695
      %v5566 = vpow.pop %v5565
      %v5567 = vmul.f32 %v5543, 1.442695
      %v5568 = vpow.pop %v5567
      %v5569 = vmul.f32 %v5544, 1.442695
      %v5570 = vpow.pop %v5569
      %v5571 = vmul.f32 %v5545, 1.442695
      %v5572 = vpow.pop %v5571
      %v5573 = vmul.f32 %v5546, 1.442695
      %v5574 = vpow.pop %v5573
      %v5575 = vmul.f32 %v5547, 1.442695
      %v5576 = vpow.pop %v5575
      %v5577 = vmul.f32 %v5548, 1.442695
      %v5578 = vpow.pop %v5577
      %v5579 = vmul.f32 %v5549, 1.442695
      %v5580 = vpow.pop %v5579
      %v5581 = vmul.f32 %v5550, 1.442695
      %v5582 = vpow.pop %v5581
      %v5583 = vadd.f32 %v5552, 1.0
      %v5584 = vadd.f32 %v5554, 1.0
      %v5585 = vadd.f32 %v5556, 1.0
      %v5586 = vadd.f32 %v5558, 1.0
      %v5587 = vadd.f32 %v5560, 1.0
      %v5588 = vadd.f32 %v5562, 1.0
      %v5589 = vadd.f32 %v5564, 1.0
      %v5590 = vadd.f32 %v5566, 1.0
      %v5591 = vadd.f32 %v5568, 1.0
      %v5592 = vadd.f32 %v5570, 1.0
      %v5593 = vadd.f32 %v5572, 1.0
      %v5594 = vadd.f32 %v5574, 1.0
      %v5595 = vadd.f32 %v5576, 1.0
      %v5596 = vadd.f32 %v5578, 1.0
      %v5597 = vadd.f32 %v5580, 1.0
      %v5598 = vadd.f32 %v5582, 1.0
      %v5599 = vrcp.pop %v5583
      %v5600 = vmul.f32 1.0, %v5599
      %v5601 = vrcp.pop %v5584
      %v5602 = vmul.f32 1.0, %v5601
      %v5603 = vrcp.pop %v5585
      %v5604 = vmul.f32 1.0, %v5603
      %v5605 = vrcp.pop %v5586
      %v5606 = vmul.f32 1.0, %v5605
      %v5607 = vrcp.pop %v5587
      %v5608 = vmul.f32 1.0, %v5607
      %v5609 = vrcp.pop %v5588
      %v5610 = vmul.f32 1.0, %v5609
      %v5611 = vrcp.pop %v5589
      %v5612 = vmul.f32 1.0, %v5611
      %v5613 = vrcp.pop %v5590
      %v5614 = vmul.f32 1.0, %v5613
      %v5615 = vrcp.pop %v5591
      %v5616 = vmul.f32 1.0, %v5615
      %v5617 = vrcp.pop %v5592
      %v5618 = vmul.f32 1.0, %v5617
      %v5619 = vrcp.pop %v5593
      %v5620 = vmul.f32 1.0, %v5619
      %v5621 = vrcp.pop %v5594
      %v5622 = vmul.f32 1.0, %v5621
      %v5623 = vrcp.pop %v5595
      %v5624 = vmul.f32 1.0, %v5623
      %v5625 = vrcp.pop %v5596
      %v5626 = vmul.f32 1.0, %v5625
      %v5627 = vrcp.pop %v5597
      %v5628 = vmul.f32 1.0, %v5627
      %v5629 = vrcp.pop %v5598
      %v5630 = vmul.f32 1.0, %v5629
      %v5631 = vmul.f32 %v4693, %v5600
      %v5632 = vmul.f32 %v4694, %v5602
      %v5633 = vmul.f32 %v4695, %v5604
      %v5634 = vmul.f32 %v4696, %v5606
      %v5635 = vmul.f32 %v4697, %v5608
      %v5636 = vmul.f32 %v4698, %v5610
      %v5637 = vmul.f32 %v4699, %v5612
      %v5638 = vmul.f32 %v4700, %v5614
      %v5639 = vmul.f32 %v4701, %v5616
      %v5640 = vmul.f32 %v4702, %v5618
      %v5641 = vmul.f32 %v4703, %v5620
      %v5642 = vmul.f32 %v4704, %v5622
      %v5643 = vmul.f32 %v4705, %v5624
      %v5644 = vmul.f32 %v4706, %v5626
      %v5645 = vmul.f32 %v4707, %v5628
      %v5646 = vmul.f32 %v4708, %v5630
      %v5647 = vsel %vm1279, %v5631, 0.0
      %5648 = vadd.xlane.f32.xlu0 %v5647
      %v5649 = vpop.xlane.xlu0 %5648
      %v5650 = vsel %vm1279, %v5632, 0.0
      %5651 = vadd.xlane.f32.xlu0 %v5650
      %v5652 = vpop.xlane.xlu0 %5651
      %v5653 = vsel %vm1279, %v5633, 0.0
      %5654 = vadd.xlane.f32.xlu0 %v5653
      %v5655 = vpop.xlane.xlu0 %5654
      %v5656 = vsel %vm1279, %v5634, 0.0
      %5657 = vadd.xlane.f32.xlu0 %v5656
      %v5658 = vpop.xlane.xlu0 %5657
      %v5659 = vsel %vm1279, %v5635, 0.0
      %5660 = vadd.xlane.f32.xlu0 %v5659
      %v5661 = vpop.xlane.xlu0 %5660
      %v5662 = vsel %vm1279, %v5636, 0.0
      %5663 = vadd.xlane.f32.xlu0 %v5662
      %v5664 = vpop.xlane.xlu0 %5663
      %v5665 = vsel %vm1279, %v5637, 0.0
      %5666 = vadd.xlane.f32.xlu0 %v5665
      %v5667 = vpop.xlane.xlu0 %5666
      %v5668 = vsel %vm1279, %v5638, 0.0
      %5669 = vadd.xlane.f32.xlu0 %v5668
      %v5670 = vpop.xlane.xlu0 %5669
      %v5671 = vsel %vm1279, %v5639, 0.0
      %5672 = vadd.xlane.f32.xlu0 %v5671
      %v5673 = vpop.xlane.xlu0 %5672
      %v5674 = vsel %vm1279, %v5640, 0.0
      %5675 = vadd.xlane.f32.xlu0 %v5674
      %v5676 = vpop.xlane.xlu0 %5675
      %v5677 = vsel %vm1279, %v5641, 0.0
      %5678 = vadd.xlane.f32.xlu0 %v5677
      %v5679 = vpop.xlane.xlu0 %5678
      %v5680 = vsel %vm1279, %v5642, 0.0
      %5681 = vadd.xlane.f32.xlu0 %v5680
      %v5682 = vpop.xlane.xlu0 %5681
      %v5683 = vsel %vm1279, %v5643, 0.0
      %5684 = vadd.xlane.f32.xlu0 %v5683
      %v5685 = vpop.xlane.xlu0 %5684
      %v5686 = vsel %vm1279, %v5644, 0.0
      %5687 = vadd.xlane.f32.xlu0 %v5686
      %v5688 = vpop.xlane.xlu0 %5687
      %v5689 = vsel %vm1279, %v5645, 0.0
      %5690 = vadd.xlane.f32.xlu0 %v5689
      %v5691 = vpop.xlane.xlu0 %5690
      %v5692 = vsel %vm1279, %v5646, 0.0
      %5693 = vadd.xlane.f32.xlu0 %v5692
      %v5694 = vpop.xlane.xlu0 %5693
      %v5695 = vmul.f32 %v5649, %v1328
      %v5696 = vmul.f32 %v5652, %v1328
      %v5697 = vmul.f32 %v5655, %v1328
      %v5698 = vmul.f32 %v5658, %v1328
      %v5699 = vmul.f32 %v5661, %v1328
      %v5700 = vmul.f32 %v5664, %v1328
      %v5701 = vmul.f32 %v5667, %v1328
      %v5702 = vmul.f32 %v5670, %v1328
      %v5703 = vmul.f32 %v5673, %v1328
      %v5704 = vmul.f32 %v5676, %v1328
      %v5705 = vmul.f32 %v5679, %v1328
      %v5706 = vmul.f32 %v5682, %v1328
      %v5707 = vmul.f32 %v5685, %v1328
      %v5708 = vmul.f32 %v5688, %v1328
      %v5709 = vmul.f32 %v5691, %v1328
      %v5710 = vmul.f32 %v5694, %v1328
      %v5711 = vsub.f32 %v5631, %v5695
      %v5712 = vsub.f32 %v5632, %v5696
      %v5713 = vsub.f32 %v5633, %v5697
      %v5714 = vsub.f32 %v5634, %v5698
      %v5715 = vsub.f32 %v5635, %v5699
      %v5716 = vsub.f32 %v5636, %v5700
      %v5717 = vsub.f32 %v5637, %v5701
      %v5718 = vsub.f32 %v5638, %v5702
      %v5719 = vsub.f32 %v5639, %v5703
      %v5720 = vsub.f32 %v5640, %v5704
      %v5721 = vsub.f32 %v5641, %v5705
      %v5722 = vsub.f32 %v5642, %v5706
      %v5723 = vsub.f32 %v5643, %v5707
      %v5724 = vsub.f32 %v5644, %v5708
      %v5725 = vsub.f32 %v5645, %v5709
      %v5726 = vsub.f32 %v5646, %v5710
      %v5727 = vmul.f32 %v5711, %v5711
      %v5728 = vmul.f32 %v5712, %v5712
      %v5729 = vmul.f32 %v5713, %v5713
      %v5730 = vmul.f32 %v5714, %v5714
      %v5731 = vmul.f32 %v5715, %v5715
      %v5732 = vmul.f32 %v5716, %v5716
      %v5733 = vmul.f32 %v5717, %v5717
      %v5734 = vmul.f32 %v5718, %v5718
      %v5735 = vmul.f32 %v5719, %v5719
      %v5736 = vmul.f32 %v5720, %v5720
      %v5737 = vmul.f32 %v5721, %v5721
      %v5738 = vmul.f32 %v5722, %v5722
      %v5739 = vmul.f32 %v5723, %v5723
      %v5740 = vmul.f32 %v5724, %v5724
      %v5741 = vmul.f32 %v5725, %v5725
      %v5742 = vmul.f32 %v5726, %v5726
      %v5743 = vsel %vm1279, %v5727, 0.0
      %5744 = vadd.xlane.f32.xlu0 %v5743
      %v5745 = vpop.xlane.xlu0 %5744
      %v5746 = vsel %vm1279, %v5728, 0.0
      %5747 = vadd.xlane.f32.xlu0 %v5746
      %v5748 = vpop.xlane.xlu0 %5747
      %v5749 = vsel %vm1279, %v5729, 0.0
      %5750 = vadd.xlane.f32.xlu0 %v5749
      %v5751 = vpop.xlane.xlu0 %5750
      %v5752 = vsel %vm1279, %v5730, 0.0
      %5753 = vadd.xlane.f32.xlu0 %v5752
      %v5754 = vpop.xlane.xlu0 %5753
      %v5755 = vsel %vm1279, %v5731, 0.0
      %5756 = vadd.xlane.f32.xlu0 %v5755
      %v5757 = vpop.xlane.xlu0 %5756
      %v5758 = vsel %vm1279, %v5732, 0.0
      %5759 = vadd.xlane.f32.xlu0 %v5758
      %v5760 = vpop.xlane.xlu0 %5759
      %v5761 = vsel %vm1279, %v5733, 0.0
      %5762 = vadd.xlane.f32.xlu0 %v5761
      %v5763 = vpop.xlane.xlu0 %5762
      %v5764 = vsel %vm1279, %v5734, 0.0
      %5765 = vadd.xlane.f32.xlu0 %v5764
      %v5766 = vpop.xlane.xlu0 %5765
      %v5767 = vsel %vm1279, %v5735, 0.0
      %5768 = vadd.xlane.f32.xlu0 %v5767
      %v5769 = vpop.xlane.xlu0 %5768
      %v5770 = vsel %vm1279, %v5736, 0.0
      %5771 = vadd.xlane.f32.xlu0 %v5770
      %v5772 = vpop.xlane.xlu0 %5771
      %v5773 = vsel %vm1279, %v5737, 0.0
      %5774 = vadd.xlane.f32.xlu0 %v5773
      %v5775 = vpop.xlane.xlu0 %5774
      %v5776 = vsel %vm1279, %v5738, 0.0
      %5777 = vadd.xlane.f32.xlu0 %v5776
      %v5778 = vpop.xlane.xlu0 %5777
      %v5779 = vsel %vm1279, %v5739, 0.0
      %5780 = vadd.xlane.f32.xlu0 %v5779
      %v5781 = vpop.xlane.xlu0 %5780
      %v5782 = vsel %vm1279, %v5740, 0.0
      %5783 = vadd.xlane.f32.xlu0 %v5782
      %v5784 = vpop.xlane.xlu0 %5783
      %v5785 = vsel %vm1279, %v5741, 0.0
      %5786 = vadd.xlane.f32.xlu0 %v5785
      %v5787 = vpop.xlane.xlu0 %5786
      %v5788 = vsel %vm1279, %v5742, 0.0
      %5789 = vadd.xlane.f32.xlu0 %v5788
      %v5790 = vpop.xlane.xlu0 %5789
      %v5791 = vmul.f32 %v5745, %v1328
      %v5792 = vmul.f32 %v5748, %v1328
      %v5793 = vmul.f32 %v5751, %v1328
      %v5794 = vmul.f32 %v5754, %v1328
      %v5795 = vmul.f32 %v5757, %v1328
      %v5796 = vmul.f32 %v5760, %v1328
      %v5797 = vmul.f32 %v5763, %v1328
      %v5798 = vmul.f32 %v5766, %v1328
      %v5799 = vmul.f32 %v5769, %v1328
      %v5800 = vmul.f32 %v5772, %v1328
      %v5801 = vmul.f32 %v5775, %v1328
      %v5802 = vmul.f32 %v5778, %v1328
      %v5803 = vmul.f32 %v5781, %v1328
      %v5804 = vmul.f32 %v5784, %v1328
      %v5805 = vmul.f32 %v5787, %v1328
      %v5806 = vmul.f32 %v5790, %v1328
      %v5807 = vadd.f32 %v5791, 1e-05
      %v5808 = vadd.f32 %v5792, 1e-05
      %v5809 = vadd.f32 %v5793, 1e-05
      %v5810 = vadd.f32 %v5794, 1e-05
      %v5811 = vadd.f32 %v5795, 1e-05
      %v5812 = vadd.f32 %v5796, 1e-05
      %v5813 = vadd.f32 %v5797, 1e-05
      %v5814 = vadd.f32 %v5798, 1e-05
      %v5815 = vadd.f32 %v5799, 1e-05
      %v5816 = vadd.f32 %v5800, 1e-05
      %v5817 = vadd.f32 %v5801, 1e-05
      %v5818 = vadd.f32 %v5802, 1e-05
      %v5819 = vadd.f32 %v5803, 1e-05
      %v5820 = vadd.f32 %v5804, 1e-05
      %v5821 = vadd.f32 %v5805, 1e-05
      %v5822 = vadd.f32 %v5806, 1e-05
      %v5823 = vrsqrt.pop %v5807
      %v5824 = vrsqrt.pop %v5808
      %v5825 = vrsqrt.pop %v5809
      %v5826 = vrsqrt.pop %v5810
      %v5827 = vrsqrt.pop %v5811
      %v5828 = vrsqrt.pop %v5812
      %v5829 = vrsqrt.pop %v5813
      %v5830 = vrsqrt.pop %v5814
      %v5831 = vrsqrt.pop %v5815
      %v5832 = vrsqrt.pop %v5816
      %v5833 = vrsqrt.pop %v5817
      %v5834 = vrsqrt.pop %v5818
      %v5835 = vrsqrt.pop %v5819
      %v5836 = vrsqrt.pop %v5820
      %v5837 = vrsqrt.pop %v5821
      %v5838 = vrsqrt.pop %v5822
      %v5839 = vmul.f32 %v5711, %v5823
      %v5840 = vmul.f32 %v5712, %v5824
      %v5841 = vmul.f32 %v5713, %v5825
      %v5842 = vmul.f32 %v5714, %v5826
      %v5843 = vmul.f32 %v5715, %v5827
      %v5844 = vmul.f32 %v5716, %v5828
      %v5845 = vmul.f32 %v5717, %v5829
      %v5846 = vmul.f32 %v5718, %v5830
      %v5847 = vmul.f32 %v5719, %v5831
      %v5848 = vmul.f32 %v5720, %v5832
      %v5849 = vmul.f32 %v5721, %v5833
      %v5850 = vmul.f32 %v5722, %v5834
      %v5851 = vmul.f32 %v5723, %v5835
      %v5852 = vmul.f32 %v5724, %v5836
      %v5853 = vmul.f32 %v5725, %v5837
      %v5854 = vmul.f32 %v5726, %v5838
      %v5855 = vmul.f32 %v5839, %v1492
      %v5856 = vmul.f32 %v5840, %v1492
      %v5857 = vmul.f32 %v5841, %v1492
      %v5858 = vmul.f32 %v5842, %v1492
      %v5859 = vmul.f32 %v5843, %v1492
      %v5860 = vmul.f32 %v5844, %v1492
      %v5861 = vmul.f32 %v5845, %v1492
      %v5862 = vmul.f32 %v5846, %v1492
      %v5863 = vmul.f32 %v5847, %v1492
      %v5864 = vmul.f32 %v5848, %v1492
      %v5865 = vmul.f32 %v5849, %v1492
      %v5866 = vmul.f32 %v5850, %v1492
      %v5867 = vmul.f32 %v5851, %v1492
      %v5868 = vmul.f32 %v5852, %v1492
      %v5869 = vmul.f32 %v5853, %v1492
      %v5870 = vmul.f32 %v5854, %v1492
      %v5871 = vadd.f32 %v5855, %v1512
      %v5872 = vadd.f32 %v5856, %v1512
      %v5873 = vadd.f32 %v5857, %v1512
      %v5874 = vadd.f32 %v5858, %v1512
      %v5875 = vadd.f32 %v5859, %v1512
      %v5876 = vadd.f32 %v5860, %v1512
      %v5877 = vadd.f32 %v5861, %v1512
      %v5878 = vadd.f32 %v5862, %v1512
      %v5879 = vadd.f32 %v5863, %v1512
      %v5880 = vadd.f32 %v5864, %v1512
      %v5881 = vadd.f32 %v5865, %v1512
      %v5882 = vadd.f32 %v5866, %v1512
      %v5883 = vadd.f32 %v5867, %v1512
      %v5884 = vadd.f32 %v5868, %v1512
      %v5885 = vadd.f32 %v5869, %v1512
      %v5886 = vadd.f32 %v5870, %v1512
      %v5887 = vpack.c.bf16 %v5872, %v5871
      %v5888 = vpack.c.bf16 %v5874, %v5873
      %v5889 = vpack.c.bf16 %v5876, %v5875
      %v5890 = vpack.c.bf16 %v5878, %v5877
      %v5891 = vpack.c.bf16 %v5880, %v5879
      %v5892 = vpack.c.bf16 %v5882, %v5881
      %v5893 = vpack.c.bf16 %v5884, %v5883
      %v5894 = vpack.c.bf16 %v5886, %v5885
      %v5895 = vld [vmem:[%s2] sm:$0xf]
      %v5896 = vld [vmem:[%s2 + $0x4] sm:$0xf]
      %v5897 = vld [vmem:[%s2 + $0x8] sm:$0xf]
      %v5898 = vld [vmem:[%s2 + $0xc] sm:$0xf]
      %v5899 = vld [vmem:[%s2 + $0x10] sm:$0xf]
      %v5900 = vld [vmem:[%s2 + $0x14] sm:$0xf]
      %v5901 = vld [vmem:[%s2 + $0x18] sm:$0xf]
      %v5902 = vld [vmem:[%s2 + $0x1c] sm:$0xf]
      %v5911 = vunpack.c.l.b16 %v5895
      %v5912 = vunpack.c.l.b16 %v5896
      %v5913 = vunpack.c.l.b16 %v5897
      %v5914 = vunpack.c.l.b16 %v5898
      %v5915 = vunpack.c.l.b16 %v5899
      %v5916 = vunpack.c.l.b16 %v5900
      %v5917 = vunpack.c.l.b16 %v5901
      %v5918 = vunpack.c.l.b16 %v5902
      %v5919 = vpack.c.b16 %v5912, %v5911
      %v5920 = vpack.c.b16 %v5914, %v5913
      %v5921 = vpack.c.b16 %v5916, %v5915
      %v5922 = vpack.c.b16 %v5918, %v5917
      %v5928 = vsel %vm1279, %v5887, 0
      %v5931 = vsel %vm1279, %v5888, 0
      %v5934 = vsel %vm1279, %v5889, 0
      %v5937 = vsel %vm1279, %v5890, 0
      %v5940 = vsel %vm1279, %v5891, 0
      %v5943 = vsel %vm1279, %v5892, 0
      %v5946 = vsel %vm1279, %v5893, 0
      %v5949 = vsel %vm1279, %v5894, 0
      %5951 = vmatprep.subr.bf16.mxu0 0
      %5952 = vmatpush1.bf16.msra.mxu0 0
      %5953 = vmatprep.subr.bf16.mxu0 0
      %5954 = vmatpush1.bf16.msra.mxu0 0
      %5955 = vmatprep.subr.bf16.mxu0 0
      %5956 = vmatpush1.bf16.msra.mxu0 0
      %5957 = vmatprep.subr.bf16.mxu0 0
      %5958 = vmatpush1.bf16.msra.mxu0 0
      %5959 = vmatprep.subr.bf16.mxu0 0
      %5960 = vmatpush1.bf16.msra.mxu0 %v5922
      %5961 = vmatprep.subr.bf16.mxu0 0
      %5962 = vmatpush1.bf16.msra.mxu0 %v5921
      %5963 = vmatprep.subr.bf16.mxu0 0
      %5964 = vmatpush1.bf16.msra.mxu0 %v5920
      %5965 = vmatprep.subr.bf16.mxu0 0
      %5966 = vmatpush1.bf16.msra.mxu0 %v5919
      %5967 = vmatprep.subr.bf16.mxu0 0
      %5968 = vmatpush2.bf16.msra.mxu0 0
      %5969 = vmatprep.subr.bf16.mxu0 0
      %5970 = vmatpush2.bf16.msra.mxu0 0
      %5971 = vmatprep.subr.bf16.mxu0 0
      %5972 = vmatpush2.bf16.msra.mxu0 0
      %5973 = vmatprep.subr.bf16.mxu0 0
      %5974 = vmatpush2.bf16.msra.mxu0 0
      %5975 = vmatprep.subr.bf16.mxu0 0
      %5976 = vmatpush2.bf16.msra.mxu0 0
      %5977 = vmatprep.subr.bf16.mxu0 0
      %5978 = vmatpush2.bf16.msra.mxu0 0
      %5979 = vmatprep.subr.bf16.mxu0 0
      %5980 = vmatpush2.bf16.msra.mxu0 0
      %5981 = vmatprep.subr.bf16.mxu0 0
      %5982 = vmatpush2.bf16.msra.mxu0 0
      %5983 = vmatprep.mubr.bf16.mxu0 0
      %5984 = vmatmul.mubr.bf16.gmra.mxu0 %v5928
      %v5985 = vpop.f32.mrf.mxu0
      %v5986 = vadd.f32 %v1548, %v5985
      %v5987 = vpop.f32.mrf.mxu0
      %v5988 = vpop.f32.mrf.mxu0
      %v5989 = vadd.f32 %v1548, %v5988
      %v5990 = vpop.f32.mrf.mxu0
      %5991 = vmatprep.mubr.bf16.mxu0 0
      %5992 = vmatmul.mubr.bf16.gmra.mxu0 %v5931
      %v5993 = vpop.f32.mrf.mxu0
      %v5994 = vadd.f32 %v1548, %v5993
      %v5995 = vpop.f32.mrf.mxu0
      %v5996 = vpop.f32.mrf.mxu0
      %v5997 = vadd.f32 %v1548, %v5996
      %v5998 = vpop.f32.mrf.mxu0
      %5999 = vmatprep.mubr.bf16.mxu0 0
      %6000 = vmatmul.mubr.bf16.gmra.mxu0 %v5934
      %v6001 = vpop.f32.mrf.mxu0
      %v6002 = vadd.f32 %v1548, %v6001
      %v6003 = vpop.f32.mrf.mxu0
      %v6004 = vpop.f32.mrf.mxu0
      %v6005 = vadd.f32 %v1548, %v6004
      %v6006 = vpop.f32.mrf.mxu0
      %6007 = vmatprep.mubr.bf16.mxu0 0
      %6008 = vmatmul.mubr.bf16.gmra.mxu0 %v5937
      %v6009 = vpop.f32.mrf.mxu0
      %v6010 = vadd.f32 %v1548, %v6009
      %v6011 = vpop.f32.mrf.mxu0
      %v6012 = vpop.f32.mrf.mxu0
      %v6013 = vadd.f32 %v1548, %v6012
      %v6014 = vpop.f32.mrf.mxu0
      %6015 = vmatprep.mubr.bf16.mxu0 0
      %6016 = vmatmul.mubr.bf16.gmra.mxu0 %v5940
      %v6017 = vpop.f32.mrf.mxu0
      %v6018 = vadd.f32 %v1548, %v6017
      %v6019 = vpop.f32.mrf.mxu0
      %v6020 = vpop.f32.mrf.mxu0
      %v6021 = vadd.f32 %v1548, %v6020
      %v6022 = vpop.f32.mrf.mxu0
      %6023 = vmatprep.mubr.bf16.mxu0 0
      %6024 = vmatmul.mubr.bf16.gmra.mxu0 %v5943
      %v6025 = vpop.f32.mrf.mxu0
      %v6026 = vadd.f32 %v1548, %v6025
      %v6027 = vpop.f32.mrf.mxu0
      %v6028 = vpop.f32.mrf.mxu0
      %v6029 = vadd.f32 %v1548, %v6028
      %v6030 = vpop.f32.mrf.mxu0
      %6031 = vmatprep.mubr.bf16.mxu0 0
      %6032 = vmatmul.mubr.bf16.gmra.mxu0 %v5946
      %v6033 = vpop.f32.mrf.mxu0
      %v6034 = vadd.f32 %v1548, %v6033
      %v6035 = vpop.f32.mrf.mxu0
      %v6036 = vpop.f32.mrf.mxu0
      %v6037 = vadd.f32 %v1548, %v6036
      %v6038 = vpop.f32.mrf.mxu0
      %6039 = vmatprep.mubr.bf16.mxu0 0
      %6040 = vmatmul.mubr.bf16.gmra.mxu0 %v5949
      %v6041 = vpop.f32.mrf.mxu0
      %v6042 = vadd.f32 %v1548, %v6041
      %v6043 = vpop.f32.mrf.mxu0
      %v6044 = vpop.f32.mrf.mxu0
      %v6045 = vadd.f32 %v1548, %v6044
      %v6046 = vpop.f32.mrf.mxu0
      %6047 = vdwg.mxu0
      %v6048 = vmul.f32 %v5986, %v5986
      %v6049 = vmul.f32 %v5989, %v5989
      %v6050 = vmul.f32 %v5994, %v5994
      %v6051 = vmul.f32 %v5997, %v5997
      %v6052 = vmul.f32 %v6002, %v6002
      %v6053 = vmul.f32 %v6005, %v6005
      %v6054 = vmul.f32 %v6010, %v6010
      %v6055 = vmul.f32 %v6013, %v6013
      %v6056 = vmul.f32 %v6018, %v6018
      %v6057 = vmul.f32 %v6021, %v6021
      %v6058 = vmul.f32 %v6026, %v6026
      %v6059 = vmul.f32 %v6029, %v6029
      %v6060 = vmul.f32 %v6034, %v6034
      %v6061 = vmul.f32 %v6037, %v6037
      %v6062 = vmul.f32 %v6042, %v6042
      %v6063 = vmul.f32 %v6045, %v6045
      %v6064 = vmul.f32 %v5986, %v6048
      %v6065 = vmul.f32 %v5989, %v6049
      %v6066 = vmul.f32 %v5994, %v6050
      %v6067 = vmul.f32 %v5997, %v6051
      %v6068 = vmul.f32 %v6002, %v6052
      %v6069 = vmul.f32 %v6005, %v6053
      %v6070 = vmul.f32 %v6010, %v6054
      %v6071 = vmul.f32 %v6013, %v6055
      %v6072 = vmul.f32 %v6018, %v6056
      %v6073 = vmul.f32 %v6021, %v6057
      %v6074 = vmul.f32 %v6026, %v6058
      %v6075 = vmul.f32 %v6029, %v6059
      %v6076 = vmul.f32 %v6034, %v6060
      %v6077 = vmul.f32 %v6037, %v6061
      %v6078 = vmul.f32 %v6042, %v6062
      %v6079 = vmul.f32 %v6045, %v6063
      %v6080 = vmul.f32 %v6064, 0.044715
      %v6081 = vmul.f32 %v6065, 0.044715
      %v6082 = vmul.f32 %v6066, 0.044715
      %v6083 = vmul.f32 %v6067, 0.044715
      %v6084 = vmul.f32 %v6068, 0.044715
      %v6085 = vmul.f32 %v6069, 0.044715
      %v6086 = vmul.f32 %v6070, 0.044715
      %v6087 = vmul.f32 %v6071, 0.044715
      %v6088 = vmul.f32 %v6072, 0.044715
      %v6089 = vmul.f32 %v6073, 0.044715
      %v6090 = vmul.f32 %v6074, 0.044715
      %v6091 = vmul.f32 %v6075, 0.044715
      %v6092 = vmul.f32 %v6076, 0.044715
      %v6093 = vmul.f32 %v6077, 0.044715
      %v6094 = vmul.f32 %v6078, 0.044715
      %v6095 = vmul.f32 %v6079, 0.044715
      %v6096 = vadd.f32 %v5986, %v6080
      %v6097 = vadd.f32 %v5989, %v6081
      %v6098 = vadd.f32 %v5994, %v6082
      %v6099 = vadd.f32 %v5997, %v6083
      %v6100 = vadd.f32 %v6002, %v6084
      %v6101 = vadd.f32 %v6005, %v6085
      %v6102 = vadd.f32 %v6010, %v6086
      %v6103 = vadd.f32 %v6013, %v6087
      %v6104 = vadd.f32 %v6018, %v6088
      %v6105 = vadd.f32 %v6021, %v6089
      %v6106 = vadd.f32 %v6026, %v6090
      %v6107 = vadd.f32 %v6029, %v6091
      %v6108 = vadd.f32 %v6034, %v6092
      %v6109 = vadd.f32 %v6037, %v6093
      %v6110 = vadd.f32 %v6042, %v6094
      %v6111 = vadd.f32 %v6045, %v6095
      %v6112 = vmul.f32 %v6096, 0.7978846
      %v6113 = vmul.f32 %v6097, 0.7978846
      %v6114 = vmul.f32 %v6098, 0.7978846
      %v6115 = vmul.f32 %v6099, 0.7978846
      %v6116 = vmul.f32 %v6100, 0.7978846
      %v6117 = vmul.f32 %v6101, 0.7978846
      %v6118 = vmul.f32 %v6102, 0.7978846
      %v6119 = vmul.f32 %v6103, 0.7978846
      %v6120 = vmul.f32 %v6104, 0.7978846
      %v6121 = vmul.f32 %v6105, 0.7978846
      %v6122 = vmul.f32 %v6106, 0.7978846
      %v6123 = vmul.f32 %v6107, 0.7978846
      %v6124 = vmul.f32 %v6108, 0.7978846
      %v6125 = vmul.f32 %v6109, 0.7978846
      %v6126 = vmul.f32 %v6110, 0.7978846
      %v6127 = vmul.f32 %v6111, 0.7978846
      %v6128 = vtanh.pop %v6112
      %v6129 = vtanh.pop %v6113
      %v6130 = vtanh.pop %v6114
      %v6131 = vtanh.pop %v6115
      %v6132 = vtanh.pop %v6116
      %v6133 = vtanh.pop %v6117
      %v6134 = vtanh.pop %v6118
      %v6135 = vtanh.pop %v6119
      %v6136 = vtanh.pop %v6120
      %v6137 = vtanh.pop %v6121
      %v6138 = vtanh.pop %v6122
      %v6139 = vtanh.pop %v6123
      %v6140 = vtanh.pop %v6124
      %v6141 = vtanh.pop %v6125
      %v6142 = vtanh.pop %v6126
      %v6143 = vtanh.pop %v6127
      %v6144 = vadd.f32 %v6128, 1.0
      %v6145 = vadd.f32 %v6129, 1.0
      %v6146 = vadd.f32 %v6130, 1.0
      %v6147 = vadd.f32 %v6131, 1.0
      %v6148 = vadd.f32 %v6132, 1.0
      %v6149 = vadd.f32 %v6133, 1.0
      %v6150 = vadd.f32 %v6134, 1.0
      %v6151 = vadd.f32 %v6135, 1.0
      %v6152 = vadd.f32 %v6136, 1.0
      %v6153 = vadd.f32 %v6137, 1.0
      %v6154 = vadd.f32 %v6138, 1.0
      %v6155 = vadd.f32 %v6139, 1.0
      %v6156 = vadd.f32 %v6140, 1.0
      %v6157 = vadd.f32 %v6141, 1.0
      %v6158 = vadd.f32 %v6142, 1.0
      %v6159 = vadd.f32 %v6143, 1.0
      %v6160 = vmul.f32 %v6144, 0.5
      %v6161 = vmul.f32 %v6145, 0.5
      %v6162 = vmul.f32 %v6146, 0.5
      %v6163 = vmul.f32 %v6147, 0.5
      %v6164 = vmul.f32 %v6148, 0.5
      %v6165 = vmul.f32 %v6149, 0.5
      %v6166 = vmul.f32 %v6150, 0.5
      %v6167 = vmul.f32 %v6151, 0.5
      %v6168 = vmul.f32 %v6152, 0.5
      %v6169 = vmul.f32 %v6153, 0.5
      %v6170 = vmul.f32 %v6154, 0.5
      %v6171 = vmul.f32 %v6155, 0.5
      %v6172 = vmul.f32 %v6156, 0.5
      %v6173 = vmul.f32 %v6157, 0.5
      %v6174 = vmul.f32 %v6158, 0.5
      %v6175 = vmul.f32 %v6159, 0.5
      %v6176 = vmul.f32 %v5986, %v6160
      %v6177 = vmul.f32 %v5989, %v6161
      %v6178 = vmul.f32 %v5994, %v6162
      %v6179 = vmul.f32 %v5997, %v6163
      %v6180 = vmul.f32 %v6002, %v6164
      %v6181 = vmul.f32 %v6005, %v6165
      %v6182 = vmul.f32 %v6010, %v6166
      %v6183 = vmul.f32 %v6013, %v6167
      %v6184 = vmul.f32 %v6018, %v6168
      %v6185 = vmul.f32 %v6021, %v6169
      %v6186 = vmul.f32 %v6026, %v6170
      %v6187 = vmul.f32 %v6029, %v6171
      %v6188 = vmul.f32 %v6034, %v6172
      %v6189 = vmul.f32 %v6037, %v6173
      %v6190 = vmul.f32 %v6042, %v6174
      %v6191 = vmul.f32 %v6045, %v6175
      %v6192 = vpack.c.bf16 %v6177, %v6176
      %v6193 = vpack.c.bf16 %v6179, %v6178
      %v6194 = vpack.c.bf16 %v6181, %v6180
      %v6195 = vpack.c.bf16 %v6183, %v6182
      %v6196 = vpack.c.bf16 %v6185, %v6184
      %v6197 = vpack.c.bf16 %v6187, %v6186
      %v6198 = vpack.c.bf16 %v6189, %v6188
      %v6199 = vpack.c.bf16 %v6191, %v6190
      %v6200 = vld [vmem:[%s2 + $0x20] sm:$0xf]
      %v6201 = vld [vmem:[%s2 + $0x24] sm:$0xf]
      %v6202 = vld [vmem:[%s2 + $0x28] sm:$0xf]
      %v6203 = vld [vmem:[%s2 + $0x2c] sm:$0xf]
      %v6204 = vld [vmem:[%s2 + $0x30] sm:$0xf]
      %v6205 = vld [vmem:[%s2 + $0x34] sm:$0xf]
      %v6206 = vld [vmem:[%s2 + $0x38] sm:$0xf]
      %v6207 = vld [vmem:[%s2 + $0x3c] sm:$0xf]
      %v6208 = vld [vmem:[%s2 + $0x40] sm:$0xf]
      %v6209 = vld [vmem:[%s2 + $0x44] sm:$0xf]
      %v6210 = vld [vmem:[%s2 + $0x48] sm:$0xf]
      %v6211 = vld [vmem:[%s2 + $0x4c] sm:$0xf]
      %v6212 = vld [vmem:[%s2 + $0x50] sm:$0xf]
      %v6213 = vld [vmem:[%s2 + $0x54] sm:$0xf]
      %v6214 = vld [vmem:[%s2 + $0x58] sm:$0xf]
      %v6215 = vld [vmem:[%s2 + $0x5c] sm:$0xf]
      %v6232 = vunpack.c.l.b16 %v6200
      %v6233 = vunpack.c.l.b16 %v6201
      %v6234 = vunpack.c.l.b16 %v6202
      %v6235 = vunpack.c.l.b16 %v6203
      %v6236 = vunpack.c.l.b16 %v6204
      %v6237 = vunpack.c.l.b16 %v6205
      %v6238 = vunpack.c.l.b16 %v6206
      %v6239 = vunpack.c.l.b16 %v6207
      %v6240 = vunpack.c.l.b16 %v6208
      %v6241 = vunpack.c.l.b16 %v6209
      %v6242 = vunpack.c.l.b16 %v6210
      %v6243 = vunpack.c.l.b16 %v6211
      %v6244 = vunpack.c.l.b16 %v6212
      %v6245 = vunpack.c.l.b16 %v6213
      %v6246 = vunpack.c.l.b16 %v6214
      %v6247 = vunpack.c.l.b16 %v6215
      %v6248 = vpack.c.b16 %v6233, %v6232
      %v6249 = vpack.c.b16 %v6235, %v6234
      %v6250 = vpack.c.b16 %v6237, %v6236
      %v6251 = vpack.c.b16 %v6239, %v6238
      %v6252 = vpack.c.b16 %v6241, %v6240
      %v6253 = vpack.c.b16 %v6243, %v6242
      %v6254 = vpack.c.b16 %v6245, %v6244
      %v6255 = vpack.c.b16 %v6247, %v6246
      %6264 = vmatprep.subr.bf16.mxu0 0
      %6265 = vmatpush1.bf16.msra.mxu0 %v6255
      %6266 = vmatprep.subr.bf16.mxu0 0
      %6267 = vmatpush1.bf16.msra.mxu0 %v6254
      %6268 = vmatprep.subr.bf16.mxu0 0
      %6269 = vmatpush1.bf16.msra.mxu0 %v6253
      %6270 = vmatprep.subr.bf16.mxu0 0
      %6271 = vmatpush1.bf16.msra.mxu0 %v6252
      %6272 = vmatprep.subr.bf16.mxu0 0
      %6273 = vmatpush1.bf16.msra.mxu0 %v6251
      %6274 = vmatprep.subr.bf16.mxu0 0
      %6275 = vmatpush1.bf16.msra.mxu0 %v6250
      %6276 = vmatprep.subr.bf16.mxu0 0
      %6277 = vmatpush1.bf16.msra.mxu0 %v6249
      %6278 = vmatprep.subr.bf16.mxu0 0
      %6279 = vmatpush1.bf16.msra.mxu0 %v6248
      %6280 = vmatprep.subr.bf16.mxu0 0
      %6281 = vmatpush2.bf16.msra.mxu0 0
      %6282 = vmatprep.subr.bf16.mxu0 0
      %6283 = vmatpush2.bf16.msra.mxu0 0
      %6284 = vmatprep.subr.bf16.mxu0 0
      %6285 = vmatpush2.bf16.msra.mxu0 0
      %6286 = vmatprep.subr.bf16.mxu0 0
      %6287 = vmatpush2.bf16.msra.mxu0 0
      %6288 = vmatprep.subr.bf16.mxu0 0
      %6289 = vmatpush2.bf16.msra.mxu0 0
      %6290 = vmatprep.subr.bf16.mxu0 0
      %6291 = vmatpush2.bf16.msra.mxu0 0
      %6292 = vmatprep.subr.bf16.mxu0 0
      %6293 = vmatpush2.bf16.msra.mxu0 0
      %6294 = vmatprep.subr.bf16.mxu0 0
      %6295 = vmatpush2.bf16.msra.mxu0 0
      %6296 = vmatprep.mubr.bf16.mxu0 0
      %6297 = vmatmul.mubr.bf16.gmra.mxu0 %v6192
      %v6298 = vpop.f32.mrf.mxu0
      %v6299 = vadd.f32 %v1865, %v6298
      %v6300 = vpop.f32.mrf.mxu0
      %v6301 = vpop.f32.mrf.mxu0
      %v6302 = vadd.f32 %v1865, %v6301
      %v6303 = vpop.f32.mrf.mxu0
      %6304 = vmatprep.mubr.bf16.mxu0 0
      %6305 = vmatmul.mubr.bf16.gmra.mxu0 %v6193
      %v6306 = vpop.f32.mrf.mxu0
      %v6307 = vadd.f32 %v1865, %v6306
      %v6308 = vpop.f32.mrf.mxu0
      %v6309 = vpop.f32.mrf.mxu0
      %v6310 = vadd.f32 %v1865, %v6309
      %v6311 = vpop.f32.mrf.mxu0
      %6312 = vmatprep.mubr.bf16.mxu0 0
      %6313 = vmatmul.mubr.bf16.gmra.mxu0 %v6194
      %v6314 = vpop.f32.mrf.mxu0
      %v6315 = vadd.f32 %v1865, %v6314
      %v6316 = vpop.f32.mrf.mxu0
      %v6317 = vpop.f32.mrf.mxu0
      %v6318 = vadd.f32 %v1865, %v6317
      %v6319 = vpop.f32.mrf.mxu0
      %6320 = vmatprep.mubr.bf16.mxu0 0
      %6321 = vmatmul.mubr.bf16.gmra.mxu0 %v6195
      %v6322 = vpop.f32.mrf.mxu0
      %v6323 = vadd.f32 %v1865, %v6322
      %v6324 = vpop.f32.mrf.mxu0
      %v6325 = vpop.f32.mrf.mxu0
      %v6326 = vadd.f32 %v1865, %v6325
      %v6327 = vpop.f32.mrf.mxu0
      %6328 = vmatprep.mubr.bf16.mxu0 0
      %6329 = vmatmul.mubr.bf16.gmra.mxu0 %v6196
      %v6330 = vpop.f32.mrf.mxu0
      %v6331 = vadd.f32 %v1865, %v6330
      %v6332 = vpop.f32.mrf.mxu0
      %v6333 = vpop.f32.mrf.mxu0
      %v6334 = vadd.f32 %v1865, %v6333
      %v6335 = vpop.f32.mrf.mxu0
      %6336 = vmatprep.mubr.bf16.mxu0 0
      %6337 = vmatmul.mubr.bf16.gmra.mxu0 %v6197
      %v6338 = vpop.f32.mrf.mxu0
      %v6339 = vadd.f32 %v1865, %v6338
      %v6340 = vpop.f32.mrf.mxu0
      %v6341 = vpop.f32.mrf.mxu0
      %v6342 = vadd.f32 %v1865, %v6341
      %v6343 = vpop.f32.mrf.mxu0
      %6344 = vmatprep.mubr.bf16.mxu0 0
      %6345 = vmatmul.mubr.bf16.gmra.mxu0 %v6198
      %v6346 = vpop.f32.mrf.mxu0
      %v6347 = vadd.f32 %v1865, %v6346
      %v6348 = vpop.f32.mrf.mxu0
      %v6349 = vpop.f32.mrf.mxu0
      %v6350 = vadd.f32 %v1865, %v6349
      %v6351 = vpop.f32.mrf.mxu0
      %6352 = vmatprep.mubr.bf16.mxu0 0
      %6353 = vmatmul.mubr.bf16.gmra.mxu0 %v6199
      %v6354 = vpop.f32.mrf.mxu0
      %v6355 = vadd.f32 %v1865, %v6354
      %v6356 = vpop.f32.mrf.mxu0
      %v6357 = vpop.f32.mrf.mxu0
      %v6358 = vadd.f32 %v1865, %v6357
      %v6359 = vpop.f32.mrf.mxu0
      %6360 = vdwg.mxu0
      %vm6361 = vcmp.ge.f32.partialorder %v6299, 0.0
      %vm6362 = vcmp.ge.f32.partialorder %v6302, 0.0
      %vm6363 = vcmp.ge.f32.partialorder %v6307, 0.0
      %vm6364 = vcmp.ge.f32.partialorder %v6310, 0.0
      %vm6365 = vcmp.ge.f32.partialorder %v6315, 0.0
      %vm6366 = vcmp.ge.f32.partialorder %v6318, 0.0
      %vm6367 = vcmp.ge.f32.partialorder %v6323, 0.0
      %vm6368 = vcmp.ge.f32.partialorder %v6326, 0.0
      %vm6369 = vcmp.ge.f32.partialorder %v6331, 0.0
      %vm6370 = vcmp.ge.f32.partialorder %v6334, 0.0
      %vm6371 = vcmp.ge.f32.partialorder %v6339, 0.0
      %vm6372 = vcmp.ge.f32.partialorder %v6342, 0.0
      %vm6373 = vcmp.ge.f32.partialorder %v6347, 0.0
      %vm6374 = vcmp.ge.f32.partialorder %v6350, 0.0
      %vm6375 = vcmp.ge.f32.partialorder %v6355, 0.0
      %vm6376 = vcmp.ge.f32.partialorder %v6358, 0.0
      %v6377 = vmul.f32 %v6299, 0.1
      %v6378 = vmul.f32 %v6302, 0.1
      %v6379 = vmul.f32 %v6307, 0.1
      %v6380 = vmul.f32 %v6310, 0.1
      %v6381 = vmul.f32 %v6315, 0.1
      %v6382 = vmul.f32 %v6318, 0.1
      %v6383 = vmul.f32 %v6323, 0.1
      %v6384 = vmul.f32 %v6326, 0.1
      %v6385 = vmul.f32 %v6331, 0.1
      %v6386 = vmul.f32 %v6334, 0.1
      %v6387 = vmul.f32 %v6339, 0.1
      %v6388 = vmul.f32 %v6342, 0.1
      %v6389 = vmul.f32 %v6347, 0.1
      %v6390 = vmul.f32 %v6350, 0.1
      %v6391 = vmul.f32 %v6355, 0.1
      %v6392 = vmul.f32 %v6358, 0.1
      %v6393 = vsel %vm6361, %v6299, %v6377
      %v6394 = vsel %vm6362, %v6302, %v6378
      %v6395 = vsel %vm6363, %v6307, %v6379
      %v6396 = vsel %vm6364, %v6310, %v6380
      %v6397 = vsel %vm6365, %v6315, %v6381
      %v6398 = vsel %vm6366, %v6318, %v6382
      %v6399 = vsel %vm6367, %v6323, %v6383
      %v6400 = vsel %vm6368, %v6326, %v6384
      %v6401 = vsel %vm6369, %v6331, %v6385
      %v6402 = vsel %vm6370, %v6334, %v6386
      %v6403 = vsel %vm6371, %v6339, %v6387
      %v6404 = vsel %vm6372, %v6342, %v6388
      %v6405 = vsel %vm6373, %v6347, %v6389
      %v6406 = vsel %vm6374, %v6350, %v6390
      %v6407 = vsel %vm6375, %v6355, %v6391
      %v6408 = vsel %vm6376, %v6358, %v6392
      %v6409 = vadd.f32 %v5631, %v6393
      %v6410 = vadd.f32 %v5632, %v6394
      %v6411 = vadd.f32 %v5633, %v6395
      %v6412 = vadd.f32 %v5634, %v6396
      %v6413 = vadd.f32 %v5635, %v6397
      %v6414 = vadd.f32 %v5636, %v6398
      %v6415 = vadd.f32 %v5637, %v6399
      %v6416 = vadd.f32 %v5638, %v6400
      %v6417 = vadd.f32 %v5639, %v6401
      %v6418 = vadd.f32 %v5640, %v6402
      %v6419 = vadd.f32 %v5641, %v6403
      %v6420 = vadd.f32 %v5642, %v6404
      %v6421 = vadd.f32 %v5643, %v6405
      %v6422 = vadd.f32 %v5644, %v6406
      %v6423 = vadd.f32 %v5645, %v6407
      %v6424 = vadd.f32 %v5646, %v6408
      %v6425 = vsel %vm1279, %v6409, 0.0
      %6426 = vadd.xlane.f32.xlu0 %v6425
      %v6427 = vpop.xlane.xlu0 %6426
      %v6428 = vsel %vm1279, %v6410, 0.0
      %6429 = vadd.xlane.f32.xlu0 %v6428
      %v6430 = vpop.xlane.xlu0 %6429
      %v6431 = vsel %vm1279, %v6411, 0.0
      %6432 = vadd.xlane.f32.xlu0 %v6431
      %v6433 = vpop.xlane.xlu0 %6432
      %v6434 = vsel %vm1279, %v6412, 0.0
      %6435 = vadd.xlane.f32.xlu0 %v6434
      %v6436 = vpop.xlane.xlu0 %6435
      %v6437 = vsel %vm1279, %v6413, 0.0
      %6438 = vadd.xlane.f32.xlu0 %v6437
      %v6439 = vpop.xlane.xlu0 %6438
      %v6440 = vsel %vm1279, %v6414, 0.0
      %6441 = vadd.xlane.f32.xlu0 %v6440
      %v6442 = vpop.xlane.xlu0 %6441
      %v6443 = vsel %vm1279, %v6415, 0.0
      %6444 = vadd.xlane.f32.xlu0 %v6443
      %v6445 = vpop.xlane.xlu0 %6444
      %v6446 = vsel %vm1279, %v6416, 0.0
      %6447 = vadd.xlane.f32.xlu0 %v6446
      %v6448 = vpop.xlane.xlu0 %6447
      %v6449 = vsel %vm1279, %v6417, 0.0
      %6450 = vadd.xlane.f32.xlu0 %v6449
      %v6451 = vpop.xlane.xlu0 %6450
      %v6452 = vsel %vm1279, %v6418, 0.0
      %6453 = vadd.xlane.f32.xlu0 %v6452
      %v6454 = vpop.xlane.xlu0 %6453
      %v6455 = vsel %vm1279, %v6419, 0.0
      %6456 = vadd.xlane.f32.xlu0 %v6455
      %v6457 = vpop.xlane.xlu0 %6456
      %v6458 = vsel %vm1279, %v6420, 0.0
      %6459 = vadd.xlane.f32.xlu0 %v6458
      %v6460 = vpop.xlane.xlu0 %6459
      %v6461 = vsel %vm1279, %v6421, 0.0
      %6462 = vadd.xlane.f32.xlu0 %v6461
      %v6463 = vpop.xlane.xlu0 %6462
      %v6464 = vsel %vm1279, %v6422, 0.0
      %6465 = vadd.xlane.f32.xlu0 %v6464
      %v6466 = vpop.xlane.xlu0 %6465
      %v6467 = vsel %vm1279, %v6423, 0.0
      %6468 = vadd.xlane.f32.xlu0 %v6467
      %v6469 = vpop.xlane.xlu0 %6468
      %v6470 = vsel %vm1279, %v6424, 0.0
      %6471 = vadd.xlane.f32.xlu0 %v6470
      %v6472 = vpop.xlane.xlu0 %6471
      %v6473 = vmul.f32 %v6427, %v1328
      %v6474 = vmul.f32 %v6430, %v1328
      %v6475 = vmul.f32 %v6433, %v1328
      %v6476 = vmul.f32 %v6436, %v1328
      %v6477 = vmul.f32 %v6439, %v1328
      %v6478 = vmul.f32 %v6442, %v1328
      %v6479 = vmul.f32 %v6445, %v1328
      %v6480 = vmul.f32 %v6448, %v1328
      %v6481 = vmul.f32 %v6451, %v1328
      %v6482 = vmul.f32 %v6454, %v1328
      %v6483 = vmul.f32 %v6457, %v1328
      %v6484 = vmul.f32 %v6460, %v1328
      %v6485 = vmul.f32 %v6463, %v1328
      %v6486 = vmul.f32 %v6466, %v1328
      %v6487 = vmul.f32 %v6469, %v1328
      %v6488 = vmul.f32 %v6472, %v1328
      %v6489 = vsub.f32 %v6409, %v6473
      %v6490 = vsub.f32 %v6410, %v6474
      %v6491 = vsub.f32 %v6411, %v6475
      %v6492 = vsub.f32 %v6412, %v6476
      %v6493 = vsub.f32 %v6413, %v6477
      %v6494 = vsub.f32 %v6414, %v6478
      %v6495 = vsub.f32 %v6415, %v6479
      %v6496 = vsub.f32 %v6416, %v6480
      %v6497 = vsub.f32 %v6417, %v6481
      %v6498 = vsub.f32 %v6418, %v6482
      %v6499 = vsub.f32 %v6419, %v6483
      %v6500 = vsub.f32 %v6420, %v6484
      %v6501 = vsub.f32 %v6421, %v6485
      %v6502 = vsub.f32 %v6422, %v6486
      %v6503 = vsub.f32 %v6423, %v6487
      %v6504 = vsub.f32 %v6424, %v6488
      %v6505 = vmul.f32 %v6489, %v6489
      %v6506 = vmul.f32 %v6490, %v6490
      %v6507 = vmul.f32 %v6491, %v6491
      %v6508 = vmul.f32 %v6492, %v6492
      %v6509 = vmul.f32 %v6493, %v6493
      %v6510 = vmul.f32 %v6494, %v6494
      %v6511 = vmul.f32 %v6495, %v6495
      %v6512 = vmul.f32 %v6496, %v6496
      %v6513 = vmul.f32 %v6497, %v6497
      %v6514 = vmul.f32 %v6498, %v6498
      %v6515 = vmul.f32 %v6499, %v6499
      %v6516 = vmul.f32 %v6500, %v6500
      %v6517 = vmul.f32 %v6501, %v6501
      %v6518 = vmul.f32 %v6502, %v6502
      %v6519 = vmul.f32 %v6503, %v6503
      %v6520 = vmul.f32 %v6504, %v6504
      %v6521 = vsel %vm1279, %v6505, 0.0
      %6522 = vadd.xlane.f32.xlu0 %v6521
      %v6523 = vpop.xlane.xlu0 %6522
      %v6524 = vsel %vm1279, %v6506, 0.0
      %6525 = vadd.xlane.f32.xlu0 %v6524
      %v6526 = vpop.xlane.xlu0 %6525
      %v6527 = vsel %vm1279, %v6507, 0.0
      %6528 = vadd.xlane.f32.xlu0 %v6527
      %v6529 = vpop.xlane.xlu0 %6528
      %v6530 = vsel %vm1279, %v6508, 0.0
      %6531 = vadd.xlane.f32.xlu0 %v6530
      %v6532 = vpop.xlane.xlu0 %6531
      %v6533 = vsel %vm1279, %v6509, 0.0
      %6534 = vadd.xlane.f32.xlu0 %v6533
      %v6535 = vpop.xlane.xlu0 %6534
      %v6536 = vsel %vm1279, %v6510, 0.0
      %6537 = vadd.xlane.f32.xlu0 %v6536
      %v6538 = vpop.xlane.xlu0 %6537
      %v6539 = vsel %vm1279, %v6511, 0.0
      %6540 = vadd.xlane.f32.xlu0 %v6539
      %v6541 = vpop.xlane.xlu0 %6540
      %v6542 = vsel %vm1279, %v6512, 0.0
      %6543 = vadd.xlane.f32.xlu0 %v6542
      %v6544 = vpop.xlane.xlu0 %6543
      %v6545 = vsel %vm1279, %v6513, 0.0
      %6546 = vadd.xlane.f32.xlu0 %v6545
      %v6547 = vpop.xlane.xlu0 %6546
      %v6548 = vsel %vm1279, %v6514, 0.0
      %6549 = vadd.xlane.f32.xlu0 %v6548
      %v6550 = vpop.xlane.xlu0 %6549
      %v6551 = vsel %vm1279, %v6515, 0.0
      %6552 = vadd.xlane.f32.xlu0 %v6551
      %v6553 = vpop.xlane.xlu0 %6552
      %v6554 = vsel %vm1279, %v6516, 0.0
      %6555 = vadd.xlane.f32.xlu0 %v6554
      %v6556 = vpop.xlane.xlu0 %6555
      %v6557 = vsel %vm1279, %v6517, 0.0
      %6558 = vadd.xlane.f32.xlu0 %v6557
      %v6559 = vpop.xlane.xlu0 %6558
      %v6560 = vsel %vm1279, %v6518, 0.0
      %6561 = vadd.xlane.f32.xlu0 %v6560
      %v6562 = vpop.xlane.xlu0 %6561
      %v6563 = vsel %vm1279, %v6519, 0.0
      %6564 = vadd.xlane.f32.xlu0 %v6563
      %v6565 = vpop.xlane.xlu0 %6564
      %v6566 = vsel %vm1279, %v6520, 0.0
      %6567 = vadd.xlane.f32.xlu0 %v6566
      %v6568 = vpop.xlane.xlu0 %6567
      %v6569 = vmul.f32 %v6523, %v1328
      %v6570 = vmul.f32 %v6526, %v1328
      %v6571 = vmul.f32 %v6529, %v1328
      %v6572 = vmul.f32 %v6532, %v1328
      %v6573 = vmul.f32 %v6535, %v1328
      %v6574 = vmul.f32 %v6538, %v1328
      %v6575 = vmul.f32 %v6541, %v1328
      %v6576 = vmul.f32 %v6544, %v1328
      %v6577 = vmul.f32 %v6547, %v1328
      %v6578 = vmul.f32 %v6550, %v1328
      %v6579 = vmul.f32 %v6553, %v1328
      %v6580 = vmul.f32 %v6556, %v1328
      %v6581 = vmul.f32 %v6559, %v1328
      %v6582 = vmul.f32 %v6562, %v1328
      %v6583 = vmul.f32 %v6565, %v1328
      %v6584 = vmul.f32 %v6568, %v1328
      %v6585 = vadd.f32 %v6569, 1e-05
      %v6586 = vadd.f32 %v6570, 1e-05
      %v6587 = vadd.f32 %v6571, 1e-05
      %v6588 = vadd.f32 %v6572, 1e-05
      %v6589 = vadd.f32 %v6573, 1e-05
      %v6590 = vadd.f32 %v6574, 1e-05
      %v6591 = vadd.f32 %v6575, 1e-05
      %v6592 = vadd.f32 %v6576, 1e-05
      %v6593 = vadd.f32 %v6577, 1e-05
      %v6594 = vadd.f32 %v6578, 1e-05
      %v6595 = vadd.f32 %v6579, 1e-05
      %v6596 = vadd.f32 %v6580, 1e-05
      %v6597 = vadd.f32 %v6581, 1e-05
      %v6598 = vadd.f32 %v6582, 1e-05
      %v6599 = vadd.f32 %v6583, 1e-05
      %v6600 = vadd.f32 %v6584, 1e-05
      %v6601 = vrsqrt.pop %v6585
      %v6602 = vrsqrt.pop %v6586
      %v6603 = vrsqrt.pop %v6587
      %v6604 = vrsqrt.pop %v6588
      %v6605 = vrsqrt.pop %v6589
      %v6606 = vrsqrt.pop %v6590
      %v6607 = vrsqrt.pop %v6591
      %v6608 = vrsqrt.pop %v6592
      %v6609 = vrsqrt.pop %v6593
      %v6610 = vrsqrt.pop %v6594
      %v6611 = vrsqrt.pop %v6595
      %v6612 = vrsqrt.pop %v6596
      %v6613 = vrsqrt.pop %v6597
      %v6614 = vrsqrt.pop %v6598
      %v6615 = vrsqrt.pop %v6599
      %v6616 = vrsqrt.pop %v6600
      %v6617 = vmul.f32 %v6489, %v6601
      %v6618 = vmul.f32 %v6490, %v6602
      %v6619 = vmul.f32 %v6491, %v6603
      %v6620 = vmul.f32 %v6492, %v6604
      %v6621 = vmul.f32 %v6493, %v6605
      %v6622 = vmul.f32 %v6494, %v6606
      %v6623 = vmul.f32 %v6495, %v6607
      %v6624 = vmul.f32 %v6496, %v6608
      %v6625 = vmul.f32 %v6497, %v6609
      %v6626 = vmul.f32 %v6498, %v6610
      %v6627 = vmul.f32 %v6499, %v6611
      %v6628 = vmul.f32 %v6500, %v6612
      %v6629 = vmul.f32 %v6501, %v6613
      %v6630 = vmul.f32 %v6502, %v6614
      %v6631 = vmul.f32 %v6503, %v6615
      %v6632 = vmul.f32 %v6504, %v6616
      %v6633 = vmul.f32 %v6617, %v2286
      %v6634 = vmul.f32 %v6618, %v2286
      %v6635 = vmul.f32 %v6619, %v2286
      %v6636 = vmul.f32 %v6620, %v2286
      %v6637 = vmul.f32 %v6621, %v2286
      %v6638 = vmul.f32 %v6622, %v2286
      %v6639 = vmul.f32 %v6623, %v2286
      %v6640 = vmul.f32 %v6624, %v2286
      %v6641 = vmul.f32 %v6625, %v2286
      %v6642 = vmul.f32 %v6626, %v2286
      %v6643 = vmul.f32 %v6627, %v2286
      %v6644 = vmul.f32 %v6628, %v2286
      %v6645 = vmul.f32 %v6629, %v2286
      %v6646 = vmul.f32 %v6630, %v2286
      %v6647 = vmul.f32 %v6631, %v2286
      %v6648 = vmul.f32 %v6632, %v2286
      %v6649 = vadd.f32 %v6633, %v2306
      %v6650 = vadd.f32 %v6634, %v2306
      %v6651 = vadd.f32 %v6635, %v2306
      %v6652 = vadd.f32 %v6636, %v2306
      %v6653 = vadd.f32 %v6637, %v2306
      %v6654 = vadd.f32 %v6638, %v2306
      %v6655 = vadd.f32 %v6639, %v2306
      %v6656 = vadd.f32 %v6640, %v2306
      %v6657 = vadd.f32 %v6641, %v2306
      %v6658 = vadd.f32 %v6642, %v2306
      %v6659 = vadd.f32 %v6643, %v2306
      %v6660 = vadd.f32 %v6644, %v2306
      %v6661 = vadd.f32 %v6645, %v2306
      %v6662 = vadd.f32 %v6646, %v2306
      %v6663 = vadd.f32 %v6647, %v2306
      %v6664 = vadd.f32 %v6648, %v2306
      %v6665 = vpack.c.bf16 %v6650, %v6649
      %v6666 = vpack.c.bf16 %v6652, %v6651
      %v6667 = vpack.c.bf16 %v6654, %v6653
      %v6668 = vpack.c.bf16 %v6656, %v6655
      %v6669 = vpack.c.bf16 %v6658, %v6657
      %v6670 = vpack.c.bf16 %v6660, %v6659
      %v6671 = vpack.c.bf16 %v6662, %v6661
      %v6672 = vpack.c.bf16 %v6664, %v6663
      %v6673 = vld [vmem:[%s2 + $0x68] sm:$0xf]
      %v6674 = vld [vmem:[%s2 + $0x6c] sm:$0xf]
      %v6675 = vld [vmem:[%s2 + $0x70] sm:$0xf]
      %v6676 = vld [vmem:[%s2 + $0x74] sm:$0xf]
      %v6677 = vld [vmem:[%s2 + $0x78] sm:$0xf]
      %v6678 = vld [vmem:[%s2 + $0x7c] sm:$0xf]
      %v6679 = vld [vmem:[%s2 + $0x80] sm:$0xf]
      %v6680 = vld [vmem:[%s2 + $0x84] sm:$0xf]
      %v6689 = vunpack.c.l.b16 %v6673
      %v6690 = vunpack.c.l.b16 %v6674
      %v6691 = vunpack.c.l.b16 %v6675
      %v6692 = vunpack.c.l.b16 %v6676
      %v6693 = vunpack.c.l.b16 %v6677
      %v6694 = vunpack.c.l.b16 %v6678
      %v6695 = vunpack.c.l.b16 %v6679
      %v6696 = vunpack.c.l.b16 %v6680
      %v6697 = vpack.c.b16 %v6690, %v6689
      %v6698 = vpack.c.b16 %v6692, %v6691
      %v6699 = vpack.c.b16 %v6694, %v6693
      %v6700 = vpack.c.b16 %v6696, %v6695
      %v6706 = vsel %vm1279, %v6665, 0
      %v6709 = vsel %vm1279, %v6666, 0
      %v6712 = vsel %vm1279, %v6667, 0
      %v6715 = vsel %vm1279, %v6668, 0
      %v6718 = vsel %vm1279, %v6669, 0
      %v6721 = vsel %vm1279, %v6670, 0
      %v6724 = vsel %vm1279, %v6671, 0
      %v6727 = vsel %vm1279, %v6672, 0
      %6729 = vmatprep.subr.bf16.mxu0 0
      %6730 = vmatpush1.bf16.msra.mxu0 0
      %6731 = vmatprep.subr.bf16.mxu0 0
      %6732 = vmatpush1.bf16.msra.mxu0 0
      %6733 = vmatprep.subr.bf16.mxu0 0
      %6734 = vmatpush1.bf16.msra.mxu0 0
      %6735 = vmatprep.subr.bf16.mxu0 0
      %6736 = vmatpush1.bf16.msra.mxu0 0
      %6737 = vmatprep.subr.bf16.mxu0 0
      %6738 = vmatpush1.bf16.msra.mxu0 %v6700
      %6739 = vmatprep.subr.bf16.mxu0 0
      %6740 = vmatpush1.bf16.msra.mxu0 %v6699
      %6741 = vmatprep.subr.bf16.mxu0 0
      %6742 = vmatpush1.bf16.msra.mxu0 %v6698
      %6743 = vmatprep.subr.bf16.mxu0 0
      %6744 = vmatpush1.bf16.msra.mxu0 %v6697
      %6745 = vmatprep.subr.bf16.mxu0 0
      %6746 = vmatpush2.bf16.msra.mxu0 0
      %6747 = vmatprep.subr.bf16.mxu0 0
      %6748 = vmatpush2.bf16.msra.mxu0 0
      %6749 = vmatprep.subr.bf16.mxu0 0
      %6750 = vmatpush2.bf16.msra.mxu0 0
      %6751 = vmatprep.subr.bf16.mxu0 0
      %6752 = vmatpush2.bf16.msra.mxu0 0
      %6753 = vmatprep.subr.bf16.mxu0 0
      %6754 = vmatpush2.bf16.msra.mxu0 0
      %6755 = vmatprep.subr.bf16.mxu0 0
      %6756 = vmatpush2.bf16.msra.mxu0 0
      %6757 = vmatprep.subr.bf16.mxu0 0
      %6758 = vmatpush2.bf16.msra.mxu0 0
      %6759 = vmatprep.subr.bf16.mxu0 0
      %6760 = vmatpush2.bf16.msra.mxu0 0
      %6761 = vmatprep.mubr.bf16.mxu0 0
      %6762 = vmatmul.mubr.bf16.gmra.mxu0 %v6706
      %v6763 = vpop.f32.mrf.mxu0
      %v6764 = vadd.f32 %v2342, %v6763
      %v6765 = vpop.f32.mrf.mxu0
      %v6766 = vpop.f32.mrf.mxu0
      %v6767 = vadd.f32 %v2342, %v6766
      %v6768 = vpop.f32.mrf.mxu0
      %6769 = vmatprep.mubr.bf16.mxu0 0
      %6770 = vmatmul.mubr.bf16.gmra.mxu0 %v6709
      %v6771 = vpop.f32.mrf.mxu0
      %v6772 = vadd.f32 %v2342, %v6771
      %v6773 = vpop.f32.mrf.mxu0
      %v6774 = vpop.f32.mrf.mxu0
      %v6775 = vadd.f32 %v2342, %v6774
      %v6776 = vpop.f32.mrf.mxu0
      %6777 = vmatprep.mubr.bf16.mxu0 0
      %6778 = vmatmul.mubr.bf16.gmra.mxu0 %v6712
      %v6779 = vpop.f32.mrf.mxu0
      %v6780 = vadd.f32 %v2342, %v6779
      %v6781 = vpop.f32.mrf.mxu0
      %v6782 = vpop.f32.mrf.mxu0
      %v6783 = vadd.f32 %v2342, %v6782
      %v6784 = vpop.f32.mrf.mxu0
      %6785 = vmatprep.mubr.bf16.mxu0 0
      %6786 = vmatmul.mubr.bf16.gmra.mxu0 %v6715
      %v6787 = vpop.f32.mrf.mxu0
      %v6788 = vadd.f32 %v2342, %v6787
      %v6789 = vpop.f32.mrf.mxu0
      %v6790 = vpop.f32.mrf.mxu0
      %v6791 = vadd.f32 %v2342, %v6790
      %v6792 = vpop.f32.mrf.mxu0
      %6793 = vmatprep.mubr.bf16.mxu0 0
      %6794 = vmatmul.mubr.bf16.gmra.mxu0 %v6718
      %v6795 = vpop.f32.mrf.mxu0
      %v6796 = vadd.f32 %v2342, %v6795
      %v6797 = vpop.f32.mrf.mxu0
      %v6798 = vpop.f32.mrf.mxu0
      %v6799 = vadd.f32 %v2342, %v6798
      %v6800 = vpop.f32.mrf.mxu0
      %6801 = vmatprep.mubr.bf16.mxu0 0
      %6802 = vmatmul.mubr.bf16.gmra.mxu0 %v6721
      %v6803 = vpop.f32.mrf.mxu0
      %v6804 = vadd.f32 %v2342, %v6803
      %v6805 = vpop.f32.mrf.mxu0
      %v6806 = vpop.f32.mrf.mxu0
      %v6807 = vadd.f32 %v2342, %v6806
      %v6808 = vpop.f32.mrf.mxu0
      %6809 = vmatprep.mubr.bf16.mxu0 0
      %6810 = vmatmul.mubr.bf16.gmra.mxu0 %v6724
      %v6811 = vpop.f32.mrf.mxu0
      %v6812 = vadd.f32 %v2342, %v6811
      %v6813 = vpop.f32.mrf.mxu0
      %v6814 = vpop.f32.mrf.mxu0
      %v6815 = vadd.f32 %v2342, %v6814
      %v6816 = vpop.f32.mrf.mxu0
      %6817 = vmatprep.mubr.bf16.mxu0 0
      %6818 = vmatmul.mubr.bf16.gmra.mxu0 %v6727
      %v6819 = vpop.f32.mrf.mxu0
      %v6820 = vadd.f32 %v2342, %v6819
      %v6821 = vpop.f32.mrf.mxu0
      %v6822 = vpop.f32.mrf.mxu0
      %v6823 = vadd.f32 %v2342, %v6822
      %v6824 = vpop.f32.mrf.mxu0
      %6825 = vdwg.mxu0
      %v6826 = vmul.f32 %v6764, %v6764
      %v6827 = vmul.f32 %v6767, %v6767
      %v6828 = vmul.f32 %v6772, %v6772
      %v6829 = vmul.f32 %v6775, %v6775
      %v6830 = vmul.f32 %v6780, %v6780
      %v6831 = vmul.f32 %v6783, %v6783
      %v6832 = vmul.f32 %v6788, %v6788
      %v6833 = vmul.f32 %v6791, %v6791
      %v6834 = vmul.f32 %v6796, %v6796
      %v6835 = vmul.f32 %v6799, %v6799
      %v6836 = vmul.f32 %v6804, %v6804
      %v6837 = vmul.f32 %v6807, %v6807
      %v6838 = vmul.f32 %v6812, %v6812
      %v6839 = vmul.f32 %v6815, %v6815
      %v6840 = vmul.f32 %v6820, %v6820
      %v6841 = vmul.f32 %v6823, %v6823
      %v6842 = vsel %vm352, %v6826, 0.0
      %6843 = vadd.xlane.f32.xlu0 %v6842
      %v6844 = vpop.xlane.xlu0 %6843
      %v6845 = vsel %vm352, %v6827, 0.0
      %6846 = vadd.xlane.f32.xlu0 %v6845
      %v6847 = vpop.xlane.xlu0 %6846
      %v6848 = vsel %vm352, %v6828, 0.0
      %6849 = vadd.xlane.f32.xlu0 %v6848
      %v6850 = vpop.xlane.xlu0 %6849
      %v6851 = vsel %vm352, %v6829, 0.0
      %6852 = vadd.xlane.f32.xlu0 %v6851
      %v6853 = vpop.xlane.xlu0 %6852
      %v6854 = vsel %vm352, %v6830, 0.0
      %6855 = vadd.xlane.f32.xlu0 %v6854
      %v6856 = vpop.xlane.xlu0 %6855
      %v6857 = vsel %vm352, %v6831, 0.0
      %6858 = vadd.xlane.f32.xlu0 %v6857
      %v6859 = vpop.xlane.xlu0 %6858
      %v6860 = vsel %vm352, %v6832, 0.0
      %6861 = vadd.xlane.f32.xlu0 %v6860
      %v6862 = vpop.xlane.xlu0 %6861
      %v6863 = vsel %vm352, %v6833, 0.0
      %6864 = vadd.xlane.f32.xlu0 %v6863
      %v6865 = vpop.xlane.xlu0 %6864
      %v6866 = vsel %vm352, %v6834, 0.0
      %6867 = vadd.xlane.f32.xlu0 %v6866
      %v6868 = vpop.xlane.xlu0 %6867
      %v6869 = vsel %vm352, %v6835, 0.0
      %6870 = vadd.xlane.f32.xlu0 %v6869
      %v6871 = vpop.xlane.xlu0 %6870
      %v6872 = vsel %vm352, %v6836, 0.0
      %6873 = vadd.xlane.f32.xlu0 %v6872
      %v6874 = vpop.xlane.xlu0 %6873
      %v6875 = vsel %vm352, %v6837, 0.0
      %6876 = vadd.xlane.f32.xlu0 %v6875
      %v6877 = vpop.xlane.xlu0 %6876
      %v6878 = vsel %vm352, %v6838, 0.0
      %6879 = vadd.xlane.f32.xlu0 %v6878
      %v6880 = vpop.xlane.xlu0 %6879
      %v6881 = vsel %vm352, %v6839, 0.0
      %6882 = vadd.xlane.f32.xlu0 %v6881
      %v6883 = vpop.xlane.xlu0 %6882
      %v6884 = vsel %vm352, %v6840, 0.0
      %6885 = vadd.xlane.f32.xlu0 %v6884
      %v6886 = vpop.xlane.xlu0 %6885
      %v6887 = vsel %vm352, %v6841, 0.0
      %6888 = vadd.xlane.f32.xlu0 %v6887
      %v6889 = vpop.xlane.xlu0 %6888
      %v6890 = vrsqrt.pop %v6844
      %v6891 = vmul.f32 %v6844, %v6890
      %vm6892 = vcmp.eq.f32.partialorder %v6844, inf
      %v6893 = vsel %vm6892, %v6844, %v6891
      %vm6894 = vcmp.eq.f32.partialorder %v6844, 0.0
      %v6895 = vand.u32 %v6844, 2147483648
      %v6896 = vsel %vm6894, %v6895, %v6893
      %v6897 = vrsqrt.pop %v6847
      %v6898 = vmul.f32 %v6847, %v6897
      %vm6899 = vcmp.eq.f32.partialorder %v6847, inf
      %v6900 = vsel %vm6899, %v6847, %v6898
      %vm6901 = vcmp.eq.f32.partialorder %v6847, 0.0
      %v6902 = vand.u32 %v6847, 2147483648
      %v6903 = vsel %vm6901, %v6902, %v6900
      %v6904 = vrsqrt.pop %v6850
      %v6905 = vmul.f32 %v6850, %v6904
      %vm6906 = vcmp.eq.f32.partialorder %v6850, inf
      %v6907 = vsel %vm6906, %v6850, %v6905
      %vm6908 = vcmp.eq.f32.partialorder %v6850, 0.0
      %v6909 = vand.u32 %v6850, 2147483648
      %v6910 = vsel %vm6908, %v6909, %v6907
      %v6911 = vrsqrt.pop %v6853
      %v6912 = vmul.f32 %v6853, %v6911
      %vm6913 = vcmp.eq.f32.partialorder %v6853, inf
      %v6914 = vsel %vm6913, %v6853, %v6912
      %vm6915 = vcmp.eq.f32.partialorder %v6853, 0.0
      %v6916 = vand.u32 %v6853, 2147483648
      %v6917 = vsel %vm6915, %v6916, %v6914
      %v6918 = vrsqrt.pop %v6856
      %v6919 = vmul.f32 %v6856, %v6918
      %vm6920 = vcmp.eq.f32.partialorder %v6856, inf
      %v6921 = vsel %vm6920, %v6856, %v6919
      %vm6922 = vcmp.eq.f32.partialorder %v6856, 0.0
      %v6923 = vand.u32 %v6856, 2147483648
      %v6924 = vsel %vm6922, %v6923, %v6921
      %v6925 = vrsqrt.pop %v6859
      %v6926 = vmul.f32 %v6859, %v6925
      %vm6927 = vcmp.eq.f32.partialorder %v6859, inf
      %v6928 = vsel %vm6927, %v6859, %v6926
      %vm6929 = vcmp.eq.f32.partialorder %v6859, 0.0
      %v6930 = vand.u32 %v6859, 2147483648
      %v6931 = vsel %vm6929, %v6930, %v6928
      %v6932 = vrsqrt.pop %v6862
      %v6933 = vmul.f32 %v6862, %v6932
      %vm6934 = vcmp.eq.f32.partialorder %v6862, inf
      %v6935 = vsel %vm6934, %v6862, %v6933
      %vm6936 = vcmp.eq.f32.partialorder %v6862, 0.0
      %v6937 = vand.u32 %v6862, 2147483648
      %v6938 = vsel %vm6936, %v6937, %v6935
      %v6939 = vrsqrt.pop %v6865
      %v6940 = vmul.f32 %v6865, %v6939
      %vm6941 = vcmp.eq.f32.partialorder %v6865, inf
      %v6942 = vsel %vm6941, %v6865, %v6940
      %vm6943 = vcmp.eq.f32.partialorder %v6865, 0.0
      %v6944 = vand.u32 %v6865, 2147483648
      %v6945 = vsel %vm6943, %v6944, %v6942
      %v6946 = vrsqrt.pop %v6868
      %v6947 = vmul.f32 %v6868, %v6946
      %vm6948 = vcmp.eq.f32.partialorder %v6868, inf
      %v6949 = vsel %vm6948, %v6868, %v6947
      %vm6950 = vcmp.eq.f32.partialorder %v6868, 0.0
      %v6951 = vand.u32 %v6868, 2147483648
      %v6952 = vsel %vm6950, %v6951, %v6949
      %v6953 = vrsqrt.pop %v6871
      %v6954 = vmul.f32 %v6871, %v6953
      %vm6955 = vcmp.eq.f32.partialorder %v6871, inf
      %v6956 = vsel %vm6955, %v6871, %v6954
      %vm6957 = vcmp.eq.f32.partialorder %v6871, 0.0
      %v6958 = vand.u32 %v6871, 2147483648
      %v6959 = vsel %vm6957, %v6958, %v6956
      %v6960 = vrsqrt.pop %v6874
      %v6961 = vmul.f32 %v6874, %v6960
      %vm6962 = vcmp.eq.f32.partialorder %v6874, inf
      %v6963 = vsel %vm6962, %v6874, %v6961
      %vm6964 = vcmp.eq.f32.partialorder %v6874, 0.0
      %v6965 = vand.u32 %v6874, 2147483648
      %v6966 = vsel %vm6964, %v6965, %v6963
      %v6967 = vrsqrt.pop %v6877
      %v6968 = vmul.f32 %v6877, %v6967
      %vm6969 = vcmp.eq.f32.partialorder %v6877, inf
      %v6970 = vsel %vm6969, %v6877, %v6968
      %vm6971 = vcmp.eq.f32.partialorder %v6877, 0.0
      %v6972 = vand.u32 %v6877, 2147483648
      %v6973 = vsel %vm6971, %v6972, %v6970
      %v6974 = vrsqrt.pop %v6880
      %v6975 = vmul.f32 %v6880, %v6974
      %vm6976 = vcmp.eq.f32.partialorder %v6880, inf
      %v6977 = vsel %vm6976, %v6880, %v6975
      %vm6978 = vcmp.eq.f32.partialorder %v6880, 0.0
      %v6979 = vand.u32 %v6880, 2147483648
      %v6980 = vsel %vm6978, %v6979, %v6977
      %v6981 = vrsqrt.pop %v6883
      %v6982 = vmul.f32 %v6883, %v6981
      %vm6983 = vcmp.eq.f32.partialorder %v6883, inf
      %v6984 = vsel %vm6983, %v6883, %v6982
      %vm6985 = vcmp.eq.f32.partialorder %v6883, 0.0
      %v6986 = vand.u32 %v6883, 2147483648
      %v6987 = vsel %vm6985, %v6986, %v6984
      %v6988 = vrsqrt.pop %v6886
      %v6989 = vmul.f32 %v6886, %v6988
      %vm6990 = vcmp.eq.f32.partialorder %v6886, inf
      %v6991 = vsel %vm6990, %v6886, %v6989
      %vm6992 = vcmp.eq.f32.partialorder %v6886, 0.0
      %v6993 = vand.u32 %v6886, 2147483648
      %v6994 = vsel %vm6992, %v6993, %v6991
      %v6995 = vrsqrt.pop %v6889
      %v6996 = vmul.f32 %v6889, %v6995
      %vm6997 = vcmp.eq.f32.partialorder %v6889, inf
      %v6998 = vsel %vm6997, %v6889, %v6996
      %vm6999 = vcmp.eq.f32.partialorder %v6889, 0.0
      %v7000 = vand.u32 %v6889, 2147483648
      %v7001 = vsel %vm6999, %v7000, %v6998
      %v7002 = vmax.f32 %v6896, 1e-12
      %v7003 = vmax.f32 %v6903, 1e-12
      %v7004 = vmax.f32 %v6910, 1e-12
      %v7005 = vmax.f32 %v6917, 1e-12
      %v7006 = vmax.f32 %v6924, 1e-12
      %v7007 = vmax.f32 %v6931, 1e-12
      %v7008 = vmax.f32 %v6938, 1e-12
      %v7009 = vmax.f32 %v6945, 1e-12
      %v7010 = vmax.f32 %v6952, 1e-12
      %v7011 = vmax.f32 %v6959, 1e-12
      %v7012 = vmax.f32 %v6966, 1e-12
      %v7013 = vmax.f32 %v6973, 1e-12
      %v7014 = vmax.f32 %v6980, 1e-12
      %v7015 = vmax.f32 %v6987, 1e-12
      %v7016 = vmax.f32 %v6994, 1e-12
      %v7017 = vmax.f32 %v7001, 1e-12
      %v7018 = vrcp.pop %v7002
      %v7019 = vmul.f32 %v6764, %v7018
      %v7020 = vrcp.pop %v7003
      %v7021 = vmul.f32 %v6767, %v7020
      %v7022 = vrcp.pop %v7004
      %v7023 = vmul.f32 %v6772, %v7022
      %v7024 = vrcp.pop %v7005
      %v7025 = vmul.f32 %v6775, %v7024
      %v7026 = vrcp.pop %v7006
      %v7027 = vmul.f32 %v6780, %v7026
      %v7028 = vrcp.pop %v7007
      %v7029 = vmul.f32 %v6783, %v7028
      %v7030 = vrcp.pop %v7008
      %v7031 = vmul.f32 %v6788, %v7030
      %v7032 = vrcp.pop %v7009
      %v7033 = vmul.f32 %v6791, %v7032
      %v7034 = vrcp.pop %v7010
      %v7035 = vmul.f32 %v6796, %v7034
      %v7036 = vrcp.pop %v7011
      %v7037 = vmul.f32 %v6799, %v7036
      %v7038 = vrcp.pop %v7012
      %v7039 = vmul.f32 %v6804, %v7038
      %v7040 = vrcp.pop %v7013
      %v7041 = vmul.f32 %v6807, %v7040
      %v7042 = vrcp.pop %v7014
      %v7043 = vmul.f32 %v6812, %v7042
      %v7044 = vrcp.pop %v7015
      %v7045 = vmul.f32 %v6815, %v7044
      %v7046 = vrcp.pop %v7016
      %v7047 = vmul.f32 %v6820, %v7046
      %v7048 = vrcp.pop %v7017
      %v7049 = vmul.f32 %v6823, %v7048
      %v7050 = vmul.f32 %v4953, %v2715
      %v7051 = vmul.f32 %v4958, %v2715
      %v7052 = vmul.f32 %v4963, %v2715
      %v7053 = vmul.f32 %v4968, %v2715
      %v7054 = vmul.f32 %v4973, %v2715
      %v7055 = vmul.f32 %v4978, %v2715
      %v7056 = vmul.f32 %v4983, %v2715
      %v7057 = vmul.f32 %v4988, %v2715
      %v7058 = vmul.f32 %v4993, %v2715
      %v7059 = vmul.f32 %v4998, %v2715
      %v7060 = vmul.f32 %v5003, %v2715
      %v7061 = vmul.f32 %v5008, %v2715
      %v7062 = vmul.f32 %v5013, %v2715
      %v7063 = vmul.f32 %v5018, %v2715
      %v7064 = vmul.f32 %v5023, %v2715
      %v7065 = vmul.f32 %v5028, %v2715
      %v7066 = vadd.f32 %v2735, %v7050
      %v7067 = vadd.f32 %v2735, %v7051
      %v7068 = vadd.f32 %v2735, %v7052
      %v7069 = vadd.f32 %v2735, %v7053
      %v7070 = vadd.f32 %v2735, %v7054
      %v7071 = vadd.f32 %v2735, %v7055
      %v7072 = vadd.f32 %v2735, %v7056
      %v7073 = vadd.f32 %v2735, %v7057
      %v7074 = vadd.f32 %v2735, %v7058
      %v7075 = vadd.f32 %v2735, %v7059
      %v7076 = vadd.f32 %v2735, %v7060
      %v7077 = vadd.f32 %v2735, %v7061
      %v7078 = vadd.f32 %v2735, %v7062
      %v7079 = vadd.f32 %v2735, %v7063
      %v7080 = vadd.f32 %v2735, %v7064
      %v7081 = vadd.f32 %v2735, %v7065
      %v7082 = vmul.f32 %v5064, %v2755
      %v7083 = vmul.f32 %v5068, %v2755
      %v7084 = vmul.f32 %v5072, %v2755
      %v7085 = vmul.f32 %v5076, %v2755
      %v7086 = vmul.f32 %v5080, %v2755
      %v7087 = vmul.f32 %v5084, %v2755
      %v7088 = vmul.f32 %v5088, %v2755
      %v7089 = vmul.f32 %v5092, %v2755
      %v7090 = vmul.f32 %v5096, %v2755
      %v7091 = vmul.f32 %v5100, %v2755
      %v7092 = vmul.f32 %v5104, %v2755
      %v7093 = vmul.f32 %v5108, %v2755
      %v7094 = vmul.f32 %v5112, %v2755
      %v7095 = vmul.f32 %v5116, %v2755
      %v7096 = vmul.f32 %v5120, %v2755
      %v7097 = vmul.f32 %v5124, %v2755
      %v7098 = vadd.f32 %v7066, %v7082
      %v7099 = vadd.f32 %v7067, %v7083
      %v7100 = vadd.f32 %v7068, %v7084
      %v7101 = vadd.f32 %v7069, %v7085
      %v7102 = vadd.f32 %v7070, %v7086
      %v7103 = vadd.f32 %v7071, %v7087
      %v7104 = vadd.f32 %v7072, %v7088
      %v7105 = vadd.f32 %v7073, %v7089
      %v7106 = vadd.f32 %v7074, %v7090
      %v7107 = vadd.f32 %v7075, %v7091
      %v7108 = vadd.f32 %v7076, %v7092
      %v7109 = vadd.f32 %v7077, %v7093
      %v7110 = vadd.f32 %v7078, %v7094
      %v7111 = vadd.f32 %v7079, %v7095
      %v7112 = vadd.f32 %v7080, %v7096
      %v7113 = vadd.f32 %v7081, %v7097
      %v7114 = vmul.f32 %v5160, %v2791
      %v7115 = vmul.f32 %v5164, %v2791
      %v7116 = vmul.f32 %v5168, %v2791
      %v7117 = vmul.f32 %v5172, %v2791
      %v7118 = vmul.f32 %v5176, %v2791
      %v7119 = vmul.f32 %v5180, %v2791
      %v7120 = vmul.f32 %v5184, %v2791
      %v7121 = vmul.f32 %v5188, %v2791
      %v7122 = vmul.f32 %v5192, %v2791
      %v7123 = vmul.f32 %v5196, %v2791
      %v7124 = vmul.f32 %v5200, %v2791
      %v7125 = vmul.f32 %v5204, %v2791
      %v7126 = vmul.f32 %v5208, %v2791
      %v7127 = vmul.f32 %v5212, %v2791
      %v7128 = vmul.f32 %v5216, %v2791
      %v7129 = vmul.f32 %v5220, %v2791
      %v7130 = vadd.f32 %v7098, %v7114
      %v7131 = vadd.f32 %v7099, %v7115
      %v7132 = vadd.f32 %v7100, %v7116
      %v7133 = vadd.f32 %v7101, %v7117
      %v7134 = vadd.f32 %v7102, %v7118
      %v7135 = vadd.f32 %v7103, %v7119
      %v7136 = vadd.f32 %v7104, %v7120
      %v7137 = vadd.f32 %v7105, %v7121
      %v7138 = vadd.f32 %v7106, %v7122
      %v7139 = vadd.f32 %v7107, %v7123
      %v7140 = vadd.f32 %v7108, %v7124
      %v7141 = vadd.f32 %v7109, %v7125
      %v7142 = vadd.f32 %v7110, %v7126
      %v7143 = vadd.f32 %v7111, %v7127
      %v7144 = vadd.f32 %v7112, %v7128
      %v7145 = vadd.f32 %v7113, %v7129
      %7147 = vset.pattern.permute.xlu0 3
      %7148 = vperm.xlu0 %7147, %v7019
      %v7149 = vpop.permute.xlu0 %7148
      %7152 = vset.pattern.permute.xlu0 3
      %7153 = vperm.xlu0 %7152, %v7021
      %v7154 = vpop.permute.xlu0 %7153
      %7157 = vset.pattern.permute.xlu0 3
      %7158 = vperm.xlu0 %7157, %v7023
      %v7159 = vpop.permute.xlu0 %7158
      %7162 = vset.pattern.permute.xlu0 3
      %7163 = vperm.xlu0 %7162, %v7025
      %v7164 = vpop.permute.xlu0 %7163
      %7167 = vset.pattern.permute.xlu0 3
      %7168 = vperm.xlu0 %7167, %v7027
      %v7169 = vpop.permute.xlu0 %7168
      %7172 = vset.pattern.permute.xlu0 3
      %7173 = vperm.xlu0 %7172, %v7029
      %v7174 = vpop.permute.xlu0 %7173
      %7177 = vset.pattern.permute.xlu0 3
      %7178 = vperm.xlu0 %7177, %v7031
      %v7179 = vpop.permute.xlu0 %7178
      %7182 = vset.pattern.permute.xlu0 3
      %7183 = vperm.xlu0 %7182, %v7033
      %v7184 = vpop.permute.xlu0 %7183
      %7187 = vset.pattern.permute.xlu0 3
      %7188 = vperm.xlu0 %7187, %v7035
      %v7189 = vpop.permute.xlu0 %7188
      %7192 = vset.pattern.permute.xlu0 3
      %7193 = vperm.xlu0 %7192, %v7037
      %v7194 = vpop.permute.xlu0 %7193
      %7197 = vset.pattern.permute.xlu0 3
      %7198 = vperm.xlu0 %7197, %v7039
      %v7199 = vpop.permute.xlu0 %7198
      %7202 = vset.pattern.permute.xlu0 3
      %7203 = vperm.xlu0 %7202, %v7041
      %v7204 = vpop.permute.xlu0 %7203
      %7207 = vset.pattern.permute.xlu0 3
      %7208 = vperm.xlu0 %7207, %v7043
      %v7209 = vpop.permute.xlu0 %7208
      %7212 = vset.pattern.permute.xlu0 3
      %7213 = vperm.xlu0 %7212, %v7045
      %v7214 = vpop.permute.xlu0 %7213
      %7217 = vset.pattern.permute.xlu0 3
      %7218 = vperm.xlu0 %7217, %v7047
      %v7219 = vpop.permute.xlu0 %7218
      %7222 = vset.pattern.permute.xlu0 3
      %7223 = vperm.xlu0 %7222, %v7049
      %v7224 = vpop.permute.xlu0 %7223
      %v7226 = vmul.f32 %v7149, %v2907
      %v7227 = vmul.f32 %v7154, %v2907
      %v7228 = vmul.f32 %v7159, %v2907
      %v7229 = vmul.f32 %v7164, %v2907
      %v7230 = vmul.f32 %v7169, %v2907
      %v7231 = vmul.f32 %v7174, %v2907
      %v7232 = vmul.f32 %v7179, %v2907
      %v7233 = vmul.f32 %v7184, %v2907
      %v7234 = vmul.f32 %v7189, %v2907
      %v7235 = vmul.f32 %v7194, %v2907
      %v7236 = vmul.f32 %v7199, %v2907
      %v7237 = vmul.f32 %v7204, %v2907
      %v7238 = vmul.f32 %v7209, %v2907
      %v7239 = vmul.f32 %v7214, %v2907
      %v7240 = vmul.f32 %v7219, %v2907
      %v7241 = vmul.f32 %v7224, %v2907
      %v7242 = vadd.f32 %v7130, %v7226
      %v7243 = vadd.f32 %v7131, %v7227
      %v7244 = vadd.f32 %v7132, %v7228
      %v7245 = vadd.f32 %v7133, %v7229
      %v7246 = vadd.f32 %v7134, %v7230
      %v7247 = vadd.f32 %v7135, %v7231
      %v7248 = vadd.f32 %v7136, %v7232
      %v7249 = vadd.f32 %v7137, %v7233
      %v7250 = vadd.f32 %v7138, %v7234
      %v7251 = vadd.f32 %v7139, %v7235
      %v7252 = vadd.f32 %v7140, %v7236
      %v7253 = vadd.f32 %v7141, %v7237
      %v7254 = vadd.f32 %v7142, %v7238
      %v7255 = vadd.f32 %v7143, %v7239
      %v7256 = vadd.f32 %v7144, %v7240
      %v7257 = vadd.f32 %v7145, %v7241
      %7258 = vset.pattern.permute.xlu0 4
      %7259 = vperm.xlu0 %7258, %v7019
      %v7260 = vpop.permute.xlu0 %7259
      %7262 = vset.pattern.permute.xlu0 4
      %7263 = vperm.xlu0 %7262, %v7021
      %v7264 = vpop.permute.xlu0 %7263
      %7266 = vset.pattern.permute.xlu0 4
      %7267 = vperm.xlu0 %7266, %v7023
      %v7268 = vpop.permute.xlu0 %7267
      %7270 = vset.pattern.permute.xlu0 4
      %7271 = vperm.xlu0 %7270, %v7025
      %v7272 = vpop.permute.xlu0 %7271
      %7274 = vset.pattern.permute.xlu0 4
      %7275 = vperm.xlu0 %7274, %v7027
      %v7276 = vpop.permute.xlu0 %7275
      %7278 = vset.pattern.permute.xlu0 4
      %7279 = vperm.xlu0 %7278, %v7029
      %v7280 = vpop.permute.xlu0 %7279
      %7282 = vset.pattern.permute.xlu0 4
      %7283 = vperm.xlu0 %7282, %v7031
      %v7284 = vpop.permute.xlu0 %7283
      %7286 = vset.pattern.permute.xlu0 4
      %7287 = vperm.xlu0 %7286, %v7033
      %v7288 = vpop.permute.xlu0 %7287
      %7290 = vset.pattern.permute.xlu0 4
      %7291 = vperm.xlu0 %7290, %v7035
      %v7292 = vpop.permute.xlu0 %7291
      %7294 = vset.pattern.permute.xlu0 4
      %7295 = vperm.xlu0 %7294, %v7037
      %v7296 = vpop.permute.xlu0 %7295
      %7298 = vset.pattern.permute.xlu0 4
      %7299 = vperm.xlu0 %7298, %v7039
      %v7300 = vpop.permute.xlu0 %7299
      %7302 = vset.pattern.permute.xlu0 4
      %7303 = vperm.xlu0 %7302, %v7041
      %v7304 = vpop.permute.xlu0 %7303
      %7306 = vset.pattern.permute.xlu0 4
      %7307 = vperm.xlu0 %7306, %v7043
      %v7308 = vpop.permute.xlu0 %7307
      %7310 = vset.pattern.permute.xlu0 4
      %7311 = vperm.xlu0 %7310, %v7045
      %v7312 = vpop.permute.xlu0 %7311
      %7314 = vset.pattern.permute.xlu0 4
      %7315 = vperm.xlu0 %7314, %v7047
      %v7316 = vpop.permute.xlu0 %7315
      %7318 = vset.pattern.permute.xlu0 4
      %7319 = vperm.xlu0 %7318, %v7049
      %v7320 = vpop.permute.xlu0 %7319
      %v7322 = vmul.f32 %v7260, %v3007
      %v7323 = vmul.f32 %v7264, %v3007
      %v7324 = vmul.f32 %v7268, %v3007
      %v7325 = vmul.f32 %v7272, %v3007
      %v7326 = vmul.f32 %v7276, %v3007
      %v7327 = vmul.f32 %v7280, %v3007
      %v7328 = vmul.f32 %v7284, %v3007
      %v7329 = vmul.f32 %v7288, %v3007
      %v7330 = vmul.f32 %v7292, %v3007
      %v7331 = vmul.f32 %v7296, %v3007
      %v7332 = vmul.f32 %v7300, %v3007
      %v7333 = vmul.f32 %v7304, %v3007
      %v7334 = vmul.f32 %v7308, %v3007
      %v7335 = vmul.f32 %v7312, %v3007
      %v7336 = vmul.f32 %v7316, %v3007
      %v7337 = vmul.f32 %v7320, %v3007
      %v7338 = vadd.f32 %v7242, %v7322
      %v7339 = vadd.f32 %v7243, %v7323
      %v7340 = vadd.f32 %v7244, %v7324
      %v7341 = vadd.f32 %v7245, %v7325
      %v7342 = vadd.f32 %v7246, %v7326
      %v7343 = vadd.f32 %v7247, %v7327
      %v7344 = vadd.f32 %v7248, %v7328
      %v7345 = vadd.f32 %v7249, %v7329
      %v7346 = vadd.f32 %v7250, %v7330
      %v7347 = vadd.f32 %v7251, %v7331
      %v7348 = vadd.f32 %v7252, %v7332
      %v7349 = vadd.f32 %v7253, %v7333
      %v7350 = vadd.f32 %v7254, %v7334
      %v7351 = vadd.f32 %v7255, %v7335
      %v7352 = vadd.f32 %v7256, %v7336
      %v7353 = vadd.f32 %v7257, %v7337
      %v7354 = vmul.f32 %v7338, %v7338
      %v7355 = vmul.f32 %v7339, %v7339
      %v7356 = vmul.f32 %v7340, %v7340
      %v7357 = vmul.f32 %v7341, %v7341
      %v7358 = vmul.f32 %v7342, %v7342
      %v7359 = vmul.f32 %v7343, %v7343
      %v7360 = vmul.f32 %v7344, %v7344
      %v7361 = vmul.f32 %v7345, %v7345
      %v7362 = vmul.f32 %v7346, %v7346
      %v7363 = vmul.f32 %v7347, %v7347
      %v7364 = vmul.f32 %v7348, %v7348
      %v7365 = vmul.f32 %v7349, %v7349
      %v7366 = vmul.f32 %v7350, %v7350
      %v7367 = vmul.f32 %v7351, %v7351
      %v7368 = vmul.f32 %v7352, %v7352
      %v7369 = vmul.f32 %v7353, %v7353
      %v7370 = vmul.f32 %v7338, %v7354
      %v7371 = vmul.f32 %v7339, %v7355
      %v7372 = vmul.f32 %v7340, %v7356
      %v7373 = vmul.f32 %v7341, %v7357
      %v7374 = vmul.f32 %v7342, %v7358
      %v7375 = vmul.f32 %v7343, %v7359
      %v7376 = vmul.f32 %v7344, %v7360
      %v7377 = vmul.f32 %v7345, %v7361
      %v7378 = vmul.f32 %v7346, %v7362
      %v7379 = vmul.f32 %v7347, %v7363
      %v7380 = vmul.f32 %v7348, %v7364
      %v7381 = vmul.f32 %v7349, %v7365
      %v7382 = vmul.f32 %v7350, %v7366
      %v7383 = vmul.f32 %v7351, %v7367
      %v7384 = vmul.f32 %v7352, %v7368
      %v7385 = vmul.f32 %v7353, %v7369
      %v7386 = vmul.f32 %v7370, 0.044715
      %v7387 = vmul.f32 %v7371, 0.044715
      %v7388 = vmul.f32 %v7372, 0.044715
      %v7389 = vmul.f32 %v7373, 0.044715
      %v7390 = vmul.f32 %v7374, 0.044715
      %v7391 = vmul.f32 %v7375, 0.044715
      %v7392 = vmul.f32 %v7376, 0.044715
      %v7393 = vmul.f32 %v7377, 0.044715
      %v7394 = vmul.f32 %v7378, 0.044715
      %v7395 = vmul.f32 %v7379, 0.044715
      %v7396 = vmul.f32 %v7380, 0.044715
      %v7397 = vmul.f32 %v7381, 0.044715
      %v7398 = vmul.f32 %v7382, 0.044715
      %v7399 = vmul.f32 %v7383, 0.044715
      %v7400 = vmul.f32 %v7384, 0.044715
      %v7401 = vmul.f32 %v7385, 0.044715
      %v7402 = vadd.f32 %v7338, %v7386
      %v7403 = vadd.f32 %v7339, %v7387
      %v7404 = vadd.f32 %v7340, %v7388
      %v7405 = vadd.f32 %v7341, %v7389
      %v7406 = vadd.f32 %v7342, %v7390
      %v7407 = vadd.f32 %v7343, %v7391
      %v7408 = vadd.f32 %v7344, %v7392
      %v7409 = vadd.f32 %v7345, %v7393
      %v7410 = vadd.f32 %v7346, %v7394
      %v7411 = vadd.f32 %v7347, %v7395
      %v7412 = vadd.f32 %v7348, %v7396
      %v7413 = vadd.f32 %v7349, %v7397
      %v7414 = vadd.f32 %v7350, %v7398
      %v7415 = vadd.f32 %v7351, %v7399
      %v7416 = vadd.f32 %v7352, %v7400
      %v7417 = vadd.f32 %v7353, %v7401
      %v7418 = vmul.f32 %v7402, 0.7978846
      %v7419 = vmul.f32 %v7403, 0.7978846
      %v7420 = vmul.f32 %v7404, 0.7978846
      %v7421 = vmul.f32 %v7405, 0.7978846
      %v7422 = vmul.f32 %v7406, 0.7978846
      %v7423 = vmul.f32 %v7407, 0.7978846
      %v7424 = vmul.f32 %v7408, 0.7978846
      %v7425 = vmul.f32 %v7409, 0.7978846
      %v7426 = vmul.f32 %v7410, 0.7978846
      %v7427 = vmul.f32 %v7411, 0.7978846
      %v7428 = vmul.f32 %v7412, 0.7978846
      %v7429 = vmul.f32 %v7413, 0.7978846
      %v7430 = vmul.f32 %v7414, 0.7978846
      %v7431 = vmul.f32 %v7415, 0.7978846
      %v7432 = vmul.f32 %v7416, 0.7978846
      %v7433 = vmul.f32 %v7417, 0.7978846
      %v7434 = vtanh.pop %v7418
      %v7435 = vtanh.pop %v7419
      %v7436 = vtanh.pop %v7420
      %v7437 = vtanh.pop %v7421
      %v7438 = vtanh.pop %v7422
      %v7439 = vtanh.pop %v7423
      %v7440 = vtanh.pop %v7424
      %v7441 = vtanh.pop %v7425
      %v7442 = vtanh.pop %v7426
      %v7443 = vtanh.pop %v7427
      %v7444 = vtanh.pop %v7428
      %v7445 = vtanh.pop %v7429
      %v7446 = vtanh.pop %v7430
      %v7447 = vtanh.pop %v7431
      %v7448 = vtanh.pop %v7432
      %v7449 = vtanh.pop %v7433
      %v7450 = vadd.f32 %v7434, 1.0
      %v7451 = vadd.f32 %v7435, 1.0
      %v7452 = vadd.f32 %v7436, 1.0
      %v7453 = vadd.f32 %v7437, 1.0
      %v7454 = vadd.f32 %v7438, 1.0
      %v7455 = vadd.f32 %v7439, 1.0
      %v7456 = vadd.f32 %v7440, 1.0
      %v7457 = vadd.f32 %v7441, 1.0
      %v7458 = vadd.f32 %v7442, 1.0
      %v7459 = vadd.f32 %v7443, 1.0
      %v7460 = vadd.f32 %v7444, 1.0
      %v7461 = vadd.f32 %v7445, 1.0
      %v7462 = vadd.f32 %v7446, 1.0
      %v7463 = vadd.f32 %v7447, 1.0
      %v7464 = vadd.f32 %v7448, 1.0
      %v7465 = vadd.f32 %v7449, 1.0
      %v7466 = vmul.f32 %v7450, 0.5
      %v7467 = vmul.f32 %v7451, 0.5
      %v7468 = vmul.f32 %v7452, 0.5
      %v7469 = vmul.f32 %v7453, 0.5
      %v7470 = vmul.f32 %v7454, 0.5
      %v7471 = vmul.f32 %v7455, 0.5
      %v7472 = vmul.f32 %v7456, 0.5
      %v7473 = vmul.f32 %v7457, 0.5
      %v7474 = vmul.f32 %v7458, 0.5
      %v7475 = vmul.f32 %v7459, 0.5
      %v7476 = vmul.f32 %v7460, 0.5
      %v7477 = vmul.f32 %v7461, 0.5
      %v7478 = vmul.f32 %v7462, 0.5
      %v7479 = vmul.f32 %v7463, 0.5
      %v7480 = vmul.f32 %v7464, 0.5
      %v7481 = vmul.f32 %v7465, 0.5
      %v7482 = vmul.f32 %v7338, %v7466
      %v7483 = vmul.f32 %v7339, %v7467
      %v7484 = vmul.f32 %v7340, %v7468
      %v7485 = vmul.f32 %v7341, %v7469
      %v7486 = vmul.f32 %v7342, %v7470
      %v7487 = vmul.f32 %v7343, %v7471
      %v7488 = vmul.f32 %v7344, %v7472
      %v7489 = vmul.f32 %v7345, %v7473
      %v7490 = vmul.f32 %v7346, %v7474
      %v7491 = vmul.f32 %v7347, %v7475
      %v7492 = vmul.f32 %v7348, %v7476
      %v7493 = vmul.f32 %v7349, %v7477
      %v7494 = vmul.f32 %v7350, %v7478
      %v7495 = vmul.f32 %v7351, %v7479
      %v7496 = vmul.f32 %v7352, %v7480
      %v7497 = vmul.f32 %v7353, %v7481
      %v7498 = vpack.c.bf16 %v7483, %v7482
      %v7499 = vpack.c.bf16 %v7485, %v7484
      %v7500 = vpack.c.bf16 %v7487, %v7486
      %v7501 = vpack.c.bf16 %v7489, %v7488
      %v7502 = vpack.c.bf16 %v7491, %v7490
      %v7503 = vpack.c.bf16 %v7493, %v7492
      %v7504 = vpack.c.bf16 %v7495, %v7494
      %v7505 = vpack.c.bf16 %v7497, %v7496
      %v7506 = vld [vmem:[%s4 + $0x60] sm:$0xf]
      %v7507 = vld [vmem:[%s4 + $0x64] sm:$0xf]
      %v7510 = vunpack.c.l.b16 %v7506
      %v7511 = vunpack.c.l.b16 %v7507
      %v7512 = vpack.c.b16 %v7511, %v7510
      %v7515 = vsel %vm1045, %v7498, 0
      %v7518 = vsel %vm1045, %v7499, 0
      %v7521 = vsel %vm1045, %v7500, 0
      %v7524 = vsel %vm1045, %v7501, 0
      %v7527 = vsel %vm1045, %v7502, 0
      %v7530 = vsel %vm1045, %v7503, 0
      %v7533 = vsel %vm1045, %v7504, 0
      %v7536 = vsel %vm1045, %v7505, 0
      %7538 = vmatprep.subr.bf16.mxu0 0
      %7539 = vmatpush1.bf16.msra.mxu0 0
      %7540 = vmatprep.subr.bf16.mxu0 0
      %7541 = vmatpush1.bf16.msra.mxu0 0
      %7542 = vmatprep.subr.bf16.mxu0 0
      %7543 = vmatpush1.bf16.msra.mxu0 0
      %7544 = vmatprep.subr.bf16.mxu0 0
      %7545 = vmatpush1.bf16.msra.mxu0 0
      %7546 = vmatprep.subr.bf16.mxu0 0
      %7547 = vmatpush1.bf16.msra.mxu0 0
      %7548 = vmatprep.subr.bf16.mxu0 0
      %7549 = vmatpush1.bf16.msra.mxu0 0
      %7550 = vmatprep.subr.bf16.mxu0 0
      %7551 = vmatpush1.bf16.msra.mxu0 0
      %7552 = vmatprep.subr.bf16.mxu0 0
      %7553 = vmatpush1.bf16.msra.mxu0 %v7512
      %7554 = vmatprep.subr.bf16.mxu0 0
      %7555 = vmatpush2.bf16.msra.mxu0 0
      %7556 = vmatprep.subr.bf16.mxu0 0
      %7557 = vmatpush2.bf16.msra.mxu0 0
      %7558 = vmatprep.subr.bf16.mxu0 0
      %7559 = vmatpush2.bf16.msra.mxu0 0
      %7560 = vmatprep.subr.bf16.mxu0 0
      %7561 = vmatpush2.bf16.msra.mxu0 0
      %7562 = vmatprep.subr.bf16.mxu0 0
      %7563 = vmatpush2.bf16.msra.mxu0 0
      %7564 = vmatprep.subr.bf16.mxu0 0
      %7565 = vmatpush2.bf16.msra.mxu0 0
      %7566 = vmatprep.subr.bf16.mxu0 0
      %7567 = vmatpush2.bf16.msra.mxu0 0
      %7568 = vmatprep.subr.bf16.mxu0 0
      %7569 = vmatpush2.bf16.msra.mxu0 0
      %7570 = vmatprep.mubr.bf16.mxu0 0
      %7571 = vmatmul.mubr.bf16.gmra.mxu0 %v7515
      %v7572 = vpop.f32.mrf.mxu0
      %v7573 = vadd.f32 %v3197, %v7572
      %v7574 = vpop.f32.mrf.mxu0
      %v7575 = vpop.f32.mrf.mxu0
      %v7576 = vadd.f32 %v3197, %v7575
      %v7577 = vpop.f32.mrf.mxu0
      %7578 = vmatprep.mubr.bf16.mxu0 0
      %7579 = vmatmul.mubr.bf16.gmra.mxu0 %v7518
      %v7580 = vpop.f32.mrf.mxu0
      %v7581 = vadd.f32 %v3197, %v7580
      %v7582 = vpop.f32.mrf.mxu0
      %v7583 = vpop.f32.mrf.mxu0
      %v7584 = vadd.f32 %v3197, %v7583
      %v7585 = vpop.f32.mrf.mxu0
      %7586 = vmatprep.mubr.bf16.mxu0 0
      %7587 = vmatmul.mubr.bf16.gmra.mxu0 %v7521
      %v7588 = vpop.f32.mrf.mxu0
      %v7589 = vadd.f32 %v3197, %v7588
      %v7590 = vpop.f32.mrf.mxu0
      %v7591 = vpop.f32.mrf.mxu0
      %v7592 = vadd.f32 %v3197, %v7591
      %v7593 = vpop.f32.mrf.mxu0
      %7594 = vmatprep.mubr.bf16.mxu0 0
      %7595 = vmatmul.mubr.bf16.gmra.mxu0 %v7524
      %v7596 = vpop.f32.mrf.mxu0
      %v7597 = vadd.f32 %v3197, %v7596
      %v7598 = vpop.f32.mrf.mxu0
      %v7599 = vpop.f32.mrf.mxu0
      %v7600 = vadd.f32 %v3197, %v7599
      %v7601 = vpop.f32.mrf.mxu0
      %7602 = vmatprep.mubr.bf16.mxu0 0
      %7603 = vmatmul.mubr.bf16.gmra.mxu0 %v7527
      %v7604 = vpop.f32.mrf.mxu0
      %v7605 = vadd.f32 %v3197, %v7604
      %v7606 = vpop.f32.mrf.mxu0
      %v7607 = vpop.f32.mrf.mxu0
      %v7608 = vadd.f32 %v3197, %v7607
      %v7609 = vpop.f32.mrf.mxu0
      %7610 = vmatprep.mubr.bf16.mxu0 0
      %7611 = vmatmul.mubr.bf16.gmra.mxu0 %v7530
      %v7612 = vpop.f32.mrf.mxu0
      %v7613 = vadd.f32 %v3197, %v7612
      %v7614 = vpop.f32.mrf.mxu0
      %v7615 = vpop.f32.mrf.mxu0
      %v7616 = vadd.f32 %v3197, %v7615
      %v7617 = vpop.f32.mrf.mxu0
      %7618 = vmatprep.mubr.bf16.mxu0 0
      %7619 = vmatmul.mubr.bf16.gmra.mxu0 %v7533
      %v7620 = vpop.f32.mrf.mxu0
      %v7621 = vadd.f32 %v3197, %v7620
      %v7622 = vpop.f32.mrf.mxu0
      %v7623 = vpop.f32.mrf.mxu0
      %v7624 = vadd.f32 %v3197, %v7623
      %v7625 = vpop.f32.mrf.mxu0
      %7626 = vmatprep.mubr.bf16.mxu0 0
      %7627 = vmatmul.mubr.bf16.gmra.mxu0 %v7536
      %v7628 = vpop.f32.mrf.mxu0
      %v7629 = vadd.f32 %v3197, %v7628
      %v7630 = vpop.f32.mrf.mxu0
      %v7631 = vpop.f32.mrf.mxu0
      %v7632 = vadd.f32 %v3197, %v7631
      %v7633 = vpop.f32.mrf.mxu0
      %7634 = vdwg.mxu0
      %v7635 = vxor.u32 %v7573, 2147483648
      %v7636 = vxor.u32 %v7576, 2147483648
      %v7637 = vxor.u32 %v7581, 2147483648
      %v7638 = vxor.u32 %v7584, 2147483648
      %v7639 = vxor.u32 %v7589, 2147483648
      %v7640 = vxor.u32 %v7592, 2147483648
      %v7641 = vxor.u32 %v7597, 2147483648
      %v7642 = vxor.u32 %v7600, 2147483648
      %v7643 = vxor.u32 %v7605, 2147483648
      %v7644 = vxor.u32 %v7608, 2147483648
      %v7645 = vxor.u32 %v7613, 2147483648
      %v7646 = vxor.u32 %v7616, 2147483648
      %v7647 = vxor.u32 %v7621, 2147483648
      %v7648 = vxor.u32 %v7624, 2147483648
      %v7649 = vxor.u32 %v7629, 2147483648
      %v7650 = vxor.u32 %v7632, 2147483648
      %v7651 = vmul.f32 %v7635, 1.442695
      %v7652 = vpow.pop %v7651
      %v7653 = vmul.f32 %v7636, 1.442695
      %v7654 = vpow.pop %v7653
      %v7655 = vmul.f32 %v7637, 1.442695
      %v7656 = vpow.pop %v7655
      %v7657 = vmul.f32 %v7638, 1.442695
      %v7658 = vpow.pop %v7657
      %v7659 = vmul.f32 %v7639, 1.442695
      %v7660 = vpow.pop %v7659
      %v7661 = vmul.f32 %v7640, 1.442695
      %v7662 = vpow.pop %v7661
      %v7663 = vmul.f32 %v7641, 1.442695
      %v7664 = vpow.pop %v7663
      %v7665 = vmul.f32 %v7642, 1.442695
      %v7666 = vpow.pop %v7665
      %v7667 = vmul.f32 %v7643, 1.442695
      %v7668 = vpow.pop %v7667
      %v7669 = vmul.f32 %v7644, 1.442695
      %v7670 = vpow.pop %v7669
      %v7671 = vmul.f32 %v7645, 1.442695
      %v7672 = vpow.pop %v7671
      %v7673 = vmul.f32 %v7646, 1.442695
      %v7674 = vpow.pop %v7673
      %v7675 = vmul.f32 %v7647, 1.442695
      %v7676 = vpow.pop %v7675
      %v7677 = vmul.f32 %v7648, 1.442695
      %v7678 = vpow.pop %v7677
      %v7679 = vmul.f32 %v7649, 1.442695
      %v7680 = vpow.pop %v7679
      %v7681 = vmul.f32 %v7650, 1.442695
      %v7682 = vpow.pop %v7681
      %v7683 = vadd.f32 %v7652, 1.0
      %v7684 = vadd.f32 %v7654, 1.0
      %v7685 = vadd.f32 %v7656, 1.0
      %v7686 = vadd.f32 %v7658, 1.0
      %v7687 = vadd.f32 %v7660, 1.0
      %v7688 = vadd.f32 %v7662, 1.0
      %v7689 = vadd.f32 %v7664, 1.0
      %v7690 = vadd.f32 %v7666, 1.0
      %v7691 = vadd.f32 %v7668, 1.0
      %v7692 = vadd.f32 %v7670, 1.0
      %v7693 = vadd.f32 %v7672, 1.0
      %v7694 = vadd.f32 %v7674, 1.0
      %v7695 = vadd.f32 %v7676, 1.0
      %v7696 = vadd.f32 %v7678, 1.0
      %v7697 = vadd.f32 %v7680, 1.0
      %v7698 = vadd.f32 %v7682, 1.0
      %v7699 = vrcp.pop %v7683
      %v7700 = vmul.f32 1.0, %v7699
      %v7701 = vrcp.pop %v7684
      %v7702 = vmul.f32 1.0, %v7701
      %v7703 = vrcp.pop %v7685
      %v7704 = vmul.f32 1.0, %v7703
      %v7705 = vrcp.pop %v7686
      %v7706 = vmul.f32 1.0, %v7705
      %v7707 = vrcp.pop %v7687
      %v7708 = vmul.f32 1.0, %v7707
      %v7709 = vrcp.pop %v7688
      %v7710 = vmul.f32 1.0, %v7709
      %v7711 = vrcp.pop %v7689
      %v7712 = vmul.f32 1.0, %v7711
      %v7713 = vrcp.pop %v7690
      %v7714 = vmul.f32 1.0, %v7713
      %v7715 = vrcp.pop %v7691
      %v7716 = vmul.f32 1.0, %v7715
      %v7717 = vrcp.pop %v7692
      %v7718 = vmul.f32 1.0, %v7717
      %v7719 = vrcp.pop %v7693
      %v7720 = vmul.f32 1.0, %v7719
      %v7721 = vrcp.pop %v7694
      %v7722 = vmul.f32 1.0, %v7721
      %v7723 = vrcp.pop %v7695
      %v7724 = vmul.f32 1.0, %v7723
      %v7725 = vrcp.pop %v7696
      %v7726 = vmul.f32 1.0, %v7725
      %v7727 = vrcp.pop %v7697
      %v7728 = vmul.f32 1.0, %v7727
      %v7729 = vrcp.pop %v7698
      %v7730 = vmul.f32 1.0, %v7729
      %v7731 = vmul.f32 %v4693, %v7700
      %v7732 = vmul.f32 %v4694, %v7702
      %v7733 = vmul.f32 %v4695, %v7704
      %v7734 = vmul.f32 %v4696, %v7706
      %v7735 = vmul.f32 %v4697, %v7708
      %v7736 = vmul.f32 %v4698, %v7710
      %v7737 = vmul.f32 %v4699, %v7712
      %v7738 = vmul.f32 %v4700, %v7714
      %v7739 = vmul.f32 %v4701, %v7716
      %v7740 = vmul.f32 %v4702, %v7718
      %v7741 = vmul.f32 %v4703, %v7720
      %v7742 = vmul.f32 %v4704, %v7722
      %v7743 = vmul.f32 %v4705, %v7724
      %v7744 = vmul.f32 %v4706, %v7726
      %v7745 = vmul.f32 %v4707, %v7728
      %v7746 = vmul.f32 %v4708, %v7730
      %v7747 = vsel %vm1279, %v7731, 0.0
      %7748 = vadd.xlane.f32.xlu0 %v7747
      %v7749 = vpop.xlane.xlu0 %7748
      %v7750 = vsel %vm1279, %v7732, 0.0
      %7751 = vadd.xlane.f32.xlu0 %v7750
      %v7752 = vpop.xlane.xlu0 %7751
      %v7753 = vsel %vm1279, %v7733, 0.0
      %7754 = vadd.xlane.f32.xlu0 %v7753
      %v7755 = vpop.xlane.xlu0 %7754
      %v7756 = vsel %vm1279, %v7734, 0.0
      %7757 = vadd.xlane.f32.xlu0 %v7756
      %v7758 = vpop.xlane.xlu0 %7757
      %v7759 = vsel %vm1279, %v7735, 0.0
      %7760 = vadd.xlane.f32.xlu0 %v7759
      %v7761 = vpop.xlane.xlu0 %7760
      %v7762 = vsel %vm1279, %v7736, 0.0
      %7763 = vadd.xlane.f32.xlu0 %v7762
      %v7764 = vpop.xlane.xlu0 %7763
      %v7765 = vsel %vm1279, %v7737, 0.0
      %7766 = vadd.xlane.f32.xlu0 %v7765
      %v7767 = vpop.xlane.xlu0 %7766
      %v7768 = vsel %vm1279, %v7738, 0.0
      %7769 = vadd.xlane.f32.xlu0 %v7768
      %v7770 = vpop.xlane.xlu0 %7769
      %v7771 = vsel %vm1279, %v7739, 0.0
      %7772 = vadd.xlane.f32.xlu0 %v7771
      %v7773 = vpop.xlane.xlu0 %7772
      %v7774 = vsel %vm1279, %v7740, 0.0
      %7775 = vadd.xlane.f32.xlu0 %v7774
      %v7776 = vpop.xlane.xlu0 %7775
      %v7777 = vsel %vm1279, %v7741, 0.0
      %7778 = vadd.xlane.f32.xlu0 %v7777
      %v7779 = vpop.xlane.xlu0 %7778
      %v7780 = vsel %vm1279, %v7742, 0.0
      %7781 = vadd.xlane.f32.xlu0 %v7780
      %v7782 = vpop.xlane.xlu0 %7781
      %v7783 = vsel %vm1279, %v7743, 0.0
      %7784 = vadd.xlane.f32.xlu0 %v7783
      %v7785 = vpop.xlane.xlu0 %7784
      %v7786 = vsel %vm1279, %v7744, 0.0
      %7787 = vadd.xlane.f32.xlu0 %v7786
      %v7788 = vpop.xlane.xlu0 %7787
      %v7789 = vsel %vm1279, %v7745, 0.0
      %7790 = vadd.xlane.f32.xlu0 %v7789
      %v7791 = vpop.xlane.xlu0 %7790
      %v7792 = vsel %vm1279, %v7746, 0.0
      %7793 = vadd.xlane.f32.xlu0 %v7792
      %v7794 = vpop.xlane.xlu0 %7793
      %v7795 = vmul.f32 %v7749, %v1328
      %v7796 = vmul.f32 %v7752, %v1328
      %v7797 = vmul.f32 %v7755, %v1328
      %v7798 = vmul.f32 %v7758, %v1328
      %v7799 = vmul.f32 %v7761, %v1328
      %v7800 = vmul.f32 %v7764, %v1328
      %v7801 = vmul.f32 %v7767, %v1328
      %v7802 = vmul.f32 %v7770, %v1328
      %v7803 = vmul.f32 %v7773, %v1328
      %v7804 = vmul.f32 %v7776, %v1328
      %v7805 = vmul.f32 %v7779, %v1328
      %v7806 = vmul.f32 %v7782, %v1328
      %v7807 = vmul.f32 %v7785, %v1328
      %v7808 = vmul.f32 %v7788, %v1328
      %v7809 = vmul.f32 %v7791, %v1328
      %v7810 = vmul.f32 %v7794, %v1328
      %v7811 = vsub.f32 %v7731, %v7795
      %v7812 = vsub.f32 %v7732, %v7796
      %v7813 = vsub.f32 %v7733, %v7797
      %v7814 = vsub.f32 %v7734, %v7798
      %v7815 = vsub.f32 %v7735, %v7799
      %v7816 = vsub.f32 %v7736, %v7800
      %v7817 = vsub.f32 %v7737, %v7801
      %v7818 = vsub.f32 %v7738, %v7802
      %v7819 = vsub.f32 %v7739, %v7803
      %v7820 = vsub.f32 %v7740, %v7804
      %v7821 = vsub.f32 %v7741, %v7805
      %v7822 = vsub.f32 %v7742, %v7806
      %v7823 = vsub.f32 %v7743, %v7807
      %v7824 = vsub.f32 %v7744, %v7808
      %v7825 = vsub.f32 %v7745, %v7809
      %v7826 = vsub.f32 %v7746, %v7810
      %v7827 = vmul.f32 %v7811, %v7811
      %v7828 = vmul.f32 %v7812, %v7812
      %v7829 = vmul.f32 %v7813, %v7813
      %v7830 = vmul.f32 %v7814, %v7814
      %v7831 = vmul.f32 %v7815, %v7815
      %v7832 = vmul.f32 %v7816, %v7816
      %v7833 = vmul.f32 %v7817, %v7817
      %v7834 = vmul.f32 %v7818, %v7818
      %v7835 = vmul.f32 %v7819, %v7819
      %v7836 = vmul.f32 %v7820, %v7820
      %v7837 = vmul.f32 %v7821, %v7821
      %v7838 = vmul.f32 %v7822, %v7822
      %v7839 = vmul.f32 %v7823, %v7823
      %v7840 = vmul.f32 %v7824, %v7824
      %v7841 = vmul.f32 %v7825, %v7825
      %v7842 = vmul.f32 %v7826, %v7826
      %v7843 = vsel %vm1279, %v7827, 0.0
      %7844 = vadd.xlane.f32.xlu0 %v7843
      %v7845 = vpop.xlane.xlu0 %7844
      %v7846 = vsel %vm1279, %v7828, 0.0
      %7847 = vadd.xlane.f32.xlu0 %v7846
      %v7848 = vpop.xlane.xlu0 %7847
      %v7849 = vsel %vm1279, %v7829, 0.0
      %7850 = vadd.xlane.f32.xlu0 %v7849
      %v7851 = vpop.xlane.xlu0 %7850
      %v7852 = vsel %vm1279, %v7830, 0.0
      %7853 = vadd.xlane.f32.xlu0 %v7852
      %v7854 = vpop.xlane.xlu0 %7853
      %v7855 = vsel %vm1279, %v7831, 0.0
      %7856 = vadd.xlane.f32.xlu0 %v7855
      %v7857 = vpop.xlane.xlu0 %7856
      %v7858 = vsel %vm1279, %v7832, 0.0
      %7859 = vadd.xlane.f32.xlu0 %v7858
      %v7860 = vpop.xlane.xlu0 %7859
      %v7861 = vsel %vm1279, %v7833, 0.0
      %7862 = vadd.xlane.f32.xlu0 %v7861
      %v7863 = vpop.xlane.xlu0 %7862
      %v7864 = vsel %vm1279, %v7834, 0.0
      %7865 = vadd.xlane.f32.xlu0 %v7864
      %v7866 = vpop.xlane.xlu0 %7865
      %v7867 = vsel %vm1279, %v7835, 0.0
      %7868 = vadd.xlane.f32.xlu0 %v7867
      %v7869 = vpop.xlane.xlu0 %7868
      %v7870 = vsel %vm1279, %v7836, 0.0
      %7871 = vadd.xlane.f32.xlu0 %v7870
      %v7872 = vpop.xlane.xlu0 %7871
      %v7873 = vsel %vm1279, %v7837, 0.0
      %7874 = vadd.xlane.f32.xlu0 %v7873
      %v7875 = vpop.xlane.xlu0 %7874
      %v7876 = vsel %vm1279, %v7838, 0.0
      %7877 = vadd.xlane.f32.xlu0 %v7876
      %v7878 = vpop.xlane.xlu0 %7877
      %v7879 = vsel %vm1279, %v7839, 0.0
      %7880 = vadd.xlane.f32.xlu0 %v7879
      %v7881 = vpop.xlane.xlu0 %7880
      %v7882 = vsel %vm1279, %v7840, 0.0
      %7883 = vadd.xlane.f32.xlu0 %v7882
      %v7884 = vpop.xlane.xlu0 %7883
      %v7885 = vsel %vm1279, %v7841, 0.0
      %7886 = vadd.xlane.f32.xlu0 %v7885
      %v7887 = vpop.xlane.xlu0 %7886
      %v7888 = vsel %vm1279, %v7842, 0.0
      %7889 = vadd.xlane.f32.xlu0 %v7888
      %v7890 = vpop.xlane.xlu0 %7889
      %v7891 = vmul.f32 %v7845, %v1328
      %v7892 = vmul.f32 %v7848, %v1328
      %v7893 = vmul.f32 %v7851, %v1328
      %v7894 = vmul.f32 %v7854, %v1328
      %v7895 = vmul.f32 %v7857, %v1328
      %v7896 = vmul.f32 %v7860, %v1328
      %v7897 = vmul.f32 %v7863, %v1328
      %v7898 = vmul.f32 %v7866, %v1328
      %v7899 = vmul.f32 %v7869, %v1328
      %v7900 = vmul.f32 %v7872, %v1328
      %v7901 = vmul.f32 %v7875, %v1328
      %v7902 = vmul.f32 %v7878, %v1328
      %v7903 = vmul.f32 %v7881, %v1328
      %v7904 = vmul.f32 %v7884, %v1328
      %v7905 = vmul.f32 %v7887, %v1328
      %v7906 = vmul.f32 %v7890, %v1328
      %v7907 = vadd.f32 %v7891, 1e-05
      %v7908 = vadd.f32 %v7892, 1e-05
      %v7909 = vadd.f32 %v7893, 1e-05
      %v7910 = vadd.f32 %v7894, 1e-05
      %v7911 = vadd.f32 %v7895, 1e-05
      %v7912 = vadd.f32 %v7896, 1e-05
      %v7913 = vadd.f32 %v7897, 1e-05
      %v7914 = vadd.f32 %v7898, 1e-05
      %v7915 = vadd.f32 %v7899, 1e-05
      %v7916 = vadd.f32 %v7900, 1e-05
      %v7917 = vadd.f32 %v7901, 1e-05
      %v7918 = vadd.f32 %v7902, 1e-05
      %v7919 = vadd.f32 %v7903, 1e-05
      %v7920 = vadd.f32 %v7904, 1e-05
      %v7921 = vadd.f32 %v7905, 1e-05
      %v7922 = vadd.f32 %v7906, 1e-05
      %v7923 = vrsqrt.pop %v7907
      %v7924 = vrsqrt.pop %v7908
      %v7925 = vrsqrt.pop %v7909
      %v7926 = vrsqrt.pop %v7910
      %v7927 = vrsqrt.pop %v7911
      %v7928 = vrsqrt.pop %v7912
      %v7929 = vrsqrt.pop %v7913
      %v7930 = vrsqrt.pop %v7914
      %v7931 = vrsqrt.pop %v7915
      %v7932 = vrsqrt.pop %v7916
      %v7933 = vrsqrt.pop %v7917
      %v7934 = vrsqrt.pop %v7918
      %v7935 = vrsqrt.pop %v7919
      %v7936 = vrsqrt.pop %v7920
      %v7937 = vrsqrt.pop %v7921
      %v7938 = vrsqrt.pop %v7922
      %v7939 = vmul.f32 %v7811, %v7923
      %v7940 = vmul.f32 %v7812, %v7924
      %v7941 = vmul.f32 %v7813, %v7925
      %v7942 = vmul.f32 %v7814, %v7926
      %v7943 = vmul.f32 %v7815, %v7927
      %v7944 = vmul.f32 %v7816, %v7928
      %v7945 = vmul.f32 %v7817, %v7929
      %v7946 = vmul.f32 %v7818, %v7930
      %v7947 = vmul.f32 %v7819, %v7931
      %v7948 = vmul.f32 %v7820, %v7932
      %v7949 = vmul.f32 %v7821, %v7933
      %v7950 = vmul.f32 %v7822, %v7934
      %v7951 = vmul.f32 %v7823, %v7935
      %v7952 = vmul.f32 %v7824, %v7936
      %v7953 = vmul.f32 %v7825, %v7937
      %v7954 = vmul.f32 %v7826, %v7938
      %v7955 = vmul.f32 %v7939, %v3648
      %v7956 = vmul.f32 %v7940, %v3648
      %v7957 = vmul.f32 %v7941, %v3648
      %v7958 = vmul.f32 %v7942, %v3648
      %v7959 = vmul.f32 %v7943, %v3648
      %v7960 = vmul.f32 %v7944, %v3648
      %v7961 = vmul.f32 %v7945, %v3648
      %v7962 = vmul.f32 %v7946, %v3648
      %v7963 = vmul.f32 %v7947, %v3648
      %v7964 = vmul.f32 %v7948, %v3648
      %v7965 = vmul.f32 %v7949, %v3648
      %v7966 = vmul.f32 %v7950, %v3648
      %v7967 = vmul.f32 %v7951, %v3648
      %v7968 = vmul.f32 %v7952, %v3648
      %v7969 = vmul.f32 %v7953, %v3648
      %v7970 = vmul.f32 %v7954, %v3648
      %v7971 = vadd.f32 %v7955, %v3668
      %v7972 = vadd.f32 %v7956, %v3668
      %v7973 = vadd.f32 %v7957, %v3668
      %v7974 = vadd.f32 %v7958, %v3668
      %v7975 = vadd.f32 %v7959, %v3668
      %v7976 = vadd.f32 %v7960, %v3668
      %v7977 = vadd.f32 %v7961, %v3668
      %v7978 = vadd.f32 %v7962, %v3668
      %v7979 = vadd.f32 %v7963, %v3668
      %v7980 = vadd.f32 %v7964, %v3668
      %v7981 = vadd.f32 %v7965, %v3668
      %v7982 = vadd.f32 %v7966, %v3668
      %v7983 = vadd.f32 %v7967, %v3668
      %v7984 = vadd.f32 %v7968, %v3668
      %v7985 = vadd.f32 %v7969, %v3668
      %v7986 = vadd.f32 %v7970, %v3668
      %v7987 = vpack.c.bf16 %v7972, %v7971
      %v7988 = vpack.c.bf16 %v7974, %v7973
      %v7989 = vpack.c.bf16 %v7976, %v7975
      %v7990 = vpack.c.bf16 %v7978, %v7977
      %v7991 = vpack.c.bf16 %v7980, %v7979
      %v7992 = vpack.c.bf16 %v7982, %v7981
      %v7993 = vpack.c.bf16 %v7984, %v7983
      %v7994 = vpack.c.bf16 %v7986, %v7985
      %v7995 = vld [vmem:[%s4] sm:$0xf]
      %v7996 = vld [vmem:[%s4 + $0x4] sm:$0xf]
      %v7997 = vld [vmem:[%s4 + $0x8] sm:$0xf]
      %v7998 = vld [vmem:[%s4 + $0xc] sm:$0xf]
      %v7999 = vld [vmem:[%s4 + $0x10] sm:$0xf]
      %v8000 = vld [vmem:[%s4 + $0x14] sm:$0xf]
      %v8001 = vld [vmem:[%s4 + $0x18] sm:$0xf]
      %v8002 = vld [vmem:[%s4 + $0x1c] sm:$0xf]
      %v8011 = vunpack.c.l.b16 %v7995
      %v8012 = vunpack.c.l.b16 %v7996
      %v8013 = vunpack.c.l.b16 %v7997
      %v8014 = vunpack.c.l.b16 %v7998
      %v8015 = vunpack.c.l.b16 %v7999
      %v8016 = vunpack.c.l.b16 %v8000
      %v8017 = vunpack.c.l.b16 %v8001
      %v8018 = vunpack.c.l.b16 %v8002
      %v8019 = vpack.c.b16 %v8012, %v8011
      %v8020 = vpack.c.b16 %v8014, %v8013
      %v8021 = vpack.c.b16 %v8016, %v8015
      %v8022 = vpack.c.b16 %v8018, %v8017
      %v8028 = vsel %vm1279, %v7987, 0
      %v8031 = vsel %vm1279, %v7988, 0
      %v8034 = vsel %vm1279, %v7989, 0
      %v8037 = vsel %vm1279, %v7990, 0
      %v8040 = vsel %vm1279, %v7991, 0
      %v8043 = vsel %vm1279, %v7992, 0
      %v8046 = vsel %vm1279, %v7993, 0
      %v8049 = vsel %vm1279, %v7994, 0
      %8051 = vmatprep.subr.bf16.mxu0 0
      %8052 = vmatpush1.bf16.msra.mxu0 0
      %8053 = vmatprep.subr.bf16.mxu0 0
      %8054 = vmatpush1.bf16.msra.mxu0 0
      %8055 = vmatprep.subr.bf16.mxu0 0
      %8056 = vmatpush1.bf16.msra.mxu0 0
      %8057 = vmatprep.subr.bf16.mxu0 0
      %8058 = vmatpush1.bf16.msra.mxu0 0
      %8059 = vmatprep.subr.bf16.mxu0 0
      %8060 = vmatpush1.bf16.msra.mxu0 %v8022
      %8061 = vmatprep.subr.bf16.mxu0 0
      %8062 = vmatpush1.bf16.msra.mxu0 %v8021
      %8063 = vmatprep.subr.bf16.mxu0 0
      %8064 = vmatpush1.bf16.msra.mxu0 %v8020
      %8065 = vmatprep.subr.bf16.mxu0 0
      %8066 = vmatpush1.bf16.msra.mxu0 %v8019
      %8067 = vmatprep.subr.bf16.mxu0 0
      %8068 = vmatpush2.bf16.msra.mxu0 0
      %8069 = vmatprep.subr.bf16.mxu0 0
      %8070 = vmatpush2.bf16.msra.mxu0 0
      %8071 = vmatprep.subr.bf16.mxu0 0
      %8072 = vmatpush2.bf16.msra.mxu0 0
      %8073 = vmatprep.subr.bf16.mxu0 0
      %8074 = vmatpush2.bf16.msra.mxu0 0
      %8075 = vmatprep.subr.bf16.mxu0 0
      %8076 = vmatpush2.bf16.msra.mxu0 0
      %8077 = vmatprep.subr.bf16.mxu0 0
      %8078 = vmatpush2.bf16.msra.mxu0 0
      %8079 = vmatprep.subr.bf16.mxu0 0
      %8080 = vmatpush2.bf16.msra.mxu0 0
      %8081 = vmatprep.subr.bf16.mxu0 0
      %8082 = vmatpush2.bf16.msra.mxu0 0
      %8083 = vmatprep.mubr.bf16.mxu0 0
      %8084 = vmatmul.mubr.bf16.gmra.mxu0 %v8028
      %v8085 = vpop.f32.mrf.mxu0
      %v8086 = vadd.f32 %v3704, %v8085
      %v8087 = vpop.f32.mrf.mxu0
      %v8088 = vpop.f32.mrf.mxu0
      %v8089 = vadd.f32 %v3704, %v8088
      %v8090 = vpop.f32.mrf.mxu0
      %8091 = vmatprep.mubr.bf16.mxu0 0
      %8092 = vmatmul.mubr.bf16.gmra.mxu0 %v8031
      %v8093 = vpop.f32.mrf.mxu0
      %v8094 = vadd.f32 %v3704, %v8093
      %v8095 = vpop.f32.mrf.mxu0
      %v8096 = vpop.f32.mrf.mxu0
      %v8097 = vadd.f32 %v3704, %v8096
      %v8098 = vpop.f32.mrf.mxu0
      %8099 = vmatprep.mubr.bf16.mxu0 0
      %8100 = vmatmul.mubr.bf16.gmra.mxu0 %v8034
      %v8101 = vpop.f32.mrf.mxu0
      %v8102 = vadd.f32 %v3704, %v8101
      %v8103 = vpop.f32.mrf.mxu0
      %v8104 = vpop.f32.mrf.mxu0
      %v8105 = vadd.f32 %v3704, %v8104
      %v8106 = vpop.f32.mrf.mxu0
      %8107 = vmatprep.mubr.bf16.mxu0 0
      %8108 = vmatmul.mubr.bf16.gmra.mxu0 %v8037
      %v8109 = vpop.f32.mrf.mxu0
      %v8110 = vadd.f32 %v3704, %v8109
      %v8111 = vpop.f32.mrf.mxu0
      %v8112 = vpop.f32.mrf.mxu0
      %v8113 = vadd.f32 %v3704, %v8112
      %v8114 = vpop.f32.mrf.mxu0
      %8115 = vmatprep.mubr.bf16.mxu0 0
      %8116 = vmatmul.mubr.bf16.gmra.mxu0 %v8040
      %v8117 = vpop.f32.mrf.mxu0
      %v8118 = vadd.f32 %v3704, %v8117
      %v8119 = vpop.f32.mrf.mxu0
      %v8120 = vpop.f32.mrf.mxu0
      %v8121 = vadd.f32 %v3704, %v8120
      %v8122 = vpop.f32.mrf.mxu0
      %8123 = vmatprep.mubr.bf16.mxu0 0
      %8124 = vmatmul.mubr.bf16.gmra.mxu0 %v8043
      %v8125 = vpop.f32.mrf.mxu0
      %v8126 = vadd.f32 %v3704, %v8125
      %v8127 = vpop.f32.mrf.mxu0
      %v8128 = vpop.f32.mrf.mxu0
      %v8129 = vadd.f32 %v3704, %v8128
      %v8130 = vpop.f32.mrf.mxu0
      %8131 = vmatprep.mubr.bf16.mxu0 0
      %8132 = vmatmul.mubr.bf16.gmra.mxu0 %v8046
      %v8133 = vpop.f32.mrf.mxu0
      %v8134 = vadd.f32 %v3704, %v8133
      %v8135 = vpop.f32.mrf.mxu0
      %v8136 = vpop.f32.mrf.mxu0
      %v8137 = vadd.f32 %v3704, %v8136
      %v8138 = vpop.f32.mrf.mxu0
      %8139 = vmatprep.mubr.bf16.mxu0 0
      %8140 = vmatmul.mubr.bf16.gmra.mxu0 %v8049
      %v8141 = vpop.f32.mrf.mxu0
      %v8142 = vadd.f32 %v3704, %v8141
      %v8143 = vpop.f32.mrf.mxu0
      %v8144 = vpop.f32.mrf.mxu0
      %v8145 = vadd.f32 %v3704, %v8144
      %v8146 = vpop.f32.mrf.mxu0
      %8147 = vdwg.mxu0
      %v8148 = vmul.f32 %v8086, %v8086
      %v8149 = vmul.f32 %v8089, %v8089
      %v8150 = vmul.f32 %v8094, %v8094
      %v8151 = vmul.f32 %v8097, %v8097
      %v8152 = vmul.f32 %v8102, %v8102
      %v8153 = vmul.f32 %v8105, %v8105
      %v8154 = vmul.f32 %v8110, %v8110
      %v8155 = vmul.f32 %v8113, %v8113
      %v8156 = vmul.f32 %v8118, %v8118
      %v8157 = vmul.f32 %v8121, %v8121
      %v8158 = vmul.f32 %v8126, %v8126
      %v8159 = vmul.f32 %v8129, %v8129
      %v8160 = vmul.f32 %v8134, %v8134
      %v8161 = vmul.f32 %v8137, %v8137
      %v8162 = vmul.f32 %v8142, %v8142
      %v8163 = vmul.f32 %v8145, %v8145
      %v8164 = vmul.f32 %v8086, %v8148
      %v8165 = vmul.f32 %v8089, %v8149
      %v8166 = vmul.f32 %v8094, %v8150
      %v8167 = vmul.f32 %v8097, %v8151
      %v8168 = vmul.f32 %v8102, %v8152
      %v8169 = vmul.f32 %v8105, %v8153
      %v8170 = vmul.f32 %v8110, %v8154
      %v8171 = vmul.f32 %v8113, %v8155
      %v8172 = vmul.f32 %v8118, %v8156
      %v8173 = vmul.f32 %v8121, %v8157
      %v8174 = vmul.f32 %v8126, %v8158
      %v8175 = vmul.f32 %v8129, %v8159
      %v8176 = vmul.f32 %v8134, %v8160
      %v8177 = vmul.f32 %v8137, %v8161
      %v8178 = vmul.f32 %v8142, %v8162
      %v8179 = vmul.f32 %v8145, %v8163
      %v8180 = vmul.f32 %v8164, 0.044715
      %v8181 = vmul.f32 %v8165, 0.044715
      %v8182 = vmul.f32 %v8166, 0.044715
      %v8183 = vmul.f32 %v8167, 0.044715
      %v8184 = vmul.f32 %v8168, 0.044715
      %v8185 = vmul.f32 %v8169, 0.044715
      %v8186 = vmul.f32 %v8170, 0.044715
      %v8187 = vmul.f32 %v8171, 0.044715
      %v8188 = vmul.f32 %v8172, 0.044715
      %v8189 = vmul.f32 %v8173, 0.044715
      %v8190 = vmul.f32 %v8174, 0.044715
      %v8191 = vmul.f32 %v8175, 0.044715
      %v8192 = vmul.f32 %v8176, 0.044715
      %v8193 = vmul.f32 %v8177, 0.044715
      %v8194 = vmul.f32 %v8178, 0.044715
      %v8195 = vmul.f32 %v8179, 0.044715
      %v8196 = vadd.f32 %v8086, %v8180
      %v8197 = vadd.f32 %v8089, %v8181
      %v8198 = vadd.f32 %v8094, %v8182
      %v8199 = vadd.f32 %v8097, %v8183
      %v8200 = vadd.f32 %v8102, %v8184
      %v8201 = vadd.f32 %v8105, %v8185
      %v8202 = vadd.f32 %v8110, %v8186
      %v8203 = vadd.f32 %v8113, %v8187
      %v8204 = vadd.f32 %v8118, %v8188
      %v8205 = vadd.f32 %v8121, %v8189
      %v8206 = vadd.f32 %v8126, %v8190
      %v8207 = vadd.f32 %v8129, %v8191
      %v8208 = vadd.f32 %v8134, %v8192
      %v8209 = vadd.f32 %v8137, %v8193
      %v8210 = vadd.f32 %v8142, %v8194
      %v8211 = vadd.f32 %v8145, %v8195
      %v8212 = vmul.f32 %v8196, 0.7978846
      %v8213 = vmul.f32 %v8197, 0.7978846
      %v8214 = vmul.f32 %v8198, 0.7978846
      %v8215 = vmul.f32 %v8199, 0.7978846
      %v8216 = vmul.f32 %v8200, 0.7978846
      %v8217 = vmul.f32 %v8201, 0.7978846
      %v8218 = vmul.f32 %v8202, 0.7978846
      %v8219 = vmul.f32 %v8203, 0.7978846
      %v8220 = vmul.f32 %v8204, 0.7978846
      %v8221 = vmul.f32 %v8205, 0.7978846
      %v8222 = vmul.f32 %v8206, 0.7978846
      %v8223 = vmul.f32 %v8207, 0.7978846
      %v8224 = vmul.f32 %v8208, 0.7978846
      %v8225 = vmul.f32 %v8209, 0.7978846
      %v8226 = vmul.f32 %v8210, 0.7978846
      %v8227 = vmul.f32 %v8211, 0.7978846
      %v8228 = vtanh.pop %v8212
      %v8229 = vtanh.pop %v8213
      %v8230 = vtanh.pop %v8214
      %v8231 = vtanh.pop %v8215
      %v8232 = vtanh.pop %v8216
      %v8233 = vtanh.pop %v8217
      %v8234 = vtanh.pop %v8218
      %v8235 = vtanh.pop %v8219
      %v8236 = vtanh.pop %v8220
      %v8237 = vtanh.pop %v8221
      %v8238 = vtanh.pop %v8222
      %v8239 = vtanh.pop %v8223
      %v8240 = vtanh.pop %v8224
      %v8241 = vtanh.pop %v8225
      %v8242 = vtanh.pop %v8226
      %v8243 = vtanh.pop %v8227
      %v8244 = vadd.f32 %v8228, 1.0
      %v8245 = vadd.f32 %v8229, 1.0
      %v8246 = vadd.f32 %v8230, 1.0
      %v8247 = vadd.f32 %v8231, 1.0
      %v8248 = vadd.f32 %v8232, 1.0
      %v8249 = vadd.f32 %v8233, 1.0
      %v8250 = vadd.f32 %v8234, 1.0
      %v8251 = vadd.f32 %v8235, 1.0
      %v8252 = vadd.f32 %v8236, 1.0
      %v8253 = vadd.f32 %v8237, 1.0
      %v8254 = vadd.f32 %v8238, 1.0
      %v8255 = vadd.f32 %v8239, 1.0
      %v8256 = vadd.f32 %v8240, 1.0
      %v8257 = vadd.f32 %v8241, 1.0
      %v8258 = vadd.f32 %v8242, 1.0
      %v8259 = vadd.f32 %v8243, 1.0
      %v8260 = vmul.f32 %v8244, 0.5
      %v8261 = vmul.f32 %v8245, 0.5
      %v8262 = vmul.f32 %v8246, 0.5
      %v8263 = vmul.f32 %v8247, 0.5
      %v8264 = vmul.f32 %v8248, 0.5
      %v8265 = vmul.f32 %v8249, 0.5
      %v8266 = vmul.f32 %v8250, 0.5
      %v8267 = vmul.f32 %v8251, 0.5
      %v8268 = vmul.f32 %v8252, 0.5
      %v8269 = vmul.f32 %v8253, 0.5
      %v8270 = vmul.f32 %v8254, 0.5
      %v8271 = vmul.f32 %v8255, 0.5
      %v8272 = vmul.f32 %v8256, 0.5
      %v8273 = vmul.f32 %v8257, 0.5
      %v8274 = vmul.f32 %v8258, 0.5
      %v8275 = vmul.f32 %v8259, 0.5
      %v8276 = vmul.f32 %v8086, %v8260
      %v8277 = vmul.f32 %v8089, %v8261
      %v8278 = vmul.f32 %v8094, %v8262
      %v8279 = vmul.f32 %v8097, %v8263
      %v8280 = vmul.f32 %v8102, %v8264
      %v8281 = vmul.f32 %v8105, %v8265
      %v8282 = vmul.f32 %v8110, %v8266
      %v8283 = vmul.f32 %v8113, %v8267
      %v8284 = vmul.f32 %v8118, %v8268
      %v8285 = vmul.f32 %v8121, %v8269
      %v8286 = vmul.f32 %v8126, %v8270
      %v8287 = vmul.f32 %v8129, %v8271
      %v8288 = vmul.f32 %v8134, %v8272
      %v8289 = vmul.f32 %v8137, %v8273
      %v8290 = vmul.f32 %v8142, %v8274
      %v8291 = vmul.f32 %v8145, %v8275
      %v8292 = vpack.c.bf16 %v8277, %v8276
      %v8293 = vpack.c.bf16 %v8279, %v8278
      %v8294 = vpack.c.bf16 %v8281, %v8280
      %v8295 = vpack.c.bf16 %v8283, %v8282
      %v8296 = vpack.c.bf16 %v8285, %v8284
      %v8297 = vpack.c.bf16 %v8287, %v8286
      %v8298 = vpack.c.bf16 %v8289, %v8288
      %v8299 = vpack.c.bf16 %v8291, %v8290
      %v8300 = vld [vmem:[%s4 + $0x20] sm:$0xf]
      %v8301 = vld [vmem:[%s4 + $0x24] sm:$0xf]
      %v8302 = vld [vmem:[%s4 + $0x28] sm:$0xf]
      %v8303 = vld [vmem:[%s4 + $0x2c] sm:$0xf]
      %v8304 = vld [vmem:[%s4 + $0x30] sm:$0xf]
      %v8305 = vld [vmem:[%s4 + $0x34] sm:$0xf]
      %v8306 = vld [vmem:[%s4 + $0x38] sm:$0xf]
      %v8307 = vld [vmem:[%s4 + $0x3c] sm:$0xf]
      %v8308 = vld [vmem:[%s4 + $0x40] sm:$0xf]
      %v8309 = vld [vmem:[%s4 + $0x44] sm:$0xf]
      %v8310 = vld [vmem:[%s4 + $0x48] sm:$0xf]
      %v8311 = vld [vmem:[%s4 + $0x4c] sm:$0xf]
      %v8312 = vld [vmem:[%s4 + $0x50] sm:$0xf]
      %v8313 = vld [vmem:[%s4 + $0x54] sm:$0xf]
      %v8314 = vld [vmem:[%s4 + $0x58] sm:$0xf]
      %v8315 = vld [vmem:[%s4 + $0x5c] sm:$0xf]
      %v8332 = vunpack.c.l.b16 %v8300
      %v8333 = vunpack.c.l.b16 %v8301
      %v8334 = vunpack.c.l.b16 %v8302
      %v8335 = vunpack.c.l.b16 %v8303
      %v8336 = vunpack.c.l.b16 %v8304
      %v8337 = vunpack.c.l.b16 %v8305
      %v8338 = vunpack.c.l.b16 %v8306
      %v8339 = vunpack.c.l.b16 %v8307
      %v8340 = vunpack.c.l.b16 %v8308
      %v8341 = vunpack.c.l.b16 %v8309
      %v8342 = vunpack.c.l.b16 %v8310
      %v8343 = vunpack.c.l.b16 %v8311
      %v8344 = vunpack.c.l.b16 %v8312
      %v8345 = vunpack.c.l.b16 %v8313
      %v8346 = vunpack.c.l.b16 %v8314
      %v8347 = vunpack.c.l.b16 %v8315
      %v8348 = vpack.c.b16 %v8333, %v8332
      %v8349 = vpack.c.b16 %v8335, %v8334
      %v8350 = vpack.c.b16 %v8337, %v8336
      %v8351 = vpack.c.b16 %v8339, %v8338
      %v8352 = vpack.c.b16 %v8341, %v8340
      %v8353 = vpack.c.b16 %v8343, %v8342
      %v8354 = vpack.c.b16 %v8345, %v8344
      %v8355 = vpack.c.b16 %v8347, %v8346
      %8364 = vmatprep.subr.bf16.mxu0 0
      %8365 = vmatpush1.bf16.msra.mxu0 %v8355
      %8366 = vmatprep.subr.bf16.mxu0 0
      %8367 = vmatpush1.bf16.msra.mxu0 %v8354
      %8368 = vmatprep.subr.bf16.mxu0 0
      %8369 = vmatpush1.bf16.msra.mxu0 %v8353
      %8370 = vmatprep.subr.bf16.mxu0 0
      %8371 = vmatpush1.bf16.msra.mxu0 %v8352
      %8372 = vmatprep.subr.bf16.mxu0 0
      %8373 = vmatpush1.bf16.msra.mxu0 %v8351
      %8374 = vmatprep.subr.bf16.mxu0 0
      %8375 = vmatpush1.bf16.msra.mxu0 %v8350
      %8376 = vmatprep.subr.bf16.mxu0 0
      %8377 = vmatpush1.bf16.msra.mxu0 %v8349
      %8378 = vmatprep.subr.bf16.mxu0 0
      %8379 = vmatpush1.bf16.msra.mxu0 %v8348
      %8380 = vmatprep.subr.bf16.mxu0 0
      %8381 = vmatpush2.bf16.msra.mxu0 0
      %8382 = vmatprep.subr.bf16.mxu0 0
      %8383 = vmatpush2.bf16.msra.mxu0 0
      %8384 = vmatprep.subr.bf16.mxu0 0
      %8385 = vmatpush2.bf16.msra.mxu0 0
      %8386 = vmatprep.subr.bf16.mxu0 0
      %8387 = vmatpush2.bf16.msra.mxu0 0
      %8388 = vmatprep.subr.bf16.mxu0 0
      %8389 = vmatpush2.bf16.msra.mxu0 0
      %8390 = vmatprep.subr.bf16.mxu0 0
      %8391 = vmatpush2.bf16.msra.mxu0 0
      %8392 = vmatprep.subr.bf16.mxu0 0
      %8393 = vmatpush2.bf16.msra.mxu0 0
      %8394 = vmatprep.subr.bf16.mxu0 0
      %8395 = vmatpush2.bf16.msra.mxu0 0
      %8396 = vmatprep.mubr.bf16.mxu0 0
      %8397 = vmatmul.mubr.bf16.gmra.mxu0 %v8292
      %v8398 = vpop.f32.mrf.mxu0
      %v8399 = vadd.f32 %v4021, %v8398
      %v8400 = vpop.f32.mrf.mxu0
      %v8401 = vpop.f32.mrf.mxu0
      %v8402 = vadd.f32 %v4021, %v8401
      %v8403 = vpop.f32.mrf.mxu0
      %8404 = vmatprep.mubr.bf16.mxu0 0
      %8405 = vmatmul.mubr.bf16.gmra.mxu0 %v8293
      %v8406 = vpop.f32.mrf.mxu0
      %v8407 = vadd.f32 %v4021, %v8406
      %v8408 = vpop.f32.mrf.mxu0
      %v8409 = vpop.f32.mrf.mxu0
      %v8410 = vadd.f32 %v4021, %v8409
      %v8411 = vpop.f32.mrf.mxu0
      %8412 = vmatprep.mubr.bf16.mxu0 0
      %8413 = vmatmul.mubr.bf16.gmra.mxu0 %v8294
      %v8414 = vpop.f32.mrf.mxu0
      %v8415 = vadd.f32 %v4021, %v8414
      %v8416 = vpop.f32.mrf.mxu0
      %v8417 = vpop.f32.mrf.mxu0
      %v8418 = vadd.f32 %v4021, %v8417
      %v8419 = vpop.f32.mrf.mxu0
      %8420 = vmatprep.mubr.bf16.mxu0 0
      %8421 = vmatmul.mubr.bf16.gmra.mxu0 %v8295
      %v8422 = vpop.f32.mrf.mxu0
      %v8423 = vadd.f32 %v4021, %v8422
      %v8424 = vpop.f32.mrf.mxu0
      %v8425 = vpop.f32.mrf.mxu0
      %v8426 = vadd.f32 %v4021, %v8425
      %v8427 = vpop.f32.mrf.mxu0
      %8428 = vmatprep.mubr.bf16.mxu0 0
      %8429 = vmatmul.mubr.bf16.gmra.mxu0 %v8296
      %v8430 = vpop.f32.mrf.mxu0
      %v8431 = vadd.f32 %v4021, %v8430
      %v8432 = vpop.f32.mrf.mxu0
      %v8433 = vpop.f32.mrf.mxu0
      %v8434 = vadd.f32 %v4021, %v8433
      %v8435 = vpop.f32.mrf.mxu0
      %8436 = vmatprep.mubr.bf16.mxu0 0
      %8437 = vmatmul.mubr.bf16.gmra.mxu0 %v8297
      %v8438 = vpop.f32.mrf.mxu0
      %v8439 = vadd.f32 %v4021, %v8438
      %v8440 = vpop.f32.mrf.mxu0
      %v8441 = vpop.f32.mrf.mxu0
      %v8442 = vadd.f32 %v4021, %v8441
      %v8443 = vpop.f32.mrf.mxu0
      %8444 = vmatprep.mubr.bf16.mxu0 0
      %8445 = vmatmul.mubr.bf16.gmra.mxu0 %v8298
      %v8446 = vpop.f32.mrf.mxu0
      %v8447 = vadd.f32 %v4021, %v8446
      %v8448 = vpop.f32.mrf.mxu0
      %v8449 = vpop.f32.mrf.mxu0
      %v8450 = vadd.f32 %v4021, %v8449
      %v8451 = vpop.f32.mrf.mxu0
      %8452 = vmatprep.mubr.bf16.mxu0 0
      %8453 = vmatmul.mubr.bf16.gmra.mxu0 %v8299
      %v8454 = vpop.f32.mrf.mxu0
      %v8455 = vadd.f32 %v4021, %v8454
      %v8456 = vpop.f32.mrf.mxu0
      %v8457 = vpop.f32.mrf.mxu0
      %v8458 = vadd.f32 %v4021, %v8457
      %v8459 = vpop.f32.mrf.mxu0
      %8460 = vdwg.mxu0
      %vm8461 = vcmp.ge.f32.partialorder %v8399, 0.0
      %vm8462 = vcmp.ge.f32.partialorder %v8402, 0.0
      %vm8463 = vcmp.ge.f32.partialorder %v8407, 0.0
      %vm8464 = vcmp.ge.f32.partialorder %v8410, 0.0
      %vm8465 = vcmp.ge.f32.partialorder %v8415, 0.0
      %vm8466 = vcmp.ge.f32.partialorder %v8418, 0.0
      %vm8467 = vcmp.ge.f32.partialorder %v8423, 0.0
      %vm8468 = vcmp.ge.f32.partialorder %v8426, 0.0
      %vm8469 = vcmp.ge.f32.partialorder %v8431, 0.0
      %vm8470 = vcmp.ge.f32.partialorder %v8434, 0.0
      %vm8471 = vcmp.ge.f32.partialorder %v8439, 0.0
      %vm8472 = vcmp.ge.f32.partialorder %v8442, 0.0
      %vm8473 = vcmp.ge.f32.partialorder %v8447, 0.0
      %vm8474 = vcmp.ge.f32.partialorder %v8450, 0.0
      %vm8475 = vcmp.ge.f32.partialorder %v8455, 0.0
      %vm8476 = vcmp.ge.f32.partialorder %v8458, 0.0
      %v8477 = vmul.f32 %v8399, 0.1
      %v8478 = vmul.f32 %v8402, 0.1
      %v8479 = vmul.f32 %v8407, 0.1
      %v8480 = vmul.f32 %v8410, 0.1
      %v8481 = vmul.f32 %v8415, 0.1
      %v8482 = vmul.f32 %v8418, 0.1
      %v8483 = vmul.f32 %v8423, 0.1
      %v8484 = vmul.f32 %v8426, 0.1
      %v8485 = vmul.f32 %v8431, 0.1
      %v8486 = vmul.f32 %v8434, 0.1
      %v8487 = vmul.f32 %v8439, 0.1
      %v8488 = vmul.f32 %v8442, 0.1
      %v8489 = vmul.f32 %v8447, 0.1
      %v8490 = vmul.f32 %v8450, 0.1
      %v8491 = vmul.f32 %v8455, 0.1
      %v8492 = vmul.f32 %v8458, 0.1
      %v8493 = vsel %vm8461, %v8399, %v8477
      %v8494 = vsel %vm8462, %v8402, %v8478
      %v8495 = vsel %vm8463, %v8407, %v8479
      %v8496 = vsel %vm8464, %v8410, %v8480
      %v8497 = vsel %vm8465, %v8415, %v8481
      %v8498 = vsel %vm8466, %v8418, %v8482
      %v8499 = vsel %vm8467, %v8423, %v8483
      %v8500 = vsel %vm8468, %v8426, %v8484
      %v8501 = vsel %vm8469, %v8431, %v8485
      %v8502 = vsel %vm8470, %v8434, %v8486
      %v8503 = vsel %vm8471, %v8439, %v8487
      %v8504 = vsel %vm8472, %v8442, %v8488
      %v8505 = vsel %vm8473, %v8447, %v8489
      %v8506 = vsel %vm8474, %v8450, %v8490
      %v8507 = vsel %vm8475, %v8455, %v8491
      %v8508 = vsel %vm8476, %v8458, %v8492
      %v8509 = vadd.f32 %v7731, %v8493
      %v8510 = vadd.f32 %v7732, %v8494
      %v8511 = vadd.f32 %v7733, %v8495
      %v8512 = vadd.f32 %v7734, %v8496
      %v8513 = vadd.f32 %v7735, %v8497
      %v8514 = vadd.f32 %v7736, %v8498
      %v8515 = vadd.f32 %v7737, %v8499
      %v8516 = vadd.f32 %v7738, %v8500
      %v8517 = vadd.f32 %v7739, %v8501
      %v8518 = vadd.f32 %v7740, %v8502
      %v8519 = vadd.f32 %v7741, %v8503
      %v8520 = vadd.f32 %v7742, %v8504
      %v8521 = vadd.f32 %v7743, %v8505
      %v8522 = vadd.f32 %v7744, %v8506
      %v8523 = vadd.f32 %v7745, %v8507
      %v8524 = vadd.f32 %v7746, %v8508
      %v8525 = vsel %vm1279, %v8509, 0.0
      %8526 = vadd.xlane.f32.xlu0 %v8525
      %v8527 = vpop.xlane.xlu0 %8526
      %v8528 = vsel %vm1279, %v8510, 0.0
      %8529 = vadd.xlane.f32.xlu0 %v8528
      %v8530 = vpop.xlane.xlu0 %8529
      %v8531 = vsel %vm1279, %v8511, 0.0
      %8532 = vadd.xlane.f32.xlu0 %v8531
      %v8533 = vpop.xlane.xlu0 %8532
      %v8534 = vsel %vm1279, %v8512, 0.0
      %8535 = vadd.xlane.f32.xlu0 %v8534
      %v8536 = vpop.xlane.xlu0 %8535
      %v8537 = vsel %vm1279, %v8513, 0.0
      %8538 = vadd.xlane.f32.xlu0 %v8537
      %v8539 = vpop.xlane.xlu0 %8538
      %v8540 = vsel %vm1279, %v8514, 0.0
      %8541 = vadd.xlane.f32.xlu0 %v8540
      %v8542 = vpop.xlane.xlu0 %8541
      %v8543 = vsel %vm1279, %v8515, 0.0
      %8544 = vadd.xlane.f32.xlu0 %v8543
      %v8545 = vpop.xlane.xlu0 %8544
      %v8546 = vsel %vm1279, %v8516, 0.0
      %8547 = vadd.xlane.f32.xlu0 %v8546
      %v8548 = vpop.xlane.xlu0 %8547
      %v8549 = vsel %vm1279, %v8517, 0.0
      %8550 = vadd.xlane.f32.xlu0 %v8549
      %v8551 = vpop.xlane.xlu0 %8550
      %v8552 = vsel %vm1279, %v8518, 0.0
      %8553 = vadd.xlane.f32.xlu0 %v8552
      %v8554 = vpop.xlane.xlu0 %8553
      %v8555 = vsel %vm1279, %v8519, 0.0
      %8556 = vadd.xlane.f32.xlu0 %v8555
      %v8557 = vpop.xlane.xlu0 %8556
      %v8558 = vsel %vm1279, %v8520, 0.0
      %8559 = vadd.xlane.f32.xlu0 %v8558
      %v8560 = vpop.xlane.xlu0 %8559
      %v8561 = vsel %vm1279, %v8521, 0.0
      %8562 = vadd.xlane.f32.xlu0 %v8561
      %v8563 = vpop.xlane.xlu0 %8562
      %v8564 = vsel %vm1279, %v8522, 0.0
      %8565 = vadd.xlane.f32.xlu0 %v8564
      %v8566 = vpop.xlane.xlu0 %8565
      %v8567 = vsel %vm1279, %v8523, 0.0
      %8568 = vadd.xlane.f32.xlu0 %v8567
      %v8569 = vpop.xlane.xlu0 %8568
      %v8570 = vsel %vm1279, %v8524, 0.0
      %8571 = vadd.xlane.f32.xlu0 %v8570
      %v8572 = vpop.xlane.xlu0 %8571
      %v8573 = vmul.f32 %v8527, %v1328
      %v8574 = vmul.f32 %v8530, %v1328
      %v8575 = vmul.f32 %v8533, %v1328
      %v8576 = vmul.f32 %v8536, %v1328
      %v8577 = vmul.f32 %v8539, %v1328
      %v8578 = vmul.f32 %v8542, %v1328
      %v8579 = vmul.f32 %v8545, %v1328
      %v8580 = vmul.f32 %v8548, %v1328
      %v8581 = vmul.f32 %v8551, %v1328
      %v8582 = vmul.f32 %v8554, %v1328
      %v8583 = vmul.f32 %v8557, %v1328
      %v8584 = vmul.f32 %v8560, %v1328
      %v8585 = vmul.f32 %v8563, %v1328
      %v8586 = vmul.f32 %v8566, %v1328
      %v8587 = vmul.f32 %v8569, %v1328
      %v8588 = vmul.f32 %v8572, %v1328
      %v8589 = vsub.f32 %v8509, %v8573
      %v8590 = vsub.f32 %v8510, %v8574
      %v8591 = vsub.f32 %v8511, %v8575
      %v8592 = vsub.f32 %v8512, %v8576
      %v8593 = vsub.f32 %v8513, %v8577
      %v8594 = vsub.f32 %v8514, %v8578
      %v8595 = vsub.f32 %v8515, %v8579
      %v8596 = vsub.f32 %v8516, %v8580
      %v8597 = vsub.f32 %v8517, %v8581
      %v8598 = vsub.f32 %v8518, %v8582
      %v8599 = vsub.f32 %v8519, %v8583
      %v8600 = vsub.f32 %v8520, %v8584
      %v8601 = vsub.f32 %v8521, %v8585
      %v8602 = vsub.f32 %v8522, %v8586
      %v8603 = vsub.f32 %v8523, %v8587
      %v8604 = vsub.f32 %v8524, %v8588
      %v8605 = vmul.f32 %v8589, %v8589
      %v8606 = vmul.f32 %v8590, %v8590
      %v8607 = vmul.f32 %v8591, %v8591
      %v8608 = vmul.f32 %v8592, %v8592
      %v8609 = vmul.f32 %v8593, %v8593
      %v8610 = vmul.f32 %v8594, %v8594
      %v8611 = vmul.f32 %v8595, %v8595
      %v8612 = vmul.f32 %v8596, %v8596
      %v8613 = vmul.f32 %v8597, %v8597
      %v8614 = vmul.f32 %v8598, %v8598
      %v8615 = vmul.f32 %v8599, %v8599
      %v8616 = vmul.f32 %v8600, %v8600
      %v8617 = vmul.f32 %v8601, %v8601
      %v8618 = vmul.f32 %v8602, %v8602
      %v8619 = vmul.f32 %v8603, %v8603
      %v8620 = vmul.f32 %v8604, %v8604
      %v8621 = vsel %vm1279, %v8605, 0.0
      %8622 = vadd.xlane.f32.xlu0 %v8621
      %v8623 = vpop.xlane.xlu0 %8622
      %v8624 = vsel %vm1279, %v8606, 0.0
      %8625 = vadd.xlane.f32.xlu0 %v8624
      %v8626 = vpop.xlane.xlu0 %8625
      %v8627 = vsel %vm1279, %v8607, 0.0
      %8628 = vadd.xlane.f32.xlu0 %v8627
      %v8629 = vpop.xlane.xlu0 %8628
      %v8630 = vsel %vm1279, %v8608, 0.0
      %8631 = vadd.xlane.f32.xlu0 %v8630
      %v8632 = vpop.xlane.xlu0 %8631
      %v8633 = vsel %vm1279, %v8609, 0.0
      %8634 = vadd.xlane.f32.xlu0 %v8633
      %v8635 = vpop.xlane.xlu0 %8634
      %v8636 = vsel %vm1279, %v8610, 0.0
      %8637 = vadd.xlane.f32.xlu0 %v8636
      %v8638 = vpop.xlane.xlu0 %8637
      %v8639 = vsel %vm1279, %v8611, 0.0
      %8640 = vadd.xlane.f32.xlu0 %v8639
      %v8641 = vpop.xlane.xlu0 %8640
      %v8642 = vsel %vm1279, %v8612, 0.0
      %8643 = vadd.xlane.f32.xlu0 %v8642
      %v8644 = vpop.xlane.xlu0 %8643
      %v8645 = vsel %vm1279, %v8613, 0.0
      %8646 = vadd.xlane.f32.xlu0 %v8645
      %v8647 = vpop.xlane.xlu0 %8646
      %v8648 = vsel %vm1279, %v8614, 0.0
      %8649 = vadd.xlane.f32.xlu0 %v8648
      %v8650 = vpop.xlane.xlu0 %8649
      %v8651 = vsel %vm1279, %v8615, 0.0
      %8652 = vadd.xlane.f32.xlu0 %v8651
      %v8653 = vpop.xlane.xlu0 %8652
      %v8654 = vsel %vm1279, %v8616, 0.0
      %8655 = vadd.xlane.f32.xlu0 %v8654
      %v8656 = vpop.xlane.xlu0 %8655
      %v8657 = vsel %vm1279, %v8617, 0.0
      %8658 = vadd.xlane.f32.xlu0 %v8657
      %v8659 = vpop.xlane.xlu0 %8658
      %v8660 = vsel %vm1279, %v8618, 0.0
      %8661 = vadd.xlane.f32.xlu0 %v8660
      %v8662 = vpop.xlane.xlu0 %8661
      %v8663 = vsel %vm1279, %v8619, 0.0
      %8664 = vadd.xlane.f32.xlu0 %v8663
      %v8665 = vpop.xlane.xlu0 %8664
      %v8666 = vsel %vm1279, %v8620, 0.0
      %8667 = vadd.xlane.f32.xlu0 %v8666
      %v8668 = vpop.xlane.xlu0 %8667
      %v8669 = vmul.f32 %v8623, %v1328
      %v8670 = vmul.f32 %v8626, %v1328
      %v8671 = vmul.f32 %v8629, %v1328
      %v8672 = vmul.f32 %v8632, %v1328
      %v8673 = vmul.f32 %v8635, %v1328
      %v8674 = vmul.f32 %v8638, %v1328
      %v8675 = vmul.f32 %v8641, %v1328
      %v8676 = vmul.f32 %v8644, %v1328
      %v8677 = vmul.f32 %v8647, %v1328
      %v8678 = vmul.f32 %v8650, %v1328
      %v8679 = vmul.f32 %v8653, %v1328
      %v8680 = vmul.f32 %v8656, %v1328
      %v8681 = vmul.f32 %v8659, %v1328
      %v8682 = vmul.f32 %v8662, %v1328
      %v8683 = vmul.f32 %v8665, %v1328
      %v8684 = vmul.f32 %v8668, %v1328
      %v8685 = vadd.f32 %v8669, 1e-05
      %v8686 = vadd.f32 %v8670, 1e-05
      %v8687 = vadd.f32 %v8671, 1e-05
      %v8688 = vadd.f32 %v8672, 1e-05
      %v8689 = vadd.f32 %v8673, 1e-05
      %v8690 = vadd.f32 %v8674, 1e-05
      %v8691 = vadd.f32 %v8675, 1e-05
      %v8692 = vadd.f32 %v8676, 1e-05
      %v8693 = vadd.f32 %v8677, 1e-05
      %v8694 = vadd.f32 %v8678, 1e-05
      %v8695 = vadd.f32 %v8679, 1e-05
      %v8696 = vadd.f32 %v8680, 1e-05
      %v8697 = vadd.f32 %v8681, 1e-05
      %v8698 = vadd.f32 %v8682, 1e-05
      %v8699 = vadd.f32 %v8683, 1e-05
      %v8700 = vadd.f32 %v8684, 1e-05
      %v8701 = vrsqrt.pop %v8685
      %v8702 = vrsqrt.pop %v8686
      %v8703 = vrsqrt.pop %v8687
      %v8704 = vrsqrt.pop %v8688
      %v8705 = vrsqrt.pop %v8689
      %v8706 = vrsqrt.pop %v8690
      %v8707 = vrsqrt.pop %v8691
      %v8708 = vrsqrt.pop %v8692
      %v8709 = vrsqrt.pop %v8693
      %v8710 = vrsqrt.pop %v8694
      %v8711 = vrsqrt.pop %v8695
      %v8712 = vrsqrt.pop %v8696
      %v8713 = vrsqrt.pop %v8697
      %v8714 = vrsqrt.pop %v8698
      %v8715 = vrsqrt.pop %v8699
      %v8716 = vrsqrt.pop %v8700
      %v8717 = vmul.f32 %v8589, %v8701
      %v8718 = vmul.f32 %v8590, %v8702
      %v8719 = vmul.f32 %v8591, %v8703
      %v8720 = vmul.f32 %v8592, %v8704
      %v8721 = vmul.f32 %v8593, %v8705
      %v8722 = vmul.f32 %v8594, %v8706
      %v8723 = vmul.f32 %v8595, %v8707
      %v8724 = vmul.f32 %v8596, %v8708
      %v8725 = vmul.f32 %v8597, %v8709
      %v8726 = vmul.f32 %v8598, %v8710
      %v8727 = vmul.f32 %v8599, %v8711
      %v8728 = vmul.f32 %v8600, %v8712
      %v8729 = vmul.f32 %v8601, %v8713
      %v8730 = vmul.f32 %v8602, %v8714
      %v8731 = vmul.f32 %v8603, %v8715
      %v8732 = vmul.f32 %v8604, %v8716
      %v8733 = vmul.f32 %v8717, %v4442
      %v8734 = vmul.f32 %v8718, %v4442
      %v8735 = vmul.f32 %v8719, %v4442
      %v8736 = vmul.f32 %v8720, %v4442
      %v8737 = vmul.f32 %v8721, %v4442
      %v8738 = vmul.f32 %v8722, %v4442
      %v8739 = vmul.f32 %v8723, %v4442
      %v8740 = vmul.f32 %v8724, %v4442
      %v8741 = vmul.f32 %v8725, %v4442
      %v8742 = vmul.f32 %v8726, %v4442
      %v8743 = vmul.f32 %v8727, %v4442
      %v8744 = vmul.f32 %v8728, %v4442
      %v8745 = vmul.f32 %v8729, %v4442
      %v8746 = vmul.f32 %v8730, %v4442
      %v8747 = vmul.f32 %v8731, %v4442
      %v8748 = vmul.f32 %v8732, %v4442
      %v8749 = vadd.f32 %v8733, %v4462
      %v8750 = vadd.f32 %v8734, %v4462
      %v8751 = vadd.f32 %v8735, %v4462
      %v8752 = vadd.f32 %v8736, %v4462
      %v8753 = vadd.f32 %v8737, %v4462
      %v8754 = vadd.f32 %v8738, %v4462
      %v8755 = vadd.f32 %v8739, %v4462
      %v8756 = vadd.f32 %v8740, %v4462
      %v8757 = vadd.f32 %v8741, %v4462
      %v8758 = vadd.f32 %v8742, %v4462
      %v8759 = vadd.f32 %v8743, %v4462
      %v8760 = vadd.f32 %v8744, %v4462
      %v8761 = vadd.f32 %v8745, %v4462
      %v8762 = vadd.f32 %v8746, %v4462
      %v8763 = vadd.f32 %v8747, %v4462
      %v8764 = vadd.f32 %v8748, %v4462
      %v8765 = vpack.c.bf16 %v8750, %v8749
      %v8766 = vpack.c.bf16 %v8752, %v8751
      %v8767 = vpack.c.bf16 %v8754, %v8753
      %v8768 = vpack.c.bf16 %v8756, %v8755
      %v8769 = vpack.c.bf16 %v8758, %v8757
      %v8770 = vpack.c.bf16 %v8760, %v8759
      %v8771 = vpack.c.bf16 %v8762, %v8761
      %v8772 = vpack.c.bf16 %v8764, %v8763
      %v8773 = vld [vmem:[%s4 + $0x68] sm:$0xf]
      %v8774 = vld [vmem:[%s4 + $0x6c] sm:$0xf]
      %v8775 = vld [vmem:[%s4 + $0x70] sm:$0xf]
      %v8776 = vld [vmem:[%s4 + $0x74] sm:$0xf]
      %v8777 = vld [vmem:[%s4 + $0x78] sm:$0xf]
      %v8778 = vld [vmem:[%s4 + $0x7c] sm:$0xf]
      %v8779 = vld [vmem:[%s4 + $0x80] sm:$0xf]
      %v8780 = vld [vmem:[%s4 + $0x84] sm:$0xf]
      %v8789 = vunpack.c.l.b16 %v8773
      %v8790 = vunpack.c.l.b16 %v8774
      %v8791 = vunpack.c.l.b16 %v8775
      %v8792 = vunpack.c.l.b16 %v8776
      %v8793 = vunpack.c.l.b16 %v8777
      %v8794 = vunpack.c.l.b16 %v8778
      %v8795 = vunpack.c.l.b16 %v8779
      %v8796 = vunpack.c.l.b16 %v8780
      %v8797 = vpack.c.b16 %v8790, %v8789
      %v8798 = vpack.c.b16 %v8792, %v8791
      %v8799 = vpack.c.b16 %v8794, %v8793
      %v8800 = vpack.c.b16 %v8796, %v8795
      %v8806 = vsel %vm1279, %v8765, 0
      %v8809 = vsel %vm1279, %v8766, 0
      %v8812 = vsel %vm1279, %v8767, 0
      %v8815 = vsel %vm1279, %v8768, 0
      %v8818 = vsel %vm1279, %v8769, 0
      %v8821 = vsel %vm1279, %v8770, 0
      %v8824 = vsel %vm1279, %v8771, 0
      %v8827 = vsel %vm1279, %v8772, 0
      %8829 = vmatprep.subr.bf16.mxu0 0
      %8830 = vmatpush1.bf16.msra.mxu0 0
      %8831 = vmatprep.subr.bf16.mxu0 0
      %8832 = vmatpush1.bf16.msra.mxu0 0
      %8833 = vmatprep.subr.bf16.mxu0 0
      %8834 = vmatpush1.bf16.msra.mxu0 0
      %8835 = vmatprep.subr.bf16.mxu0 0
      %8836 = vmatpush1.bf16.msra.mxu0 0
      %8837 = vmatprep.subr.bf16.mxu0 0
      %8838 = vmatpush1.bf16.msra.mxu0 %v8800
      %8839 = vmatprep.subr.bf16.mxu0 0
      %8840 = vmatpush1.bf16.msra.mxu0 %v8799
      %8841 = vmatprep.subr.bf16.mxu0 0
      %8842 = vmatpush1.bf16.msra.mxu0 %v8798
      %8843 = vmatprep.subr.bf16.mxu0 0
      %8844 = vmatpush1.bf16.msra.mxu0 %v8797
      %8845 = vmatprep.subr.bf16.mxu0 0
      %8846 = vmatpush2.bf16.msra.mxu0 0
      %8847 = vmatprep.subr.bf16.mxu0 0
      %8848 = vmatpush2.bf16.msra.mxu0 0
      %8849 = vmatprep.subr.bf16.mxu0 0
      %8850 = vmatpush2.bf16.msra.mxu0 0
      %8851 = vmatprep.subr.bf16.mxu0 0
      %8852 = vmatpush2.bf16.msra.mxu0 0
      %8853 = vmatprep.subr.bf16.mxu0 0
      %8854 = vmatpush2.bf16.msra.mxu0 0
      %8855 = vmatprep.subr.bf16.mxu0 0
      %8856 = vmatpush2.bf16.msra.mxu0 0
      %8857 = vmatprep.subr.bf16.mxu0 0
      %8858 = vmatpush2.bf16.msra.mxu0 0
      %8859 = vmatprep.subr.bf16.mxu0 0
      %8860 = vmatpush2.bf16.msra.mxu0 0
      %8861 = vmatprep.mubr.bf16.mxu0 0
      %8862 = vmatmul.mubr.bf16.gmra.mxu0 %v8806
      %v8863 = vpop.f32.mrf.mxu0
      %v8864 = vadd.f32 %v4498, %v8863
      %v8865 = vpop.f32.mrf.mxu0
      %v8866 = vpop.f32.mrf.mxu0
      %v8867 = vadd.f32 %v4498, %v8866
      %v8868 = vpop.f32.mrf.mxu0
      %8869 = vmatprep.mubr.bf16.mxu0 0
      %8870 = vmatmul.mubr.bf16.gmra.mxu0 %v8809
      %v8871 = vpop.f32.mrf.mxu0
      %v8872 = vadd.f32 %v4498, %v8871
      %v8873 = vpop.f32.mrf.mxu0
      %v8874 = vpop.f32.mrf.mxu0
      %v8875 = vadd.f32 %v4498, %v8874
      %v8876 = vpop.f32.mrf.mxu0
      %8877 = vmatprep.mubr.bf16.mxu0 0
      %8878 = vmatmul.mubr.bf16.gmra.mxu0 %v8812
      %v8879 = vpop.f32.mrf.mxu0
      %v8880 = vadd.f32 %v4498, %v8879
      %v8881 = vpop.f32.mrf.mxu0
      %v8882 = vpop.f32.mrf.mxu0
      %v8883 = vadd.f32 %v4498, %v8882
      %v8884 = vpop.f32.mrf.mxu0
      %8885 = vmatprep.mubr.bf16.mxu0 0
      %8886 = vmatmul.mubr.bf16.gmra.mxu0 %v8815
      %v8887 = vpop.f32.mrf.mxu0
      %v8888 = vadd.f32 %v4498, %v8887
      %v8889 = vpop.f32.mrf.mxu0
      %v8890 = vpop.f32.mrf.mxu0
      %v8891 = vadd.f32 %v4498, %v8890
      %v8892 = vpop.f32.mrf.mxu0
      %8893 = vmatprep.mubr.bf16.mxu0 0
      %8894 = vmatmul.mubr.bf16.gmra.mxu0 %v8818
      %v8895 = vpop.f32.mrf.mxu0
      %v8896 = vadd.f32 %v4498, %v8895
      %v8897 = vpop.f32.mrf.mxu0
      %v8898 = vpop.f32.mrf.mxu0
      %v8899 = vadd.f32 %v4498, %v8898
      %v8900 = vpop.f32.mrf.mxu0
      %8901 = vmatprep.mubr.bf16.mxu0 0
      %8902 = vmatmul.mubr.bf16.gmra.mxu0 %v8821
      %v8903 = vpop.f32.mrf.mxu0
      %v8904 = vadd.f32 %v4498, %v8903
      %v8905 = vpop.f32.mrf.mxu0
      %v8906 = vpop.f32.mrf.mxu0
      %v8907 = vadd.f32 %v4498, %v8906
      %v8908 = vpop.f32.mrf.mxu0
      %8909 = vmatprep.mubr.bf16.mxu0 0
      %8910 = vmatmul.mubr.bf16.gmra.mxu0 %v8824
      %v8911 = vpop.f32.mrf.mxu0
      %v8912 = vadd.f32 %v4498, %v8911
      %v8913 = vpop.f32.mrf.mxu0
      %v8914 = vpop.f32.mrf.mxu0
      %v8915 = vadd.f32 %v4498, %v8914
      %v8916 = vpop.f32.mrf.mxu0
      %8917 = vmatprep.mubr.bf16.mxu0 0
      %8918 = vmatmul.mubr.bf16.gmra.mxu0 %v8827
      %v8919 = vpop.f32.mrf.mxu0
      %v8920 = vadd.f32 %v4498, %v8919
      %v8921 = vpop.f32.mrf.mxu0
      %v8922 = vpop.f32.mrf.mxu0
      %v8923 = vadd.f32 %v4498, %v8922
      %v8924 = vpop.f32.mrf.mxu0
      %8925 = vdwg.mxu0
      %v8926 = vadd.f32 %v4919, %v7019
      %v8927 = vadd.f32 %v4921, %v7021
      %v8928 = vadd.f32 %v4923, %v7023
      %v8929 = vadd.f32 %v4925, %v7025
      %v8930 = vadd.f32 %v4927, %v7027
      %v8931 = vadd.f32 %v4929, %v7029
      %v8932 = vadd.f32 %v4931, %v7031
      %v8933 = vadd.f32 %v4933, %v7033
      %v8934 = vadd.f32 %v4935, %v7035
      %v8935 = vadd.f32 %v4937, %v7037
      %v8936 = vadd.f32 %v4939, %v7039
      %v8937 = vadd.f32 %v4941, %v7041
      %v8938 = vadd.f32 %v4943, %v7043
      %v8939 = vadd.f32 %v4945, %v7045
      %v8940 = vadd.f32 %v4947, %v7047
      %v8941 = vadd.f32 %v4949, %v7049
      %v8942 = vadd.f32 %v8926, %v8864
      %v8943 = vadd.f32 %v8927, %v8867
      %v8944 = vadd.f32 %v8928, %v8872
      %v8945 = vadd.f32 %v8929, %v8875
      %v8946 = vadd.f32 %v8930, %v8880
      %v8947 = vadd.f32 %v8931, %v8883
      %v8948 = vadd.f32 %v8932, %v8888
      %v8949 = vadd.f32 %v8933, %v8891
      %v8950 = vadd.f32 %v8934, %v8896
      %v8951 = vadd.f32 %v8935, %v8899
      %v8952 = vadd.f32 %v8936, %v8904
      %v8953 = vadd.f32 %v8937, %v8907
      %v8954 = vadd.f32 %v8938, %v8912
      %v8955 = vadd.f32 %v8939, %v8915
      %v8956 = vadd.f32 %v8940, %v8920
      %v8957 = vadd.f32 %v8941, %v8923
      %s8958 = scalar_lea.vmem %s275, 128
      %8959 = vst.msk [vmem:[%s8958] sm:$0xff] %vm352, %v8942
      %8960 = vst.msk [vmem:[%s8958 + $0x8] sm:$0xff] %vm352, %v8943
      %8961 = vst.msk [vmem:[%s8958 + $0x10] sm:$0xff] %vm352, %v8944
      %8962 = vst.msk [vmem:[%s8958 + $0x18] sm:$0xff] %vm352, %v8945
      %8963 = vst.msk [vmem:[%s8958 + $0x20] sm:$0xff] %vm352, %v8946
      %8964 = vst.msk [vmem:[%s8958 + $0x28] sm:$0xff] %vm352, %v8947
      %8965 = vst.msk [vmem:[%s8958 + $0x30] sm:$0xff] %vm352, %v8948
      %8966 = vst.msk [vmem:[%s8958 + $0x38] sm:$0xff] %vm352, %v8949
      %8967 = vst.msk [vmem:[%s8958 + $0x40] sm:$0xff] %vm352, %v8950
      %8968 = vst.msk [vmem:[%s8958 + $0x48] sm:$0xff] %vm352, %v8951
      %8969 = vst.msk [vmem:[%s8958 + $0x50] sm:$0xff] %vm352, %v8952
      %8970 = vst.msk [vmem:[%s8958 + $0x58] sm:$0xff] %vm352, %v8953
      %8971 = vst.msk [vmem:[%s8958 + $0x60] sm:$0xff] %vm352, %v8954
      %8972 = vst.msk [vmem:[%s8958 + $0x68] sm:$0xff] %vm352, %v8955
      %8973 = vst.msk [vmem:[%s8958 + $0x70] sm:$0xff] %vm352, %v8956
      %8974 = vst.msk [vmem:[%s8958 + $0x78] sm:$0xff] %vm352, %v8957
      %s8975 = smul.u32 32, %s17
      %p8976 = scmp.lt.s32.totalorder %s8975, 63
      %s8977 = scalar_select %p8976, %s8975, 63
      %s8978 = smul.addr %s8977, 8
      %s8979 = scalar_lea.vmem %s6, %s8978
      // Predicated region
      $region45: #{gripper_grasp_sampler.1} parent=43 // pred_check
        %p8980 = pneg %p171
      $region46: #{gripper_grasp_sampler.1} parent=43 // pred_check_branch
        %8982 = sbr.rel (%p8980) target = $region48
      $region47: #{gripper_grasp_sampler.1} parent=43 // pred_region
        %s8983 = smul.u32 32, %s17
      $region48: #{gripper_grasp_sampler.1} parent=43 // pred_fallthru
        _
    $region44: #{gripper_grasp_sampler.1} parent=5 // pred_fallthru
      _
    %p8984 = scmp.le.s32.totalorder 2, %s12
    // Predicated region
    $region49: #{gripper_grasp_sampler.1} parent=5 // pred_check
      %p8985 = pneg %p8984
    $region50: #{gripper_grasp_sampler.1} parent=5 // pred_check_branch
      %8987 = sbr.rel (%p8985) target = $region52
    $region51: #{gripper_grasp_sampler.1} parent=5 // pred_region
      %s8988 = ssub.s32 %s12, 2
      // Predicated region
      $region53: #{gripper_grasp_sampler.1} parent=51 // pred_check
        %p8989 = pneg %p177
      $region54: #{gripper_grasp_sampler.1} parent=51 // pred_check_branch
        %8991 = sbr.rel (%p8989) target = $region56
      $region55: #{gripper_grasp_sampler.1} parent=51 // pred_region
        %s8992 = smul.u32 32, %s18
        %p8993 = scmp.lt.s32.totalorder %s8992, 63
        %s8994 = scalar_select %p8993, %s8992, 63
        %s8995 = smul.addr %s8994, 8
        %s8996 = scalar_lea.vmem %s6, %s8995
      $region56: #{gripper_grasp_sampler.1} parent=51 // pred_fallthru
        _
    $region52: #{gripper_grasp_sampler.1} parent=5 // pred_fallthru
      _
  $region6: #{gripper_grasp_sampler.1} parent=0 // loop_footer
    %s16 = sadd.s32 1, %s12
  $region7: #{gripper_grasp_sampler.1} parent=0 // loop_footer_branch
    %11 = sbr.rel target = $region3
  $region8: #{gripper_grasp_sampler.1} parent=0 // loop_exit
    _

</llo_original>
